<compile_context>
chip_gen: v5e
topology: v5e:2x2
jax: 0.10.0
libtpu: 0.0.40
codegen_flags: <defaults>
</compile_context>

<pallas_src>
import jax
import jax.numpy as jnp
from jax import lax
from jax.experimental import pallas as pl
from jax.experimental.pallas import tpu as pltpu

C = 160            # channels
G = 10             # groups of the 3x3 conv
CG = C // G        # 16 channels per group
H = W = 14         # spatial size fixed by the module
P = H * W          # 196 pixels
EPS = 1e-5

PAD_OFF = 16       # first interior row of the zero-padded stage-1 buffer
PAD_ROWS = 240     # >= PAD_OFF + P + 15 (= 227), multiple of 16 (bf16 sublane pack)

_VMEM = pl.BlockSpec(memory_space=pltpu.MemorySpace.VMEM)


def fused_kernel(x_ref, w1_ref, g1_ref, b1_ref, w2_ref, g2_ref, b2_ref,
                 o_ref, pad_ref):
    """1x1 conv -> BN -> ReLU -> grouped 3x3 conv -> BN -> ReLU, VMEM resident.

    x_ref   : (C, P)          f32   input (free reshape of NCHW; cast to bf16 here)
    w1_ref  : (C, C)          bf16  1x1 conv weight, (in, out) layout
    w2_ref  : (9, C, C)       bf16  per-tap block-diagonal grouped-conv weights (in, out)
    g*/b*   : (1, C)          f32   batch-norm affine parameters
    o_ref   : (C, P)          f32   output, already in channel-major layout
    pad_ref : (PAD_ROWS, C)   bf16  zero-halo padded stage-1 activations
    """
    inv_p = jnp.float32(1.0 / P)

    # ---------- stage 1: 1x1 conv (MXU).  Contract on x's axis 0 -> (P, C). ----------
    x_bf = x_ref[...].astype(jnp.bfloat16)
    y1 = lax.dot_general(x_bf, w1_ref[...],
                         dimension_numbers=(((0,), (0,)), ((), ())),
                         preferred_element_type=jnp.float32)          # (P, C)

    # ---------- BN1 (training-mode batch stats, single pass) + ReLU ----------
    s1 = jnp.sum(y1, axis=0, keepdims=True)
    q1 = jnp.sum(y1 * y1, axis=0, keepdims=True)
    mean1 = s1 * inv_p
    var1 = q1 * inv_p - mean1 * mean1
    scale1 = g1_ref[...] * lax.rsqrt(var1 + EPS)
    shift1 = b1_ref[...] - mean1 * scale1
    a1 = jnp.maximum(y1 * scale1 + shift1, 0.0)

    # ---------- zero ONLY the halo rows, then store a1 as bf16 ----------
    pad_ref[0:16, :] = jnp.zeros((16, C), jnp.bfloat16)
    pad_ref[208:240, :] = jnp.zeros((32, C), jnp.bfloat16)
    pad_ref[pl.ds(PAD_OFF, P), :] = a1.astype(jnp.bfloat16)

    # Column (w coordinate) of every flat pixel, for the W-boundary masks.
    col = lax.broadcasted_iota(jnp.int32, (P, 1), 0) % W
    not_left = col != 0            # rows whose dw == -1 neighbour is in-image
    not_right = col != (W - 1)     # rows whose dw == +1 neighbour is in-image

    # ---------- stage 2: grouped 3x3 conv = 9 block-diagonal matmuls ----------
    # Accumulate as a value chain (one store at the end); mask each dw-group's
    # partial sum once (2 selects total) instead of masking 6 taps.
    acc = None
    for dw, mask in ((-1, not_left), (0, None), (1, not_right)):
        part = None
        for dh in (-1, 0, 1):
            k = (dh + 1) * 3 + (dw + 1)
            tap = pad_ref[pl.ds(PAD_OFF + dh * W + dw, P), :]          # (P, C) bf16
            d = jnp.dot(tap, w2_ref[k], preferred_element_type=jnp.float32)
            part = d if part is None else part + d
        if mask is not None:
            part = jnp.where(mask, part, 0.0)
        acc = part if acc is None else acc + part                      # (P, C) f32

    # ---------- BN2 (single-pass stats) + ReLU ----------
    s2 = jnp.sum(acc, axis=0, keepdims=True)
    q2 = jnp.sum(acc * acc, axis=0, keepdims=True)
    mean2 = s2 * inv_p
    var2 = q2 * inv_p - mean2 * mean2
    scale2 = g2_ref[...] * lax.rsqrt(var2 + EPS)
    shift2 = b2_ref[...] - mean2 * scale2
    y2 = jnp.maximum(acc * scale2 + shift2, 0.0)                       # (P, C)

    # ---------- write output already transposed to (C, P) ----------
    o_ref[...] = jnp.transpose(y2)


def make_params(key):
    """Raw parameters in PyTorch layouts."""
    k1, k2, k3, k4, k5, k6 = jax.random.split(key, 6)
    w1 = jax.random.normal(k1, (C, C, 1, 1), jnp.float32) * 0.05       # Conv2d 1x1
    g1 = 1.0 + 0.1 * jax.random.normal(k2, (C,), jnp.float32)          # BN1 gamma
    b1 = 0.1 * jax.random.normal(k3, (C,), jnp.float32)                # BN1 beta
    w2 = jax.random.normal(k4, (C, CG, 3, 3), jnp.float32) * 0.05      # Conv2d 3x3 grouped
    g2 = 1.0 + 0.1 * jax.random.normal(k5, (C,), jnp.float32)          # BN2 gamma
    b2 = 0.1 * jax.random.normal(k6, (C,), jnp.float32)                # BN2 beta
    return w1, g1, b1, w2, g2, b2


def _block_diag_taps(w2):
    """Grouped-conv weights (Cout, Cin/g, 3, 3) -> 9 block-diagonal (Cin, Cout)
    matrices so the grouped conv becomes plain MXU matmuls (no per-block scatter)."""
    w2_g = w2.reshape(G, CG, CG, 3, 3)                   # (g, co_g, ci_g, kh, kw)
    taps = jnp.transpose(w2_g, (3, 4, 0, 2, 1))          # (kh, kw, g, ci_g, co_g)
    taps = taps.reshape(9, G, CG, CG)                    # k = kh*3 + kw
    eye = jnp.eye(G, dtype=w2.dtype)
    full = jnp.einsum('kgij,gh->kgihj', taps, eye)       # (k, g, ci_g, g', co_g)
    return full.reshape(9, C, C)                         # (k, cin, cout)


def prepare_params(w1, g1, b1, w2, g2, b2):
    """One-time parameter transform — kept OUT of the jitted forward pass."""
    w1t = jnp.asarray(w1.reshape(C, C).T, dtype=jnp.bfloat16)          # (cin, cout)
    wtaps = _block_diag_taps(w2).astype(jnp.bfloat16)                  # (9, cin, cout)
    return (w1t,
            g1.reshape(1, C).astype(jnp.float32),
            b1.reshape(1, C).astype(jnp.float32),
            wtaps,
            g2.reshape(1, C).astype(jnp.float32),
            b2.reshape(1, C).astype(jnp.float32))


_COST = pl.CostEstimate(
    flops=2 * P * C * C * (1 + 9),                       # 1x1 conv + 9 block-diag taps
    transcendentals=2 * C,                               # two per-channel rsqrt
    bytes_accessed=P * C * 4 + (1 + 9) * C * C * 2 + 4 * C * 4 + P * C * 4,
)


@jax.jit
def forward(x_nchw, w1t, g1, b1, wtaps, g2, b2):
    # NCHW (1, C, H, W) -> (C, P): metadata-only reshape, no transpose / copy.
    x_cp = x_nchw.reshape(C, P)

    y_cp = pl.pallas_call(
        fused_kernel,
        out_shape=jax.ShapeDtypeStruct((C, P), jnp.float32),
        in_specs=[_VMEM] * 7,
        out_specs=_VMEM,
        scratch_shapes=[pltpu.VMEM((PAD_ROWS, C), jnp.bfloat16)],
        cost_estimate=_COST,
    )(x_cp, w1t, g1, b1, wtaps, g2, b2)

    # (C, P) -> NCHW (1, C, H, W): metadata-only reshape.
    return y_cp.reshape(1, C, H, W)


def reference(x, w1, g1, b1, w2, g2, b2):
    """Pure-JAX f32 reference of the PyTorch module (training-mode BN)."""
    hi = lax.Precision.HIGHEST

    def bn_relu(y, g, b):
        m = y.mean(axis=(0, 2, 3))
        v = y.var(axis=(0, 2, 3))                         # biased variance
        yn = (y - m[None, :, None, None]) * lax.rsqrt(v + EPS)[None, :, None, None]
        return jnp.maximum(yn * g[None, :, None, None] + b[None, :, None, None], 0.0)

    y1 = lax.conv_general_dilated(x, w1, (1, 1), 'VALID',
                                  dimension_numbers=('NCHW', 'OIHW', 'NCHW'),
                                  precision=hi)
    a1 = bn_relu(y1, g1, b1)
    y2 = lax.conv_general_dilated(a1, w2, (1, 1), ((1, 1), (1, 1)),
                                  dimension_numbers=('NCHW', 'OIHW', 'NCHW'),
                                  feature_group_count=G, precision=hi)
    return bn_relu(y2, g2, b2)


if __name__ == "__main__":
    key = jax.random.PRNGKey(0)
    kx, kp = jax.random.split(key)
    x69 = jax.random.normal(kx, (1, C, H, W), jnp.float32)

    raw_params = make_params(kp)
    params = prepare_params(*raw_params)     # one-time, outside the jitted path

    out = forward(x69, *params)
    jax.block_until_ready(out)
    assert out.shape == (1, C, H, W), out.shape
    assert out.dtype == jnp.float32

    ref = reference(x69, *raw_params)
    err = float(jnp.max(jnp.abs(out - ref)))
    assert err < 0.2, f"max abs error vs f32 reference too large: {err}"

    print("KERNEL_OK")
</pallas_src>

<mosaic_0001>
module attributes {stable_mosaic.version = 11 : i64} {
  func.func @fused_kernel(%arg0: memref<160x196xf32, #tpu.memory_space<vmem>>, %arg1: memref<160x160xbf16, #tpu.memory_space<vmem>>, %arg2: memref<1x160xf32, #tpu.memory_space<vmem>>, %arg3: memref<1x160xf32, #tpu.memory_space<vmem>>, %arg4: memref<9x160x160xbf16, #tpu.memory_space<vmem>>, %arg5: memref<1x160xf32, #tpu.memory_space<vmem>>, %arg6: memref<1x160xf32, #tpu.memory_space<vmem>>, %arg7: memref<160x196xf32, #tpu.memory_space<vmem>>, %arg8: memref<240x160xbf16, #tpu.memory_space<vmem>>) attributes {dimension_semantics = [], scalar_prefetch = 0 : i64, scratch_operands = 1 : i64, tpu.core_type = #tpu.core_type<tc>} {
    %c0 = arith.constant 0 : index
    %c0_0 = arith.constant 0 : index
    %0 = vector.load %arg0[%c0, %c0_0] : memref<160x196xf32, #tpu.memory_space<vmem>>, vector<160x196xf32>
    %1 = arith.truncf %0 : vector<160x196xf32> to vector<160x196xbf16>
    %c0_1 = arith.constant 0 : index
    %c0_2 = arith.constant 0 : index
    %2 = vector.load %arg1[%c0_1, %c0_2] : memref<160x160xbf16, #tpu.memory_space<vmem>>, vector<160x160xbf16>
    %cst = arith.constant dense<0.000000e+00> : vector<196x160xf32>
    %3 = tpu.matmul %1, %2, %cst {dimension_numbers = #tpu.dot_dimension_numbers<[0], [0], [1], [1], [0, 1, 1, 1], [], []>} : vector<160x196xbf16>, vector<160x160xbf16>, vector<196x160xf32> -> vector<196x160xf32>
    %cst_3 = arith.constant dense<0.000000e+00> : vector<160xf32>
    %4 = vector.multi_reduction <add>, %3, %cst_3 [0] : vector<196x160xf32> to vector<160xf32>
    %5 = vector.shape_cast %4 : vector<160xf32> to vector<1x160xf32>
    %6 = arith.mulf %3, %3 : vector<196x160xf32>
    %cst_4 = arith.constant dense<0.000000e+00> : vector<160xf32>
    %7 = vector.multi_reduction <add>, %6, %cst_4 [0] : vector<196x160xf32> to vector<160xf32>
    %8 = vector.shape_cast %7 : vector<160xf32> to vector<1x160xf32>
    %cst_5 = arith.constant 0.00510204071 : f32
    %9 = vector.broadcast %cst_5 : f32 to vector<1x160xf32>
    %10 = arith.mulf %5, %9 : vector<1x160xf32>
    %cst_6 = arith.constant 0.00510204071 : f32
    %11 = vector.broadcast %cst_6 : f32 to vector<1x160xf32>
    %12 = arith.mulf %8, %11 : vector<1x160xf32>
    %13 = arith.mulf %10, %10 : vector<1x160xf32>
    %14 = arith.subf %12, %13 : vector<1x160xf32>
    %c0_7 = arith.constant 0 : index
    %c0_8 = arith.constant 0 : index
    %15 = vector.load %arg2[%c0_7, %c0_8] : memref<1x160xf32, #tpu.memory_space<vmem>>, vector<1x160xf32>
    %cst_9 = arith.constant 9.99999974E-6 : f32
    %16 = vector.broadcast %cst_9 : f32 to vector<1x160xf32>
    %17 = arith.addf %14, %16 : vector<1x160xf32>
    %18 = math.rsqrt %17 : vector<1x160xf32>
    %19 = arith.mulf %15, %18 : vector<1x160xf32>
    %c0_10 = arith.constant 0 : index
    %c0_11 = arith.constant 0 : index
    %20 = vector.load %arg3[%c0_10, %c0_11] : memref<1x160xf32, #tpu.memory_space<vmem>>, vector<1x160xf32>
    %21 = arith.mulf %10, %19 : vector<1x160xf32>
    %22 = arith.subf %20, %21 : vector<1x160xf32>
    %23 = vector.broadcast %19 : vector<1x160xf32> to vector<196x160xf32>
    %24 = arith.mulf %3, %23 : vector<196x160xf32>
    %25 = vector.broadcast %22 : vector<1x160xf32> to vector<196x160xf32>
    %26 = arith.addf %24, %25 : vector<196x160xf32>
    %cst_12 = arith.constant 0.000000e+00 : f32
    %27 = vector.broadcast %cst_12 : f32 to vector<196x160xf32>
    %28 = arith.maximumf %26, %27 : vector<196x160xf32>
    %cst_13 = arith.constant 0.000000e+00 : bf16
    %29 = vector.broadcast %cst_13 : bf16 to vector<16x160xbf16>
    %c0_14 = arith.constant 0 : index
    %c0_15 = arith.constant 0 : index
    %30 = vector.load %arg8[%c0_14, %c0_15] : memref<240x160xbf16, #tpu.memory_space<vmem>>, vector<16x160xbf16>
    tpu.vector_store %arg8[%c0_14, %c0_15], %29 {strides = array<i32>} : memref<240x160xbf16, #tpu.memory_space<vmem>>, vector<16x160xbf16>,
    %cst_16 = arith.constant 0.000000e+00 : bf16
    %31 = vector.broadcast %cst_16 : bf16 to vector<32x160xbf16>
    %c208 = arith.constant 208 : index
    %c0_17 = arith.constant 0 : index
    %32 = vector.load %arg8[%c208, %c0_17] : memref<240x160xbf16, #tpu.memory_space<vmem>>, vector<32x160xbf16>
    tpu.vector_store %arg8[%c208, %c0_17], %31 {strides = array<i32>} : memref<240x160xbf16, #tpu.memory_space<vmem>>, vector<32x160xbf16>,
    %33 = arith.truncf %28 : vector<196x160xf32> to vector<196x160xbf16>
    %c16 = arith.constant 16 : index
    %c0_18 = arith.constant 0 : index
    %34 = vector.load %arg8[%c16, %c0_18] : memref<240x160xbf16, #tpu.memory_space<vmem>>, vector<196x160xbf16>
    tpu.vector_store %arg8[%c16, %c0_18], %33 {strides = array<i32>} : memref<240x160xbf16, #tpu.memory_space<vmem>>, vector<196x160xbf16>,
    %35 = tpu.iota {dimensions = array<i32: 0>} : vector<196x1xi32>
    %c14_i32 = arith.constant 14 : i32
    %c0_i32 = arith.constant 0 : i32
    %36 = arith.cmpi eq, %c14_i32, %c0_i32 : i32
    %c1_i32 = arith.constant 1 : i32
    %37 = arith.select %36, %c1_i32, %c14_i32 : i32
    %38 = vector.broadcast %37 : i32 to vector<196x1xi32>
    %39 = arith.remsi %35, %38 : vector<196x1xi32>
    %c0_i32_19 = arith.constant 0 : i32
    %40 = vector.broadcast %c0_i32_19 : i32 to vector<196x1xi32>
    %41 = arith.cmpi ne, %39, %40 : vector<196x1xi32>
    %c0_i32_20 = arith.constant 0 : i32
    %42 = vector.broadcast %c0_i32_20 : i32 to vector<196x1xi32>
    %43 = arith.cmpi slt, %39, %42 : vector<196x1xi32>
    %c0_i32_21 = arith.constant 0 : i32
    %44 = arith.cmpi slt, %37, %c0_i32_21 : i32
    %45 = vector.broadcast %44 : i1 to vector<196x1xi1>
    %46 = vector.broadcast %45 : vector<196x1xi1> to vector<196x1xi1>
    %47 = arith.xori %43, %46 : vector<196x1xi1>
    %48 = arith.andi %47, %41 : vector<196x1xi1>
    %49 = vector.broadcast %37 : i32 to vector<196x1xi32>
    %50 = arith.addi %39, %49 : vector<196x1xi32>
    %51 = arith.select %48, %50, %39 : vector<196x1xi1>, vector<196x1xi32>
    %c0_i32_22 = arith.constant 0 : i32
    %52 = vector.broadcast %c0_i32_22 : i32 to vector<196x1xi32>
    %53 = arith.cmpi ne, %51, %52 : vector<196x1xi32>
    %c13_i32 = arith.constant 13 : i32
    %54 = vector.broadcast %c13_i32 : i32 to vector<196x1xi32>
    %55 = arith.cmpi ne, %51, %54 : vector<196x1xi32>
    %c1 = arith.constant 1 : index
    %c0_23 = arith.constant 0 : index
    %56 = vector.load %arg8[%c1, %c0_23] : memref<240x160xbf16, #tpu.memory_space<vmem>>, vector<196x160xbf16>
    %c0_24 = arith.constant 0 : index
    %c0_25 = arith.constant 0 : index
    %c0_26 = arith.constant 0 : index
    %57 = vector.load %arg4[%c0_24, %c0_25, %c0_26] : memref<9x160x160xbf16, #tpu.memory_space<vmem>>, vector<1x160x160xbf16>
    %58 = vector.shape_cast %57 : vector<1x160x160xbf16> to vector<160x160xbf16>
    %cst_27 = arith.constant dense<0.000000e+00> : vector<196x160xf32>
    %59 = tpu.matmul %56, %58, %cst_27 {dimension_numbers = #tpu.dot_dimension_numbers<[1], [0], [0], [1], [0, 0, 1, 1], [], []>} : vector<196x160xbf16>, vector<160x160xbf16>, vector<196x160xf32> -> vector<196x160xf32>
    %c15 = arith.constant 15 : index
    %c0_28 = arith.constant 0 : index
    %60 = vector.load %arg8[%c15, %c0_28] : memref<240x160xbf16, #tpu.memory_space<vmem>>, vector<196x160xbf16>
    %c3 = arith.constant 3 : index
    %c0_29 = arith.constant 0 : index
    %c0_30 = arith.constant 0 : index
    %61 = vector.load %arg4[%c3, %c0_29, %c0_30] : memref<9x160x160xbf16, #tpu.memory_space<vmem>>, vector<1x160x160xbf16>
    %62 = vector.shape_cast %61 : vector<1x160x160xbf16> to vector<160x160xbf16>
    %cst_31 = arith.constant dense<0.000000e+00> : vector<196x160xf32>
    %63 = tpu.matmul %60, %62, %cst_31 {dimension_numbers = #tpu.dot_dimension_numbers<[1], [0], [0], [1], [0, 0, 1, 1], [], []>} : vector<196x160xbf16>, vector<160x160xbf16>, vector<196x160xf32> -> vector<196x160xf32>
    %64 = arith.addf %59, %63 : vector<196x160xf32>
    %c29 = arith.constant 29 : index
    %c0_32 = arith.constant 0 : index
    %65 = vector.load %arg8[%c29, %c0_32] : memref<240x160xbf16, #tpu.memory_space<vmem>>, vector<196x160xbf16>
    %c6 = arith.constant 6 : index
    %c0_33 = arith.constant 0 : index
    %c0_34 = arith.constant 0 : index
    %66 = vector.load %arg4[%c6, %c0_33, %c0_34] : memref<9x160x160xbf16, #tpu.memory_space<vmem>>, vector<1x160x160xbf16>
    %67 = vector.shape_cast %66 : vector<1x160x160xbf16> to vector<160x160xbf16>
    %cst_35 = arith.constant dense<0.000000e+00> : vector<196x160xf32>
    %68 = tpu.matmul %65, %67, %cst_35 {dimension_numbers = #tpu.dot_dimension_numbers<[1], [0], [0], [1], [0, 0, 1, 1], [], []>} : vector<196x160xbf16>, vector<160x160xbf16>, vector<196x160xf32> -> vector<196x160xf32>
    %69 = arith.addf %64, %68 : vector<196x160xf32>
    %cst_36 = arith.constant 0.000000e+00 : f32
    %70 = vector.shape_cast %53 : vector<196x1xi1> to vector<196x1xi1>
    %71 = vector.broadcast %70 : vector<196x1xi1> to vector<196x160xi1>
    %72 = vector.broadcast %cst_36 : f32 to vector<196x160xf32>
    %73 = arith.select %71, %69, %72 : vector<196x160xi1>, vector<196x160xf32>
    %c2 = arith.constant 2 : index
    %c0_37 = arith.constant 0 : index
    %74 = vector.load %arg8[%c2, %c0_37] : memref<240x160xbf16, #tpu.memory_space<vmem>>, vector<196x160xbf16>
    %c1_38 = arith.constant 1 : index
    %c0_39 = arith.constant 0 : index
    %c0_40 = arith.constant 0 : index
    %75 = vector.load %arg4[%c1_38, %c0_39, %c0_40] : memref<9x160x160xbf16, #tpu.memory_space<vmem>>, vector<1x160x160xbf16>
    %76 = vector.shape_cast %75 : vector<1x160x160xbf16> to vector<160x160xbf16>
    %cst_41 = arith.constant dense<0.000000e+00> : vector<196x160xf32>
    %77 = tpu.matmul %74, %76, %cst_41 {dimension_numbers = #tpu.dot_dimension_numbers<[1], [0], [0], [1], [0, 0, 1, 1], [], []>} : vector<196x160xbf16>, vector<160x160xbf16>, vector<196x160xf32> -> vector<196x160xf32>
    %c16_42 = arith.constant 16 : index
    %c0_43 = arith.constant 0 : index
    %78 = vector.load %arg8[%c16_42, %c0_43] : memref<240x160xbf16, #tpu.memory_space<vmem>>, vector<196x160xbf16>
    %c4 = arith.constant 4 : index
    %c0_44 = arith.constant 0 : index
    %c0_45 = arith.constant 0 : index
    %79 = vector.load %arg4[%c4, %c0_44, %c0_45] : memref<9x160x160xbf16, #tpu.memory_space<vmem>>, vector<1x160x160xbf16>
    %80 = vector.shape_cast %79 : vector<1x160x160xbf16> to vector<160x160xbf16>
    %cst_46 = arith.constant dense<0.000000e+00> : vector<196x160xf32>
    %81 = tpu.matmul %78, %80, %cst_46 {dimension_numbers = #tpu.dot_dimension_numbers<[1], [0], [0], [1], [0, 0, 1, 1], [], []>} : vector<196x160xbf16>, vector<160x160xbf16>, vector<196x160xf32> -> vector<196x160xf32>
    %82 = arith.addf %77, %81 : vector<196x160xf32>
    %c30 = arith.constant 30 : index
    %c0_47 = arith.constant 0 : index
    %83 = vector.load %arg8[%c30, %c0_47] : memref<240x160xbf16, #tpu.memory_space<vmem>>, vector<196x160xbf16>
    %c7 = arith.constant 7 : index
    %c0_48 = arith.constant 0 : index
    %c0_49 = arith.constant 0 : index
    %84 = vector.load %arg4[%c7, %c0_48, %c0_49] : memref<9x160x160xbf16, #tpu.memory_space<vmem>>, vector<1x160x160xbf16>
    %85 = vector.shape_cast %84 : vector<1x160x160xbf16> to vector<160x160xbf16>
    %cst_50 = arith.constant dense<0.000000e+00> : vector<196x160xf32>
    %86 = tpu.matmul %83, %85, %cst_50 {dimension_numbers = #tpu.dot_dimension_numbers<[1], [0], [0], [1], [0, 0, 1, 1], [], []>} : vector<196x160xbf16>, vector<160x160xbf16>, vector<196x160xf32> -> vector<196x160xf32>
    %87 = arith.addf %82, %86 : vector<196x160xf32>
    %88 = arith.addf %73, %87 : vector<196x160xf32>
    %c3_51 = arith.constant 3 : index
    %c0_52 = arith.constant 0 : index
    %89 = vector.load %arg8[%c3_51, %c0_52] : memref<240x160xbf16, #tpu.memory_space<vmem>>, vector<196x160xbf16>
    %c2_53 = arith.constant 2 : index
    %c0_54 = arith.constant 0 : index
    %c0_55 = arith.constant 0 : index
    %90 = vector.load %arg4[%c2_53, %c0_54, %c0_55] : memref<9x160x160xbf16, #tpu.memory_space<vmem>>, vector<1x160x160xbf16>
    %91 = vector.shape_cast %90 : vector<1x160x160xbf16> to vector<160x160xbf16>
    %cst_56 = arith.constant dense<0.000000e+00> : vector<196x160xf32>
    %92 = tpu.matmul %89, %91, %cst_56 {dimension_numbers = #tpu.dot_dimension_numbers<[1], [0], [0], [1], [0, 0, 1, 1], [], []>} : vector<196x160xbf16>, vector<160x160xbf16>, vector<196x160xf32> -> vector<196x160xf32>
    %c17 = arith.constant 17 : index
    %c0_57 = arith.constant 0 : index
    %93 = vector.load %arg8[%c17, %c0_57] : memref<240x160xbf16, #tpu.memory_space<vmem>>, vector<196x160xbf16>
    %c5 = arith.constant 5 : index
    %c0_58 = arith.constant 0 : index
    %c0_59 = arith.constant 0 : index
    %94 = vector.load %arg4[%c5, %c0_58, %c0_59] : memref<9x160x160xbf16, #tpu.memory_space<vmem>>, vector<1x160x160xbf16>
    %95 = vector.shape_cast %94 : vector<1x160x160xbf16> to vector<160x160xbf16>
    %cst_60 = arith.constant dense<0.000000e+00> : vector<196x160xf32>
    %96 = tpu.matmul %93, %95, %cst_60 {dimension_numbers = #tpu.dot_dimension_numbers<[1], [0], [0], [1], [0, 0, 1, 1], [], []>} : vector<196x160xbf16>, vector<160x160xbf16>, vector<196x160xf32> -> vector<196x160xf32>
    %97 = arith.addf %92, %96 : vector<196x160xf32>
    %c31 = arith.constant 31 : index
    %c0_61 = arith.constant 0 : index
    %98 = vector.load %arg8[%c31, %c0_61] : memref<240x160xbf16, #tpu.memory_space<vmem>>, vector<196x160xbf16>
    %c8 = arith.constant 8 : index
    %c0_62 = arith.constant 0 : index
    %c0_63 = arith.constant 0 : index
    %99 = vector.load %arg4[%c8, %c0_62, %c0_63] : memref<9x160x160xbf16, #tpu.memory_space<vmem>>, vector<1x160x160xbf16>
    %100 = vector.shape_cast %99 : vector<1x160x160xbf16> to vector<160x160xbf16>
    %cst_64 = arith.constant dense<0.000000e+00> : vector<196x160xf32>
    %101 = tpu.matmul %98, %100, %cst_64 {dimension_numbers = #tpu.dot_dimension_numbers<[1], [0], [0], [1], [0, 0, 1, 1], [], []>} : vector<196x160xbf16>, vector<160x160xbf16>, vector<196x160xf32> -> vector<196x160xf32>
    %102 = arith.addf %97, %101 : vector<196x160xf32>
    %cst_65 = arith.constant 0.000000e+00 : f32
    %103 = vector.shape_cast %55 : vector<196x1xi1> to vector<196x1xi1>
    %104 = vector.broadcast %103 : vector<196x1xi1> to vector<196x160xi1>
    %105 = vector.broadcast %cst_65 : f32 to vector<196x160xf32>
    %106 = arith.select %104, %102, %105 : vector<196x160xi1>, vector<196x160xf32>
    %107 = arith.addf %88, %106 : vector<196x160xf32>
    %cst_66 = arith.constant dense<0.000000e+00> : vector<160xf32>
    %108 = vector.multi_reduction <add>, %107, %cst_66 [0] : vector<196x160xf32> to vector<160xf32>
    %109 = vector.shape_cast %108 : vector<160xf32> to vector<1x160xf32>
    %110 = arith.mulf %107, %107 : vector<196x160xf32>
    %cst_67 = arith.constant dense<0.000000e+00> : vector<160xf32>
    %111 = vector.multi_reduction <add>, %110, %cst_67 [0] : vector<196x160xf32> to vector<160xf32>
    %112 = vector.shape_cast %111 : vector<160xf32> to vector<1x160xf32>
    %cst_68 = arith.constant 0.00510204071 : f32
    %113 = vector.broadcast %cst_68 : f32 to vector<1x160xf32>
    %114 = arith.mulf %109, %113 : vector<1x160xf32>
    %cst_69 = arith.constant 0.00510204071 : f32
    %115 = vector.broadcast %cst_69 : f32 to vector<1x160xf32>
    %116 = arith.mulf %112, %115 : vector<1x160xf32>
    %117 = arith.mulf %114, %114 : vector<1x160xf32>
    %118 = arith.subf %116, %117 : vector<1x160xf32>
    %c0_70 = arith.constant 0 : index
    %c0_71 = arith.constant 0 : index
    %119 = vector.load %arg5[%c0_70, %c0_71] : memref<1x160xf32, #tpu.memory_space<vmem>>, vector<1x160xf32>
    %cst_72 = arith.constant 9.99999974E-6 : f32
    %120 = vector.broadcast %cst_72 : f32 to vector<1x160xf32>
    %121 = arith.addf %118, %120 : vector<1x160xf32>
    %122 = math.rsqrt %121 : vector<1x160xf32>
    %123 = arith.mulf %119, %122 : vector<1x160xf32>
    %c0_73 = arith.constant 0 : index
    %c0_74 = arith.constant 0 : index
    %124 = vector.load %arg6[%c0_73, %c0_74] : memref<1x160xf32, #tpu.memory_space<vmem>>, vector<1x160xf32>
    %125 = arith.mulf %114, %123 : vector<1x160xf32>
    %126 = arith.subf %124, %125 : vector<1x160xf32>
    %127 = vector.broadcast %123 : vector<1x160xf32> to vector<196x160xf32>
    %128 = arith.mulf %107, %127 : vector<196x160xf32>
    %129 = vector.broadcast %126 : vector<1x160xf32> to vector<196x160xf32>
    %130 = arith.addf %128, %129 : vector<196x160xf32>
    %cst_75 = arith.constant 0.000000e+00 : f32
    %131 = vector.broadcast %cst_75 : f32 to vector<196x160xf32>
    %132 = arith.maximumf %130, %131 : vector<196x160xf32>
    %133 = tpu.transpose %132, [1, 0] : vector<196x160xf32> -> vector<160x196xf32>
    %c0_76 = arith.constant 0 : index
    %c0_77 = arith.constant 0 : index
    %134 = vector.load %arg7[%c0_76, %c0_77] : memref<160x196xf32, #tpu.memory_space<vmem>>, vector<160x196xf32>
    tpu.vector_store %arg7[%c0_76, %c0_77], %133 {strides = array<i32>} : memref<160x196xf32, #tpu.memory_space<vmem>>, vector<160x196xf32>,
    return
  }
}

</mosaic_0001>

<llo_original>
// kernel: forward.1
$region0: #{forward.1}
  #allocation0 [shape = 'u32[]', space=smem, size = 0x4, offset = 0x4, fixed_abs, tag = 'smem constant byte address 0x4 - core index']
  #allocation1 [shape = 'u32[72,128]{1,0:T(1,128)}', space=vmem, size = 0x9000, scoped, tag = 'internal scratch']
  #allocation2 [shape = 'bf16[240,160]{1,0:T(8,128)(2,1)}', space=vmem, size = 0x1e000, scoped, tag = 'scratch operand']
  %s0 = inlined_call_operand.vmem [shape: f32[160,196], index: 0, kind: input, shape index: {}]
  %s1 = inlined_call_operand.vmem [shape: bf16[160,160], index: 1, kind: input, shape index: {}]
  %s2 = inlined_call_operand.vmem [shape: f32[1,160], index: 2, kind: input, shape index: {}]
  %s3 = inlined_call_operand.vmem [shape: f32[1,160], index: 3, kind: input, shape index: {}]
  %s4 = inlined_call_operand.vmem [shape: bf16[9,160,160], index: 4, kind: input, shape index: {}]
  %s5 = inlined_call_operand.vmem [shape: f32[1,160], index: 5, kind: input, shape index: {}]
  %s6 = inlined_call_operand.vmem [shape: f32[1,160], index: 6, kind: input, shape index: {}]
  %s7 = inlined_call_operand.vmem [shape: f32[160,196], index: 7, kind: output, shape index: {}]
  %s8 = sld [smem:[#allocation0]]
  $region38: #{forward.1} parent=0
    _
  %s10 = ssub.s32 1, %s8
  %s11 = scalar_select 0, %s10, %s8
  // Predicated region
  $region2: #{forward.1} parent=0 // pred_check
    _
  $region3: #{forward.1} parent=0 // pred_check_branch
    %13 = sbr.rel (0) target = $region5
  $region4: #{forward.1} parent=0 // pred_region
    _
  $region5: #{forward.1} parent=0 // pred_fallthru
    _
  // Predicated region
  $region6: #{forward.1} parent=0 // pred_check
    _
  $region7: #{forward.1} parent=0 // pred_check_branch
    %15 = sbr.rel (0) target = $region9
  $region8: #{forward.1} parent=0 // pred_region
    _
  $region9: #{forward.1} parent=0 // pred_fallthru
    _
  // Predicated region
  $region10: #{forward.1} parent=0 // pred_check
    _
  $region11: #{forward.1} parent=0 // pred_check_branch
    %17 = sbr.rel (0) target = $region13
  $region12: #{forward.1} parent=0 // pred_region
    _
  $region13: #{forward.1} parent=0 // pred_fallthru
    _
  // Predicated region
  $region14: #{forward.1} parent=0 // pred_check
    _
  $region15: #{forward.1} parent=0 // pred_check_branch
    %19 = sbr.rel (0) target = $region17
  $region16: #{forward.1} parent=0 // pred_region
    _
  $region17: #{forward.1} parent=0 // pred_fallthru
    _
  // Predicated region
  $region18: #{forward.1} parent=0 // pred_check
    _
  $region19: #{forward.1} parent=0 // pred_check_branch
    %21 = sbr.rel (0) target = $region21
  $region20: #{forward.1} parent=0 // pred_region
    _
  $region21: #{forward.1} parent=0 // pred_fallthru
    _
  // Predicated region
  $region22: #{forward.1} parent=0 // pred_check
    _
  $region23: #{forward.1} parent=0 // pred_check_branch
    %23 = sbr.rel (0) target = $region25
  $region24: #{forward.1} parent=0 // pred_region
    _
  $region25: #{forward.1} parent=0 // pred_fallthru
    _
  // Predicated region
  $region26: #{forward.1} parent=0 // pred_check
    _
  $region27: #{forward.1} parent=0 // pred_check_branch
    %25 = sbr.rel (0) target = $region29
  $region28: #{forward.1} parent=0 // pred_region
    _
  $region29: #{forward.1} parent=0 // pred_fallthru
    _
  %v27 = vld [vmem:[%s0] sm:$0xff]
  %v28 = vld [vmem:[%s0 + $0x8] sm:$0xff]
  %v29 = vld [vmem:[%s0 + $0x10] sm:$0xff]
  %v30 = vld [vmem:[%s0 + $0x18] sm:$0xff]
  %v31 = vld [vmem:[%s0 + $0x20] sm:$0xff]
  %v32 = vld [vmem:[%s0 + $0x28] sm:$0xff]
  %v33 = vld [vmem:[%s0 + $0x30] sm:$0xff]
  %v34 = vld [vmem:[%s0 + $0x38] sm:$0xff]
  %v35 = vld [vmem:[%s0 + $0x40] sm:$0xff]
  %v36 = vld [vmem:[%s0 + $0x48] sm:$0xff]
  %v37 = vld [vmem:[%s0 + $0x50] sm:$0xff]
  %v38 = vld [vmem:[%s0 + $0x58] sm:$0xff]
  %v39 = vld [vmem:[%s0 + $0x60] sm:$0xff]
  %v40 = vld [vmem:[%s0 + $0x68] sm:$0xff]
  %v41 = vld [vmem:[%s0 + $0x70] sm:$0xff]
  %v42 = vld [vmem:[%s0 + $0x78] sm:$0xff]
  %v43 = vld [vmem:[%s0 + $0x80] sm:$0xff]
  %v44 = vld [vmem:[%s0 + $0x88] sm:$0xff]
  %v45 = vld [vmem:[%s0 + $0x90] sm:$0xff]
  %v46 = vld [vmem:[%s0 + $0x98] sm:$0xff]
  %v47 = vld [vmem:[%s0 + $0xa0] sm:$0xff]
  %v48 = vld [vmem:[%s0 + $0xa8] sm:$0xff]
  %v49 = vld [vmem:[%s0 + $0xb0] sm:$0xff]
  %v50 = vld [vmem:[%s0 + $0xb8] sm:$0xff]
  %v51 = vld [vmem:[%s0 + $0xc0] sm:$0xff]
  %v52 = vld [vmem:[%s0 + $0xc8] sm:$0xff]
  %v53 = vld [vmem:[%s0 + $0xd0] sm:$0xff]
  %v54 = vld [vmem:[%s0 + $0xd8] sm:$0xff]
  %v55 = vld [vmem:[%s0 + $0xe0] sm:$0xff]
  %v56 = vld [vmem:[%s0 + $0xe8] sm:$0xff]
  %v57 = vld [vmem:[%s0 + $0xf0] sm:$0xff]
  %v58 = vld [vmem:[%s0 + $0xf8] sm:$0xff]
  %v59 = vld [vmem:[%s0 + $0x100] sm:$0xff]
  %v60 = vld [vmem:[%s0 + $0x108] sm:$0xff]
  %v61 = vld [vmem:[%s0 + $0x110] sm:$0xff]
  %v62 = vld [vmem:[%s0 + $0x118] sm:$0xff]
  %v63 = vld [vmem:[%s0 + $0x120] sm:$0xff]
  %v64 = vld [vmem:[%s0 + $0x128] sm:$0xff]
  %v65 = vld [vmem:[%s0 + $0x130] sm:$0xff]
  %v66 = vld [vmem:[%s0 + $0x138] sm:$0xff]
  %v67 = vpack.c.bf16 %v29, %v27
  %v68 = vpack.c.bf16 %v30, %v28
  %v69 = vpack.c.bf16 %v33, %v31
  %v70 = vpack.c.bf16 %v34, %v32
  %v71 = vpack.c.bf16 %v37, %v35
  %v72 = vpack.c.bf16 %v38, %v36
  %v73 = vpack.c.bf16 %v41, %v39
  %v74 = vpack.c.bf16 %v42, %v40
  %v75 = vpack.c.bf16 %v45, %v43
  %v76 = vpack.c.bf16 %v46, %v44
  %v77 = vpack.c.bf16 %v49, %v47
  %v78 = vpack.c.bf16 %v50, %v48
  %v79 = vpack.c.bf16 %v53, %v51
  %v80 = vpack.c.bf16 %v54, %v52
  %v81 = vpack.c.bf16 %v57, %v55
  %v82 = vpack.c.bf16 %v58, %v56
  %v83 = vpack.c.bf16 %v61, %v59
  %v84 = vpack.c.bf16 %v62, %v60
  %v85 = vpack.c.bf16 %v65, %v63
  %v86 = vpack.c.bf16 %v66, %v64
  %v87 = vld [vmem:[%s1] sm:$0xff]
  %v88 = vld [vmem:[%s1 + $0x8] sm:$0xff]
  %v89 = vld [vmem:[%s1 + $0x10] sm:$0xff]
  %v90 = vld [vmem:[%s1 + $0x18] sm:$0xff]
  %v91 = vld [vmem:[%s1 + $0x20] sm:$0xff]
  %v92 = vld [vmem:[%s1 + $0x28] sm:$0xff]
  %v93 = vld [vmem:[%s1 + $0x30] sm:$0xff]
  %v94 = vld [vmem:[%s1 + $0x38] sm:$0xff]
  %v95 = vld [vmem:[%s1 + $0x40] sm:$0xff]
  %v96 = vld [vmem:[%s1 + $0x48] sm:$0xff]
  %v97 = vld [vmem:[%s1 + $0x50] sm:$0xff]
  %v98 = vld [vmem:[%s1 + $0x58] sm:$0xff]
  %v99 = vld [vmem:[%s1 + $0x60] sm:$0xff]
  %v100 = vld [vmem:[%s1 + $0x68] sm:$0xff]
  %v101 = vld [vmem:[%s1 + $0x70] sm:$0xff]
  %v102 = vld [vmem:[%s1 + $0x78] sm:$0xff]
  %v103 = vld [vmem:[%s1 + $0x80] sm:$0xff]
  %v104 = vld [vmem:[%s1 + $0x88] sm:$0xff]
  %v105 = vld [vmem:[%s1 + $0x90] sm:$0xff]
  %v106 = vld [vmem:[%s1 + $0x98] sm:$0xff]
  %107 = vxpose.binary.xlu0.c.b16.start [1/16] %v68, %v67, 128
  %108 = vxpose.binary.xlu0.c.b16.cont [2/16] %v70, %v69, 128
  %109 = vxpose.binary.xlu0.c.b16.cont [3/16] %v72, %v71, 128
  %110 = vxpose.binary.xlu0.c.b16.cont [4/16] %v74, %v73, 128
  %111 = vxpose.binary.xlu0.c.b16.cont [5/16] %v76, %v75, 128
  %112 = vxpose.binary.xlu0.c.b16.cont [6/16] %v78, %v77, 128
  %113 = vxpose.binary.xlu0.c.b16.cont [7/16] %v80, %v79, 128
  %114 = vxpose.binary.xlu0.c.b16.end [8/16] %v82, %v81, 128
  %v115 = vpop.trf.xlu0
  %v116 = vpop.trf.xlu0
  %v117 = vpop.trf.xlu0
  %v118 = vpop.trf.xlu0
  %v119 = vpop.trf.xlu0
  %v120 = vpop.trf.xlu0
  %v121 = vpop.trf.xlu0
  %v122 = vpop.trf.xlu0
  %v123 = vpop.trf.xlu0
  %v124 = vpop.trf.xlu0
  %v125 = vpop.trf.xlu0
  %v126 = vpop.trf.xlu0
  %v127 = vpop.trf.xlu0
  %v128 = vpop.trf.xlu0
  %v129 = vpop.trf.xlu0
  %v130 = vpop.trf.xlu0
  %131 = vxpose.binary.xlu0.c.b16.start [1/16] %v84, %v83, 128
  %132 = vxpose.binary.xlu0.c.b16.cont [2/16] %v86, %v85, 128
  %133 = vxpose.binary.xlu0.c.b16.cont [3/16] 0, 0, 128
  %134 = vxpose.binary.xlu0.c.b16.cont [4/16] 0, 0, 128
  %135 = vxpose.binary.xlu0.c.b16.cont [5/16] 0, 0, 128
  %136 = vxpose.binary.xlu0.c.b16.cont [6/16] 0, 0, 128
  %137 = vxpose.binary.xlu0.c.b16.cont [7/16] 0, 0, 128
  %138 = vxpose.binary.xlu0.c.b16.end [8/16] 0, 0, 128
  %v139 = vpop.trf.xlu0
  %v140 = vpop.trf.xlu0
  %v141 = vpop.trf.xlu0
  %v142 = vpop.trf.xlu0
  %v143 = vpop.trf.xlu0
  %v144 = vpop.trf.xlu0
  %v145 = vpop.trf.xlu0
  %v146 = vpop.trf.xlu0
  %v147 = vpop.trf.xlu0
  %v148 = vpop.trf.xlu0
  %v149 = vpop.trf.xlu0
  %v150 = vpop.trf.xlu0
  %v151 = vpop.trf.xlu0
  %v152 = vpop.trf.xlu0
  %v153 = vpop.trf.xlu0
  %v154 = vpop.trf.xlu0
  %v175 = vunpack.c.l.b16 %v87
  %v176 = vunpack.c.h.b16 %v87
  %v177 = vunpack.c.l.b16 %v88
  %v178 = vunpack.c.h.b16 %v88
  %v179 = vunpack.c.l.b16 %v89
  %v180 = vunpack.c.h.b16 %v89
  %v181 = vunpack.c.l.b16 %v90
  %v182 = vunpack.c.h.b16 %v90
  %v183 = vunpack.c.l.b16 %v91
  %v184 = vunpack.c.h.b16 %v91
  %v185 = vunpack.c.l.b16 %v92
  %v186 = vunpack.c.h.b16 %v92
  %v187 = vunpack.c.l.b16 %v93
  %v188 = vunpack.c.h.b16 %v93
  %v189 = vunpack.c.l.b16 %v94
  %v190 = vunpack.c.h.b16 %v94
  %v191 = vunpack.c.l.b16 %v95
  %v192 = vunpack.c.h.b16 %v95
  %v193 = vunpack.c.l.b16 %v96
  %v194 = vunpack.c.h.b16 %v96
  %v195 = vunpack.c.l.b16 %v97
  %v196 = vunpack.c.h.b16 %v97
  %v197 = vunpack.c.l.b16 %v98
  %v198 = vunpack.c.h.b16 %v98
  %v199 = vunpack.c.l.b16 %v99
  %v200 = vunpack.c.h.b16 %v99
  %v201 = vunpack.c.l.b16 %v100
  %v202 = vunpack.c.h.b16 %v100
  %v203 = vunpack.c.l.b16 %v101
  %v204 = vunpack.c.h.b16 %v101
  %v205 = vunpack.c.l.b16 %v102
  %v206 = vunpack.c.h.b16 %v102
  %v207 = vunpack.c.l.b16 %v103
  %v208 = vunpack.c.h.b16 %v103
  %v209 = vunpack.c.l.b16 %v104
  %v210 = vunpack.c.h.b16 %v104
  %v211 = vunpack.c.l.b16 %v105
  %v212 = vunpack.c.h.b16 %v105
  %v213 = vunpack.c.l.b16 %v106
  %v214 = vunpack.c.h.b16 %v106
  %v215 = vpack.c.b16 %v177, %v175
  %v216 = vpack.c.b16 %v178, %v176
  %v217 = vpack.c.b16 %v181, %v179
  %v218 = vpack.c.b16 %v182, %v180
  %v219 = vpack.c.b16 %v185, %v183
  %v220 = vpack.c.b16 %v186, %v184
  %v221 = vpack.c.b16 %v189, %v187
  %v222 = vpack.c.b16 %v190, %v188
  %v223 = vpack.c.b16 %v193, %v191
  %v224 = vpack.c.b16 %v194, %v192
  %v225 = vpack.c.b16 %v197, %v195
  %v226 = vpack.c.b16 %v198, %v196
  %v227 = vpack.c.b16 %v201, %v199
  %v228 = vpack.c.b16 %v202, %v200
  %v229 = vpack.c.b16 %v205, %v203
  %v230 = vpack.c.b16 %v206, %v204
  %v231 = vpack.c.b16 %v209, %v207
  %v232 = vpack.c.b16 %v210, %v208
  %v233 = vpack.c.b16 %v213, %v211
  %v234 = vpack.c.b16 %v214, %v212
  %vm255 = vcmask 261120
  %v257 = vsel %vm255, %v139, 0
  %v260 = vsel %vm255, %v141, 0
  %v263 = vsel %vm255, %v143, 0
  %v266 = vsel %vm255, %v145, 0
  %v269 = vsel %vm255, %v147, 0
  %v272 = vsel %vm255, %v149, 0
  %v275 = vsel %vm255, %v151, 0
  %v278 = vsel %vm255, %v153, 0
  %v281 = vsel %vm255, %v140, 0
  %v284 = vsel %vm255, %v142, 0
  %v287 = vsel %vm255, %v144, 0
  %v290 = vsel %vm255, %v146, 0
  %v293 = vsel %vm255, %v148, 0
  %295 = vmatpush.bf16.msra.mxu0 %v229
  %296 = vmatpush.bf16.msra.mxu0 %v227
  %297 = vmatpush.bf16.msra.mxu0 %v225
  %298 = vmatpush.bf16.msra.mxu0 %v223
  %299 = vmatpush.bf16.msra.mxu0 %v221
  %300 = vmatpush.bf16.msra.mxu0 %v219
  %301 = vmatpush.bf16.msra.mxu0 %v217
  %302 = vmatpush.bf16.msra.mxu0 %v215
  %303 = vmatmul.bf16.gmra.mxu0 %v115
  %v304 = vpop.f32.mrf.mxu0
  %v305 = vadd.f32 0.0, %v304
  %v306 = vpop.f32.mrf.mxu0
  %v307 = vadd.f32 0.0, %v306
  %308 = vmatmul.bf16.gmra.mxu0 %v117
  %v309 = vpop.f32.mrf.mxu0
  %v310 = vadd.f32 0.0, %v309
  %v311 = vpop.f32.mrf.mxu0
  %v312 = vadd.f32 0.0, %v311
  %313 = vmatmul.bf16.gmra.mxu0 %v119
  %v314 = vpop.f32.mrf.mxu0
  %v315 = vadd.f32 0.0, %v314
  %v316 = vpop.f32.mrf.mxu0
  %v317 = vadd.f32 0.0, %v316
  %318 = vmatmul.bf16.gmra.mxu0 %v121
  %v319 = vpop.f32.mrf.mxu0
  %v320 = vadd.f32 0.0, %v319
  %v321 = vpop.f32.mrf.mxu0
  %v322 = vadd.f32 0.0, %v321
  %323 = vmatmul.bf16.gmra.mxu0 %v123
  %v324 = vpop.f32.mrf.mxu0
  %v325 = vadd.f32 0.0, %v324
  %v326 = vpop.f32.mrf.mxu0
  %v327 = vadd.f32 0.0, %v326
  %328 = vmatmul.bf16.gmra.mxu0 %v125
  %v329 = vpop.f32.mrf.mxu0
  %v330 = vadd.f32 0.0, %v329
  %v331 = vpop.f32.mrf.mxu0
  %v332 = vadd.f32 0.0, %v331
  %333 = vmatmul.bf16.gmra.mxu0 %v127
  %v334 = vpop.f32.mrf.mxu0
  %v335 = vadd.f32 0.0, %v334
  %v336 = vpop.f32.mrf.mxu0
  %v337 = vadd.f32 0.0, %v336
  %338 = vmatmul.bf16.gmra.mxu0 %v129
  %v339 = vpop.f32.mrf.mxu0
  %v340 = vadd.f32 0.0, %v339
  %v341 = vpop.f32.mrf.mxu0
  %v342 = vadd.f32 0.0, %v341
  %343 = vmatmul.bf16.gmra.mxu0 %v116
  %v344 = vpop.f32.mrf.mxu0
  %v345 = vadd.f32 0.0, %v344
  %v346 = vpop.f32.mrf.mxu0
  %v347 = vadd.f32 0.0, %v346
  %348 = vmatmul.bf16.gmra.mxu0 %v118
  %v349 = vpop.f32.mrf.mxu0
  %v350 = vadd.f32 0.0, %v349
  %v351 = vpop.f32.mrf.mxu0
  %v352 = vadd.f32 0.0, %v351
  %353 = vmatmul.bf16.gmra.mxu0 %v120
  %v354 = vpop.f32.mrf.mxu0
  %v355 = vadd.f32 0.0, %v354
  %v356 = vpop.f32.mrf.mxu0
  %v357 = vadd.f32 0.0, %v356
  %358 = vmatmul.bf16.gmra.mxu0 %v122
  %v359 = vpop.f32.mrf.mxu0
  %v360 = vadd.f32 0.0, %v359
  %v361 = vpop.f32.mrf.mxu0
  %v362 = vadd.f32 0.0, %v361
  %363 = vmatmul.bf16.gmra.mxu0 %v124
  %v364 = vpop.f32.mrf.mxu0
  %v365 = vadd.f32 0.0, %v364
  %v366 = vpop.f32.mrf.mxu0
  %367 = vdwg.mxu0
  %368 = vmatpush.bf16.msra.mxu0 0
  %369 = vmatpush.bf16.msra.mxu0 0
  %370 = vmatpush.bf16.msra.mxu0 0
  %371 = vmatpush.bf16.msra.mxu0 0
  %372 = vmatpush.bf16.msra.mxu0 0
  %373 = vmatpush.bf16.msra.mxu0 0
  %374 = vmatpush.bf16.msra.mxu0 %v233
  %375 = vmatpush.bf16.msra.mxu0 %v231
  %376 = vmatmul.bf16.gmra.mxu0 %v257
  %v377 = vpop.f32.mrf.mxu0
  %v378 = vadd.f32 %v305, %v377
  %v379 = vpop.f32.mrf.mxu0
  %v380 = vadd.f32 %v307, %v379
  %381 = vmatmul.bf16.gmra.mxu0 %v260
  %v382 = vpop.f32.mrf.mxu0
  %v383 = vadd.f32 %v310, %v382
  %v384 = vpop.f32.mrf.mxu0
  %v385 = vadd.f32 %v312, %v384
  %386 = vmatmul.bf16.gmra.mxu0 %v263
  %v387 = vpop.f32.mrf.mxu0
  %v388 = vadd.f32 %v315, %v387
  %v389 = vpop.f32.mrf.mxu0
  %v390 = vadd.f32 %v317, %v389
  %391 = vmatmul.bf16.gmra.mxu0 %v266
  %v392 = vpop.f32.mrf.mxu0
  %v393 = vadd.f32 %v320, %v392
  %v394 = vpop.f32.mrf.mxu0
  %v395 = vadd.f32 %v322, %v394
  %396 = vmatmul.bf16.gmra.mxu0 %v269
  %v397 = vpop.f32.mrf.mxu0
  %v398 = vadd.f32 %v325, %v397
  %v399 = vpop.f32.mrf.mxu0
  %v400 = vadd.f32 %v327, %v399
  %401 = vmatmul.bf16.gmra.mxu0 %v272
  %v402 = vpop.f32.mrf.mxu0
  %v403 = vadd.f32 %v330, %v402
  %v404 = vpop.f32.mrf.mxu0
  %v405 = vadd.f32 %v332, %v404
  %406 = vmatmul.bf16.gmra.mxu0 %v275
  %v407 = vpop.f32.mrf.mxu0
  %v408 = vadd.f32 %v335, %v407
  %v409 = vpop.f32.mrf.mxu0
  %v410 = vadd.f32 %v337, %v409
  %411 = vmatmul.bf16.gmra.mxu0 %v278
  %v412 = vpop.f32.mrf.mxu0
  %v413 = vadd.f32 %v340, %v412
  %v414 = vpop.f32.mrf.mxu0
  %v415 = vadd.f32 %v342, %v414
  %416 = vmatmul.bf16.gmra.mxu0 %v281
  %v417 = vpop.f32.mrf.mxu0
  %v418 = vadd.f32 %v345, %v417
  %v419 = vpop.f32.mrf.mxu0
  %v420 = vadd.f32 %v347, %v419
  %421 = vmatmul.bf16.gmra.mxu0 %v284
  %v422 = vpop.f32.mrf.mxu0
  %v423 = vadd.f32 %v350, %v422
  %v424 = vpop.f32.mrf.mxu0
  %v425 = vadd.f32 %v352, %v424
  %426 = vmatmul.bf16.gmra.mxu0 %v287
  %v427 = vpop.f32.mrf.mxu0
  %v428 = vadd.f32 %v355, %v427
  %v429 = vpop.f32.mrf.mxu0
  %v430 = vadd.f32 %v357, %v429
  %431 = vmatmul.bf16.gmra.mxu0 %v290
  %v432 = vpop.f32.mrf.mxu0
  %v433 = vadd.f32 %v360, %v432
  %v434 = vpop.f32.mrf.mxu0
  %v435 = vadd.f32 %v362, %v434
  %436 = vmatmul.bf16.gmra.mxu0 %v293
  %v437 = vpop.f32.mrf.mxu0
  %v438 = vadd.f32 %v365, %v437
  %v439 = vpop.f32.mrf.mxu0
  %440 = vdwg.mxu0
  %441 = vmatpush.bf16.msra.mxu0 %v230
  %442 = vmatpush.bf16.msra.mxu0 %v228
  %443 = vmatpush.bf16.msra.mxu0 %v226
  %444 = vmatpush.bf16.msra.mxu0 %v224
  %445 = vmatpush.bf16.msra.mxu0 %v222
  %446 = vmatpush.bf16.msra.mxu0 %v220
  %447 = vmatpush.bf16.msra.mxu0 %v218
  %448 = vmatpush.bf16.msra.mxu0 %v216
  %449 = vmatmul.bf16.gmra.mxu0 %v115
  %v450 = vpop.f32.mrf.mxu0
  %v451 = vadd.f32 0.0, %v450
  %v452 = vpop.f32.mrf.mxu0
  %v453 = vadd.f32 0.0, %v452
  %454 = vmatmul.bf16.gmra.mxu0 %v117
  %v455 = vpop.f32.mrf.mxu0
  %v456 = vadd.f32 0.0, %v455
  %v457 = vpop.f32.mrf.mxu0
  %v458 = vadd.f32 0.0, %v457
  %459 = vmatmul.bf16.gmra.mxu0 %v119
  %v460 = vpop.f32.mrf.mxu0
  %v461 = vadd.f32 0.0, %v460
  %v462 = vpop.f32.mrf.mxu0
  %v463 = vadd.f32 0.0, %v462
  %464 = vmatmul.bf16.gmra.mxu0 %v121
  %v465 = vpop.f32.mrf.mxu0
  %v466 = vadd.f32 0.0, %v465
  %v467 = vpop.f32.mrf.mxu0
  %v468 = vadd.f32 0.0, %v467
  %469 = vmatmul.bf16.gmra.mxu0 %v123
  %v470 = vpop.f32.mrf.mxu0
  %v471 = vadd.f32 0.0, %v470
  %v472 = vpop.f32.mrf.mxu0
  %v473 = vadd.f32 0.0, %v472
  %474 = vmatmul.bf16.gmra.mxu0 %v125
  %v475 = vpop.f32.mrf.mxu0
  %v476 = vadd.f32 0.0, %v475
  %v477 = vpop.f32.mrf.mxu0
  %v478 = vadd.f32 0.0, %v477
  %479 = vmatmul.bf16.gmra.mxu0 %v127
  %v480 = vpop.f32.mrf.mxu0
  %v481 = vadd.f32 0.0, %v480
  %v482 = vpop.f32.mrf.mxu0
  %v483 = vadd.f32 0.0, %v482
  %484 = vmatmul.bf16.gmra.mxu0 %v129
  %v485 = vpop.f32.mrf.mxu0
  %v486 = vadd.f32 0.0, %v485
  %v487 = vpop.f32.mrf.mxu0
  %v488 = vadd.f32 0.0, %v487
  %489 = vmatmul.bf16.gmra.mxu0 %v116
  %v490 = vpop.f32.mrf.mxu0
  %v491 = vadd.f32 0.0, %v490
  %v492 = vpop.f32.mrf.mxu0
  %v493 = vadd.f32 0.0, %v492
  %494 = vmatmul.bf16.gmra.mxu0 %v118
  %v495 = vpop.f32.mrf.mxu0
  %v496 = vadd.f32 0.0, %v495
  %v497 = vpop.f32.mrf.mxu0
  %v498 = vadd.f32 0.0, %v497
  %499 = vmatmul.bf16.gmra.mxu0 %v120
  %v500 = vpop.f32.mrf.mxu0
  %v501 = vadd.f32 0.0, %v500
  %v502 = vpop.f32.mrf.mxu0
  %v503 = vadd.f32 0.0, %v502
  %504 = vmatmul.bf16.gmra.mxu0 %v122
  %v505 = vpop.f32.mrf.mxu0
  %v506 = vadd.f32 0.0, %v505
  %v507 = vpop.f32.mrf.mxu0
  %v508 = vadd.f32 0.0, %v507
  %509 = vmatmul.bf16.gmra.mxu0 %v124
  %v510 = vpop.f32.mrf.mxu0
  %v511 = vadd.f32 0.0, %v510
  %v512 = vpop.f32.mrf.mxu0
  %513 = vdwg.mxu0
  %514 = vmatpush.bf16.msra.mxu0 0
  %515 = vmatpush.bf16.msra.mxu0 0
  %516 = vmatpush.bf16.msra.mxu0 0
  %517 = vmatpush.bf16.msra.mxu0 0
  %518 = vmatpush.bf16.msra.mxu0 0
  %519 = vmatpush.bf16.msra.mxu0 0
  %520 = vmatpush.bf16.msra.mxu0 %v234
  %521 = vmatpush.bf16.msra.mxu0 %v232
  %522 = vmatmul.bf16.gmra.mxu0 %v257
  %v523 = vpop.f32.mrf.mxu0
  %v524 = vadd.f32 %v451, %v523
  %v525 = vpop.f32.mrf.mxu0
  %v526 = vadd.f32 %v453, %v525
  %527 = vmatmul.bf16.gmra.mxu0 %v260
  %v528 = vpop.f32.mrf.mxu0
  %v529 = vadd.f32 %v456, %v528
  %v530 = vpop.f32.mrf.mxu0
  %v531 = vadd.f32 %v458, %v530
  %532 = vmatmul.bf16.gmra.mxu0 %v263
  %v533 = vpop.f32.mrf.mxu0
  %v534 = vadd.f32 %v461, %v533
  %v535 = vpop.f32.mrf.mxu0
  %v536 = vadd.f32 %v463, %v535
  %537 = vmatmul.bf16.gmra.mxu0 %v266
  %v538 = vpop.f32.mrf.mxu0
  %v539 = vadd.f32 %v466, %v538
  %v540 = vpop.f32.mrf.mxu0
  %v541 = vadd.f32 %v468, %v540
  %542 = vmatmul.bf16.gmra.mxu0 %v269
  %v543 = vpop.f32.mrf.mxu0
  %v544 = vadd.f32 %v471, %v543
  %v545 = vpop.f32.mrf.mxu0
  %v546 = vadd.f32 %v473, %v545
  %547 = vmatmul.bf16.gmra.mxu0 %v272
  %v548 = vpop.f32.mrf.mxu0
  %v549 = vadd.f32 %v476, %v548
  %v550 = vpop.f32.mrf.mxu0
  %v551 = vadd.f32 %v478, %v550
  %552 = vmatmul.bf16.gmra.mxu0 %v275
  %v553 = vpop.f32.mrf.mxu0
  %v554 = vadd.f32 %v481, %v553
  %v555 = vpop.f32.mrf.mxu0
  %v556 = vadd.f32 %v483, %v555
  %557 = vmatmul.bf16.gmra.mxu0 %v278
  %v558 = vpop.f32.mrf.mxu0
  %v559 = vadd.f32 %v486, %v558
  %v560 = vpop.f32.mrf.mxu0
  %v561 = vadd.f32 %v488, %v560
  %562 = vmatmul.bf16.gmra.mxu0 %v281
  %v563 = vpop.f32.mrf.mxu0
  %v564 = vadd.f32 %v491, %v563
  %v565 = vpop.f32.mrf.mxu0
  %v566 = vadd.f32 %v493, %v565
  %567 = vmatmul.bf16.gmra.mxu0 %v284
  %v568 = vpop.f32.mrf.mxu0
  %v569 = vadd.f32 %v496, %v568
  %v570 = vpop.f32.mrf.mxu0
  %v571 = vadd.f32 %v498, %v570
  %572 = vmatmul.bf16.gmra.mxu0 %v287
  %v573 = vpop.f32.mrf.mxu0
  %v574 = vadd.f32 %v501, %v573
  %v575 = vpop.f32.mrf.mxu0
  %v576 = vadd.f32 %v503, %v575
  %577 = vmatmul.bf16.gmra.mxu0 %v290
  %v578 = vpop.f32.mrf.mxu0
  %v579 = vadd.f32 %v506, %v578
  %v580 = vpop.f32.mrf.mxu0
  %v581 = vadd.f32 %v508, %v580
  %582 = vmatmul.bf16.gmra.mxu0 %v293
  %v583 = vpop.f32.mrf.mxu0
  %v584 = vadd.f32 %v511, %v583
  %v585 = vpop.f32.mrf.mxu0
  %586 = vdwg.mxu0
  %v587 = vadd.f32 %v378, %v380
  %v588 = vadd.f32 %v587, %v383
  %v589 = vadd.f32 %v588, %v385
  %v590 = vadd.f32 %v589, %v388
  %v591 = vadd.f32 %v590, %v390
  %v592 = vadd.f32 %v591, %v393
  %v593 = vadd.f32 %v592, %v395
  %v594 = vadd.f32 %v593, %v398
  %v595 = vadd.f32 %v594, %v400
  %v596 = vadd.f32 %v595, %v403
  %v597 = vadd.f32 %v596, %v405
  %v598 = vadd.f32 %v597, %v408
  %v599 = vadd.f32 %v598, %v410
  %v600 = vadd.f32 %v599, %v413
  %v601 = vadd.f32 %v600, %v415
  %v602 = vadd.f32 %v601, %v418
  %v603 = vadd.f32 %v602, %v420
  %v604 = vadd.f32 %v603, %v423
  %v605 = vadd.f32 %v604, %v425
  %v606 = vadd.f32 %v605, %v428
  %v607 = vadd.f32 %v606, %v430
  %v608 = vadd.f32 %v607, %v433
  %v609 = vadd.f32 %v608, %v435
  %vm610 = vcmask 1043456
  %v611 = vsel %vm610, %v438, 0.0
  %v612 = vadd.f32 %v609, %v611
  %v613 = vrot.slane %v612, 4
  %v614 = vadd.f32 %v612, %v613
  %v615 = vrot.slane %v614, 2
  %v616 = vadd.f32 %v614, %v615
  %v617 = vrot.slane %v616, 1
  %v618 = vadd.f32 %v616, %v617
  %v619 = vsel %vm255, %v524, 0.0
  %v620 = vsel %vm255, %v526, 0.0
  %v621 = vadd.f32 %v619, %v620
  %v622 = vsel %vm255, %v529, 0.0
  %v623 = vadd.f32 %v621, %v622
  %v624 = vsel %vm255, %v531, 0.0
  %v625 = vadd.f32 %v623, %v624
  %v626 = vsel %vm255, %v534, 0.0
  %v627 = vadd.f32 %v625, %v626
  %v628 = vsel %vm255, %v536, 0.0
  %v629 = vadd.f32 %v627, %v628
  %v630 = vsel %vm255, %v539, 0.0
  %v631 = vadd.f32 %v629, %v630
  %v632 = vsel %vm255, %v541, 0.0
  %v633 = vadd.f32 %v631, %v632
  %v634 = vsel %vm255, %v544, 0.0
  %v635 = vadd.f32 %v633, %v634
  %v636 = vsel %vm255, %v546, 0.0
  %v637 = vadd.f32 %v635, %v636
  %v638 = vsel %vm255, %v549, 0.0
  %v639 = vadd.f32 %v637, %v638
  %v640 = vsel %vm255, %v551, 0.0
  %v641 = vadd.f32 %v639, %v640
  %v642 = vsel %vm255, %v554, 0.0
  %v643 = vadd.f32 %v641, %v642
  %v644 = vsel %vm255, %v556, 0.0
  %v645 = vadd.f32 %v643, %v644
  %v646 = vsel %vm255, %v559, 0.0
  %v647 = vadd.f32 %v645, %v646
  %v648 = vsel %vm255, %v561, 0.0
  %v649 = vadd.f32 %v647, %v648
  %v650 = vsel %vm255, %v564, 0.0
  %v651 = vadd.f32 %v649, %v650
  %v652 = vsel %vm255, %v566, 0.0
  %v653 = vadd.f32 %v651, %v652
  %v654 = vsel %vm255, %v569, 0.0
  %v655 = vadd.f32 %v653, %v654
  %v656 = vsel %vm255, %v571, 0.0
  %v657 = vadd.f32 %v655, %v656
  %v658 = vsel %vm255, %v574, 0.0
  %v659 = vadd.f32 %v657, %v658
  %v660 = vsel %vm255, %v576, 0.0
  %v661 = vadd.f32 %v659, %v660
  %v662 = vsel %vm255, %v579, 0.0
  %v663 = vadd.f32 %v661, %v662
  %v664 = vsel %vm255, %v581, 0.0
  %v665 = vadd.f32 %v663, %v664
  %vm666 = vcmask 257024
  %v667 = vsel %vm666, %v584, 0.0
  %v668 = vadd.f32 %v665, %v667
  %v669 = vrot.slane %v668, 4
  %v670 = vadd.f32 %v668, %v669
  %v671 = vrot.slane %v670, 2
  %v672 = vadd.f32 %v670, %v671
  %v673 = vrot.slane %v672, 1
  %v674 = vadd.f32 %v672, %v673
  %v675 = vmul.f32 %v378, %v378
  %v676 = vmul.f32 %v524, %v524
  %v677 = vmul.f32 %v380, %v380
  %v678 = vmul.f32 %v526, %v526
  %v679 = vmul.f32 %v383, %v383
  %v680 = vmul.f32 %v529, %v529
  %v681 = vmul.f32 %v385, %v385
  %v682 = vmul.f32 %v531, %v531
  %v683 = vmul.f32 %v388, %v388
  %v684 = vmul.f32 %v534, %v534
  %v685 = vmul.f32 %v390, %v390
  %v686 = vmul.f32 %v536, %v536
  %v687 = vmul.f32 %v393, %v393
  %v688 = vmul.f32 %v539, %v539
  %v689 = vmul.f32 %v395, %v395
  %v690 = vmul.f32 %v541, %v541
  %v691 = vmul.f32 %v398, %v398
  %v692 = vmul.f32 %v544, %v544
  %v693 = vmul.f32 %v400, %v400
  %v694 = vmul.f32 %v546, %v546
  %v695 = vmul.f32 %v403, %v403
  %v696 = vmul.f32 %v549, %v549
  %v697 = vmul.f32 %v405, %v405
  %v698 = vmul.f32 %v551, %v551
  %v699 = vmul.f32 %v408, %v408
  %v700 = vmul.f32 %v554, %v554
  %v701 = vmul.f32 %v410, %v410
  %v702 = vmul.f32 %v556, %v556
  %v703 = vmul.f32 %v413, %v413
  %v704 = vmul.f32 %v559, %v559
  %v705 = vmul.f32 %v415, %v415
  %v706 = vmul.f32 %v561, %v561
  %v707 = vmul.f32 %v418, %v418
  %v708 = vmul.f32 %v564, %v564
  %v709 = vmul.f32 %v420, %v420
  %v710 = vmul.f32 %v566, %v566
  %v711 = vmul.f32 %v423, %v423
  %v712 = vmul.f32 %v569, %v569
  %v713 = vmul.f32 %v425, %v425
  %v714 = vmul.f32 %v571, %v571
  %v715 = vmul.f32 %v428, %v428
  %v716 = vmul.f32 %v574, %v574
  %v717 = vmul.f32 %v430, %v430
  %v718 = vmul.f32 %v576, %v576
  %v719 = vmul.f32 %v433, %v433
  %v720 = vmul.f32 %v579, %v579
  %v721 = vmul.f32 %v435, %v435
  %v722 = vmul.f32 %v581, %v581
  %v723 = vmul.f32 %v438, %v438
  %v724 = vmul.f32 %v584, %v584
  %v725 = vadd.f32 %v675, %v677
  %v726 = vadd.f32 %v725, %v679
  %v727 = vadd.f32 %v726, %v681
  %v728 = vadd.f32 %v727, %v683
  %v729 = vadd.f32 %v728, %v685
  %v730 = vadd.f32 %v729, %v687
  %v731 = vadd.f32 %v730, %v689
  %v732 = vadd.f32 %v731, %v691
  %v733 = vadd.f32 %v732, %v693
  %v734 = vadd.f32 %v733, %v695
  %v735 = vadd.f32 %v734, %v697
  %v736 = vadd.f32 %v735, %v699
  %v737 = vadd.f32 %v736, %v701
  %v738 = vadd.f32 %v737, %v703
  %v739 = vadd.f32 %v738, %v705
  %v740 = vadd.f32 %v739, %v707
  %v741 = vadd.f32 %v740, %v709
  %v742 = vadd.f32 %v741, %v711
  %v743 = vadd.f32 %v742, %v713
  %v744 = vadd.f32 %v743, %v715
  %v745 = vadd.f32 %v744, %v717
  %v746 = vadd.f32 %v745, %v719
  %v747 = vadd.f32 %v746, %v721
  %v748 = vsel %vm610, %v723, 0.0
  %v749 = vadd.f32 %v747, %v748
  %v750 = vrot.slane %v749, 4
  %v751 = vadd.f32 %v749, %v750
  %v752 = vrot.slane %v751, 2
  %v753 = vadd.f32 %v751, %v752
  %v754 = vrot.slane %v753, 1
  %v755 = vadd.f32 %v753, %v754
  %v756 = vsel %vm255, %v676, 0.0
  %v757 = vsel %vm255, %v678, 0.0
  %v758 = vadd.f32 %v756, %v757
  %v759 = vsel %vm255, %v680, 0.0
  %v760 = vadd.f32 %v758, %v759
  %v761 = vsel %vm255, %v682, 0.0
  %v762 = vadd.f32 %v760, %v761
  %v763 = vsel %vm255, %v684, 0.0
  %v764 = vadd.f32 %v762, %v763
  %v765 = vsel %vm255, %v686, 0.0
  %v766 = vadd.f32 %v764, %v765
  %v767 = vsel %vm255, %v688, 0.0
  %v768 = vadd.f32 %v766, %v767
  %v769 = vsel %vm255, %v690, 0.0
  %v770 = vadd.f32 %v768, %v769
  %v771 = vsel %vm255, %v692, 0.0
  %v772 = vadd.f32 %v770, %v771
  %v773 = vsel %vm255, %v694, 0.0
  %v774 = vadd.f32 %v772, %v773
  %v775 = vsel %vm255, %v696, 0.0
  %v776 = vadd.f32 %v774, %v775
  %v777 = vsel %vm255, %v698, 0.0
  %v778 = vadd.f32 %v776, %v777
  %v779 = vsel %vm255, %v700, 0.0
  %v780 = vadd.f32 %v778, %v779
  %v781 = vsel %vm255, %v702, 0.0
  %v782 = vadd.f32 %v780, %v781
  %v783 = vsel %vm255, %v704, 0.0
  %v784 = vadd.f32 %v782, %v783
  %v785 = vsel %vm255, %v706, 0.0
  %v786 = vadd.f32 %v784, %v785
  %v787 = vsel %vm255, %v708, 0.0
  %v788 = vadd.f32 %v786, %v787
  %v789 = vsel %vm255, %v710, 0.0
  %v790 = vadd.f32 %v788, %v789
  %v791 = vsel %vm255, %v712, 0.0
  %v792 = vadd.f32 %v790, %v791
  %v793 = vsel %vm255, %v714, 0.0
  %v794 = vadd.f32 %v792, %v793
  %v795 = vsel %vm255, %v716, 0.0
  %v796 = vadd.f32 %v794, %v795
  %v797 = vsel %vm255, %v718, 0.0
  %v798 = vadd.f32 %v796, %v797
  %v799 = vsel %vm255, %v720, 0.0
  %v800 = vadd.f32 %v798, %v799
  %v801 = vsel %vm255, %v722, 0.0
  %v802 = vadd.f32 %v800, %v801
  %v803 = vsel %vm666, %v724, 0.0
  %v804 = vadd.f32 %v802, %v803
  %v805 = vrot.slane %v804, 4
  %v806 = vadd.f32 %v804, %v805
  %v807 = vrot.slane %v806, 2
  %v808 = vadd.f32 %v806, %v807
  %v809 = vrot.slane %v808, 1
  %v810 = vadd.f32 %v808, %v809
  %v811 = vmul.f32 %v618, 0.0051020407
  %v812 = vmul.f32 %v674, 0.0051020407
  %v813 = vmul.f32 %v755, 0.0051020407
  %v814 = vmul.f32 %v810, 0.0051020407
  %v815 = vmul.f32 %v811, %v811
  %v816 = vmul.f32 %v812, %v812
  %v817 = vsub.f32 %v813, %v815
  %v818 = vsub.f32 %v814, %v816
  %v819 = vld [vmem:[%s2] sm:$0x3]
  %v820 = vadd.f32 %v817, 1e-05
  %v821 = vadd.f32 %v818, 1e-05
  %v822 = vrsqrt.pop %v820
  %v823 = vmul.f32 %v822, %v820
  %v824 = vmul.f32 %v823, %v822
  %v825 = vmul.f32 0.5, %v824
  %v826 = vsub.f32 1.5, %v825
  %v827 = vmul.f32 %v822, %v826
  %vm828 = vweird.f32 %v820
  %vm829 = vweird.f32 %v822
  %vm830 = vmor %vm828, %vm829
  %v831 = vsel %vm830, %v822, %v827
  %v832 = vrsqrt.pop %v821
  %v833 = vmul.f32 %v832, %v821
  %v834 = vmul.f32 %v833, %v832
  %v835 = vmul.f32 0.5, %v834
  %v836 = vsub.f32 1.5, %v835
  %v837 = vmul.f32 %v832, %v836
  %vm838 = vweird.f32 %v821
  %vm839 = vweird.f32 %v832
  %vm840 = vmor %vm838, %vm839
  %v841 = vsel %vm840, %v832, %v837
  %v844 = vrot.slane %v841, 7
  %vm845 = vcmask 1040384
  %v846 = vsel %vm845, %v831, %v844
  %v848 = vmul.f32 %v819, %v846
  %v849 = vld [vmem:[%s3] sm:$0x3]
  %v851 = vperm.slane %v848, 0
  %v852 = vperm.slane %v848, 1
  %v855 = vmul.f32 %v811, %v851
  %v856 = vmul.f32 %v812, %v852
  %v859 = vrot.slane %v856, 7
  %v860 = vsel %vm845, %v855, %v859
  %v862 = vsub.f32 %v849, %v860
  %v863 = vmul.f32 %v378, %v851
  %v864 = vmul.f32 %v524, %v852
  %v865 = vmul.f32 %v380, %v851
  %v866 = vmul.f32 %v526, %v852
  %v867 = vmul.f32 %v383, %v851
  %v868 = vmul.f32 %v529, %v852
  %v869 = vmul.f32 %v385, %v851
  %v870 = vmul.f32 %v531, %v852
  %v871 = vmul.f32 %v388, %v851
  %v872 = vmul.f32 %v534, %v852
  %v873 = vmul.f32 %v390, %v851
  %v874 = vmul.f32 %v536, %v852
  %v875 = vmul.f32 %v393, %v851
  %v876 = vmul.f32 %v539, %v852
  %v877 = vmul.f32 %v395, %v851
  %v878 = vmul.f32 %v541, %v852
  %v879 = vmul.f32 %v398, %v851
  %v880 = vmul.f32 %v544, %v852
  %v881 = vmul.f32 %v400, %v851
  %v882 = vmul.f32 %v546, %v852
  %v883 = vmul.f32 %v403, %v851
  %v884 = vmul.f32 %v549, %v852
  %v885 = vmul.f32 %v405, %v851
  %v886 = vmul.f32 %v551, %v852
  %v887 = vmul.f32 %v408, %v851
  %v888 = vmul.f32 %v554, %v852
  %v889 = vmul.f32 %v410, %v851
  %v890 = vmul.f32 %v556, %v852
  %v891 = vmul.f32 %v413, %v851
  %v892 = vmul.f32 %v559, %v852
  %v893 = vmul.f32 %v415, %v851
  %v894 = vmul.f32 %v561, %v852
  %v895 = vmul.f32 %v418, %v851
  %v896 = vmul.f32 %v564, %v852
  %v897 = vmul.f32 %v420, %v851
  %v898 = vmul.f32 %v566, %v852
  %v899 = vmul.f32 %v423, %v851
  %v900 = vmul.f32 %v569, %v852
  %v901 = vmul.f32 %v425, %v851
  %v902 = vmul.f32 %v571, %v852
  %v903 = vmul.f32 %v428, %v851
  %v904 = vmul.f32 %v574, %v852
  %v905 = vmul.f32 %v430, %v851
  %v906 = vmul.f32 %v576, %v852
  %v907 = vmul.f32 %v433, %v851
  %v908 = vmul.f32 %v579, %v852
  %v909 = vmul.f32 %v435, %v851
  %v910 = vmul.f32 %v581, %v852
  %v911 = vmul.f32 %v438, %v851
  %v912 = vmul.f32 %v584, %v852
  %v914 = vperm.slane %v862, 0
  %v915 = vperm.slane %v862, 1
  %v918 = vadd.f32 %v863, %v914
  %v919 = vadd.f32 %v864, %v915
  %v920 = vadd.f32 %v865, %v914
  %v921 = vadd.f32 %v866, %v915
  %v922 = vadd.f32 %v867, %v914
  %v923 = vadd.f32 %v868, %v915
  %v924 = vadd.f32 %v869, %v914
  %v925 = vadd.f32 %v870, %v915
  %v926 = vadd.f32 %v871, %v914
  %v927 = vadd.f32 %v872, %v915
  %v928 = vadd.f32 %v873, %v914
  %v929 = vadd.f32 %v874, %v915
  %v930 = vadd.f32 %v875, %v914
  %v931 = vadd.f32 %v876, %v915
  %v932 = vadd.f32 %v877, %v914
  %v933 = vadd.f32 %v878, %v915
  %v934 = vadd.f32 %v879, %v914
  %v935 = vadd.f32 %v880, %v915
  %v936 = vadd.f32 %v881, %v914
  %v937 = vadd.f32 %v882, %v915
  %v938 = vadd.f32 %v883, %v914
  %v939 = vadd.f32 %v884, %v915
  %v940 = vadd.f32 %v885, %v914
  %v941 = vadd.f32 %v886, %v915
  %v942 = vadd.f32 %v887, %v914
  %v943 = vadd.f32 %v888, %v915
  %v944 = vadd.f32 %v889, %v914
  %v945 = vadd.f32 %v890, %v915
  %v946 = vadd.f32 %v891, %v914
  %v947 = vadd.f32 %v892, %v915
  %v948 = vadd.f32 %v893, %v914
  %v949 = vadd.f32 %v894, %v915
  %v950 = vadd.f32 %v895, %v914
  %v951 = vadd.f32 %v896, %v915
  %v952 = vadd.f32 %v897, %v914
  %v953 = vadd.f32 %v898, %v915
  %v954 = vadd.f32 %v899, %v914
  %v955 = vadd.f32 %v900, %v915
  %v956 = vadd.f32 %v901, %v914
  %v957 = vadd.f32 %v902, %v915
  %v958 = vadd.f32 %v903, %v914
  %v959 = vadd.f32 %v904, %v915
  %v960 = vadd.f32 %v905, %v914
  %v961 = vadd.f32 %v906, %v915
  %v962 = vadd.f32 %v907, %v914
  %v963 = vadd.f32 %v908, %v915
  %v964 = vadd.f32 %v909, %v914
  %v965 = vadd.f32 %v910, %v915
  %v966 = vadd.f32 %v911, %v914
  %v967 = vadd.f32 %v912, %v915
  %v968 = vmax.f32 %v918, 0.0
  %v969 = vmax.f32 %v919, 0.0
  %v970 = vmax.f32 %v920, 0.0
  %v971 = vmax.f32 %v921, 0.0
  %v972 = vmax.f32 %v922, 0.0
  %v973 = vmax.f32 %v923, 0.0
  %v974 = vmax.f32 %v924, 0.0
  %v975 = vmax.f32 %v925, 0.0
  %v976 = vmax.f32 %v926, 0.0
  %v977 = vmax.f32 %v927, 0.0
  %v978 = vmax.f32 %v928, 0.0
  %v979 = vmax.f32 %v929, 0.0
  %v980 = vmax.f32 %v930, 0.0
  %v981 = vmax.f32 %v931, 0.0
  %v982 = vmax.f32 %v932, 0.0
  %v983 = vmax.f32 %v933, 0.0
  %v984 = vmax.f32 %v934, 0.0
  %v985 = vmax.f32 %v935, 0.0
  %v986 = vmax.f32 %v936, 0.0
  %v987 = vmax.f32 %v937, 0.0
  %v988 = vmax.f32 %v938, 0.0
  %v989 = vmax.f32 %v939, 0.0
  %v990 = vmax.f32 %v940, 0.0
  %v991 = vmax.f32 %v941, 0.0
  %v992 = vmax.f32 %v942, 0.0
  %v993 = vmax.f32 %v943, 0.0
  %v994 = vmax.f32 %v944, 0.0
  %v995 = vmax.f32 %v945, 0.0
  %v996 = vmax.f32 %v946, 0.0
  %v997 = vmax.f32 %v947, 0.0
  %v998 = vmax.f32 %v948, 0.0
  %v999 = vmax.f32 %v949, 0.0
  %v1000 = vmax.f32 %v950, 0.0
  %v1001 = vmax.f32 %v951, 0.0
  %v1002 = vmax.f32 %v952, 0.0
  %v1003 = vmax.f32 %v953, 0.0
  %v1004 = vmax.f32 %v954, 0.0
  %v1005 = vmax.f32 %v955, 0.0
  %v1006 = vmax.f32 %v956, 0.0
  %v1007 = vmax.f32 %v957, 0.0
  %v1008 = vmax.f32 %v958, 0.0
  %v1009 = vmax.f32 %v959, 0.0
  %v1010 = vmax.f32 %v960, 0.0
  %v1011 = vmax.f32 %v961, 0.0
  %v1012 = vmax.f32 %v962, 0.0
  %v1013 = vmax.f32 %v963, 0.0
  %v1014 = vmax.f32 %v964, 0.0
  %v1015 = vmax.f32 %v965, 0.0
  %v1016 = vmax.f32 %v966, 0.0
  %v1017 = vmax.f32 %v967, 0.0
  %vm1018 = vcmask 261124
  %vm1019 = vmor %vm1018, %vm610
  %1020 = vst.msk [vmem:[#allocation2] sm:$0xff] %vm1019, 0
  %1021 = vst.msk [vmem:[#allocation2 + $0x8] sm:$0xff] %vm1019, 0
  %1022 = vst.msk [vmem:[#allocation2 + $0xd0] sm:$0xff] %vm1019, 0
  %1023 = vst.msk [vmem:[#allocation2 + $0xd8] sm:$0xff] %vm1019, 0
  %1024 = vst.msk [vmem:[#allocation2 + $0xe0] sm:$0xff] %vm1019, 0
  %1025 = vst.msk [vmem:[#allocation2 + $0xe8] sm:$0xff] %vm1019, 0
  %v1026 = vpack.c.bf16 %v969, %v968
  %v1027 = vpack.c.bf16 %v971, %v970
  %v1028 = vpack.c.bf16 %v973, %v972
  %v1029 = vpack.c.bf16 %v975, %v974
  %v1030 = vpack.c.bf16 %v977, %v976
  %v1031 = vpack.c.bf16 %v979, %v978
  %v1032 = vpack.c.bf16 %v981, %v980
  %v1033 = vpack.c.bf16 %v983, %v982
  %v1034 = vpack.c.bf16 %v985, %v984
  %v1035 = vpack.c.bf16 %v987, %v986
  %v1036 = vpack.c.bf16 %v989, %v988
  %v1037 = vpack.c.bf16 %v991, %v990
  %v1038 = vpack.c.bf16 %v993, %v992
  %v1039 = vpack.c.bf16 %v995, %v994
  %v1040 = vpack.c.bf16 %v997, %v996
  %v1041 = vpack.c.bf16 %v999, %v998
  %v1042 = vpack.c.bf16 %v1001, %v1000
  %v1043 = vpack.c.bf16 %v1003, %v1002
  %v1044 = vpack.c.bf16 %v1005, %v1004
  %v1045 = vpack.c.bf16 %v1007, %v1006
  %v1046 = vpack.c.bf16 %v1009, %v1008
  %v1047 = vpack.c.bf16 %v1011, %v1010
  %v1048 = vpack.c.bf16 %v1013, %v1012
  %v1049 = vpack.c.bf16 %v1015, %v1014
  %v1050 = vpack.c.bf16 %v1017, %v1016
  %1051 = vst.msk [vmem:[#allocation2 + $0x10] sm:$0xff] %vm1019, %v1026
  %1052 = vst.msk [vmem:[#allocation2 + $0x18] sm:$0xff] %vm1019, %v1027
  %1053 = vst.msk [vmem:[#allocation2 + $0x20] sm:$0xff] %vm1019, %v1028
  %1054 = vst.msk [vmem:[#allocation2 + $0x28] sm:$0xff] %vm1019, %v1029
  %1055 = vst.msk [vmem:[#allocation2 + $0x30] sm:$0xff] %vm1019, %v1030
  %1056 = vst.msk [vmem:[#allocation2 + $0x38] sm:$0xff] %vm1019, %v1031
  %1057 = vst.msk [vmem:[#allocation2 + $0x40] sm:$0xff] %vm1019, %v1032
  %1058 = vst.msk [vmem:[#allocation2 + $0x48] sm:$0xff] %vm1019, %v1033
  %1059 = vst.msk [vmem:[#allocation2 + $0x50] sm:$0xff] %vm1019, %v1034
  %1060 = vst.msk [vmem:[#allocation2 + $0x58] sm:$0xff] %vm1019, %v1035
  %1061 = vst.msk [vmem:[#allocation2 + $0x60] sm:$0xff] %vm1019, %v1036
  %1062 = vst.msk [vmem:[#allocation2 + $0x68] sm:$0xff] %vm1019, %v1037
  %1063 = vst.msk [vmem:[#allocation2 + $0x70] sm:$0xff] %vm1019, %v1038
  %1064 = vst.msk [vmem:[#allocation2 + $0x78] sm:$0xff] %vm1019, %v1039
  %1065 = vst.msk [vmem:[#allocation2 + $0x80] sm:$0xff] %vm1019, %v1040
  %1066 = vst.msk [vmem:[#allocation2 + $0x88] sm:$0xff] %vm1019, %v1041
  %1067 = vst.msk [vmem:[#allocation2 + $0x90] sm:$0xff] %vm1019, %v1042
  %1068 = vst.msk [vmem:[#allocation2 + $0x98] sm:$0xff] %vm1019, %v1043
  %1069 = vst.msk [vmem:[#allocation2 + $0xa0] sm:$0xff] %vm1019, %v1044
  %1070 = vst.msk [vmem:[#allocation2 + $0xa8] sm:$0xff] %vm1019, %v1045
  %1071 = vst.msk [vmem:[#allocation2 + $0xb0] sm:$0xff] %vm1019, %v1046
  %1072 = vst.msk [vmem:[#allocation2 + $0xb8] sm:$0xff] %vm1019, %v1047
  %1073 = vst.msk [vmem:[#allocation2 + $0xc0] sm:$0xff] %vm1019, %v1048
  %1074 = vst.msk [vmem:[#allocation2 + $0xc8] sm:$0xff] %vm1019, %v1049
  %vm1075 = vcmask 1041408
  %vm1076 = vcmask 259076
  %vm1077 = vmor %vm1076, %vm1075
  %1078 = vst.msk [vmem:[#allocation2 + $0xd0] sm:$0x33] %vm1077, %v1050
  %v1079 = vlaneseq
  %v1080 = vshrl.u32 %v1079, 7
  %v1081 = vadd.s32 %v1080, 8
  %v1082 = vadd.s32 %v1080, 16
  %v1083 = vadd.s32 %v1080, 24
  %v1084 = vadd.s32 %v1080, 32
  %v1085 = vadd.s32 %v1080, 40
  %v1086 = vadd.s32 %v1080, 48
  %v1087 = vadd.s32 %v1080, 56
  %v1088 = vadd.s32 %v1080, 64
  %v1089 = vadd.s32 %v1080, 72
  %v1090 = vadd.s32 %v1080, 80
  %v1091 = vadd.s32 %v1080, 88
  %v1092 = vadd.s32 %v1080, 96
  %v1093 = vadd.s32 %v1080, 104
  %v1094 = vadd.s32 %v1080, 112
  %v1095 = vadd.s32 %v1080, 120
  %v1096 = vadd.s32 %v1080, 128
  %v1097 = vadd.s32 %v1080, 136
  %v1098 = vadd.s32 %v1080, 144
  %v1099 = vadd.s32 %v1080, 152
  %v1100 = vadd.s32 %v1080, 160
  %v1101 = vadd.s32 %v1080, 168
  %v1102 = vadd.s32 %v1080, 176
  %v1103 = vadd.s32 %v1080, 184
  %v1104 = vadd.s32 %v1080, 192
  %vm1105 = vcmp.lt.s32.totalorder %v1080, 0
  %v1106 = vsub.s32 0, %v1080
  %v1107 = vsel %vm1105, %v1106, %v1080
  %v1108 = vand.u32 %v1107, 65535
  %v1109 = vshrl.u32 %v1107, 16
  %v1111 = vmul.u32 %v1108, 9362
  %v1112 = vmul.u32 %v1108, 37449
  %v1113 = vmul.u32 %v1109, 9362
  %v1114 = vmul.u32 %v1109, 37449
  %v1115 = vshll.u32 %v1112, 16
  %v1116 = vshrl.u32 %v1112, 16
  %v1117 = vshll.u32 %v1113, 16
  %v1118 = vshrl.u32 %v1113, 16
  %vm1119 = vc.u32 %v1111, %v1115
  %v1120 = vsel %vm1119, 1, 0
  %v1121 = vadd.s32 %v1111, %v1115
  %v1122 = vadd.s32 %v1114, %v1120
  %vm1123 = vc.u32 %v1121, %v1117
  %v1124 = vsel %vm1123, 1, 0
  %v1125 = vadd.s32 %v1121, %v1117
  %v1126 = vadd.s32 %v1122, %v1124
  %v1127 = vadd.s32 %v1126, %v1116
  %v1128 = vadd.s32 %v1127, %v1118
  %vm1129 = vc.u32 %v1125, 2454267026
  %v1130 = vsel %vm1129, 1, 0
  %v1131 = vadd.s32 %v1128, %v1130
  %v1132 = vshrl.u32 %v1131, 3
  %v1133 = vmul.u32 %v1132, 14
  %v1134 = vsub.s32 %v1107, %v1133
  %v1135 = vsub.s32 0, %v1134
  %v1136 = vsel %vm1105, %v1135, %v1134
  %vm1137 = vcmp.lt.s32.totalorder %v1081, 0
  %v1138 = vsub.s32 0, %v1081
  %v1139 = vsel %vm1137, %v1138, %v1081
  %v1140 = vand.u32 %v1139, 65535
  %v1141 = vshrl.u32 %v1139, 16
  %v1143 = vmul.u32 %v1140, 9362
  %v1144 = vmul.u32 %v1140, 37449
  %v1145 = vmul.u32 %v1141, 9362
  %v1146 = vmul.u32 %v1141, 37449
  %v1147 = vshll.u32 %v1144, 16
  %v1148 = vshrl.u32 %v1144, 16
  %v1149 = vshll.u32 %v1145, 16
  %v1150 = vshrl.u32 %v1145, 16
  %vm1151 = vc.u32 %v1143, %v1147
  %v1152 = vsel %vm1151, 1, 0
  %v1153 = vadd.s32 %v1143, %v1147
  %v1154 = vadd.s32 %v1146, %v1152
  %vm1155 = vc.u32 %v1153, %v1149
  %v1156 = vsel %vm1155, 1, 0
  %v1157 = vadd.s32 %v1153, %v1149
  %v1158 = vadd.s32 %v1154, %v1156
  %v1159 = vadd.s32 %v1158, %v1148
  %v1160 = vadd.s32 %v1159, %v1150
  %vm1161 = vc.u32 %v1157, 2454267026
  %v1162 = vsel %vm1161, 1, 0
  %v1163 = vadd.s32 %v1160, %v1162
  %v1164 = vshrl.u32 %v1163, 3
  %v1165 = vmul.u32 %v1164, 14
  %v1166 = vsub.s32 %v1139, %v1165
  %v1167 = vsub.s32 0, %v1166
  %v1168 = vsel %vm1137, %v1167, %v1166
  %vm1169 = vcmp.lt.s32.totalorder %v1082, 0
  %v1170 = vsub.s32 0, %v1082
  %v1171 = vsel %vm1169, %v1170, %v1082
  %v1172 = vand.u32 %v1171, 65535
  %v1173 = vshrl.u32 %v1171, 16
  %v1175 = vmul.u32 %v1172, 9362
  %v1176 = vmul.u32 %v1172, 37449
  %v1177 = vmul.u32 %v1173, 9362
  %v1178 = vmul.u32 %v1173, 37449
  %v1179 = vshll.u32 %v1176, 16
  %v1180 = vshrl.u32 %v1176, 16
  %v1181 = vshll.u32 %v1177, 16
  %v1182 = vshrl.u32 %v1177, 16
  %vm1183 = vc.u32 %v1175, %v1179
  %v1184 = vsel %vm1183, 1, 0
  %v1185 = vadd.s32 %v1175, %v1179
  %v1186 = vadd.s32 %v1178, %v1184
  %vm1187 = vc.u32 %v1185, %v1181
  %v1188 = vsel %vm1187, 1, 0
  %v1189 = vadd.s32 %v1185, %v1181
  %v1190 = vadd.s32 %v1186, %v1188
  %v1191 = vadd.s32 %v1190, %v1180
  %v1192 = vadd.s32 %v1191, %v1182
  %vm1193 = vc.u32 %v1189, 2454267026
  %v1194 = vsel %vm1193, 1, 0
  %v1195 = vadd.s32 %v1192, %v1194
  %v1196 = vshrl.u32 %v1195, 3
  %v1197 = vmul.u32 %v1196, 14
  %v1198 = vsub.s32 %v1171, %v1197
  %v1199 = vsub.s32 0, %v1198
  %v1200 = vsel %vm1169, %v1199, %v1198
  %vm1201 = vcmp.lt.s32.totalorder %v1083, 0
  %v1202 = vsub.s32 0, %v1083
  %v1203 = vsel %vm1201, %v1202, %v1083
  %v1204 = vand.u32 %v1203, 65535
  %v1205 = vshrl.u32 %v1203, 16
  %v1207 = vmul.u32 %v1204, 9362
  %v1208 = vmul.u32 %v1204, 37449
  %v1209 = vmul.u32 %v1205, 9362
  %v1210 = vmul.u32 %v1205, 37449
  %v1211 = vshll.u32 %v1208, 16
  %v1212 = vshrl.u32 %v1208, 16
  %v1213 = vshll.u32 %v1209, 16
  %v1214 = vshrl.u32 %v1209, 16
  %vm1215 = vc.u32 %v1207, %v1211
  %v1216 = vsel %vm1215, 1, 0
  %v1217 = vadd.s32 %v1207, %v1211
  %v1218 = vadd.s32 %v1210, %v1216
  %vm1219 = vc.u32 %v1217, %v1213
  %v1220 = vsel %vm1219, 1, 0
  %v1221 = vadd.s32 %v1217, %v1213
  %v1222 = vadd.s32 %v1218, %v1220
  %v1223 = vadd.s32 %v1222, %v1212
  %v1224 = vadd.s32 %v1223, %v1214
  %vm1225 = vc.u32 %v1221, 2454267026
  %v1226 = vsel %vm1225, 1, 0
  %v1227 = vadd.s32 %v1224, %v1226
  %v1228 = vshrl.u32 %v1227, 3
  %v1229 = vmul.u32 %v1228, 14
  %v1230 = vsub.s32 %v1203, %v1229
  %v1231 = vsub.s32 0, %v1230
  %v1232 = vsel %vm1201, %v1231, %v1230
  %vm1233 = vcmp.lt.s32.totalorder %v1084, 0
  %v1234 = vsub.s32 0, %v1084
  %v1235 = vsel %vm1233, %v1234, %v1084
  %v1236 = vand.u32 %v1235, 65535
  %v1237 = vshrl.u32 %v1235, 16
  %v1239 = vmul.u32 %v1236, 9362
  %v1240 = vmul.u32 %v1236, 37449
  %v1241 = vmul.u32 %v1237, 9362
  %v1242 = vmul.u32 %v1237, 37449
  %v1243 = vshll.u32 %v1240, 16
  %v1244 = vshrl.u32 %v1240, 16
  %v1245 = vshll.u32 %v1241, 16
  %v1246 = vshrl.u32 %v1241, 16
  %vm1247 = vc.u32 %v1239, %v1243
  %v1248 = vsel %vm1247, 1, 0
  %v1249 = vadd.s32 %v1239, %v1243
  %v1250 = vadd.s32 %v1242, %v1248
  %vm1251 = vc.u32 %v1249, %v1245
  %v1252 = vsel %vm1251, 1, 0
  %v1253 = vadd.s32 %v1249, %v1245
  %v1254 = vadd.s32 %v1250, %v1252
  %v1255 = vadd.s32 %v1254, %v1244
  %v1256 = vadd.s32 %v1255, %v1246
  %vm1257 = vc.u32 %v1253, 2454267026
  %v1258 = vsel %vm1257, 1, 0
  %v1259 = vadd.s32 %v1256, %v1258
  %v1260 = vshrl.u32 %v1259, 3
  %v1261 = vmul.u32 %v1260, 14
  %v1262 = vsub.s32 %v1235, %v1261
  %v1263 = vsub.s32 0, %v1262
  %v1264 = vsel %vm1233, %v1263, %v1262
  %vm1265 = vcmp.lt.s32.totalorder %v1085, 0
  %v1266 = vsub.s32 0, %v1085
  %v1267 = vsel %vm1265, %v1266, %v1085
  %v1268 = vand.u32 %v1267, 65535
  %v1269 = vshrl.u32 %v1267, 16
  %v1271 = vmul.u32 %v1268, 9362
  %v1272 = vmul.u32 %v1268, 37449
  %v1273 = vmul.u32 %v1269, 9362
  %v1274 = vmul.u32 %v1269, 37449
  %v1275 = vshll.u32 %v1272, 16
  %v1276 = vshrl.u32 %v1272, 16
  %v1277 = vshll.u32 %v1273, 16
  %v1278 = vshrl.u32 %v1273, 16
  %vm1279 = vc.u32 %v1271, %v1275
  %v1280 = vsel %vm1279, 1, 0
  %v1281 = vadd.s32 %v1271, %v1275
  %v1282 = vadd.s32 %v1274, %v1280
  %vm1283 = vc.u32 %v1281, %v1277
  %v1284 = vsel %vm1283, 1, 0
  %v1285 = vadd.s32 %v1281, %v1277
  %v1286 = vadd.s32 %v1282, %v1284
  %v1287 = vadd.s32 %v1286, %v1276
  %v1288 = vadd.s32 %v1287, %v1278
  %vm1289 = vc.u32 %v1285, 2454267026
  %v1290 = vsel %vm1289, 1, 0
  %v1291 = vadd.s32 %v1288, %v1290
  %v1292 = vshrl.u32 %v1291, 3
  %v1293 = vmul.u32 %v1292, 14
  %v1294 = vsub.s32 %v1267, %v1293
  %v1295 = vsub.s32 0, %v1294
  %v1296 = vsel %vm1265, %v1295, %v1294
  %vm1297 = vcmp.lt.s32.totalorder %v1086, 0
  %v1298 = vsub.s32 0, %v1086
  %v1299 = vsel %vm1297, %v1298, %v1086
  %v1300 = vand.u32 %v1299, 65535
  %v1301 = vshrl.u32 %v1299, 16
  %v1303 = vmul.u32 %v1300, 9362
  %v1304 = vmul.u32 %v1300, 37449
  %v1305 = vmul.u32 %v1301, 9362
  %v1306 = vmul.u32 %v1301, 37449
  %v1307 = vshll.u32 %v1304, 16
  %v1308 = vshrl.u32 %v1304, 16
  %v1309 = vshll.u32 %v1305, 16
  %v1310 = vshrl.u32 %v1305, 16
  %vm1311 = vc.u32 %v1303, %v1307
  %v1312 = vsel %vm1311, 1, 0
  %v1313 = vadd.s32 %v1303, %v1307
  %v1314 = vadd.s32 %v1306, %v1312
  %vm1315 = vc.u32 %v1313, %v1309
  %v1316 = vsel %vm1315, 1, 0
  %v1317 = vadd.s32 %v1313, %v1309
  %v1318 = vadd.s32 %v1314, %v1316
  %v1319 = vadd.s32 %v1318, %v1308
  %v1320 = vadd.s32 %v1319, %v1310
  %vm1321 = vc.u32 %v1317, 2454267026
  %v1322 = vsel %vm1321, 1, 0
  %v1323 = vadd.s32 %v1320, %v1322
  %v1324 = vshrl.u32 %v1323, 3
  %v1325 = vmul.u32 %v1324, 14
  %v1326 = vsub.s32 %v1299, %v1325
  %v1327 = vsub.s32 0, %v1326
  %v1328 = vsel %vm1297, %v1327, %v1326
  %vm1329 = vcmp.lt.s32.totalorder %v1087, 0
  %v1330 = vsub.s32 0, %v1087
  %v1331 = vsel %vm1329, %v1330, %v1087
  %v1332 = vand.u32 %v1331, 65535
  %v1333 = vshrl.u32 %v1331, 16
  %v1335 = vmul.u32 %v1332, 9362
  %v1336 = vmul.u32 %v1332, 37449
  %v1337 = vmul.u32 %v1333, 9362
  %v1338 = vmul.u32 %v1333, 37449
  %v1339 = vshll.u32 %v1336, 16
  %v1340 = vshrl.u32 %v1336, 16
  %v1341 = vshll.u32 %v1337, 16
  %v1342 = vshrl.u32 %v1337, 16
  %vm1343 = vc.u32 %v1335, %v1339
  %v1344 = vsel %vm1343, 1, 0
  %v1345 = vadd.s32 %v1335, %v1339
  %v1346 = vadd.s32 %v1338, %v1344
  %vm1347 = vc.u32 %v1345, %v1341
  %v1348 = vsel %vm1347, 1, 0
  %v1349 = vadd.s32 %v1345, %v1341
  %v1350 = vadd.s32 %v1346, %v1348
  %v1351 = vadd.s32 %v1350, %v1340
  %v1352 = vadd.s32 %v1351, %v1342
  %vm1353 = vc.u32 %v1349, 2454267026
  %v1354 = vsel %vm1353, 1, 0
  %v1355 = vadd.s32 %v1352, %v1354
  %v1356 = vshrl.u32 %v1355, 3
  %v1357 = vmul.u32 %v1356, 14
  %v1358 = vsub.s32 %v1331, %v1357
  %v1359 = vsub.s32 0, %v1358
  %v1360 = vsel %vm1329, %v1359, %v1358
  %vm1361 = vcmp.lt.s32.totalorder %v1088, 0
  %v1362 = vsub.s32 0, %v1088
  %v1363 = vsel %vm1361, %v1362, %v1088
  %v1364 = vand.u32 %v1363, 65535
  %v1365 = vshrl.u32 %v1363, 16
  %v1367 = vmul.u32 %v1364, 9362
  %v1368 = vmul.u32 %v1364, 37449
  %v1369 = vmul.u32 %v1365, 9362
  %v1370 = vmul.u32 %v1365, 37449
  %v1371 = vshll.u32 %v1368, 16
  %v1372 = vshrl.u32 %v1368, 16
  %v1373 = vshll.u32 %v1369, 16
  %v1374 = vshrl.u32 %v1369, 16
  %vm1375 = vc.u32 %v1367, %v1371
  %v1376 = vsel %vm1375, 1, 0
  %v1377 = vadd.s32 %v1367, %v1371
  %v1378 = vadd.s32 %v1370, %v1376
  %vm1379 = vc.u32 %v1377, %v1373
  %v1380 = vsel %vm1379, 1, 0
  %v1381 = vadd.s32 %v1377, %v1373
  %v1382 = vadd.s32 %v1378, %v1380
  %v1383 = vadd.s32 %v1382, %v1372
  %v1384 = vadd.s32 %v1383, %v1374
  %vm1385 = vc.u32 %v1381, 2454267026
  %v1386 = vsel %vm1385, 1, 0
  %v1387 = vadd.s32 %v1384, %v1386
  %v1388 = vshrl.u32 %v1387, 3
  %v1389 = vmul.u32 %v1388, 14
  %v1390 = vsub.s32 %v1363, %v1389
  %v1391 = vsub.s32 0, %v1390
  %v1392 = vsel %vm1361, %v1391, %v1390
  %vm1393 = vcmp.lt.s32.totalorder %v1089, 0
  %v1394 = vsub.s32 0, %v1089
  %v1395 = vsel %vm1393, %v1394, %v1089
  %v1396 = vand.u32 %v1395, 65535
  %v1397 = vshrl.u32 %v1395, 16
  %v1399 = vmul.u32 %v1396, 9362
  %v1400 = vmul.u32 %v1396, 37449
  %v1401 = vmul.u32 %v1397, 9362
  %v1402 = vmul.u32 %v1397, 37449
  %v1403 = vshll.u32 %v1400, 16
  %v1404 = vshrl.u32 %v1400, 16
  %v1405 = vshll.u32 %v1401, 16
  %v1406 = vshrl.u32 %v1401, 16
  %vm1407 = vc.u32 %v1399, %v1403
  %v1408 = vsel %vm1407, 1, 0
  %v1409 = vadd.s32 %v1399, %v1403
  %v1410 = vadd.s32 %v1402, %v1408
  %vm1411 = vc.u32 %v1409, %v1405
  %v1412 = vsel %vm1411, 1, 0
  %v1413 = vadd.s32 %v1409, %v1405
  %v1414 = vadd.s32 %v1410, %v1412
  %v1415 = vadd.s32 %v1414, %v1404
  %v1416 = vadd.s32 %v1415, %v1406
  %vm1417 = vc.u32 %v1413, 2454267026
  %v1418 = vsel %vm1417, 1, 0
  %v1419 = vadd.s32 %v1416, %v1418
  %v1420 = vshrl.u32 %v1419, 3
  %v1421 = vmul.u32 %v1420, 14
  %v1422 = vsub.s32 %v1395, %v1421
  %v1423 = vsub.s32 0, %v1422
  %v1424 = vsel %vm1393, %v1423, %v1422
  %vm1425 = vcmp.lt.s32.totalorder %v1090, 0
  %v1426 = vsub.s32 0, %v1090
  %v1427 = vsel %vm1425, %v1426, %v1090
  %v1428 = vand.u32 %v1427, 65535
  %v1429 = vshrl.u32 %v1427, 16
  %v1431 = vmul.u32 %v1428, 9362
  %v1432 = vmul.u32 %v1428, 37449
  %v1433 = vmul.u32 %v1429, 9362
  %v1434 = vmul.u32 %v1429, 37449
  %v1435 = vshll.u32 %v1432, 16
  %v1436 = vshrl.u32 %v1432, 16
  %v1437 = vshll.u32 %v1433, 16
  %v1438 = vshrl.u32 %v1433, 16
  %vm1439 = vc.u32 %v1431, %v1435
  %v1440 = vsel %vm1439, 1, 0
  %v1441 = vadd.s32 %v1431, %v1435
  %v1442 = vadd.s32 %v1434, %v1440
  %vm1443 = vc.u32 %v1441, %v1437
  %v1444 = vsel %vm1443, 1, 0
  %v1445 = vadd.s32 %v1441, %v1437
  %v1446 = vadd.s32 %v1442, %v1444
  %v1447 = vadd.s32 %v1446, %v1436
  %v1448 = vadd.s32 %v1447, %v1438
  %vm1449 = vc.u32 %v1445, 2454267026
  %v1450 = vsel %vm1449, 1, 0
  %v1451 = vadd.s32 %v1448, %v1450
  %v1452 = vshrl.u32 %v1451, 3
  %v1453 = vmul.u32 %v1452, 14
  %v1454 = vsub.s32 %v1427, %v1453
  %v1455 = vsub.s32 0, %v1454
  %v1456 = vsel %vm1425, %v1455, %v1454
  %vm1457 = vcmp.lt.s32.totalorder %v1091, 0
  %v1458 = vsub.s32 0, %v1091
  %v1459 = vsel %vm1457, %v1458, %v1091
  %v1460 = vand.u32 %v1459, 65535
  %v1461 = vshrl.u32 %v1459, 16
  %v1463 = vmul.u32 %v1460, 9362
  %v1464 = vmul.u32 %v1460, 37449
  %v1465 = vmul.u32 %v1461, 9362
  %v1466 = vmul.u32 %v1461, 37449
  %v1467 = vshll.u32 %v1464, 16
  %v1468 = vshrl.u32 %v1464, 16
  %v1469 = vshll.u32 %v1465, 16
  %v1470 = vshrl.u32 %v1465, 16
  %vm1471 = vc.u32 %v1463, %v1467
  %v1472 = vsel %vm1471, 1, 0
  %v1473 = vadd.s32 %v1463, %v1467
  %v1474 = vadd.s32 %v1466, %v1472
  %vm1475 = vc.u32 %v1473, %v1469
  %v1476 = vsel %vm1475, 1, 0
  %v1477 = vadd.s32 %v1473, %v1469
  %v1478 = vadd.s32 %v1474, %v1476
  %v1479 = vadd.s32 %v1478, %v1468
  %v1480 = vadd.s32 %v1479, %v1470
  %vm1481 = vc.u32 %v1477, 2454267026
  %v1482 = vsel %vm1481, 1, 0
  %v1483 = vadd.s32 %v1480, %v1482
  %v1484 = vshrl.u32 %v1483, 3
  %v1485 = vmul.u32 %v1484, 14
  %v1486 = vsub.s32 %v1459, %v1485
  %v1487 = vsub.s32 0, %v1486
  %v1488 = vsel %vm1457, %v1487, %v1486
  %vm1489 = vcmp.lt.s32.totalorder %v1092, 0
  %v1490 = vsub.s32 0, %v1092
  %v1491 = vsel %vm1489, %v1490, %v1092
  %v1492 = vand.u32 %v1491, 65535
  %v1493 = vshrl.u32 %v1491, 16
  %v1495 = vmul.u32 %v1492, 9362
  %v1496 = vmul.u32 %v1492, 37449
  %v1497 = vmul.u32 %v1493, 9362
  %v1498 = vmul.u32 %v1493, 37449
  %v1499 = vshll.u32 %v1496, 16
  %v1500 = vshrl.u32 %v1496, 16
  %v1501 = vshll.u32 %v1497, 16
  %v1502 = vshrl.u32 %v1497, 16
  %vm1503 = vc.u32 %v1495, %v1499
  %v1504 = vsel %vm1503, 1, 0
  %v1505 = vadd.s32 %v1495, %v1499
  %v1506 = vadd.s32 %v1498, %v1504
  %vm1507 = vc.u32 %v1505, %v1501
  %v1508 = vsel %vm1507, 1, 0
  %v1509 = vadd.s32 %v1505, %v1501
  %v1510 = vadd.s32 %v1506, %v1508
  %v1511 = vadd.s32 %v1510, %v1500
  %v1512 = vadd.s32 %v1511, %v1502
  %vm1513 = vc.u32 %v1509, 2454267026
  %v1514 = vsel %vm1513, 1, 0
  %v1515 = vadd.s32 %v1512, %v1514
  %v1516 = vshrl.u32 %v1515, 3
  %v1517 = vmul.u32 %v1516, 14
  %v1518 = vsub.s32 %v1491, %v1517
  %v1519 = vsub.s32 0, %v1518
  %v1520 = vsel %vm1489, %v1519, %v1518
  %vm1521 = vcmp.lt.s32.totalorder %v1093, 0
  %v1522 = vsub.s32 0, %v1093
  %v1523 = vsel %vm1521, %v1522, %v1093
  %v1524 = vand.u32 %v1523, 65535
  %v1525 = vshrl.u32 %v1523, 16
  %v1527 = vmul.u32 %v1524, 9362
  %v1528 = vmul.u32 %v1524, 37449
  %v1529 = vmul.u32 %v1525, 9362
  %v1530 = vmul.u32 %v1525, 37449
  %v1531 = vshll.u32 %v1528, 16
  %v1532 = vshrl.u32 %v1528, 16
  %v1533 = vshll.u32 %v1529, 16
  %v1534 = vshrl.u32 %v1529, 16
  %vm1535 = vc.u32 %v1527, %v1531
  %v1536 = vsel %vm1535, 1, 0
  %v1537 = vadd.s32 %v1527, %v1531
  %v1538 = vadd.s32 %v1530, %v1536
  %vm1539 = vc.u32 %v1537, %v1533
  %v1540 = vsel %vm1539, 1, 0
  %v1541 = vadd.s32 %v1537, %v1533
  %v1542 = vadd.s32 %v1538, %v1540
  %v1543 = vadd.s32 %v1542, %v1532
  %v1544 = vadd.s32 %v1543, %v1534
  %vm1545 = vc.u32 %v1541, 2454267026
  %v1546 = vsel %vm1545, 1, 0
  %v1547 = vadd.s32 %v1544, %v1546
  %v1548 = vshrl.u32 %v1547, 3
  %v1549 = vmul.u32 %v1548, 14
  %v1550 = vsub.s32 %v1523, %v1549
  %v1551 = vsub.s32 0, %v1550
  %v1552 = vsel %vm1521, %v1551, %v1550
  %vm1553 = vcmp.lt.s32.totalorder %v1094, 0
  %v1554 = vsub.s32 0, %v1094
  %v1555 = vsel %vm1553, %v1554, %v1094
  %v1556 = vand.u32 %v1555, 65535
  %v1557 = vshrl.u32 %v1555, 16
  %v1559 = vmul.u32 %v1556, 9362
  %v1560 = vmul.u32 %v1556, 37449
  %v1561 = vmul.u32 %v1557, 9362
  %v1562 = vmul.u32 %v1557, 37449
  %v1563 = vshll.u32 %v1560, 16
  %v1564 = vshrl.u32 %v1560, 16
  %v1565 = vshll.u32 %v1561, 16
  %v1566 = vshrl.u32 %v1561, 16
  %vm1567 = vc.u32 %v1559, %v1563
  %v1568 = vsel %vm1567, 1, 0
  %v1569 = vadd.s32 %v1559, %v1563
  %v1570 = vadd.s32 %v1562, %v1568
  %vm1571 = vc.u32 %v1569, %v1565
  %v1572 = vsel %vm1571, 1, 0
  %v1573 = vadd.s32 %v1569, %v1565
  %v1574 = vadd.s32 %v1570, %v1572
  %v1575 = vadd.s32 %v1574, %v1564
  %v1576 = vadd.s32 %v1575, %v1566
  %vm1577 = vc.u32 %v1573, 2454267026
  %v1578 = vsel %vm1577, 1, 0
  %v1579 = vadd.s32 %v1576, %v1578
  %v1580 = vshrl.u32 %v1579, 3
  %v1581 = vmul.u32 %v1580, 14
  %v1582 = vsub.s32 %v1555, %v1581
  %v1583 = vsub.s32 0, %v1582
  %v1584 = vsel %vm1553, %v1583, %v1582
  %vm1585 = vcmp.lt.s32.totalorder %v1095, 0
  %v1586 = vsub.s32 0, %v1095
  %v1587 = vsel %vm1585, %v1586, %v1095
  %v1588 = vand.u32 %v1587, 65535
  %v1589 = vshrl.u32 %v1587, 16
  %v1591 = vmul.u32 %v1588, 9362
  %v1592 = vmul.u32 %v1588, 37449
  %v1593 = vmul.u32 %v1589, 9362
  %v1594 = vmul.u32 %v1589, 37449
  %v1595 = vshll.u32 %v1592, 16
  %v1596 = vshrl.u32 %v1592, 16
  %v1597 = vshll.u32 %v1593, 16
  %v1598 = vshrl.u32 %v1593, 16
  %vm1599 = vc.u32 %v1591, %v1595
  %v1600 = vsel %vm1599, 1, 0
  %v1601 = vadd.s32 %v1591, %v1595
  %v1602 = vadd.s32 %v1594, %v1600
  %vm1603 = vc.u32 %v1601, %v1597
  %v1604 = vsel %vm1603, 1, 0
  %v1605 = vadd.s32 %v1601, %v1597
  %v1606 = vadd.s32 %v1602, %v1604
  %v1607 = vadd.s32 %v1606, %v1596
  %v1608 = vadd.s32 %v1607, %v1598
  %vm1609 = vc.u32 %v1605, 2454267026
  %v1610 = vsel %vm1609, 1, 0
  %v1611 = vadd.s32 %v1608, %v1610
  %v1612 = vshrl.u32 %v1611, 3
  %v1613 = vmul.u32 %v1612, 14
  %v1614 = vsub.s32 %v1587, %v1613
  %v1615 = vsub.s32 0, %v1614
  %v1616 = vsel %vm1585, %v1615, %v1614
  %vm1617 = vcmp.lt.s32.totalorder %v1096, 0
  %v1618 = vsub.s32 0, %v1096
  %v1619 = vsel %vm1617, %v1618, %v1096
  %v1620 = vand.u32 %v1619, 65535
  %v1621 = vshrl.u32 %v1619, 16
  %v1623 = vmul.u32 %v1620, 9362
  %v1624 = vmul.u32 %v1620, 37449
  %v1625 = vmul.u32 %v1621, 9362
  %v1626 = vmul.u32 %v1621, 37449
  %v1627 = vshll.u32 %v1624, 16
  %v1628 = vshrl.u32 %v1624, 16
  %v1629 = vshll.u32 %v1625, 16
  %v1630 = vshrl.u32 %v1625, 16
  %vm1631 = vc.u32 %v1623, %v1627
  %v1632 = vsel %vm1631, 1, 0
  %v1633 = vadd.s32 %v1623, %v1627
  %v1634 = vadd.s32 %v1626, %v1632
  %vm1635 = vc.u32 %v1633, %v1629
  %v1636 = vsel %vm1635, 1, 0
  %v1637 = vadd.s32 %v1633, %v1629
  %v1638 = vadd.s32 %v1634, %v1636
  %v1639 = vadd.s32 %v1638, %v1628
  %v1640 = vadd.s32 %v1639, %v1630
  %vm1641 = vc.u32 %v1637, 2454267026
  %v1642 = vsel %vm1641, 1, 0
  %v1643 = vadd.s32 %v1640, %v1642
  %v1644 = vshrl.u32 %v1643, 3
  %v1645 = vmul.u32 %v1644, 14
  %v1646 = vsub.s32 %v1619, %v1645
  %v1647 = vsub.s32 0, %v1646
  %v1648 = vsel %vm1617, %v1647, %v1646
  %vm1649 = vcmp.lt.s32.totalorder %v1097, 0
  %v1650 = vsub.s32 0, %v1097
  %v1651 = vsel %vm1649, %v1650, %v1097
  %v1652 = vand.u32 %v1651, 65535
  %v1653 = vshrl.u32 %v1651, 16
  %v1655 = vmul.u32 %v1652, 9362
  %v1656 = vmul.u32 %v1652, 37449
  %v1657 = vmul.u32 %v1653, 9362
  %v1658 = vmul.u32 %v1653, 37449
  %v1659 = vshll.u32 %v1656, 16
  %v1660 = vshrl.u32 %v1656, 16
  %v1661 = vshll.u32 %v1657, 16
  %v1662 = vshrl.u32 %v1657, 16
  %vm1663 = vc.u32 %v1655, %v1659
  %v1664 = vsel %vm1663, 1, 0
  %v1665 = vadd.s32 %v1655, %v1659
  %v1666 = vadd.s32 %v1658, %v1664
  %vm1667 = vc.u32 %v1665, %v1661
  %v1668 = vsel %vm1667, 1, 0
  %v1669 = vadd.s32 %v1665, %v1661
  %v1670 = vadd.s32 %v1666, %v1668
  %v1671 = vadd.s32 %v1670, %v1660
  %v1672 = vadd.s32 %v1671, %v1662
  %vm1673 = vc.u32 %v1669, 2454267026
  %v1674 = vsel %vm1673, 1, 0
  %v1675 = vadd.s32 %v1672, %v1674
  %v1676 = vshrl.u32 %v1675, 3
  %v1677 = vmul.u32 %v1676, 14
  %v1678 = vsub.s32 %v1651, %v1677
  %v1679 = vsub.s32 0, %v1678
  %v1680 = vsel %vm1649, %v1679, %v1678
  %vm1681 = vcmp.lt.s32.totalorder %v1098, 0
  %v1682 = vsub.s32 0, %v1098
  %v1683 = vsel %vm1681, %v1682, %v1098
  %v1684 = vand.u32 %v1683, 65535
  %v1685 = vshrl.u32 %v1683, 16
  %v1687 = vmul.u32 %v1684, 9362
  %v1688 = vmul.u32 %v1684, 37449
  %v1689 = vmul.u32 %v1685, 9362
  %v1690 = vmul.u32 %v1685, 37449
  %v1691 = vshll.u32 %v1688, 16
  %v1692 = vshrl.u32 %v1688, 16
  %v1693 = vshll.u32 %v1689, 16
  %v1694 = vshrl.u32 %v1689, 16
  %vm1695 = vc.u32 %v1687, %v1691
  %v1696 = vsel %vm1695, 1, 0
  %v1697 = vadd.s32 %v1687, %v1691
  %v1698 = vadd.s32 %v1690, %v1696
  %vm1699 = vc.u32 %v1697, %v1693
  %v1700 = vsel %vm1699, 1, 0
  %v1701 = vadd.s32 %v1697, %v1693
  %v1702 = vadd.s32 %v1698, %v1700
  %v1703 = vadd.s32 %v1702, %v1692
  %v1704 = vadd.s32 %v1703, %v1694
  %vm1705 = vc.u32 %v1701, 2454267026
  %v1706 = vsel %vm1705, 1, 0
  %v1707 = vadd.s32 %v1704, %v1706
  %v1708 = vshrl.u32 %v1707, 3
  %v1709 = vmul.u32 %v1708, 14
  %v1710 = vsub.s32 %v1683, %v1709
  %v1711 = vsub.s32 0, %v1710
  %v1712 = vsel %vm1681, %v1711, %v1710
  %vm1713 = vcmp.lt.s32.totalorder %v1099, 0
  %v1714 = vsub.s32 0, %v1099
  %v1715 = vsel %vm1713, %v1714, %v1099
  %v1716 = vand.u32 %v1715, 65535
  %v1717 = vshrl.u32 %v1715, 16
  %v1719 = vmul.u32 %v1716, 9362
  %v1720 = vmul.u32 %v1716, 37449
  %v1721 = vmul.u32 %v1717, 9362
  %v1722 = vmul.u32 %v1717, 37449
  %v1723 = vshll.u32 %v1720, 16
  %v1724 = vshrl.u32 %v1720, 16
  %v1725 = vshll.u32 %v1721, 16
  %v1726 = vshrl.u32 %v1721, 16
  %vm1727 = vc.u32 %v1719, %v1723
  %v1728 = vsel %vm1727, 1, 0
  %v1729 = vadd.s32 %v1719, %v1723
  %v1730 = vadd.s32 %v1722, %v1728
  %vm1731 = vc.u32 %v1729, %v1725
  %v1732 = vsel %vm1731, 1, 0
  %v1733 = vadd.s32 %v1729, %v1725
  %v1734 = vadd.s32 %v1730, %v1732
  %v1735 = vadd.s32 %v1734, %v1724
  %v1736 = vadd.s32 %v1735, %v1726
  %vm1737 = vc.u32 %v1733, 2454267026
  %v1738 = vsel %vm1737, 1, 0
  %v1739 = vadd.s32 %v1736, %v1738
  %v1740 = vshrl.u32 %v1739, 3
  %v1741 = vmul.u32 %v1740, 14
  %v1742 = vsub.s32 %v1715, %v1741
  %v1743 = vsub.s32 0, %v1742
  %v1744 = vsel %vm1713, %v1743, %v1742
  %vm1745 = vcmp.lt.s32.totalorder %v1100, 0
  %v1746 = vsub.s32 0, %v1100
  %v1747 = vsel %vm1745, %v1746, %v1100
  %v1748 = vand.u32 %v1747, 65535
  %v1749 = vshrl.u32 %v1747, 16
  %v1751 = vmul.u32 %v1748, 9362
  %v1752 = vmul.u32 %v1748, 37449
  %v1753 = vmul.u32 %v1749, 9362
  %v1754 = vmul.u32 %v1749, 37449
  %v1755 = vshll.u32 %v1752, 16
  %v1756 = vshrl.u32 %v1752, 16
  %v1757 = vshll.u32 %v1753, 16
  %v1758 = vshrl.u32 %v1753, 16
  %vm1759 = vc.u32 %v1751, %v1755
  %v1760 = vsel %vm1759, 1, 0
  %v1761 = vadd.s32 %v1751, %v1755
  %v1762 = vadd.s32 %v1754, %v1760
  %vm1763 = vc.u32 %v1761, %v1757
  %v1764 = vsel %vm1763, 1, 0
  %v1765 = vadd.s32 %v1761, %v1757
  %v1766 = vadd.s32 %v1762, %v1764
  %v1767 = vadd.s32 %v1766, %v1756
  %v1768 = vadd.s32 %v1767, %v1758
  %vm1769 = vc.u32 %v1765, 2454267026
  %v1770 = vsel %vm1769, 1, 0
  %v1771 = vadd.s32 %v1768, %v1770
  %v1772 = vshrl.u32 %v1771, 3
  %v1773 = vmul.u32 %v1772, 14
  %v1774 = vsub.s32 %v1747, %v1773
  %v1775 = vsub.s32 0, %v1774
  %v1776 = vsel %vm1745, %v1775, %v1774
  %vm1777 = vcmp.lt.s32.totalorder %v1101, 0
  %v1778 = vsub.s32 0, %v1101
  %v1779 = vsel %vm1777, %v1778, %v1101
  %v1780 = vand.u32 %v1779, 65535
  %v1781 = vshrl.u32 %v1779, 16
  %v1783 = vmul.u32 %v1780, 9362
  %v1784 = vmul.u32 %v1780, 37449
  %v1785 = vmul.u32 %v1781, 9362
  %v1786 = vmul.u32 %v1781, 37449
  %v1787 = vshll.u32 %v1784, 16
  %v1788 = vshrl.u32 %v1784, 16
  %v1789 = vshll.u32 %v1785, 16
  %v1790 = vshrl.u32 %v1785, 16
  %vm1791 = vc.u32 %v1783, %v1787
  %v1792 = vsel %vm1791, 1, 0
  %v1793 = vadd.s32 %v1783, %v1787
  %v1794 = vadd.s32 %v1786, %v1792
  %vm1795 = vc.u32 %v1793, %v1789
  %v1796 = vsel %vm1795, 1, 0
  %v1797 = vadd.s32 %v1793, %v1789
  %v1798 = vadd.s32 %v1794, %v1796
  %v1799 = vadd.s32 %v1798, %v1788
  %v1800 = vadd.s32 %v1799, %v1790
  %vm1801 = vc.u32 %v1797, 2454267026
  %v1802 = vsel %vm1801, 1, 0
  %v1803 = vadd.s32 %v1800, %v1802
  %v1804 = vshrl.u32 %v1803, 3
  %v1805 = vmul.u32 %v1804, 14
  %v1806 = vsub.s32 %v1779, %v1805
  %v1807 = vsub.s32 0, %v1806
  %v1808 = vsel %vm1777, %v1807, %v1806
  %vm1809 = vcmp.lt.s32.totalorder %v1102, 0
  %v1810 = vsub.s32 0, %v1102
  %v1811 = vsel %vm1809, %v1810, %v1102
  %v1812 = vand.u32 %v1811, 65535
  %v1813 = vshrl.u32 %v1811, 16
  %v1815 = vmul.u32 %v1812, 9362
  %v1816 = vmul.u32 %v1812, 37449
  %v1817 = vmul.u32 %v1813, 9362
  %v1818 = vmul.u32 %v1813, 37449
  %v1819 = vshll.u32 %v1816, 16
  %v1820 = vshrl.u32 %v1816, 16
  %v1821 = vshll.u32 %v1817, 16
  %v1822 = vshrl.u32 %v1817, 16
  %vm1823 = vc.u32 %v1815, %v1819
  %v1824 = vsel %vm1823, 1, 0
  %v1825 = vadd.s32 %v1815, %v1819
  %v1826 = vadd.s32 %v1818, %v1824
  %vm1827 = vc.u32 %v1825, %v1821
  %v1828 = vsel %vm1827, 1, 0
  %v1829 = vadd.s32 %v1825, %v1821
  %v1830 = vadd.s32 %v1826, %v1828
  %v1831 = vadd.s32 %v1830, %v1820
  %v1832 = vadd.s32 %v1831, %v1822
  %vm1833 = vc.u32 %v1829, 2454267026
  %v1834 = vsel %vm1833, 1, 0
  %v1835 = vadd.s32 %v1832, %v1834
  %v1836 = vshrl.u32 %v1835, 3
  %v1837 = vmul.u32 %v1836, 14
  %v1838 = vsub.s32 %v1811, %v1837
  %v1839 = vsub.s32 0, %v1838
  %v1840 = vsel %vm1809, %v1839, %v1838
  %vm1841 = vcmp.lt.s32.totalorder %v1103, 0
  %v1842 = vsub.s32 0, %v1103
  %v1843 = vsel %vm1841, %v1842, %v1103
  %v1844 = vand.u32 %v1843, 65535
  %v1845 = vshrl.u32 %v1843, 16
  %v1847 = vmul.u32 %v1844, 9362
  %v1848 = vmul.u32 %v1844, 37449
  %v1849 = vmul.u32 %v1845, 9362
  %v1850 = vmul.u32 %v1845, 37449
  %v1851 = vshll.u32 %v1848, 16
  %v1852 = vshrl.u32 %v1848, 16
  %v1853 = vshll.u32 %v1849, 16
  %v1854 = vshrl.u32 %v1849, 16
  %vm1855 = vc.u32 %v1847, %v1851
  %v1856 = vsel %vm1855, 1, 0
  %v1857 = vadd.s32 %v1847, %v1851
  %v1858 = vadd.s32 %v1850, %v1856
  %vm1859 = vc.u32 %v1857, %v1853
  %v1860 = vsel %vm1859, 1, 0
  %v1861 = vadd.s32 %v1857, %v1853
  %v1862 = vadd.s32 %v1858, %v1860
  %v1863 = vadd.s32 %v1862, %v1852
  %v1864 = vadd.s32 %v1863, %v1854
  %vm1865 = vc.u32 %v1861, 2454267026
  %v1866 = vsel %vm1865, 1, 0
  %v1867 = vadd.s32 %v1864, %v1866
  %v1868 = vshrl.u32 %v1867, 3
  %v1869 = vmul.u32 %v1868, 14
  %v1870 = vsub.s32 %v1843, %v1869
  %v1871 = vsub.s32 0, %v1870
  %v1872 = vsel %vm1841, %v1871, %v1870
  %vm1873 = vcmp.lt.s32.totalorder %v1104, 0
  %v1874 = vsub.s32 0, %v1104
  %v1875 = vsel %vm1873, %v1874, %v1104
  %v1876 = vand.u32 %v1875, 65535
  %v1877 = vshrl.u32 %v1875, 16
  %v1879 = vmul.u32 %v1876, 9362
  %v1880 = vmul.u32 %v1876, 37449
  %v1881 = vmul.u32 %v1877, 9362
  %v1882 = vmul.u32 %v1877, 37449
  %v1883 = vshll.u32 %v1880, 16
  %v1884 = vshrl.u32 %v1880, 16
  %v1885 = vshll.u32 %v1881, 16
  %v1886 = vshrl.u32 %v1881, 16
  %vm1887 = vc.u32 %v1879, %v1883
  %v1888 = vsel %vm1887, 1, 0
  %v1889 = vadd.s32 %v1879, %v1883
  %v1890 = vadd.s32 %v1882, %v1888
  %vm1891 = vc.u32 %v1889, %v1885
  %v1892 = vsel %vm1891, 1, 0
  %v1893 = vadd.s32 %v1889, %v1885
  %v1894 = vadd.s32 %v1890, %v1892
  %v1895 = vadd.s32 %v1894, %v1884
  %v1896 = vadd.s32 %v1895, %v1886
  %vm1897 = vc.u32 %v1893, 2454267026
  %v1898 = vsel %vm1897, 1, 0
  %v1899 = vadd.s32 %v1896, %v1898
  %v1900 = vshrl.u32 %v1899, 3
  %v1901 = vmul.u32 %v1900, 14
  %v1902 = vsub.s32 %v1875, %v1901
  %v1903 = vsub.s32 0, %v1902
  %v1904 = vsel %vm1873, %v1903, %v1902
  %vm1905 = vcmp.ne.s32.totalorder %v1136, 0
  %vm1906 = vcmp.ne.s32.totalorder %v1168, 0
  %vm1907 = vcmp.ne.s32.totalorder %v1200, 0
  %vm1908 = vcmp.ne.s32.totalorder %v1232, 0
  %vm1909 = vcmp.ne.s32.totalorder %v1264, 0
  %vm1910 = vcmp.ne.s32.totalorder %v1296, 0
  %vm1911 = vcmp.ne.s32.totalorder %v1328, 0
  %vm1912 = vcmp.ne.s32.totalorder %v1360, 0
  %vm1913 = vcmp.ne.s32.totalorder %v1392, 0
  %vm1914 = vcmp.ne.s32.totalorder %v1424, 0
  %vm1915 = vcmp.ne.s32.totalorder %v1456, 0
  %vm1916 = vcmp.ne.s32.totalorder %v1488, 0
  %vm1917 = vcmp.ne.s32.totalorder %v1520, 0
  %vm1918 = vcmp.ne.s32.totalorder %v1552, 0
  %vm1919 = vcmp.ne.s32.totalorder %v1584, 0
  %vm1920 = vcmp.ne.s32.totalorder %v1616, 0
  %vm1921 = vcmp.ne.s32.totalorder %v1648, 0
  %vm1922 = vcmp.ne.s32.totalorder %v1680, 0
  %vm1923 = vcmp.ne.s32.totalorder %v1712, 0
  %vm1924 = vcmp.ne.s32.totalorder %v1744, 0
  %vm1925 = vcmp.ne.s32.totalorder %v1776, 0
  %vm1926 = vcmp.ne.s32.totalorder %v1808, 0
  %vm1927 = vcmp.ne.s32.totalorder %v1840, 0
  %vm1928 = vcmp.ne.s32.totalorder %v1872, 0
  %vm1929 = vcmp.ne.s32.totalorder %v1904, 0
  %vm1930 = vcmp.lt.s32.totalorder %v1136, 0
  %vm1931 = vcmp.lt.s32.totalorder %v1168, 0
  %vm1932 = vcmp.lt.s32.totalorder %v1200, 0
  %vm1933 = vcmp.lt.s32.totalorder %v1232, 0
  %vm1934 = vcmp.lt.s32.totalorder %v1264, 0
  %vm1935 = vcmp.lt.s32.totalorder %v1296, 0
  %vm1936 = vcmp.lt.s32.totalorder %v1328, 0
  %vm1937 = vcmp.lt.s32.totalorder %v1360, 0
  %vm1938 = vcmp.lt.s32.totalorder %v1392, 0
  %vm1939 = vcmp.lt.s32.totalorder %v1424, 0
  %vm1940 = vcmp.lt.s32.totalorder %v1456, 0
  %vm1941 = vcmp.lt.s32.totalorder %v1488, 0
  %vm1942 = vcmp.lt.s32.totalorder %v1520, 0
  %vm1943 = vcmp.lt.s32.totalorder %v1552, 0
  %vm1944 = vcmp.lt.s32.totalorder %v1584, 0
  %vm1945 = vcmp.lt.s32.totalorder %v1616, 0
  %vm1946 = vcmp.lt.s32.totalorder %v1648, 0
  %vm1947 = vcmp.lt.s32.totalorder %v1680, 0
  %vm1948 = vcmp.lt.s32.totalorder %v1712, 0
  %vm1949 = vcmp.lt.s32.totalorder %v1744, 0
  %vm1950 = vcmp.lt.s32.totalorder %v1776, 0
  %vm1951 = vcmp.lt.s32.totalorder %v1808, 0
  %vm1952 = vcmp.lt.s32.totalorder %v1840, 0
  %vm1953 = vcmp.lt.s32.totalorder %v1872, 0
  %vm1954 = vcmp.lt.s32.totalorder %v1904, 0
  %vm1955 = vmand %vm1930, %vm1905
  %vm1956 = vmand %vm1931, %vm1906
  %vm1957 = vmand %vm1932, %vm1907
  %vm1958 = vmand %vm1933, %vm1908
  %vm1959 = vmand %vm1934, %vm1909
  %vm1960 = vmand %vm1935, %vm1910
  %vm1961 = vmand %vm1936, %vm1911
  %vm1962 = vmand %vm1937, %vm1912
  %vm1963 = vmand %vm1938, %vm1913
  %vm1964 = vmand %vm1939, %vm1914
  %vm1965 = vmand %vm1940, %vm1915
  %vm1966 = vmand %vm1941, %vm1916
  %vm1967 = vmand %vm1942, %vm1917
  %vm1968 = vmand %vm1943, %vm1918
  %vm1969 = vmand %vm1944, %vm1919
  %vm1970 = vmand %vm1945, %vm1920
  %vm1971 = vmand %vm1946, %vm1921
  %vm1972 = vmand %vm1947, %vm1922
  %vm1973 = vmand %vm1948, %vm1923
  %vm1974 = vmand %vm1949, %vm1924
  %vm1975 = vmand %vm1950, %vm1925
  %vm1976 = vmand %vm1951, %vm1926
  %vm1977 = vmand %vm1952, %vm1927
  %vm1978 = vmand %vm1953, %vm1928
  %vm1979 = vmand %vm1954, %vm1929
  %v1980 = vadd.s32 %v1136, 14
  %v1981 = vadd.s32 %v1168, 14
  %v1982 = vadd.s32 %v1200, 14
  %v1983 = vadd.s32 %v1232, 14
  %v1984 = vadd.s32 %v1264, 14
  %v1985 = vadd.s32 %v1296, 14
  %v1986 = vadd.s32 %v1328, 14
  %v1987 = vadd.s32 %v1360, 14
  %v1988 = vadd.s32 %v1392, 14
  %v1989 = vadd.s32 %v1424, 14
  %v1990 = vadd.s32 %v1456, 14
  %v1991 = vadd.s32 %v1488, 14
  %v1992 = vadd.s32 %v1520, 14
  %v1993 = vadd.s32 %v1552, 14
  %v1994 = vadd.s32 %v1584, 14
  %v1995 = vadd.s32 %v1616, 14
  %v1996 = vadd.s32 %v1648, 14
  %v1997 = vadd.s32 %v1680, 14
  %v1998 = vadd.s32 %v1712, 14
  %v1999 = vadd.s32 %v1744, 14
  %v2000 = vadd.s32 %v1776, 14
  %v2001 = vadd.s32 %v1808, 14
  %v2002 = vadd.s32 %v1840, 14
  %v2003 = vadd.s32 %v1872, 14
  %v2004 = vadd.s32 %v1904, 14
  %v2005 = vsel %vm1955, %v1980, %v1136
  %v2006 = vsel %vm1956, %v1981, %v1168
  %v2007 = vsel %vm1957, %v1982, %v1200
  %v2008 = vsel %vm1958, %v1983, %v1232
  %v2009 = vsel %vm1959, %v1984, %v1264
  %v2010 = vsel %vm1960, %v1985, %v1296
  %v2011 = vsel %vm1961, %v1986, %v1328
  %v2012 = vsel %vm1962, %v1987, %v1360
  %v2013 = vsel %vm1963, %v1988, %v1392
  %v2014 = vsel %vm1964, %v1989, %v1424
  %v2015 = vsel %vm1965, %v1990, %v1456
  %v2016 = vsel %vm1966, %v1991, %v1488
  %v2017 = vsel %vm1967, %v1992, %v1520
  %v2018 = vsel %vm1968, %v1993, %v1552
  %v2019 = vsel %vm1969, %v1994, %v1584
  %v2020 = vsel %vm1970, %v1995, %v1616
  %v2021 = vsel %vm1971, %v1996, %v1648
  %v2022 = vsel %vm1972, %v1997, %v1680
  %v2023 = vsel %vm1973, %v1998, %v1712
  %v2024 = vsel %vm1974, %v1999, %v1744
  %v2025 = vsel %vm1975, %v2000, %v1776
  %v2026 = vsel %vm1976, %v2001, %v1808
  %v2027 = vsel %vm1977, %v2002, %v1840
  %v2028 = vsel %vm1978, %v2003, %v1872
  %v2029 = vsel %vm1979, %v2004, %v1904
  %vm2030 = vcmp.ne.s32.totalorder %v2005, 0
  %vm2031 = vcmp.ne.s32.totalorder %v2006, 0
  %vm2032 = vcmp.ne.s32.totalorder %v2007, 0
  %vm2033 = vcmp.ne.s32.totalorder %v2008, 0
  %vm2034 = vcmp.ne.s32.totalorder %v2009, 0
  %vm2035 = vcmp.ne.s32.totalorder %v2010, 0
  %vm2036 = vcmp.ne.s32.totalorder %v2011, 0
  %vm2037 = vcmp.ne.s32.totalorder %v2012, 0
  %vm2038 = vcmp.ne.s32.totalorder %v2013, 0
  %vm2039 = vcmp.ne.s32.totalorder %v2014, 0
  %vm2040 = vcmp.ne.s32.totalorder %v2015, 0
  %vm2041 = vcmp.ne.s32.totalorder %v2016, 0
  %vm2042 = vcmp.ne.s32.totalorder %v2017, 0
  %vm2043 = vcmp.ne.s32.totalorder %v2018, 0
  %vm2044 = vcmp.ne.s32.totalorder %v2019, 0
  %vm2045 = vcmp.ne.s32.totalorder %v2020, 0
  %vm2046 = vcmp.ne.s32.totalorder %v2021, 0
  %vm2047 = vcmp.ne.s32.totalorder %v2022, 0
  %vm2048 = vcmp.ne.s32.totalorder %v2023, 0
  %vm2049 = vcmp.ne.s32.totalorder %v2024, 0
  %vm2050 = vcmp.ne.s32.totalorder %v2025, 0
  %vm2051 = vcmp.ne.s32.totalorder %v2026, 0
  %vm2052 = vcmp.ne.s32.totalorder %v2027, 0
  %vm2053 = vcmp.ne.s32.totalorder %v2028, 0
  %vm2054 = vcmp.ne.s32.totalorder %v2029, 0
  %vm2055 = vcmp.ne.s32.totalorder %v2005, 13
  %vm2056 = vcmp.ne.s32.totalorder %v2006, 13
  %vm2057 = vcmp.ne.s32.totalorder %v2007, 13
  %vm2058 = vcmp.ne.s32.totalorder %v2008, 13
  %vm2059 = vcmp.ne.s32.totalorder %v2009, 13
  %vm2060 = vcmp.ne.s32.totalorder %v2010, 13
  %vm2061 = vcmp.ne.s32.totalorder %v2011, 13
  %vm2062 = vcmp.ne.s32.totalorder %v2012, 13
  %vm2063 = vcmp.ne.s32.totalorder %v2013, 13
  %vm2064 = vcmp.ne.s32.totalorder %v2014, 13
  %vm2065 = vcmp.ne.s32.totalorder %v2015, 13
  %vm2066 = vcmp.ne.s32.totalorder %v2016, 13
  %vm2067 = vcmp.ne.s32.totalorder %v2017, 13
  %vm2068 = vcmp.ne.s32.totalorder %v2018, 13
  %vm2069 = vcmp.ne.s32.totalorder %v2019, 13
  %vm2070 = vcmp.ne.s32.totalorder %v2020, 13
  %vm2071 = vcmp.ne.s32.totalorder %v2021, 13
  %vm2072 = vcmp.ne.s32.totalorder %v2022, 13
  %vm2073 = vcmp.ne.s32.totalorder %v2023, 13
  %vm2074 = vcmp.ne.s32.totalorder %v2024, 13
  %vm2075 = vcmp.ne.s32.totalorder %v2025, 13
  %vm2076 = vcmp.ne.s32.totalorder %v2026, 13
  %vm2077 = vcmp.ne.s32.totalorder %v2027, 13
  %vm2078 = vcmp.ne.s32.totalorder %v2028, 13
  %vm2079 = vcmp.ne.s32.totalorder %v2029, 13
  %v2080 = vld [vmem:[#allocation2] sm:$0xff]
  %v2081 = vld [vmem:[#allocation2 + $0x8] sm:$0xff]
  %v2082 = vld [vmem:[#allocation2 + $0x10] sm:$0xff]
  %v2083 = vld [vmem:[#allocation2 + $0x18] sm:$0xff]
  %v2084 = vld [vmem:[#allocation2 + $0x20] sm:$0xff]
  %v2085 = vld [vmem:[#allocation2 + $0x28] sm:$0xff]
  %v2086 = vld [vmem:[#allocation2 + $0x30] sm:$0xff]
  %v2087 = vld [vmem:[#allocation2 + $0x38] sm:$0xff]
  %v2088 = vld [vmem:[#allocation2 + $0x40] sm:$0xff]
  %v2089 = vld [vmem:[#allocation2 + $0x48] sm:$0xff]
  %v2090 = vld [vmem:[#allocation2 + $0x50] sm:$0xff]
  %v2091 = vld [vmem:[#allocation2 + $0x58] sm:$0xff]
  %v2092 = vld [vmem:[#allocation2 + $0x60] sm:$0xff]
  %v2093 = vld [vmem:[#allocation2 + $0x68] sm:$0xff]
  %v2094 = vld [vmem:[#allocation2 + $0x70] sm:$0xff]
  %v2095 = vld [vmem:[#allocation2 + $0x78] sm:$0xff]
  %v2096 = vld [vmem:[#allocation2 + $0x80] sm:$0xff]
  %v2097 = vld [vmem:[#allocation2 + $0x88] sm:$0xff]
  %v2098 = vld [vmem:[#allocation2 + $0x90] sm:$0xff]
  %v2099 = vld [vmem:[#allocation2 + $0x98] sm:$0xff]
  %v2100 = vld [vmem:[#allocation2 + $0xa0] sm:$0xff]
  %v2101 = vld [vmem:[#allocation2 + $0xa8] sm:$0xff]
  %v2102 = vld [vmem:[#allocation2 + $0xb0] sm:$0xff]
  %v2103 = vld [vmem:[#allocation2 + $0xb8] sm:$0xff]
  %v2104 = vld [vmem:[#allocation2 + $0xc0] sm:$0x77]
  %v2105 = vld [vmem:[%s4] sm:$0xff]
  %v2106 = vld [vmem:[%s4 + $0x8] sm:$0xff]
  %v2107 = vld [vmem:[%s4 + $0x10] sm:$0xff]
  %v2108 = vld [vmem:[%s4 + $0x18] sm:$0xff]
  %v2109 = vld [vmem:[%s4 + $0x20] sm:$0xff]
  %v2110 = vld [vmem:[%s4 + $0x28] sm:$0xff]
  %v2111 = vld [vmem:[%s4 + $0x30] sm:$0xff]
  %v2112 = vld [vmem:[%s4 + $0x38] sm:$0xff]
  %v2113 = vld [vmem:[%s4 + $0x40] sm:$0xff]
  %v2114 = vld [vmem:[%s4 + $0x48] sm:$0xff]
  %v2115 = vld [vmem:[%s4 + $0x50] sm:$0xff]
  %v2116 = vld [vmem:[%s4 + $0x58] sm:$0xff]
  %v2117 = vld [vmem:[%s4 + $0x60] sm:$0xff]
  %v2118 = vld [vmem:[%s4 + $0x68] sm:$0xff]
  %v2119 = vld [vmem:[%s4 + $0x70] sm:$0xff]
  %v2120 = vld [vmem:[%s4 + $0x78] sm:$0xff]
  %v2121 = vld [vmem:[%s4 + $0x80] sm:$0xff]
  %v2122 = vld [vmem:[%s4 + $0x88] sm:$0xff]
  %v2123 = vld [vmem:[%s4 + $0x90] sm:$0xff]
  %v2124 = vld [vmem:[%s4 + $0x98] sm:$0xff]
  %v2125 = vld [vmem:[#allocation2 + $0x8] sm:$0x88]
  %v2126 = vld [vmem:[#allocation2 + $0xc0] sm:$0xff]
  %v2127 = vld [vmem:[#allocation2 + $0xc8] sm:$0xff]
  %v2128 = vld [vmem:[#allocation2 + $0xd0] sm:$0x33]
  %s2129 = scalar_lea.vmem %s4, 480
  %v2130 = vld [vmem:[%s2129] sm:$0xff]
  %v2131 = vld [vmem:[%s2129 + $0x8] sm:$0xff]
  %v2132 = vld [vmem:[%s2129 + $0x10] sm:$0xff]
  %v2133 = vld [vmem:[%s2129 + $0x18] sm:$0xff]
  %v2134 = vld [vmem:[%s2129 + $0x20] sm:$0xff]
  %v2135 = vld [vmem:[%s2129 + $0x28] sm:$0xff]
  %v2136 = vld [vmem:[%s2129 + $0x30] sm:$0xff]
  %v2137 = vld [vmem:[%s2129 + $0x38] sm:$0xff]
  %v2138 = vld [vmem:[%s2129 + $0x40] sm:$0xff]
  %v2139 = vld [vmem:[%s2129 + $0x48] sm:$0xff]
  %v2140 = vld [vmem:[%s2129 + $0x50] sm:$0xff]
  %v2141 = vld [vmem:[%s2129 + $0x58] sm:$0xff]
  %v2142 = vld [vmem:[%s2129 + $0x60] sm:$0xff]
  %v2143 = vld [vmem:[%s2129 + $0x68] sm:$0xff]
  %v2144 = vld [vmem:[%s2129 + $0x70] sm:$0xff]
  %v2145 = vld [vmem:[%s2129 + $0x78] sm:$0xff]
  %v2146 = vld [vmem:[%s2129 + $0x80] sm:$0xff]
  %v2147 = vld [vmem:[%s2129 + $0x88] sm:$0xff]
  %v2148 = vld [vmem:[%s2129 + $0x90] sm:$0xff]
  %v2149 = vld [vmem:[%s2129 + $0x98] sm:$0xff]
  %v2176 = vunpack.c.l.b16 %v2125
  %v2177 = vunpack.c.h.b16 %v2125
  %v2178 = vunpack.c.l.b16 %v2082
  %v2179 = vunpack.c.h.b16 %v2082
  %v2180 = vunpack.c.l.b16 %v2083
  %v2181 = vunpack.c.h.b16 %v2083
  %v2182 = vunpack.c.l.b16 %v2084
  %v2183 = vunpack.c.h.b16 %v2084
  %v2184 = vunpack.c.l.b16 %v2085
  %v2185 = vunpack.c.h.b16 %v2085
  %v2186 = vunpack.c.l.b16 %v2086
  %v2187 = vunpack.c.h.b16 %v2086
  %v2188 = vunpack.c.l.b16 %v2087
  %v2189 = vunpack.c.h.b16 %v2087
  %v2190 = vunpack.c.l.b16 %v2088
  %v2191 = vunpack.c.h.b16 %v2088
  %v2192 = vunpack.c.l.b16 %v2089
  %v2193 = vunpack.c.h.b16 %v2089
  %v2194 = vunpack.c.l.b16 %v2090
  %v2195 = vunpack.c.h.b16 %v2090
  %v2196 = vunpack.c.l.b16 %v2091
  %v2197 = vunpack.c.h.b16 %v2091
  %v2198 = vunpack.c.l.b16 %v2092
  %v2199 = vunpack.c.h.b16 %v2092
  %v2200 = vunpack.c.l.b16 %v2093
  %v2201 = vunpack.c.h.b16 %v2093
  %v2202 = vunpack.c.l.b16 %v2094
  %v2203 = vunpack.c.h.b16 %v2094
  %v2204 = vunpack.c.l.b16 %v2095
  %v2205 = vunpack.c.h.b16 %v2095
  %v2206 = vunpack.c.l.b16 %v2096
  %v2207 = vunpack.c.h.b16 %v2096
  %v2208 = vunpack.c.l.b16 %v2097
  %v2209 = vunpack.c.h.b16 %v2097
  %v2210 = vunpack.c.l.b16 %v2098
  %v2211 = vunpack.c.h.b16 %v2098
  %v2212 = vunpack.c.l.b16 %v2099
  %v2213 = vunpack.c.h.b16 %v2099
  %v2214 = vunpack.c.l.b16 %v2100
  %v2215 = vunpack.c.h.b16 %v2100
  %v2216 = vunpack.c.l.b16 %v2101
  %v2217 = vunpack.c.h.b16 %v2101
  %v2218 = vunpack.c.l.b16 %v2102
  %v2219 = vunpack.c.h.b16 %v2102
  %v2220 = vunpack.c.l.b16 %v2103
  %v2221 = vunpack.c.h.b16 %v2103
  %v2222 = vunpack.c.l.b16 %v2126
  %v2223 = vunpack.c.h.b16 %v2126
  %v2224 = vunpack.c.l.b16 %v2127
  %v2225 = vunpack.c.h.b16 %v2127
  %v2226 = vunpack.c.l.b16 %v2128
  %v2227 = vunpack.c.h.b16 %v2128
  %v2228 = vpack.c.b16 %v2178, %v2176
  %v2229 = vpack.c.b16 %v2179, %v2177
  %v2230 = vpack.c.b16 %v2182, %v2180
  %v2231 = vpack.c.b16 %v2183, %v2181
  %v2232 = vpack.c.b16 %v2186, %v2184
  %v2233 = vpack.c.b16 %v2187, %v2185
  %v2234 = vpack.c.b16 %v2190, %v2188
  %v2235 = vpack.c.b16 %v2191, %v2189
  %v2236 = vpack.c.b16 %v2194, %v2192
  %v2237 = vpack.c.b16 %v2195, %v2193
  %v2238 = vpack.c.b16 %v2198, %v2196
  %v2239 = vpack.c.b16 %v2199, %v2197
  %v2240 = vpack.c.b16 %v2202, %v2200
  %v2241 = vpack.c.b16 %v2203, %v2201
  %v2242 = vpack.c.b16 %v2206, %v2204
  %v2243 = vpack.c.b16 %v2207, %v2205
  %v2244 = vpack.c.b16 %v2210, %v2208
  %v2245 = vpack.c.b16 %v2211, %v2209
  %v2246 = vpack.c.b16 %v2214, %v2212
  %v2247 = vpack.c.b16 %v2215, %v2213
  %v2248 = vpack.c.b16 %v2218, %v2216
  %v2249 = vpack.c.b16 %v2219, %v2217
  %v2250 = vpack.c.b16 %v2222, %v2220
  %v2251 = vpack.c.b16 %v2223, %v2221
  %v2252 = vpack.c.b16 %v2226, %v2224
  %v2253 = vpack.c.b16 %v2227, %v2225
  %vm2254 = vsmask.f32 4352
  %v2256 = vshrl.u32 %v2228, 16
  %v2258 = vrot.slane %v2256, 3
  %v2259 = vshll.u32 %v2228, 16
  %v2261 = vrot.slane %v2259, 4
  %v2262 = vor.u32 %v2258, %v2261
  %v2264 = vshrl.u32 %v2230, 16
  %v2266 = vrot.slane %v2264, 3
  %v2267 = vshll.u32 %v2230, 16
  %v2269 = vrot.slane %v2267, 4
  %v2270 = vor.u32 %v2266, %v2269
  %v2271 = vsel %vm2254, %v2262, %v2270
  %v2273 = vshrl.u32 %v2229, 16
  %v2275 = vrot.slane %v2273, 3
  %v2276 = vshll.u32 %v2229, 16
  %v2278 = vrot.slane %v2276, 4
  %v2279 = vor.u32 %v2275, %v2278
  %v2281 = vshrl.u32 %v2231, 16
  %v2283 = vrot.slane %v2281, 3
  %v2284 = vshll.u32 %v2231, 16
  %v2286 = vrot.slane %v2284, 4
  %v2287 = vor.u32 %v2283, %v2286
  %v2288 = vsel %vm2254, %v2279, %v2287
  %v2290 = vshrl.u32 %v2232, 16
  %v2292 = vrot.slane %v2290, 3
  %v2293 = vshll.u32 %v2232, 16
  %v2295 = vrot.slane %v2293, 4
  %v2296 = vor.u32 %v2292, %v2295
  %v2297 = vsel %vm2254, %v2270, %v2296
  %v2299 = vshrl.u32 %v2233, 16
  %v2301 = vrot.slane %v2299, 3
  %v2302 = vshll.u32 %v2233, 16
  %v2304 = vrot.slane %v2302, 4
  %v2305 = vor.u32 %v2301, %v2304
  %v2306 = vsel %vm2254, %v2287, %v2305
  %v2308 = vshrl.u32 %v2234, 16
  %v2310 = vrot.slane %v2308, 3
  %v2311 = vshll.u32 %v2234, 16
  %v2313 = vrot.slane %v2311, 4
  %v2314 = vor.u32 %v2310, %v2313
  %v2315 = vsel %vm2254, %v2296, %v2314
  %v2317 = vshrl.u32 %v2235, 16
  %v2319 = vrot.slane %v2317, 3
  %v2320 = vshll.u32 %v2235, 16
  %v2322 = vrot.slane %v2320, 4
  %v2323 = vor.u32 %v2319, %v2322
  %v2324 = vsel %vm2254, %v2305, %v2323
  %v2326 = vshrl.u32 %v2236, 16
  %v2328 = vrot.slane %v2326, 3
  %v2329 = vshll.u32 %v2236, 16
  %v2331 = vrot.slane %v2329, 4
  %v2332 = vor.u32 %v2328, %v2331
  %v2333 = vsel %vm2254, %v2314, %v2332
  %v2335 = vshrl.u32 %v2237, 16
  %v2337 = vrot.slane %v2335, 3
  %v2338 = vshll.u32 %v2237, 16
  %v2340 = vrot.slane %v2338, 4
  %v2341 = vor.u32 %v2337, %v2340
  %v2342 = vsel %vm2254, %v2323, %v2341
  %v2344 = vshrl.u32 %v2238, 16
  %v2346 = vrot.slane %v2344, 3
  %v2347 = vshll.u32 %v2238, 16
  %v2349 = vrot.slane %v2347, 4
  %v2350 = vor.u32 %v2346, %v2349
  %v2351 = vsel %vm2254, %v2332, %v2350
  %v2353 = vshrl.u32 %v2239, 16
  %v2355 = vrot.slane %v2353, 3
  %v2356 = vshll.u32 %v2239, 16
  %v2358 = vrot.slane %v2356, 4
  %v2359 = vor.u32 %v2355, %v2358
  %v2360 = vsel %vm2254, %v2341, %v2359
  %v2362 = vshrl.u32 %v2240, 16
  %v2364 = vrot.slane %v2362, 3
  %v2365 = vshll.u32 %v2240, 16
  %v2367 = vrot.slane %v2365, 4
  %v2368 = vor.u32 %v2364, %v2367
  %v2369 = vsel %vm2254, %v2350, %v2368
  %v2371 = vshrl.u32 %v2241, 16
  %v2373 = vrot.slane %v2371, 3
  %v2374 = vshll.u32 %v2241, 16
  %v2376 = vrot.slane %v2374, 4
  %v2377 = vor.u32 %v2373, %v2376
  %v2378 = vsel %vm2254, %v2359, %v2377
  %v2380 = vshrl.u32 %v2242, 16
  %v2382 = vrot.slane %v2380, 3
  %v2383 = vshll.u32 %v2242, 16
  %v2385 = vrot.slane %v2383, 4
  %v2386 = vor.u32 %v2382, %v2385
  %v2387 = vsel %vm2254, %v2368, %v2386
  %v2389 = vshrl.u32 %v2243, 16
  %v2391 = vrot.slane %v2389, 3
  %v2392 = vshll.u32 %v2243, 16
  %v2394 = vrot.slane %v2392, 4
  %v2395 = vor.u32 %v2391, %v2394
  %v2396 = vsel %vm2254, %v2377, %v2395
  %v2398 = vshrl.u32 %v2244, 16
  %v2400 = vrot.slane %v2398, 3
  %v2401 = vshll.u32 %v2244, 16
  %v2403 = vrot.slane %v2401, 4
  %v2404 = vor.u32 %v2400, %v2403
  %v2405 = vsel %vm2254, %v2386, %v2404
  %v2407 = vshrl.u32 %v2245, 16
  %v2409 = vrot.slane %v2407, 3
  %v2410 = vshll.u32 %v2245, 16
  %v2412 = vrot.slane %v2410, 4
  %v2413 = vor.u32 %v2409, %v2412
  %v2414 = vsel %vm2254, %v2395, %v2413
  %v2416 = vshrl.u32 %v2246, 16
  %v2418 = vrot.slane %v2416, 3
  %v2419 = vshll.u32 %v2246, 16
  %v2421 = vrot.slane %v2419, 4
  %v2422 = vor.u32 %v2418, %v2421
  %v2423 = vsel %vm2254, %v2404, %v2422
  %v2425 = vshrl.u32 %v2247, 16
  %v2427 = vrot.slane %v2425, 3
  %v2428 = vshll.u32 %v2247, 16
  %v2430 = vrot.slane %v2428, 4
  %v2431 = vor.u32 %v2427, %v2430
  %v2432 = vsel %vm2254, %v2413, %v2431
  %v2434 = vshrl.u32 %v2248, 16
  %v2436 = vrot.slane %v2434, 3
  %v2437 = vshll.u32 %v2248, 16
  %v2439 = vrot.slane %v2437, 4
  %v2440 = vor.u32 %v2436, %v2439
  %v2441 = vsel %vm2254, %v2422, %v2440
  %v2443 = vshrl.u32 %v2249, 16
  %v2445 = vrot.slane %v2443, 3
  %v2446 = vshll.u32 %v2249, 16
  %v2448 = vrot.slane %v2446, 4
  %v2449 = vor.u32 %v2445, %v2448
  %v2450 = vsel %vm2254, %v2431, %v2449
  %v2452 = vshrl.u32 %v2250, 16
  %v2454 = vrot.slane %v2452, 3
  %v2455 = vshll.u32 %v2250, 16
  %v2457 = vrot.slane %v2455, 4
  %v2458 = vor.u32 %v2454, %v2457
  %v2459 = vsel %vm2254, %v2440, %v2458
  %v2461 = vshrl.u32 %v2251, 16
  %v2463 = vrot.slane %v2461, 3
  %v2464 = vshll.u32 %v2251, 16
  %v2466 = vrot.slane %v2464, 4
  %v2467 = vor.u32 %v2463, %v2466
  %v2468 = vsel %vm2254, %v2449, %v2467
  %v2470 = vshrl.u32 %v2252, 16
  %v2472 = vrot.slane %v2470, 3
  %v2473 = vshll.u32 %v2252, 16
  %v2475 = vrot.slane %v2473, 4
  %v2476 = vor.u32 %v2472, %v2475
  %v2477 = vsel %vm2254, %v2458, %v2476
  %v2479 = vshrl.u32 %v2253, 16
  %v2481 = vrot.slane %v2479, 3
  %v2482 = vshll.u32 %v2253, 16
  %v2484 = vrot.slane %v2482, 4
  %v2485 = vor.u32 %v2481, %v2484
  %v2486 = vsel %vm2254, %v2467, %v2485
  %v2520 = vunpack.c.l.b16 %v2130
  %v2521 = vunpack.c.h.b16 %v2130
  %v2522 = vunpack.c.l.b16 %v2131
  %v2523 = vunpack.c.h.b16 %v2131
  %v2524 = vunpack.c.l.b16 %v2132
  %v2525 = vunpack.c.h.b16 %v2132
  %v2526 = vunpack.c.l.b16 %v2133
  %v2527 = vunpack.c.h.b16 %v2133
  %v2528 = vunpack.c.l.b16 %v2134
  %v2529 = vunpack.c.h.b16 %v2134
  %v2530 = vunpack.c.l.b16 %v2135
  %v2531 = vunpack.c.h.b16 %v2135
  %v2532 = vunpack.c.l.b16 %v2136
  %v2533 = vunpack.c.h.b16 %v2136
  %v2534 = vunpack.c.l.b16 %v2137
  %v2535 = vunpack.c.h.b16 %v2137
  %v2536 = vunpack.c.l.b16 %v2138
  %v2537 = vunpack.c.h.b16 %v2138
  %v2538 = vunpack.c.l.b16 %v2139
  %v2539 = vunpack.c.h.b16 %v2139
  %v2540 = vunpack.c.l.b16 %v2140
  %v2541 = vunpack.c.h.b16 %v2140
  %v2542 = vunpack.c.l.b16 %v2141
  %v2543 = vunpack.c.h.b16 %v2141
  %v2544 = vunpack.c.l.b16 %v2142
  %v2545 = vunpack.c.h.b16 %v2142
  %v2546 = vunpack.c.l.b16 %v2143
  %v2547 = vunpack.c.h.b16 %v2143
  %v2548 = vunpack.c.l.b16 %v2144
  %v2549 = vunpack.c.h.b16 %v2144
  %v2550 = vunpack.c.l.b16 %v2145
  %v2551 = vunpack.c.h.b16 %v2145
  %v2552 = vunpack.c.l.b16 %v2146
  %v2553 = vunpack.c.h.b16 %v2146
  %v2554 = vunpack.c.l.b16 %v2147
  %v2555 = vunpack.c.h.b16 %v2147
  %v2556 = vunpack.c.l.b16 %v2148
  %v2557 = vunpack.c.h.b16 %v2148
  %v2558 = vunpack.c.l.b16 %v2149
  %v2559 = vunpack.c.h.b16 %v2149
  %v2560 = vpack.c.b16 %v2522, %v2520
  %v2561 = vpack.c.b16 %v2523, %v2521
  %v2562 = vpack.c.b16 %v2526, %v2524
  %v2563 = vpack.c.b16 %v2527, %v2525
  %v2564 = vpack.c.b16 %v2530, %v2528
  %v2565 = vpack.c.b16 %v2531, %v2529
  %v2566 = vpack.c.b16 %v2534, %v2532
  %v2567 = vpack.c.b16 %v2535, %v2533
  %v2568 = vpack.c.b16 %v2538, %v2536
  %v2569 = vpack.c.b16 %v2539, %v2537
  %v2570 = vpack.c.b16 %v2542, %v2540
  %v2571 = vpack.c.b16 %v2543, %v2541
  %v2572 = vpack.c.b16 %v2546, %v2544
  %v2573 = vpack.c.b16 %v2547, %v2545
  %v2574 = vpack.c.b16 %v2550, %v2548
  %v2575 = vpack.c.b16 %v2551, %v2549
  %v2576 = vpack.c.b16 %v2554, %v2552
  %v2577 = vpack.c.b16 %v2555, %v2553
  %v2578 = vpack.c.b16 %v2558, %v2556
  %v2579 = vpack.c.b16 %v2559, %v2557
  %v2601 = vsel %vm255, %v2288, 0
  %v2604 = vsel %vm255, %v2306, 0
  %v2607 = vsel %vm255, %v2324, 0
  %v2610 = vsel %vm255, %v2342, 0
  %v2613 = vsel %vm255, %v2360, 0
  %v2616 = vsel %vm255, %v2378, 0
  %v2619 = vsel %vm255, %v2396, 0
  %v2622 = vsel %vm255, %v2414, 0
  %v2625 = vsel %vm255, %v2432, 0
  %v2628 = vsel %vm255, %v2450, 0
  %v2631 = vsel %vm255, %v2468, 0
  %v2634 = vsel %vm255, %v2486, 0
  %v2637 = vsel %vm255, %v2485, 0
  %2639 = vmatpush.bf16.msra.mxu0 %v2574
  %2640 = vmatpush.bf16.msra.mxu0 %v2572
  %2641 = vmatpush.bf16.msra.mxu0 %v2570
  %2642 = vmatpush.bf16.msra.mxu0 %v2568
  %2643 = vmatpush.bf16.msra.mxu0 %v2566
  %2644 = vmatpush.bf16.msra.mxu0 %v2564
  %2645 = vmatpush.bf16.msra.mxu0 %v2562
  %2646 = vmatpush.bf16.msra.mxu0 %v2560
  %2647 = vmatmul.bf16.gmra.mxu0 %v2271
  %v2648 = vpop.f32.mrf.mxu0
  %v2649 = vadd.f32 0.0, %v2648
  %v2650 = vpop.f32.mrf.mxu0
  %v2651 = vadd.f32 0.0, %v2650
  %2652 = vmatmul.bf16.gmra.mxu0 %v2297
  %v2653 = vpop.f32.mrf.mxu0
  %v2654 = vadd.f32 0.0, %v2653
  %v2655 = vpop.f32.mrf.mxu0
  %v2656 = vadd.f32 0.0, %v2655
  %2657 = vmatmul.bf16.gmra.mxu0 %v2315
  %v2658 = vpop.f32.mrf.mxu0
  %v2659 = vadd.f32 0.0, %v2658
  %v2660 = vpop.f32.mrf.mxu0
  %v2661 = vadd.f32 0.0, %v2660
  %2662 = vmatmul.bf16.gmra.mxu0 %v2333
  %v2663 = vpop.f32.mrf.mxu0
  %v2664 = vadd.f32 0.0, %v2663
  %v2665 = vpop.f32.mrf.mxu0
  %v2666 = vadd.f32 0.0, %v2665
  %2667 = vmatmul.bf16.gmra.mxu0 %v2351
  %v2668 = vpop.f32.mrf.mxu0
  %v2669 = vadd.f32 0.0, %v2668
  %v2670 = vpop.f32.mrf.mxu0
  %v2671 = vadd.f32 0.0, %v2670
  %2672 = vmatmul.bf16.gmra.mxu0 %v2369
  %v2673 = vpop.f32.mrf.mxu0
  %v2674 = vadd.f32 0.0, %v2673
  %v2675 = vpop.f32.mrf.mxu0
  %v2676 = vadd.f32 0.0, %v2675
  %2677 = vmatmul.bf16.gmra.mxu0 %v2387
  %v2678 = vpop.f32.mrf.mxu0
  %v2679 = vadd.f32 0.0, %v2678
  %v2680 = vpop.f32.mrf.mxu0
  %v2681 = vadd.f32 0.0, %v2680
  %2682 = vmatmul.bf16.gmra.mxu0 %v2405
  %v2683 = vpop.f32.mrf.mxu0
  %v2684 = vadd.f32 0.0, %v2683
  %v2685 = vpop.f32.mrf.mxu0
  %v2686 = vadd.f32 0.0, %v2685
  %2687 = vmatmul.bf16.gmra.mxu0 %v2423
  %v2688 = vpop.f32.mrf.mxu0
  %v2689 = vadd.f32 0.0, %v2688
  %v2690 = vpop.f32.mrf.mxu0
  %v2691 = vadd.f32 0.0, %v2690
  %2692 = vmatmul.bf16.gmra.mxu0 %v2441
  %v2693 = vpop.f32.mrf.mxu0
  %v2694 = vadd.f32 0.0, %v2693
  %v2695 = vpop.f32.mrf.mxu0
  %v2696 = vadd.f32 0.0, %v2695
  %2697 = vmatmul.bf16.gmra.mxu0 %v2459
  %v2698 = vpop.f32.mrf.mxu0
  %v2699 = vadd.f32 0.0, %v2698
  %v2700 = vpop.f32.mrf.mxu0
  %v2701 = vadd.f32 0.0, %v2700
  %2702 = vmatmul.bf16.gmra.mxu0 %v2477
  %v2703 = vpop.f32.mrf.mxu0
  %v2704 = vadd.f32 0.0, %v2703
  %v2705 = vpop.f32.mrf.mxu0
  %v2706 = vadd.f32 0.0, %v2705
  %2707 = vmatmul.bf16.gmra.mxu0 %v2476
  %v2708 = vpop.f32.mrf.mxu0
  %v2709 = vadd.f32 0.0, %v2708
  %v2710 = vpop.f32.mrf.mxu0
  %2711 = vdwg.mxu0
  %2712 = vmatpush.bf16.msra.mxu0 0
  %2713 = vmatpush.bf16.msra.mxu0 0
  %2714 = vmatpush.bf16.msra.mxu0 0
  %2715 = vmatpush.bf16.msra.mxu0 0
  %2716 = vmatpush.bf16.msra.mxu0 0
  %2717 = vmatpush.bf16.msra.mxu0 0
  %2718 = vmatpush.bf16.msra.mxu0 %v2578
  %2719 = vmatpush.bf16.msra.mxu0 %v2576
  %2720 = vmatmul.bf16.gmra.mxu0 %v2601
  %v2721 = vpop.f32.mrf.mxu0
  %v2722 = vadd.f32 %v2649, %v2721
  %v2723 = vpop.f32.mrf.mxu0
  %v2724 = vadd.f32 %v2651, %v2723
  %2725 = vmatmul.bf16.gmra.mxu0 %v2604
  %v2726 = vpop.f32.mrf.mxu0
  %v2727 = vadd.f32 %v2654, %v2726
  %v2728 = vpop.f32.mrf.mxu0
  %v2729 = vadd.f32 %v2656, %v2728
  %2730 = vmatmul.bf16.gmra.mxu0 %v2607
  %v2731 = vpop.f32.mrf.mxu0
  %v2732 = vadd.f32 %v2659, %v2731
  %v2733 = vpop.f32.mrf.mxu0
  %v2734 = vadd.f32 %v2661, %v2733
  %2735 = vmatmul.bf16.gmra.mxu0 %v2610
  %v2736 = vpop.f32.mrf.mxu0
  %v2737 = vadd.f32 %v2664, %v2736
  %v2738 = vpop.f32.mrf.mxu0
  %v2739 = vadd.f32 %v2666, %v2738
  %2740 = vmatmul.bf16.gmra.mxu0 %v2613
  %v2741 = vpop.f32.mrf.mxu0
  %v2742 = vadd.f32 %v2669, %v2741
  %v2743 = vpop.f32.mrf.mxu0
  %v2744 = vadd.f32 %v2671, %v2743
  %2745 = vmatmul.bf16.gmra.mxu0 %v2616
  %v2746 = vpop.f32.mrf.mxu0
  %v2747 = vadd.f32 %v2674, %v2746
  %v2748 = vpop.f32.mrf.mxu0
  %v2749 = vadd.f32 %v2676, %v2748
  %2750 = vmatmul.bf16.gmra.mxu0 %v2619
  %v2751 = vpop.f32.mrf.mxu0
  %v2752 = vadd.f32 %v2679, %v2751
  %v2753 = vpop.f32.mrf.mxu0
  %v2754 = vadd.f32 %v2681, %v2753
  %2755 = vmatmul.bf16.gmra.mxu0 %v2622
  %v2756 = vpop.f32.mrf.mxu0
  %v2757 = vadd.f32 %v2684, %v2756
  %v2758 = vpop.f32.mrf.mxu0
  %v2759 = vadd.f32 %v2686, %v2758
  %2760 = vmatmul.bf16.gmra.mxu0 %v2625
  %v2761 = vpop.f32.mrf.mxu0
  %v2762 = vadd.f32 %v2689, %v2761
  %v2763 = vpop.f32.mrf.mxu0
  %v2764 = vadd.f32 %v2691, %v2763
  %2765 = vmatmul.bf16.gmra.mxu0 %v2628
  %v2766 = vpop.f32.mrf.mxu0
  %v2767 = vadd.f32 %v2694, %v2766
  %v2768 = vpop.f32.mrf.mxu0
  %v2769 = vadd.f32 %v2696, %v2768
  %2770 = vmatmul.bf16.gmra.mxu0 %v2631
  %v2771 = vpop.f32.mrf.mxu0
  %v2772 = vadd.f32 %v2699, %v2771
  %v2773 = vpop.f32.mrf.mxu0
  %v2774 = vadd.f32 %v2701, %v2773
  %2775 = vmatmul.bf16.gmra.mxu0 %v2634
  %v2776 = vpop.f32.mrf.mxu0
  %v2777 = vadd.f32 %v2704, %v2776
  %v2778 = vpop.f32.mrf.mxu0
  %v2779 = vadd.f32 %v2706, %v2778
  %2780 = vmatmul.bf16.gmra.mxu0 %v2637
  %v2781 = vpop.f32.mrf.mxu0
  %v2782 = vadd.f32 %v2709, %v2781
  %v2783 = vpop.f32.mrf.mxu0
  %2784 = vdwg.mxu0
  %2785 = vmatpush.bf16.msra.mxu0 %v2575
  %2786 = vmatpush.bf16.msra.mxu0 %v2573
  %2787 = vmatpush.bf16.msra.mxu0 %v2571
  %2788 = vmatpush.bf16.msra.mxu0 %v2569
  %2789 = vmatpush.bf16.msra.mxu0 %v2567
  %2790 = vmatpush.bf16.msra.mxu0 %v2565
  %2791 = vmatpush.bf16.msra.mxu0 %v2563
  %2792 = vmatpush.bf16.msra.mxu0 %v2561
  %2793 = vmatmul.bf16.gmra.mxu0 %v2271
  %v2794 = vpop.f32.mrf.mxu0
  %v2795 = vadd.f32 0.0, %v2794
  %v2796 = vpop.f32.mrf.mxu0
  %v2797 = vadd.f32 0.0, %v2796
  %2798 = vmatmul.bf16.gmra.mxu0 %v2297
  %v2799 = vpop.f32.mrf.mxu0
  %v2800 = vadd.f32 0.0, %v2799
  %v2801 = vpop.f32.mrf.mxu0
  %v2802 = vadd.f32 0.0, %v2801
  %2803 = vmatmul.bf16.gmra.mxu0 %v2315
  %v2804 = vpop.f32.mrf.mxu0
  %v2805 = vadd.f32 0.0, %v2804
  %v2806 = vpop.f32.mrf.mxu0
  %v2807 = vadd.f32 0.0, %v2806
  %2808 = vmatmul.bf16.gmra.mxu0 %v2333
  %v2809 = vpop.f32.mrf.mxu0
  %v2810 = vadd.f32 0.0, %v2809
  %v2811 = vpop.f32.mrf.mxu0
  %v2812 = vadd.f32 0.0, %v2811
  %2813 = vmatmul.bf16.gmra.mxu0 %v2351
  %v2814 = vpop.f32.mrf.mxu0
  %v2815 = vadd.f32 0.0, %v2814
  %v2816 = vpop.f32.mrf.mxu0
  %v2817 = vadd.f32 0.0, %v2816
  %2818 = vmatmul.bf16.gmra.mxu0 %v2369
  %v2819 = vpop.f32.mrf.mxu0
  %v2820 = vadd.f32 0.0, %v2819
  %v2821 = vpop.f32.mrf.mxu0
  %v2822 = vadd.f32 0.0, %v2821
  %2823 = vmatmul.bf16.gmra.mxu0 %v2387
  %v2824 = vpop.f32.mrf.mxu0
  %v2825 = vadd.f32 0.0, %v2824
  %v2826 = vpop.f32.mrf.mxu0
  %v2827 = vadd.f32 0.0, %v2826
  %2828 = vmatmul.bf16.gmra.mxu0 %v2405
  %v2829 = vpop.f32.mrf.mxu0
  %v2830 = vadd.f32 0.0, %v2829
  %v2831 = vpop.f32.mrf.mxu0
  %v2832 = vadd.f32 0.0, %v2831
  %2833 = vmatmul.bf16.gmra.mxu0 %v2423
  %v2834 = vpop.f32.mrf.mxu0
  %v2835 = vadd.f32 0.0, %v2834
  %v2836 = vpop.f32.mrf.mxu0
  %v2837 = vadd.f32 0.0, %v2836
  %2838 = vmatmul.bf16.gmra.mxu0 %v2441
  %v2839 = vpop.f32.mrf.mxu0
  %v2840 = vadd.f32 0.0, %v2839
  %v2841 = vpop.f32.mrf.mxu0
  %v2842 = vadd.f32 0.0, %v2841
  %2843 = vmatmul.bf16.gmra.mxu0 %v2459
  %v2844 = vpop.f32.mrf.mxu0
  %v2845 = vadd.f32 0.0, %v2844
  %v2846 = vpop.f32.mrf.mxu0
  %v2847 = vadd.f32 0.0, %v2846
  %2848 = vmatmul.bf16.gmra.mxu0 %v2477
  %v2849 = vpop.f32.mrf.mxu0
  %v2850 = vadd.f32 0.0, %v2849
  %v2851 = vpop.f32.mrf.mxu0
  %v2852 = vadd.f32 0.0, %v2851
  %2853 = vmatmul.bf16.gmra.mxu0 %v2476
  %v2854 = vpop.f32.mrf.mxu0
  %v2855 = vadd.f32 0.0, %v2854
  %v2856 = vpop.f32.mrf.mxu0
  %2857 = vdwg.mxu0
  %2858 = vmatpush.bf16.msra.mxu0 0
  %2859 = vmatpush.bf16.msra.mxu0 0
  %2860 = vmatpush.bf16.msra.mxu0 0
  %2861 = vmatpush.bf16.msra.mxu0 0
  %2862 = vmatpush.bf16.msra.mxu0 0
  %2863 = vmatpush.bf16.msra.mxu0 0
  %2864 = vmatpush.bf16.msra.mxu0 %v2579
  %2865 = vmatpush.bf16.msra.mxu0 %v2577
  %2866 = vmatmul.bf16.gmra.mxu0 %v2601
  %v2867 = vpop.f32.mrf.mxu0
  %v2868 = vadd.f32 %v2795, %v2867
  %v2869 = vpop.f32.mrf.mxu0
  %v2870 = vadd.f32 %v2797, %v2869
  %2871 = vmatmul.bf16.gmra.mxu0 %v2604
  %v2872 = vpop.f32.mrf.mxu0
  %v2873 = vadd.f32 %v2800, %v2872
  %v2874 = vpop.f32.mrf.mxu0
  %v2875 = vadd.f32 %v2802, %v2874
  %2876 = vmatmul.bf16.gmra.mxu0 %v2607
  %v2877 = vpop.f32.mrf.mxu0
  %v2878 = vadd.f32 %v2805, %v2877
  %v2879 = vpop.f32.mrf.mxu0
  %v2880 = vadd.f32 %v2807, %v2879
  %2881 = vmatmul.bf16.gmra.mxu0 %v2610
  %v2882 = vpop.f32.mrf.mxu0
  %v2883 = vadd.f32 %v2810, %v2882
  %v2884 = vpop.f32.mrf.mxu0
  %v2885 = vadd.f32 %v2812, %v2884
  %2886 = vmatmul.bf16.gmra.mxu0 %v2613
  %v2887 = vpop.f32.mrf.mxu0
  %v2888 = vadd.f32 %v2815, %v2887
  %v2889 = vpop.f32.mrf.mxu0
  %v2890 = vadd.f32 %v2817, %v2889
  %2891 = vmatmul.bf16.gmra.mxu0 %v2616
  %v2892 = vpop.f32.mrf.mxu0
  %v2893 = vadd.f32 %v2820, %v2892
  %v2894 = vpop.f32.mrf.mxu0
  %v2895 = vadd.f32 %v2822, %v2894
  %2896 = vmatmul.bf16.gmra.mxu0 %v2619
  %v2897 = vpop.f32.mrf.mxu0
  %v2898 = vadd.f32 %v2825, %v2897
  %v2899 = vpop.f32.mrf.mxu0
  %v2900 = vadd.f32 %v2827, %v2899
  %2901 = vmatmul.bf16.gmra.mxu0 %v2622
  %v2902 = vpop.f32.mrf.mxu0
  %v2903 = vadd.f32 %v2830, %v2902
  %v2904 = vpop.f32.mrf.mxu0
  %v2905 = vadd.f32 %v2832, %v2904
  %2906 = vmatmul.bf16.gmra.mxu0 %v2625
  %v2907 = vpop.f32.mrf.mxu0
  %v2908 = vadd.f32 %v2835, %v2907
  %v2909 = vpop.f32.mrf.mxu0
  %v2910 = vadd.f32 %v2837, %v2909
  %2911 = vmatmul.bf16.gmra.mxu0 %v2628
  %v2912 = vpop.f32.mrf.mxu0
  %v2913 = vadd.f32 %v2840, %v2912
  %v2914 = vpop.f32.mrf.mxu0
  %v2915 = vadd.f32 %v2842, %v2914
  %2916 = vmatmul.bf16.gmra.mxu0 %v2631
  %v2917 = vpop.f32.mrf.mxu0
  %v2918 = vadd.f32 %v2845, %v2917
  %v2919 = vpop.f32.mrf.mxu0
  %v2920 = vadd.f32 %v2847, %v2919
  %2921 = vmatmul.bf16.gmra.mxu0 %v2634
  %v2922 = vpop.f32.mrf.mxu0
  %v2923 = vadd.f32 %v2850, %v2922
  %v2924 = vpop.f32.mrf.mxu0
  %v2925 = vadd.f32 %v2852, %v2924
  %2926 = vmatmul.bf16.gmra.mxu0 %v2637
  %v2927 = vpop.f32.mrf.mxu0
  %v2928 = vadd.f32 %v2855, %v2927
  %v2929 = vpop.f32.mrf.mxu0
  %2930 = vdwg.mxu0
  %v2934 = vunpack.c.l.b16 %v2080
  %v2935 = vunpack.c.h.b16 %v2080
  %v2936 = vunpack.c.l.b16 %v2081
  %v2937 = vunpack.c.h.b16 %v2081
  %v2938 = vunpack.c.l.b16 %v2104
  %v2939 = vunpack.c.h.b16 %v2104
  %v2940 = vpack.c.b16 %v2936, %v2934
  %v2941 = vpack.c.b16 %v2937, %v2935
  %v2942 = vpack.c.b16 %v2180, %v2178
  %v2943 = vpack.c.b16 %v2181, %v2179
  %v2944 = vpack.c.b16 %v2184, %v2182
  %v2945 = vpack.c.b16 %v2185, %v2183
  %v2946 = vpack.c.b16 %v2188, %v2186
  %v2947 = vpack.c.b16 %v2189, %v2187
  %v2948 = vpack.c.b16 %v2192, %v2190
  %v2949 = vpack.c.b16 %v2193, %v2191
  %v2950 = vpack.c.b16 %v2196, %v2194
  %v2951 = vpack.c.b16 %v2197, %v2195
  %v2952 = vpack.c.b16 %v2200, %v2198
  %v2953 = vpack.c.b16 %v2201, %v2199
  %v2954 = vpack.c.b16 %v2204, %v2202
  %v2955 = vpack.c.b16 %v2205, %v2203
  %v2956 = vpack.c.b16 %v2208, %v2206
  %v2957 = vpack.c.b16 %v2209, %v2207
  %v2958 = vpack.c.b16 %v2212, %v2210
  %v2959 = vpack.c.b16 %v2213, %v2211
  %v2960 = vpack.c.b16 %v2216, %v2214
  %v2961 = vpack.c.b16 %v2217, %v2215
  %v2962 = vpack.c.b16 %v2220, %v2218
  %v2963 = vpack.c.b16 %v2221, %v2219
  %v2964 = vpack.c.b16 %v2938, %v2938
  %v2965 = vpack.c.b16 %v2939, %v2939
  %vm2966 = vsmask.f32 7424
  %v2968 = vshrl.u32 %v2940, 16
  %v2970 = vshll.u32 %v2940, 16
  %v2972 = vrot.slane %v2970, 1
  %v2973 = vor.u32 %v2968, %v2972
  %v2975 = vshll.u32 %v2942, 16
  %v2977 = vrot.slane %v2975, 1
  %v2978 = vsel %vm2966, %v2973, %v2977
  %v2980 = vshrl.u32 %v2941, 16
  %v2982 = vshll.u32 %v2941, 16
  %v2984 = vrot.slane %v2982, 1
  %v2985 = vor.u32 %v2980, %v2984
  %v2987 = vshll.u32 %v2943, 16
  %v2989 = vrot.slane %v2987, 1
  %v2990 = vsel %vm2966, %v2985, %v2989
  %v2991 = vshrl.u32 %v2942, 16
  %v2993 = vor.u32 %v2991, %v2977
  %v2995 = vshll.u32 %v2944, 16
  %v2997 = vrot.slane %v2995, 1
  %v2998 = vsel %vm2966, %v2993, %v2997
  %v2999 = vshrl.u32 %v2943, 16
  %v3001 = vor.u32 %v2999, %v2989
  %v3003 = vshll.u32 %v2945, 16
  %v3005 = vrot.slane %v3003, 1
  %v3006 = vsel %vm2966, %v3001, %v3005
  %v3007 = vshrl.u32 %v2944, 16
  %v3009 = vor.u32 %v3007, %v2997
  %v3011 = vshll.u32 %v2946, 16
  %v3013 = vrot.slane %v3011, 1
  %v3014 = vsel %vm2966, %v3009, %v3013
  %v3015 = vshrl.u32 %v2945, 16
  %v3017 = vor.u32 %v3015, %v3005
  %v3019 = vshll.u32 %v2947, 16
  %v3021 = vrot.slane %v3019, 1
  %v3022 = vsel %vm2966, %v3017, %v3021
  %v3023 = vshrl.u32 %v2946, 16
  %v3025 = vor.u32 %v3023, %v3013
  %v3027 = vshll.u32 %v2948, 16
  %v3029 = vrot.slane %v3027, 1
  %v3030 = vsel %vm2966, %v3025, %v3029
  %v3031 = vshrl.u32 %v2947, 16
  %v3033 = vor.u32 %v3031, %v3021
  %v3035 = vshll.u32 %v2949, 16
  %v3037 = vrot.slane %v3035, 1
  %v3038 = vsel %vm2966, %v3033, %v3037
  %v3039 = vshrl.u32 %v2948, 16
  %v3041 = vor.u32 %v3039, %v3029
  %v3043 = vshll.u32 %v2950, 16
  %v3045 = vrot.slane %v3043, 1
  %v3046 = vsel %vm2966, %v3041, %v3045
  %v3047 = vshrl.u32 %v2949, 16
  %v3049 = vor.u32 %v3047, %v3037
  %v3051 = vshll.u32 %v2951, 16
  %v3053 = vrot.slane %v3051, 1
  %v3054 = vsel %vm2966, %v3049, %v3053
  %v3055 = vshrl.u32 %v2950, 16
  %v3057 = vor.u32 %v3055, %v3045
  %v3059 = vshll.u32 %v2952, 16
  %v3061 = vrot.slane %v3059, 1
  %v3062 = vsel %vm2966, %v3057, %v3061
  %v3063 = vshrl.u32 %v2951, 16
  %v3065 = vor.u32 %v3063, %v3053
  %v3067 = vshll.u32 %v2953, 16
  %v3069 = vrot.slane %v3067, 1
  %v3070 = vsel %vm2966, %v3065, %v3069
  %v3071 = vshrl.u32 %v2952, 16
  %v3073 = vor.u32 %v3071, %v3061
  %v3075 = vshll.u32 %v2954, 16
  %v3077 = vrot.slane %v3075, 1
  %v3078 = vsel %vm2966, %v3073, %v3077
  %v3079 = vshrl.u32 %v2953, 16
  %v3081 = vor.u32 %v3079, %v3069
  %v3083 = vshll.u32 %v2955, 16
  %v3085 = vrot.slane %v3083, 1
  %v3086 = vsel %vm2966, %v3081, %v3085
  %v3087 = vshrl.u32 %v2954, 16
  %v3089 = vor.u32 %v3087, %v3077
  %v3091 = vshll.u32 %v2956, 16
  %v3093 = vrot.slane %v3091, 1
  %v3094 = vsel %vm2966, %v3089, %v3093
  %v3095 = vshrl.u32 %v2955, 16
  %v3097 = vor.u32 %v3095, %v3085
  %v3099 = vshll.u32 %v2957, 16
  %v3101 = vrot.slane %v3099, 1
  %v3102 = vsel %vm2966, %v3097, %v3101
  %v3103 = vshrl.u32 %v2956, 16
  %v3105 = vor.u32 %v3103, %v3093
  %v3107 = vshll.u32 %v2958, 16
  %v3109 = vrot.slane %v3107, 1
  %v3110 = vsel %vm2966, %v3105, %v3109
  %v3111 = vshrl.u32 %v2957, 16
  %v3113 = vor.u32 %v3111, %v3101
  %v3115 = vshll.u32 %v2959, 16
  %v3117 = vrot.slane %v3115, 1
  %v3118 = vsel %vm2966, %v3113, %v3117
  %v3119 = vshrl.u32 %v2958, 16
  %v3121 = vor.u32 %v3119, %v3109
  %v3123 = vshll.u32 %v2960, 16
  %v3125 = vrot.slane %v3123, 1
  %v3126 = vsel %vm2966, %v3121, %v3125
  %v3127 = vshrl.u32 %v2959, 16
  %v3129 = vor.u32 %v3127, %v3117
  %v3131 = vshll.u32 %v2961, 16
  %v3133 = vrot.slane %v3131, 1
  %v3134 = vsel %vm2966, %v3129, %v3133
  %v3135 = vshrl.u32 %v2960, 16
  %v3137 = vor.u32 %v3135, %v3125
  %v3139 = vshll.u32 %v2962, 16
  %v3141 = vrot.slane %v3139, 1
  %v3142 = vsel %vm2966, %v3137, %v3141
  %v3143 = vshrl.u32 %v2961, 16
  %v3145 = vor.u32 %v3143, %v3133
  %v3147 = vshll.u32 %v2963, 16
  %v3149 = vrot.slane %v3147, 1
  %v3150 = vsel %vm2966, %v3145, %v3149
  %v3151 = vshrl.u32 %v2962, 16
  %v3153 = vor.u32 %v3151, %v3141
  %v3155 = vshll.u32 %v2964, 16
  %v3157 = vrot.slane %v3155, 1
  %v3158 = vsel %vm2966, %v3153, %v3157
  %v3159 = vshrl.u32 %v2963, 16
  %v3161 = vor.u32 %v3159, %v3149
  %v3163 = vshll.u32 %v2965, 16
  %v3165 = vrot.slane %v3163, 1
  %v3166 = vsel %vm2966, %v3161, %v3165
  %v3167 = vshrl.u32 %v2964, 16
  %v3169 = vor.u32 %v3167, %v3157
  %v3170 = vshrl.u32 %v2965, 16
  %v3172 = vor.u32 %v3170, %v3165
  %v3206 = vunpack.c.l.b16 %v2105
  %v3207 = vunpack.c.h.b16 %v2105
  %v3208 = vunpack.c.l.b16 %v2106
  %v3209 = vunpack.c.h.b16 %v2106
  %v3210 = vunpack.c.l.b16 %v2107
  %v3211 = vunpack.c.h.b16 %v2107
  %v3212 = vunpack.c.l.b16 %v2108
  %v3213 = vunpack.c.h.b16 %v2108
  %v3214 = vunpack.c.l.b16 %v2109
  %v3215 = vunpack.c.h.b16 %v2109
  %v3216 = vunpack.c.l.b16 %v2110
  %v3217 = vunpack.c.h.b16 %v2110
  %v3218 = vunpack.c.l.b16 %v2111
  %v3219 = vunpack.c.h.b16 %v2111
  %v3220 = vunpack.c.l.b16 %v2112
  %v3221 = vunpack.c.h.b16 %v2112
  %v3222 = vunpack.c.l.b16 %v2113
  %v3223 = vunpack.c.h.b16 %v2113
  %v3224 = vunpack.c.l.b16 %v2114
  %v3225 = vunpack.c.h.b16 %v2114
  %v3226 = vunpack.c.l.b16 %v2115
  %v3227 = vunpack.c.h.b16 %v2115
  %v3228 = vunpack.c.l.b16 %v2116
  %v3229 = vunpack.c.h.b16 %v2116
  %v3230 = vunpack.c.l.b16 %v2117
  %v3231 = vunpack.c.h.b16 %v2117
  %v3232 = vunpack.c.l.b16 %v2118
  %v3233 = vunpack.c.h.b16 %v2118
  %v3234 = vunpack.c.l.b16 %v2119
  %v3235 = vunpack.c.h.b16 %v2119
  %v3236 = vunpack.c.l.b16 %v2120
  %v3237 = vunpack.c.h.b16 %v2120
  %v3238 = vunpack.c.l.b16 %v2121
  %v3239 = vunpack.c.h.b16 %v2121
  %v3240 = vunpack.c.l.b16 %v2122
  %v3241 = vunpack.c.h.b16 %v2122
  %v3242 = vunpack.c.l.b16 %v2123
  %v3243 = vunpack.c.h.b16 %v2123
  %v3244 = vunpack.c.l.b16 %v2124
  %v3245 = vunpack.c.h.b16 %v2124
  %v3246 = vpack.c.b16 %v3208, %v3206
  %v3247 = vpack.c.b16 %v3209, %v3207
  %v3248 = vpack.c.b16 %v3212, %v3210
  %v3249 = vpack.c.b16 %v3213, %v3211
  %v3250 = vpack.c.b16 %v3216, %v3214
  %v3251 = vpack.c.b16 %v3217, %v3215
  %v3252 = vpack.c.b16 %v3220, %v3218
  %v3253 = vpack.c.b16 %v3221, %v3219
  %v3254 = vpack.c.b16 %v3224, %v3222
  %v3255 = vpack.c.b16 %v3225, %v3223
  %v3256 = vpack.c.b16 %v3228, %v3226
  %v3257 = vpack.c.b16 %v3229, %v3227
  %v3258 = vpack.c.b16 %v3232, %v3230
  %v3259 = vpack.c.b16 %v3233, %v3231
  %v3260 = vpack.c.b16 %v3236, %v3234
  %v3261 = vpack.c.b16 %v3237, %v3235
  %v3262 = vpack.c.b16 %v3240, %v3238
  %v3263 = vpack.c.b16 %v3241, %v3239
  %v3264 = vpack.c.b16 %v3244, %v3242
  %v3265 = vpack.c.b16 %v3245, %v3243
  %v3287 = vsel %vm255, %v2990, 0
  %v3290 = vsel %vm255, %v3006, 0
  %v3293 = vsel %vm255, %v3022, 0
  %v3296 = vsel %vm255, %v3038, 0
  %v3299 = vsel %vm255, %v3054, 0
  %v3302 = vsel %vm255, %v3070, 0
  %v3305 = vsel %vm255, %v3086, 0
  %v3308 = vsel %vm255, %v3102, 0
  %v3311 = vsel %vm255, %v3118, 0
  %v3314 = vsel %vm255, %v3134, 0
  %v3317 = vsel %vm255, %v3150, 0
  %v3320 = vsel %vm255, %v3166, 0
  %v3323 = vsel %vm255, %v3172, 0
  %3325 = vmatpush.bf16.msra.mxu0 %v3260
  %3326 = vmatpush.bf16.msra.mxu0 %v3258
  %3327 = vmatpush.bf16.msra.mxu0 %v3256
  %3328 = vmatpush.bf16.msra.mxu0 %v3254
  %3329 = vmatpush.bf16.msra.mxu0 %v3252
  %3330 = vmatpush.bf16.msra.mxu0 %v3250
  %3331 = vmatpush.bf16.msra.mxu0 %v3248
  %3332 = vmatpush.bf16.msra.mxu0 %v3246
  %3333 = vmatmul.bf16.gmra.mxu0 %v2978
  %v3334 = vpop.f32.mrf.mxu0
  %v3335 = vadd.f32 %v2722, %v3334
  %v3336 = vpop.f32.mrf.mxu0
  %v3337 = vadd.f32 %v2724, %v3336
  %3338 = vmatmul.bf16.gmra.mxu0 %v2998
  %v3339 = vpop.f32.mrf.mxu0
  %v3340 = vadd.f32 %v2727, %v3339
  %v3341 = vpop.f32.mrf.mxu0
  %v3342 = vadd.f32 %v2729, %v3341
  %3343 = vmatmul.bf16.gmra.mxu0 %v3014
  %v3344 = vpop.f32.mrf.mxu0
  %v3345 = vadd.f32 %v2732, %v3344
  %v3346 = vpop.f32.mrf.mxu0
  %v3347 = vadd.f32 %v2734, %v3346
  %3348 = vmatmul.bf16.gmra.mxu0 %v3030
  %v3349 = vpop.f32.mrf.mxu0
  %v3350 = vadd.f32 %v2737, %v3349
  %v3351 = vpop.f32.mrf.mxu0
  %v3352 = vadd.f32 %v2739, %v3351
  %3353 = vmatmul.bf16.gmra.mxu0 %v3046
  %v3354 = vpop.f32.mrf.mxu0
  %v3355 = vadd.f32 %v2742, %v3354
  %v3356 = vpop.f32.mrf.mxu0
  %v3357 = vadd.f32 %v2744, %v3356
  %3358 = vmatmul.bf16.gmra.mxu0 %v3062
  %v3359 = vpop.f32.mrf.mxu0
  %v3360 = vadd.f32 %v2747, %v3359
  %v3361 = vpop.f32.mrf.mxu0
  %v3362 = vadd.f32 %v2749, %v3361
  %3363 = vmatmul.bf16.gmra.mxu0 %v3078
  %v3364 = vpop.f32.mrf.mxu0
  %v3365 = vadd.f32 %v2752, %v3364
  %v3366 = vpop.f32.mrf.mxu0
  %v3367 = vadd.f32 %v2754, %v3366
  %3368 = vmatmul.bf16.gmra.mxu0 %v3094
  %v3369 = vpop.f32.mrf.mxu0
  %v3370 = vadd.f32 %v2757, %v3369
  %v3371 = vpop.f32.mrf.mxu0
  %v3372 = vadd.f32 %v2759, %v3371
  %3373 = vmatmul.bf16.gmra.mxu0 %v3110
  %v3374 = vpop.f32.mrf.mxu0
  %v3375 = vadd.f32 %v2762, %v3374
  %v3376 = vpop.f32.mrf.mxu0
  %v3377 = vadd.f32 %v2764, %v3376
  %3378 = vmatmul.bf16.gmra.mxu0 %v3126
  %v3379 = vpop.f32.mrf.mxu0
  %v3380 = vadd.f32 %v2767, %v3379
  %v3381 = vpop.f32.mrf.mxu0
  %v3382 = vadd.f32 %v2769, %v3381
  %3383 = vmatmul.bf16.gmra.mxu0 %v3142
  %v3384 = vpop.f32.mrf.mxu0
  %v3385 = vadd.f32 %v2772, %v3384
  %v3386 = vpop.f32.mrf.mxu0
  %v3387 = vadd.f32 %v2774, %v3386
  %3388 = vmatmul.bf16.gmra.mxu0 %v3158
  %v3389 = vpop.f32.mrf.mxu0
  %v3390 = vadd.f32 %v2777, %v3389
  %v3391 = vpop.f32.mrf.mxu0
  %v3392 = vadd.f32 %v2779, %v3391
  %3393 = vmatmul.bf16.gmra.mxu0 %v3169
  %v3394 = vpop.f32.mrf.mxu0
  %v3395 = vadd.f32 %v2782, %v3394
  %v3396 = vpop.f32.mrf.mxu0
  %3397 = vdwg.mxu0
  %3398 = vmatpush.bf16.msra.mxu0 0
  %3399 = vmatpush.bf16.msra.mxu0 0
  %3400 = vmatpush.bf16.msra.mxu0 0
  %3401 = vmatpush.bf16.msra.mxu0 0
  %3402 = vmatpush.bf16.msra.mxu0 0
  %3403 = vmatpush.bf16.msra.mxu0 0
  %3404 = vmatpush.bf16.msra.mxu0 %v3264
  %3405 = vmatpush.bf16.msra.mxu0 %v3262
  %3406 = vmatmul.bf16.gmra.mxu0 %v3287
  %v3407 = vpop.f32.mrf.mxu0
  %v3408 = vadd.f32 %v3335, %v3407
  %v3409 = vpop.f32.mrf.mxu0
  %v3410 = vadd.f32 %v3337, %v3409
  %3411 = vmatmul.bf16.gmra.mxu0 %v3290
  %v3412 = vpop.f32.mrf.mxu0
  %v3413 = vadd.f32 %v3340, %v3412
  %v3414 = vpop.f32.mrf.mxu0
  %v3415 = vadd.f32 %v3342, %v3414
  %3416 = vmatmul.bf16.gmra.mxu0 %v3293
  %v3417 = vpop.f32.mrf.mxu0
  %v3418 = vadd.f32 %v3345, %v3417
  %v3419 = vpop.f32.mrf.mxu0
  %v3420 = vadd.f32 %v3347, %v3419
  %3421 = vmatmul.bf16.gmra.mxu0 %v3296
  %v3422 = vpop.f32.mrf.mxu0
  %v3423 = vadd.f32 %v3350, %v3422
  %v3424 = vpop.f32.mrf.mxu0
  %v3425 = vadd.f32 %v3352, %v3424
  %3426 = vmatmul.bf16.gmra.mxu0 %v3299
  %v3427 = vpop.f32.mrf.mxu0
  %v3428 = vadd.f32 %v3355, %v3427
  %v3429 = vpop.f32.mrf.mxu0
  %v3430 = vadd.f32 %v3357, %v3429
  %3431 = vmatmul.bf16.gmra.mxu0 %v3302
  %v3432 = vpop.f32.mrf.mxu0
  %v3433 = vadd.f32 %v3360, %v3432
  %v3434 = vpop.f32.mrf.mxu0
  %v3435 = vadd.f32 %v3362, %v3434
  %3436 = vmatmul.bf16.gmra.mxu0 %v3305
  %v3437 = vpop.f32.mrf.mxu0
  %v3438 = vadd.f32 %v3365, %v3437
  %v3439 = vpop.f32.mrf.mxu0
  %v3440 = vadd.f32 %v3367, %v3439
  %3441 = vmatmul.bf16.gmra.mxu0 %v3308
  %v3442 = vpop.f32.mrf.mxu0
  %v3443 = vadd.f32 %v3370, %v3442
  %v3444 = vpop.f32.mrf.mxu0
  %v3445 = vadd.f32 %v3372, %v3444
  %3446 = vmatmul.bf16.gmra.mxu0 %v3311
  %v3447 = vpop.f32.mrf.mxu0
  %v3448 = vadd.f32 %v3375, %v3447
  %v3449 = vpop.f32.mrf.mxu0
  %v3450 = vadd.f32 %v3377, %v3449
  %3451 = vmatmul.bf16.gmra.mxu0 %v3314
  %v3452 = vpop.f32.mrf.mxu0
  %v3453 = vadd.f32 %v3380, %v3452
  %v3454 = vpop.f32.mrf.mxu0
  %v3455 = vadd.f32 %v3382, %v3454
  %3456 = vmatmul.bf16.gmra.mxu0 %v3317
  %v3457 = vpop.f32.mrf.mxu0
  %v3458 = vadd.f32 %v3385, %v3457
  %v3459 = vpop.f32.mrf.mxu0
  %v3460 = vadd.f32 %v3387, %v3459
  %3461 = vmatmul.bf16.gmra.mxu0 %v3320
  %v3462 = vpop.f32.mrf.mxu0
  %v3463 = vadd.f32 %v3390, %v3462
  %v3464 = vpop.f32.mrf.mxu0
  %v3465 = vadd.f32 %v3392, %v3464
  %3466 = vmatmul.bf16.gmra.mxu0 %v3323
  %v3467 = vpop.f32.mrf.mxu0
  %v3468 = vadd.f32 %v3395, %v3467
  %v3469 = vpop.f32.mrf.mxu0
  %3470 = vdwg.mxu0
  %3471 = vmatpush.bf16.msra.mxu0 %v3261
  %3472 = vmatpush.bf16.msra.mxu0 %v3259
  %3473 = vmatpush.bf16.msra.mxu0 %v3257
  %3474 = vmatpush.bf16.msra.mxu0 %v3255
  %3475 = vmatpush.bf16.msra.mxu0 %v3253
  %3476 = vmatpush.bf16.msra.mxu0 %v3251
  %3477 = vmatpush.bf16.msra.mxu0 %v3249
  %3478 = vmatpush.bf16.msra.mxu0 %v3247
  %3479 = vmatmul.bf16.gmra.mxu0 %v2978
  %v3480 = vpop.f32.mrf.mxu0
  %v3481 = vadd.f32 %v2868, %v3480
  %v3482 = vpop.f32.mrf.mxu0
  %v3483 = vadd.f32 %v2870, %v3482
  %3484 = vmatmul.bf16.gmra.mxu0 %v2998
  %v3485 = vpop.f32.mrf.mxu0
  %v3486 = vadd.f32 %v2873, %v3485
  %v3487 = vpop.f32.mrf.mxu0
  %v3488 = vadd.f32 %v2875, %v3487
  %3489 = vmatmul.bf16.gmra.mxu0 %v3014
  %v3490 = vpop.f32.mrf.mxu0
  %v3491 = vadd.f32 %v2878, %v3490
  %v3492 = vpop.f32.mrf.mxu0
  %v3493 = vadd.f32 %v2880, %v3492
  %3494 = vmatmul.bf16.gmra.mxu0 %v3030
  %v3495 = vpop.f32.mrf.mxu0
  %v3496 = vadd.f32 %v2883, %v3495
  %v3497 = vpop.f32.mrf.mxu0
  %v3498 = vadd.f32 %v2885, %v3497
  %3499 = vmatmul.bf16.gmra.mxu0 %v3046
  %v3500 = vpop.f32.mrf.mxu0
  %v3501 = vadd.f32 %v2888, %v3500
  %v3502 = vpop.f32.mrf.mxu0
  %v3503 = vadd.f32 %v2890, %v3502
  %3504 = vmatmul.bf16.gmra.mxu0 %v3062
  %v3505 = vpop.f32.mrf.mxu0
  %v3506 = vadd.f32 %v2893, %v3505
  %v3507 = vpop.f32.mrf.mxu0
  %v3508 = vadd.f32 %v2895, %v3507
  %3509 = vmatmul.bf16.gmra.mxu0 %v3078
  %v3510 = vpop.f32.mrf.mxu0
  %v3511 = vadd.f32 %v2898, %v3510
  %v3512 = vpop.f32.mrf.mxu0
  %v3513 = vadd.f32 %v2900, %v3512
  %3514 = vmatmul.bf16.gmra.mxu0 %v3094
  %v3515 = vpop.f32.mrf.mxu0
  %v3516 = vadd.f32 %v2903, %v3515
  %v3517 = vpop.f32.mrf.mxu0
  %v3518 = vadd.f32 %v2905, %v3517
  %3519 = vmatmul.bf16.gmra.mxu0 %v3110
  %v3520 = vpop.f32.mrf.mxu0
  %v3521 = vadd.f32 %v2908, %v3520
  %v3522 = vpop.f32.mrf.mxu0
  %v3523 = vadd.f32 %v2910, %v3522
  %3524 = vmatmul.bf16.gmra.mxu0 %v3126
  %v3525 = vpop.f32.mrf.mxu0
  %v3526 = vadd.f32 %v2913, %v3525
  %v3527 = vpop.f32.mrf.mxu0
  %v3528 = vadd.f32 %v2915, %v3527
  %3529 = vmatmul.bf16.gmra.mxu0 %v3142
  %v3530 = vpop.f32.mrf.mxu0
  %v3531 = vadd.f32 %v2918, %v3530
  %v3532 = vpop.f32.mrf.mxu0
  %v3533 = vadd.f32 %v2920, %v3532
  %3534 = vmatmul.bf16.gmra.mxu0 %v3158
  %v3535 = vpop.f32.mrf.mxu0
  %v3536 = vadd.f32 %v2923, %v3535
  %v3537 = vpop.f32.mrf.mxu0
  %v3538 = vadd.f32 %v2925, %v3537
  %3539 = vmatmul.bf16.gmra.mxu0 %v3169
  %v3540 = vpop.f32.mrf.mxu0
  %v3541 = vadd.f32 %v2928, %v3540
  %v3542 = vpop.f32.mrf.mxu0
  %3543 = vdwg.mxu0
  %3544 = vmatpush.bf16.msra.mxu0 0
  %3545 = vmatpush.bf16.msra.mxu0 0
  %3546 = vmatpush.bf16.msra.mxu0 0
  %3547 = vmatpush.bf16.msra.mxu0 0
  %3548 = vmatpush.bf16.msra.mxu0 0
  %3549 = vmatpush.bf16.msra.mxu0 0
  %3550 = vmatpush.bf16.msra.mxu0 %v3265
  %3551 = vmatpush.bf16.msra.mxu0 %v3263
  %3552 = vmatmul.bf16.gmra.mxu0 %v3287
  %v3553 = vpop.f32.mrf.mxu0
  %v3554 = vadd.f32 %v3481, %v3553
  %v3555 = vpop.f32.mrf.mxu0
  %v3556 = vadd.f32 %v3483, %v3555
  %3557 = vmatmul.bf16.gmra.mxu0 %v3290
  %v3558 = vpop.f32.mrf.mxu0
  %v3559 = vadd.f32 %v3486, %v3558
  %v3560 = vpop.f32.mrf.mxu0
  %v3561 = vadd.f32 %v3488, %v3560
  %3562 = vmatmul.bf16.gmra.mxu0 %v3293
  %v3563 = vpop.f32.mrf.mxu0
  %v3564 = vadd.f32 %v3491, %v3563
  %v3565 = vpop.f32.mrf.mxu0
  %v3566 = vadd.f32 %v3493, %v3565
  %3567 = vmatmul.bf16.gmra.mxu0 %v3296
  %v3568 = vpop.f32.mrf.mxu0
  %v3569 = vadd.f32 %v3496, %v3568
  %v3570 = vpop.f32.mrf.mxu0
  %v3571 = vadd.f32 %v3498, %v3570
  %3572 = vmatmul.bf16.gmra.mxu0 %v3299
  %v3573 = vpop.f32.mrf.mxu0
  %v3574 = vadd.f32 %v3501, %v3573
  %v3575 = vpop.f32.mrf.mxu0
  %v3576 = vadd.f32 %v3503, %v3575
  %3577 = vmatmul.bf16.gmra.mxu0 %v3302
  %v3578 = vpop.f32.mrf.mxu0
  %v3579 = vadd.f32 %v3506, %v3578
  %v3580 = vpop.f32.mrf.mxu0
  %v3581 = vadd.f32 %v3508, %v3580
  %3582 = vmatmul.bf16.gmra.mxu0 %v3305
  %v3583 = vpop.f32.mrf.mxu0
  %v3584 = vadd.f32 %v3511, %v3583
  %v3585 = vpop.f32.mrf.mxu0
  %v3586 = vadd.f32 %v3513, %v3585
  %3587 = vmatmul.bf16.gmra.mxu0 %v3308
  %v3588 = vpop.f32.mrf.mxu0
  %v3589 = vadd.f32 %v3516, %v3588
  %v3590 = vpop.f32.mrf.mxu0
  %v3591 = vadd.f32 %v3518, %v3590
  %3592 = vmatmul.bf16.gmra.mxu0 %v3311
  %v3593 = vpop.f32.mrf.mxu0
  %v3594 = vadd.f32 %v3521, %v3593
  %v3595 = vpop.f32.mrf.mxu0
  %v3596 = vadd.f32 %v3523, %v3595
  %3597 = vmatmul.bf16.gmra.mxu0 %v3314
  %v3598 = vpop.f32.mrf.mxu0
  %v3599 = vadd.f32 %v3526, %v3598
  %v3600 = vpop.f32.mrf.mxu0
  %v3601 = vadd.f32 %v3528, %v3600
  %3602 = vmatmul.bf16.gmra.mxu0 %v3317
  %v3603 = vpop.f32.mrf.mxu0
  %v3604 = vadd.f32 %v3531, %v3603
  %v3605 = vpop.f32.mrf.mxu0
  %v3606 = vadd.f32 %v3533, %v3605
  %3607 = vmatmul.bf16.gmra.mxu0 %v3320
  %v3608 = vpop.f32.mrf.mxu0
  %v3609 = vadd.f32 %v3536, %v3608
  %v3610 = vpop.f32.mrf.mxu0
  %v3611 = vadd.f32 %v3538, %v3610
  %3612 = vmatmul.bf16.gmra.mxu0 %v3323
  %v3613 = vpop.f32.mrf.mxu0
  %v3614 = vadd.f32 %v3541, %v3613
  %v3615 = vpop.f32.mrf.mxu0
  %3616 = vdwg.mxu0
  %v3617 = vld [vmem:[#allocation2 + $0x18] sm:$0xcc]
  %v3618 = vld [vmem:[#allocation2 + $0x20] sm:$0xff]
  %v3619 = vld [vmem:[#allocation2 + $0x28] sm:$0xff]
  %v3620 = vld [vmem:[#allocation2 + $0x30] sm:$0xff]
  %v3621 = vld [vmem:[#allocation2 + $0x38] sm:$0xff]
  %v3622 = vld [vmem:[#allocation2 + $0x40] sm:$0xff]
  %v3623 = vld [vmem:[#allocation2 + $0x48] sm:$0xff]
  %v3624 = vld [vmem:[#allocation2 + $0x50] sm:$0xff]
  %v3625 = vld [vmem:[#allocation2 + $0x58] sm:$0xff]
  %v3626 = vld [vmem:[#allocation2 + $0x60] sm:$0xff]
  %v3627 = vld [vmem:[#allocation2 + $0x68] sm:$0xff]
  %v3628 = vld [vmem:[#allocation2 + $0x70] sm:$0xff]
  %v3629 = vld [vmem:[#allocation2 + $0x78] sm:$0xff]
  %v3630 = vld [vmem:[#allocation2 + $0x80] sm:$0xff]
  %v3631 = vld [vmem:[#allocation2 + $0x88] sm:$0xff]
  %v3632 = vld [vmem:[#allocation2 + $0x90] sm:$0xff]
  %v3633 = vld [vmem:[#allocation2 + $0x98] sm:$0xff]
  %v3634 = vld [vmem:[#allocation2 + $0xa0] sm:$0xff]
  %v3635 = vld [vmem:[#allocation2 + $0xa8] sm:$0xff]
  %v3636 = vld [vmem:[#allocation2 + $0xb0] sm:$0xff]
  %v3637 = vld [vmem:[#allocation2 + $0xb8] sm:$0xff]
  %v3638 = vld [vmem:[#allocation2 + $0xc0] sm:$0xff]
  %v3639 = vld [vmem:[#allocation2 + $0xc8] sm:$0xff]
  %v3640 = vld [vmem:[#allocation2 + $0xd0] sm:$0xff]
  %v3641 = vld [vmem:[#allocation2 + $0xd8] sm:$0xff]
  %v3642 = vld [vmem:[#allocation2 + $0xe0] sm:$0x11]
  %s3643 = scalar_lea.vmem %s4, 960
  %v3644 = vld [vmem:[%s3643] sm:$0xff]
  %v3645 = vld [vmem:[%s3643 + $0x8] sm:$0xff]
  %v3646 = vld [vmem:[%s3643 + $0x10] sm:$0xff]
  %v3647 = vld [vmem:[%s3643 + $0x18] sm:$0xff]
  %v3648 = vld [vmem:[%s3643 + $0x20] sm:$0xff]
  %v3649 = vld [vmem:[%s3643 + $0x28] sm:$0xff]
  %v3650 = vld [vmem:[%s3643 + $0x30] sm:$0xff]
  %v3651 = vld [vmem:[%s3643 + $0x38] sm:$0xff]
  %v3652 = vld [vmem:[%s3643 + $0x40] sm:$0xff]
  %v3653 = vld [vmem:[%s3643 + $0x48] sm:$0xff]
  %v3654 = vld [vmem:[%s3643 + $0x50] sm:$0xff]
  %v3655 = vld [vmem:[%s3643 + $0x58] sm:$0xff]
  %v3656 = vld [vmem:[%s3643 + $0x60] sm:$0xff]
  %v3657 = vld [vmem:[%s3643 + $0x68] sm:$0xff]
  %v3658 = vld [vmem:[%s3643 + $0x70] sm:$0xff]
  %v3659 = vld [vmem:[%s3643 + $0x78] sm:$0xff]
  %v3660 = vld [vmem:[%s3643 + $0x80] sm:$0xff]
  %v3661 = vld [vmem:[%s3643 + $0x88] sm:$0xff]
  %v3662 = vld [vmem:[%s3643 + $0x90] sm:$0xff]
  %v3663 = vld [vmem:[%s3643 + $0x98] sm:$0xff]
  %v3690 = vunpack.c.l.b16 %v3617
  %v3691 = vunpack.c.h.b16 %v3617
  %v3692 = vunpack.c.l.b16 %v3618
  %v3693 = vunpack.c.h.b16 %v3618
  %v3694 = vunpack.c.l.b16 %v3619
  %v3695 = vunpack.c.h.b16 %v3619
  %v3696 = vunpack.c.l.b16 %v3620
  %v3697 = vunpack.c.h.b16 %v3620
  %v3698 = vunpack.c.l.b16 %v3621
  %v3699 = vunpack.c.h.b16 %v3621
  %v3700 = vunpack.c.l.b16 %v3622
  %v3701 = vunpack.c.h.b16 %v3622
  %v3702 = vunpack.c.l.b16 %v3623
  %v3703 = vunpack.c.h.b16 %v3623
  %v3704 = vunpack.c.l.b16 %v3624
  %v3705 = vunpack.c.h.b16 %v3624
  %v3706 = vunpack.c.l.b16 %v3625
  %v3707 = vunpack.c.h.b16 %v3625
  %v3708 = vunpack.c.l.b16 %v3626
  %v3709 = vunpack.c.h.b16 %v3626
  %v3710 = vunpack.c.l.b16 %v3627
  %v3711 = vunpack.c.h.b16 %v3627
  %v3712 = vunpack.c.l.b16 %v3628
  %v3713 = vunpack.c.h.b16 %v3628
  %v3714 = vunpack.c.l.b16 %v3629
  %v3715 = vunpack.c.h.b16 %v3629
  %v3716 = vunpack.c.l.b16 %v3630
  %v3717 = vunpack.c.h.b16 %v3630
  %v3718 = vunpack.c.l.b16 %v3631
  %v3719 = vunpack.c.h.b16 %v3631
  %v3720 = vunpack.c.l.b16 %v3632
  %v3721 = vunpack.c.h.b16 %v3632
  %v3722 = vunpack.c.l.b16 %v3633
  %v3723 = vunpack.c.h.b16 %v3633
  %v3724 = vunpack.c.l.b16 %v3634
  %v3725 = vunpack.c.h.b16 %v3634
  %v3726 = vunpack.c.l.b16 %v3635
  %v3727 = vunpack.c.h.b16 %v3635
  %v3728 = vunpack.c.l.b16 %v3636
  %v3729 = vunpack.c.h.b16 %v3636
  %v3730 = vunpack.c.l.b16 %v3637
  %v3731 = vunpack.c.h.b16 %v3637
  %v3732 = vunpack.c.l.b16 %v3638
  %v3733 = vunpack.c.h.b16 %v3638
  %v3734 = vunpack.c.l.b16 %v3639
  %v3735 = vunpack.c.h.b16 %v3639
  %v3736 = vunpack.c.l.b16 %v3640
  %v3737 = vunpack.c.h.b16 %v3640
  %v3738 = vunpack.c.l.b16 %v3641
  %v3739 = vunpack.c.h.b16 %v3641
  %v3740 = vunpack.c.l.b16 %v3642
  %v3741 = vunpack.c.h.b16 %v3642
  %v3742 = vpack.c.b16 %v3692, %v3690
  %v3743 = vpack.c.b16 %v3693, %v3691
  %v3744 = vpack.c.b16 %v3696, %v3694
  %v3745 = vpack.c.b16 %v3697, %v3695
  %v3746 = vpack.c.b16 %v3700, %v3698
  %v3747 = vpack.c.b16 %v3701, %v3699
  %v3748 = vpack.c.b16 %v3704, %v3702
  %v3749 = vpack.c.b16 %v3705, %v3703
  %v3750 = vpack.c.b16 %v3708, %v3706
  %v3751 = vpack.c.b16 %v3709, %v3707
  %v3752 = vpack.c.b16 %v3712, %v3710
  %v3753 = vpack.c.b16 %v3713, %v3711
  %v3754 = vpack.c.b16 %v3716, %v3714
  %v3755 = vpack.c.b16 %v3717, %v3715
  %v3756 = vpack.c.b16 %v3720, %v3718
  %v3757 = vpack.c.b16 %v3721, %v3719
  %v3758 = vpack.c.b16 %v3724, %v3722
  %v3759 = vpack.c.b16 %v3725, %v3723
  %v3760 = vpack.c.b16 %v3728, %v3726
  %v3761 = vpack.c.b16 %v3729, %v3727
  %v3762 = vpack.c.b16 %v3732, %v3730
  %v3763 = vpack.c.b16 %v3733, %v3731
  %v3764 = vpack.c.b16 %v3736, %v3734
  %v3765 = vpack.c.b16 %v3737, %v3735
  %v3766 = vpack.c.b16 %v3740, %v3738
  %v3767 = vpack.c.b16 %v3741, %v3739
  %vm3768 = vsmask.f32 5376
  %v3770 = vshrl.u32 %v3742, 16
  %v3772 = vrot.slane %v3770, 2
  %v3773 = vshll.u32 %v3742, 16
  %v3775 = vrot.slane %v3773, 3
  %v3776 = vor.u32 %v3772, %v3775
  %v3778 = vshrl.u32 %v3744, 16
  %v3780 = vrot.slane %v3778, 2
  %v3781 = vshll.u32 %v3744, 16
  %v3783 = vrot.slane %v3781, 3
  %v3784 = vor.u32 %v3780, %v3783
  %v3785 = vsel %vm3768, %v3776, %v3784
  %v3787 = vshrl.u32 %v3743, 16
  %v3789 = vrot.slane %v3787, 2
  %v3790 = vshll.u32 %v3743, 16
  %v3792 = vrot.slane %v3790, 3
  %v3793 = vor.u32 %v3789, %v3792
  %v3795 = vshrl.u32 %v3745, 16
  %v3797 = vrot.slane %v3795, 2
  %v3798 = vshll.u32 %v3745, 16
  %v3800 = vrot.slane %v3798, 3
  %v3801 = vor.u32 %v3797, %v3800
  %v3802 = vsel %vm3768, %v3793, %v3801
  %v3804 = vshrl.u32 %v3746, 16
  %v3806 = vrot.slane %v3804, 2
  %v3807 = vshll.u32 %v3746, 16
  %v3809 = vrot.slane %v3807, 3
  %v3810 = vor.u32 %v3806, %v3809
  %v3811 = vsel %vm3768, %v3784, %v3810
  %v3813 = vshrl.u32 %v3747, 16
  %v3815 = vrot.slane %v3813, 2
  %v3816 = vshll.u32 %v3747, 16
  %v3818 = vrot.slane %v3816, 3
  %v3819 = vor.u32 %v3815, %v3818
  %v3820 = vsel %vm3768, %v3801, %v3819
  %v3822 = vshrl.u32 %v3748, 16
  %v3824 = vrot.slane %v3822, 2
  %v3825 = vshll.u32 %v3748, 16
  %v3827 = vrot.slane %v3825, 3
  %v3828 = vor.u32 %v3824, %v3827
  %v3829 = vsel %vm3768, %v3810, %v3828
  %v3831 = vshrl.u32 %v3749, 16
  %v3833 = vrot.slane %v3831, 2
  %v3834 = vshll.u32 %v3749, 16
  %v3836 = vrot.slane %v3834, 3
  %v3837 = vor.u32 %v3833, %v3836
  %v3838 = vsel %vm3768, %v3819, %v3837
  %v3840 = vshrl.u32 %v3750, 16
  %v3842 = vrot.slane %v3840, 2
  %v3843 = vshll.u32 %v3750, 16
  %v3845 = vrot.slane %v3843, 3
  %v3846 = vor.u32 %v3842, %v3845
  %v3847 = vsel %vm3768, %v3828, %v3846
  %v3849 = vshrl.u32 %v3751, 16
  %v3851 = vrot.slane %v3849, 2
  %v3852 = vshll.u32 %v3751, 16
  %v3854 = vrot.slane %v3852, 3
  %v3855 = vor.u32 %v3851, %v3854
  %v3856 = vsel %vm3768, %v3837, %v3855
  %v3858 = vshrl.u32 %v3752, 16
  %v3860 = vrot.slane %v3858, 2
  %v3861 = vshll.u32 %v3752, 16
  %v3863 = vrot.slane %v3861, 3
  %v3864 = vor.u32 %v3860, %v3863
  %v3865 = vsel %vm3768, %v3846, %v3864
  %v3867 = vshrl.u32 %v3753, 16
  %v3869 = vrot.slane %v3867, 2
  %v3870 = vshll.u32 %v3753, 16
  %v3872 = vrot.slane %v3870, 3
  %v3873 = vor.u32 %v3869, %v3872
  %v3874 = vsel %vm3768, %v3855, %v3873
  %v3876 = vshrl.u32 %v3754, 16
  %v3878 = vrot.slane %v3876, 2
  %v3879 = vshll.u32 %v3754, 16
  %v3881 = vrot.slane %v3879, 3
  %v3882 = vor.u32 %v3878, %v3881
  %v3883 = vsel %vm3768, %v3864, %v3882
  %v3885 = vshrl.u32 %v3755, 16
  %v3887 = vrot.slane %v3885, 2
  %v3888 = vshll.u32 %v3755, 16
  %v3890 = vrot.slane %v3888, 3
  %v3891 = vor.u32 %v3887, %v3890
  %v3892 = vsel %vm3768, %v3873, %v3891
  %v3894 = vshrl.u32 %v3756, 16
  %v3896 = vrot.slane %v3894, 2
  %v3897 = vshll.u32 %v3756, 16
  %v3899 = vrot.slane %v3897, 3
  %v3900 = vor.u32 %v3896, %v3899
  %v3901 = vsel %vm3768, %v3882, %v3900
  %v3903 = vshrl.u32 %v3757, 16
  %v3905 = vrot.slane %v3903, 2
  %v3906 = vshll.u32 %v3757, 16
  %v3908 = vrot.slane %v3906, 3
  %v3909 = vor.u32 %v3905, %v3908
  %v3910 = vsel %vm3768, %v3891, %v3909
  %v3912 = vshrl.u32 %v3758, 16
  %v3914 = vrot.slane %v3912, 2
  %v3915 = vshll.u32 %v3758, 16
  %v3917 = vrot.slane %v3915, 3
  %v3918 = vor.u32 %v3914, %v3917
  %v3919 = vsel %vm3768, %v3900, %v3918
  %v3921 = vshrl.u32 %v3759, 16
  %v3923 = vrot.slane %v3921, 2
  %v3924 = vshll.u32 %v3759, 16
  %v3926 = vrot.slane %v3924, 3
  %v3927 = vor.u32 %v3923, %v3926
  %v3928 = vsel %vm3768, %v3909, %v3927
  %v3930 = vshrl.u32 %v3760, 16
  %v3932 = vrot.slane %v3930, 2
  %v3933 = vshll.u32 %v3760, 16
  %v3935 = vrot.slane %v3933, 3
  %v3936 = vor.u32 %v3932, %v3935
  %v3937 = vsel %vm3768, %v3918, %v3936
  %v3939 = vshrl.u32 %v3761, 16
  %v3941 = vrot.slane %v3939, 2
  %v3942 = vshll.u32 %v3761, 16
  %v3944 = vrot.slane %v3942, 3
  %v3945 = vor.u32 %v3941, %v3944
  %v3946 = vsel %vm3768, %v3927, %v3945
  %v3948 = vshrl.u32 %v3762, 16
  %v3950 = vrot.slane %v3948, 2
  %v3951 = vshll.u32 %v3762, 16
  %v3953 = vrot.slane %v3951, 3
  %v3954 = vor.u32 %v3950, %v3953
  %v3955 = vsel %vm3768, %v3936, %v3954
  %v3957 = vshrl.u32 %v3763, 16
  %v3959 = vrot.slane %v3957, 2
  %v3960 = vshll.u32 %v3763, 16
  %v3962 = vrot.slane %v3960, 3
  %v3963 = vor.u32 %v3959, %v3962
  %v3964 = vsel %vm3768, %v3945, %v3963
  %v3966 = vshrl.u32 %v3764, 16
  %v3968 = vrot.slane %v3966, 2
  %v3969 = vshll.u32 %v3764, 16
  %v3971 = vrot.slane %v3969, 3
  %v3972 = vor.u32 %v3968, %v3971
  %v3973 = vsel %vm3768, %v3954, %v3972
  %v3975 = vshrl.u32 %v3765, 16
  %v3977 = vrot.slane %v3975, 2
  %v3978 = vshll.u32 %v3765, 16
  %v3980 = vrot.slane %v3978, 3
  %v3981 = vor.u32 %v3977, %v3980
  %v3982 = vsel %vm3768, %v3963, %v3981
  %v3984 = vshrl.u32 %v3766, 16
  %v3986 = vrot.slane %v3984, 2
  %v3987 = vshll.u32 %v3766, 16
  %v3989 = vrot.slane %v3987, 3
  %v3990 = vor.u32 %v3986, %v3989
  %v3991 = vsel %vm3768, %v3972, %v3990
  %v3993 = vshrl.u32 %v3767, 16
  %v3995 = vrot.slane %v3993, 2
  %v3996 = vshll.u32 %v3767, 16
  %v3998 = vrot.slane %v3996, 3
  %v3999 = vor.u32 %v3995, %v3998
  %v4000 = vsel %vm3768, %v3981, %v3999
  %v4034 = vunpack.c.l.b16 %v3644
  %v4035 = vunpack.c.h.b16 %v3644
  %v4036 = vunpack.c.l.b16 %v3645
  %v4037 = vunpack.c.h.b16 %v3645
  %v4038 = vunpack.c.l.b16 %v3646
  %v4039 = vunpack.c.h.b16 %v3646
  %v4040 = vunpack.c.l.b16 %v3647
  %v4041 = vunpack.c.h.b16 %v3647
  %v4042 = vunpack.c.l.b16 %v3648
  %v4043 = vunpack.c.h.b16 %v3648
  %v4044 = vunpack.c.l.b16 %v3649
  %v4045 = vunpack.c.h.b16 %v3649
  %v4046 = vunpack.c.l.b16 %v3650
  %v4047 = vunpack.c.h.b16 %v3650
  %v4048 = vunpack.c.l.b16 %v3651
  %v4049 = vunpack.c.h.b16 %v3651
  %v4050 = vunpack.c.l.b16 %v3652
  %v4051 = vunpack.c.h.b16 %v3652
  %v4052 = vunpack.c.l.b16 %v3653
  %v4053 = vunpack.c.h.b16 %v3653
  %v4054 = vunpack.c.l.b16 %v3654
  %v4055 = vunpack.c.h.b16 %v3654
  %v4056 = vunpack.c.l.b16 %v3655
  %v4057 = vunpack.c.h.b16 %v3655
  %v4058 = vunpack.c.l.b16 %v3656
  %v4059 = vunpack.c.h.b16 %v3656
  %v4060 = vunpack.c.l.b16 %v3657
  %v4061 = vunpack.c.h.b16 %v3657
  %v4062 = vunpack.c.l.b16 %v3658
  %v4063 = vunpack.c.h.b16 %v3658
  %v4064 = vunpack.c.l.b16 %v3659
  %v4065 = vunpack.c.h.b16 %v3659
  %v4066 = vunpack.c.l.b16 %v3660
  %v4067 = vunpack.c.h.b16 %v3660
  %v4068 = vunpack.c.l.b16 %v3661
  %v4069 = vunpack.c.h.b16 %v3661
  %v4070 = vunpack.c.l.b16 %v3662
  %v4071 = vunpack.c.h.b16 %v3662
  %v4072 = vunpack.c.l.b16 %v3663
  %v4073 = vunpack.c.h.b16 %v3663
  %v4074 = vpack.c.b16 %v4036, %v4034
  %v4075 = vpack.c.b16 %v4037, %v4035
  %v4076 = vpack.c.b16 %v4040, %v4038
  %v4077 = vpack.c.b16 %v4041, %v4039
  %v4078 = vpack.c.b16 %v4044, %v4042
  %v4079 = vpack.c.b16 %v4045, %v4043
  %v4080 = vpack.c.b16 %v4048, %v4046
  %v4081 = vpack.c.b16 %v4049, %v4047
  %v4082 = vpack.c.b16 %v4052, %v4050
  %v4083 = vpack.c.b16 %v4053, %v4051
  %v4084 = vpack.c.b16 %v4056, %v4054
  %v4085 = vpack.c.b16 %v4057, %v4055
  %v4086 = vpack.c.b16 %v4060, %v4058
  %v4087 = vpack.c.b16 %v4061, %v4059
  %v4088 = vpack.c.b16 %v4064, %v4062
  %v4089 = vpack.c.b16 %v4065, %v4063
  %v4090 = vpack.c.b16 %v4068, %v4066
  %v4091 = vpack.c.b16 %v4069, %v4067
  %v4092 = vpack.c.b16 %v4072, %v4070
  %v4093 = vpack.c.b16 %v4073, %v4071
  %v4115 = vsel %vm255, %v3802, 0
  %v4118 = vsel %vm255, %v3820, 0
  %v4121 = vsel %vm255, %v3838, 0
  %v4124 = vsel %vm255, %v3856, 0
  %v4127 = vsel %vm255, %v3874, 0
  %v4130 = vsel %vm255, %v3892, 0
  %v4133 = vsel %vm255, %v3910, 0
  %v4136 = vsel %vm255, %v3928, 0
  %v4139 = vsel %vm255, %v3946, 0
  %v4142 = vsel %vm255, %v3964, 0
  %v4145 = vsel %vm255, %v3982, 0
  %v4148 = vsel %vm255, %v4000, 0
  %v4151 = vsel %vm255, %v3999, 0
  %4153 = vmatpush.bf16.msra.mxu0 %v4088
  %4154 = vmatpush.bf16.msra.mxu0 %v4086
  %4155 = vmatpush.bf16.msra.mxu0 %v4084
  %4156 = vmatpush.bf16.msra.mxu0 %v4082
  %4157 = vmatpush.bf16.msra.mxu0 %v4080
  %4158 = vmatpush.bf16.msra.mxu0 %v4078
  %4159 = vmatpush.bf16.msra.mxu0 %v4076
  %4160 = vmatpush.bf16.msra.mxu0 %v4074
  %4161 = vmatmul.bf16.gmra.mxu0 %v3785
  %v4162 = vpop.f32.mrf.mxu0
  %v4163 = vadd.f32 0.0, %v4162
  %v4164 = vpop.f32.mrf.mxu0
  %v4165 = vadd.f32 0.0, %v4164
  %4166 = vmatmul.bf16.gmra.mxu0 %v3811
  %v4167 = vpop.f32.mrf.mxu0
  %v4168 = vadd.f32 0.0, %v4167
  %v4169 = vpop.f32.mrf.mxu0
  %v4170 = vadd.f32 0.0, %v4169
  %4171 = vmatmul.bf16.gmra.mxu0 %v3829
  %v4172 = vpop.f32.mrf.mxu0
  %v4173 = vadd.f32 0.0, %v4172
  %v4174 = vpop.f32.mrf.mxu0
  %v4175 = vadd.f32 0.0, %v4174
  %4176 = vmatmul.bf16.gmra.mxu0 %v3847
  %v4177 = vpop.f32.mrf.mxu0
  %v4178 = vadd.f32 0.0, %v4177
  %v4179 = vpop.f32.mrf.mxu0
  %v4180 = vadd.f32 0.0, %v4179
  %4181 = vmatmul.bf16.gmra.mxu0 %v3865
  %v4182 = vpop.f32.mrf.mxu0
  %v4183 = vadd.f32 0.0, %v4182
  %v4184 = vpop.f32.mrf.mxu0
  %v4185 = vadd.f32 0.0, %v4184
  %4186 = vmatmul.bf16.gmra.mxu0 %v3883
  %v4187 = vpop.f32.mrf.mxu0
  %v4188 = vadd.f32 0.0, %v4187
  %v4189 = vpop.f32.mrf.mxu0
  %v4190 = vadd.f32 0.0, %v4189
  %4191 = vmatmul.bf16.gmra.mxu0 %v3901
  %v4192 = vpop.f32.mrf.mxu0
  %v4193 = vadd.f32 0.0, %v4192
  %v4194 = vpop.f32.mrf.mxu0
  %v4195 = vadd.f32 0.0, %v4194
  %4196 = vmatmul.bf16.gmra.mxu0 %v3919
  %v4197 = vpop.f32.mrf.mxu0
  %v4198 = vadd.f32 0.0, %v4197
  %v4199 = vpop.f32.mrf.mxu0
  %v4200 = vadd.f32 0.0, %v4199
  %4201 = vmatmul.bf16.gmra.mxu0 %v3937
  %v4202 = vpop.f32.mrf.mxu0
  %v4203 = vadd.f32 0.0, %v4202
  %v4204 = vpop.f32.mrf.mxu0
  %v4205 = vadd.f32 0.0, %v4204
  %4206 = vmatmul.bf16.gmra.mxu0 %v3955
  %v4207 = vpop.f32.mrf.mxu0
  %v4208 = vadd.f32 0.0, %v4207
  %v4209 = vpop.f32.mrf.mxu0
  %v4210 = vadd.f32 0.0, %v4209
  %4211 = vmatmul.bf16.gmra.mxu0 %v3973
  %v4212 = vpop.f32.mrf.mxu0
  %v4213 = vadd.f32 0.0, %v4212
  %v4214 = vpop.f32.mrf.mxu0
  %v4215 = vadd.f32 0.0, %v4214
  %4216 = vmatmul.bf16.gmra.mxu0 %v3991
  %v4217 = vpop.f32.mrf.mxu0
  %v4218 = vadd.f32 0.0, %v4217
  %v4219 = vpop.f32.mrf.mxu0
  %v4220 = vadd.f32 0.0, %v4219
  %4221 = vmatmul.bf16.gmra.mxu0 %v3990
  %v4222 = vpop.f32.mrf.mxu0
  %v4223 = vadd.f32 0.0, %v4222
  %v4224 = vpop.f32.mrf.mxu0
  %4225 = vdwg.mxu0
  %4226 = vmatpush.bf16.msra.mxu0 0
  %4227 = vmatpush.bf16.msra.mxu0 0
  %4228 = vmatpush.bf16.msra.mxu0 0
  %4229 = vmatpush.bf16.msra.mxu0 0
  %4230 = vmatpush.bf16.msra.mxu0 0
  %4231 = vmatpush.bf16.msra.mxu0 0
  %4232 = vmatpush.bf16.msra.mxu0 %v4092
  %4233 = vmatpush.bf16.msra.mxu0 %v4090
  %4234 = vmatmul.bf16.gmra.mxu0 %v4115
  %v4235 = vpop.f32.mrf.mxu0
  %v4236 = vadd.f32 %v4163, %v4235
  %v4237 = vpop.f32.mrf.mxu0
  %v4238 = vadd.f32 %v4165, %v4237
  %4239 = vmatmul.bf16.gmra.mxu0 %v4118
  %v4240 = vpop.f32.mrf.mxu0
  %v4241 = vadd.f32 %v4168, %v4240
  %v4242 = vpop.f32.mrf.mxu0
  %v4243 = vadd.f32 %v4170, %v4242
  %4244 = vmatmul.bf16.gmra.mxu0 %v4121
  %v4245 = vpop.f32.mrf.mxu0
  %v4246 = vadd.f32 %v4173, %v4245
  %v4247 = vpop.f32.mrf.mxu0
  %v4248 = vadd.f32 %v4175, %v4247
  %4249 = vmatmul.bf16.gmra.mxu0 %v4124
  %v4250 = vpop.f32.mrf.mxu0
  %v4251 = vadd.f32 %v4178, %v4250
  %v4252 = vpop.f32.mrf.mxu0
  %v4253 = vadd.f32 %v4180, %v4252
  %4254 = vmatmul.bf16.gmra.mxu0 %v4127
  %v4255 = vpop.f32.mrf.mxu0
  %v4256 = vadd.f32 %v4183, %v4255
  %v4257 = vpop.f32.mrf.mxu0
  %v4258 = vadd.f32 %v4185, %v4257
  %4259 = vmatmul.bf16.gmra.mxu0 %v4130
  %v4260 = vpop.f32.mrf.mxu0
  %v4261 = vadd.f32 %v4188, %v4260
  %v4262 = vpop.f32.mrf.mxu0
  %v4263 = vadd.f32 %v4190, %v4262
  %4264 = vmatmul.bf16.gmra.mxu0 %v4133
  %v4265 = vpop.f32.mrf.mxu0
  %v4266 = vadd.f32 %v4193, %v4265
  %v4267 = vpop.f32.mrf.mxu0
  %v4268 = vadd.f32 %v4195, %v4267
  %4269 = vmatmul.bf16.gmra.mxu0 %v4136
  %v4270 = vpop.f32.mrf.mxu0
  %v4271 = vadd.f32 %v4198, %v4270
  %v4272 = vpop.f32.mrf.mxu0
  %v4273 = vadd.f32 %v4200, %v4272
  %4274 = vmatmul.bf16.gmra.mxu0 %v4139
  %v4275 = vpop.f32.mrf.mxu0
  %v4276 = vadd.f32 %v4203, %v4275
  %v4277 = vpop.f32.mrf.mxu0
  %v4278 = vadd.f32 %v4205, %v4277
  %4279 = vmatmul.bf16.gmra.mxu0 %v4142
  %v4280 = vpop.f32.mrf.mxu0
  %v4281 = vadd.f32 %v4208, %v4280
  %v4282 = vpop.f32.mrf.mxu0
  %v4283 = vadd.f32 %v4210, %v4282
  %4284 = vmatmul.bf16.gmra.mxu0 %v4145
  %v4285 = vpop.f32.mrf.mxu0
  %v4286 = vadd.f32 %v4213, %v4285
  %v4287 = vpop.f32.mrf.mxu0
  %v4288 = vadd.f32 %v4215, %v4287
  %4289 = vmatmul.bf16.gmra.mxu0 %v4148
  %v4290 = vpop.f32.mrf.mxu0
  %v4291 = vadd.f32 %v4218, %v4290
  %v4292 = vpop.f32.mrf.mxu0
  %v4293 = vadd.f32 %v4220, %v4292
  %4294 = vmatmul.bf16.gmra.mxu0 %v4151
  %v4295 = vpop.f32.mrf.mxu0
  %v4296 = vadd.f32 %v4223, %v4295
  %v4297 = vpop.f32.mrf.mxu0
  %4298 = vdwg.mxu0
  %4299 = vmatpush.bf16.msra.mxu0 %v4089
  %4300 = vmatpush.bf16.msra.mxu0 %v4087
  %4301 = vmatpush.bf16.msra.mxu0 %v4085
  %4302 = vmatpush.bf16.msra.mxu0 %v4083
  %4303 = vmatpush.bf16.msra.mxu0 %v4081
  %4304 = vmatpush.bf16.msra.mxu0 %v4079
  %4305 = vmatpush.bf16.msra.mxu0 %v4077
  %4306 = vmatpush.bf16.msra.mxu0 %v4075
  %4307 = vmatmul.bf16.gmra.mxu0 %v3785
  %v4308 = vpop.f32.mrf.mxu0
  %v4309 = vadd.f32 0.0, %v4308
  %v4310 = vpop.f32.mrf.mxu0
  %v4311 = vadd.f32 0.0, %v4310
  %4312 = vmatmul.bf16.gmra.mxu0 %v3811
  %v4313 = vpop.f32.mrf.mxu0
  %v4314 = vadd.f32 0.0, %v4313
  %v4315 = vpop.f32.mrf.mxu0
  %v4316 = vadd.f32 0.0, %v4315
  %4317 = vmatmul.bf16.gmra.mxu0 %v3829
  %v4318 = vpop.f32.mrf.mxu0
  %v4319 = vadd.f32 0.0, %v4318
  %v4320 = vpop.f32.mrf.mxu0
  %v4321 = vadd.f32 0.0, %v4320
  %4322 = vmatmul.bf16.gmra.mxu0 %v3847
  %v4323 = vpop.f32.mrf.mxu0
  %v4324 = vadd.f32 0.0, %v4323
  %v4325 = vpop.f32.mrf.mxu0
  %v4326 = vadd.f32 0.0, %v4325
  %4327 = vmatmul.bf16.gmra.mxu0 %v3865
  %v4328 = vpop.f32.mrf.mxu0
  %v4329 = vadd.f32 0.0, %v4328
  %v4330 = vpop.f32.mrf.mxu0
  %v4331 = vadd.f32 0.0, %v4330
  %4332 = vmatmul.bf16.gmra.mxu0 %v3883
  %v4333 = vpop.f32.mrf.mxu0
  %v4334 = vadd.f32 0.0, %v4333
  %v4335 = vpop.f32.mrf.mxu0
  %v4336 = vadd.f32 0.0, %v4335
  %4337 = vmatmul.bf16.gmra.mxu0 %v3901
  %v4338 = vpop.f32.mrf.mxu0
  %v4339 = vadd.f32 0.0, %v4338
  %v4340 = vpop.f32.mrf.mxu0
  %v4341 = vadd.f32 0.0, %v4340
  %4342 = vmatmul.bf16.gmra.mxu0 %v3919
  %v4343 = vpop.f32.mrf.mxu0
  %v4344 = vadd.f32 0.0, %v4343
  %v4345 = vpop.f32.mrf.mxu0
  %v4346 = vadd.f32 0.0, %v4345
  %4347 = vmatmul.bf16.gmra.mxu0 %v3937
  %v4348 = vpop.f32.mrf.mxu0
  %v4349 = vadd.f32 0.0, %v4348
  %v4350 = vpop.f32.mrf.mxu0
  %v4351 = vadd.f32 0.0, %v4350
  %4352 = vmatmul.bf16.gmra.mxu0 %v3955
  %v4353 = vpop.f32.mrf.mxu0
  %v4354 = vadd.f32 0.0, %v4353
  %v4355 = vpop.f32.mrf.mxu0
  %v4356 = vadd.f32 0.0, %v4355
  %4357 = vmatmul.bf16.gmra.mxu0 %v3973
  %v4358 = vpop.f32.mrf.mxu0
  %v4359 = vadd.f32 0.0, %v4358
  %v4360 = vpop.f32.mrf.mxu0
  %v4361 = vadd.f32 0.0, %v4360
  %4362 = vmatmul.bf16.gmra.mxu0 %v3991
  %v4363 = vpop.f32.mrf.mxu0
  %v4364 = vadd.f32 0.0, %v4363
  %v4365 = vpop.f32.mrf.mxu0
  %v4366 = vadd.f32 0.0, %v4365
  %4367 = vmatmul.bf16.gmra.mxu0 %v3990
  %v4368 = vpop.f32.mrf.mxu0
  %v4369 = vadd.f32 0.0, %v4368
  %v4370 = vpop.f32.mrf.mxu0
  %4371 = vdwg.mxu0
  %4372 = vmatpush.bf16.msra.mxu0 0
  %4373 = vmatpush.bf16.msra.mxu0 0
  %4374 = vmatpush.bf16.msra.mxu0 0
  %4375 = vmatpush.bf16.msra.mxu0 0
  %4376 = vmatpush.bf16.msra.mxu0 0
  %4377 = vmatpush.bf16.msra.mxu0 0
  %4378 = vmatpush.bf16.msra.mxu0 %v4093
  %4379 = vmatpush.bf16.msra.mxu0 %v4091
  %4380 = vmatmul.bf16.gmra.mxu0 %v4115
  %v4381 = vpop.f32.mrf.mxu0
  %v4382 = vadd.f32 %v4309, %v4381
  %v4383 = vpop.f32.mrf.mxu0
  %v4384 = vadd.f32 %v4311, %v4383
  %4385 = vmatmul.bf16.gmra.mxu0 %v4118
  %v4386 = vpop.f32.mrf.mxu0
  %v4387 = vadd.f32 %v4314, %v4386
  %v4388 = vpop.f32.mrf.mxu0
  %v4389 = vadd.f32 %v4316, %v4388
  %4390 = vmatmul.bf16.gmra.mxu0 %v4121
  %v4391 = vpop.f32.mrf.mxu0
  %v4392 = vadd.f32 %v4319, %v4391
  %v4393 = vpop.f32.mrf.mxu0
  %v4394 = vadd.f32 %v4321, %v4393
  %4395 = vmatmul.bf16.gmra.mxu0 %v4124
  %v4396 = vpop.f32.mrf.mxu0
  %v4397 = vadd.f32 %v4324, %v4396
  %v4398 = vpop.f32.mrf.mxu0
  %v4399 = vadd.f32 %v4326, %v4398
  %4400 = vmatmul.bf16.gmra.mxu0 %v4127
  %v4401 = vpop.f32.mrf.mxu0
  %v4402 = vadd.f32 %v4329, %v4401
  %v4403 = vpop.f32.mrf.mxu0
  %v4404 = vadd.f32 %v4331, %v4403
  %4405 = vmatmul.bf16.gmra.mxu0 %v4130
  %v4406 = vpop.f32.mrf.mxu0
  %v4407 = vadd.f32 %v4334, %v4406
  %v4408 = vpop.f32.mrf.mxu0
  %v4409 = vadd.f32 %v4336, %v4408
  %4410 = vmatmul.bf16.gmra.mxu0 %v4133
  %v4411 = vpop.f32.mrf.mxu0
  %v4412 = vadd.f32 %v4339, %v4411
  %v4413 = vpop.f32.mrf.mxu0
  %v4414 = vadd.f32 %v4341, %v4413
  %4415 = vmatmul.bf16.gmra.mxu0 %v4136
  %v4416 = vpop.f32.mrf.mxu0
  %v4417 = vadd.f32 %v4344, %v4416
  %v4418 = vpop.f32.mrf.mxu0
  %v4419 = vadd.f32 %v4346, %v4418
  %4420 = vmatmul.bf16.gmra.mxu0 %v4139
  %v4421 = vpop.f32.mrf.mxu0
  %v4422 = vadd.f32 %v4349, %v4421
  %v4423 = vpop.f32.mrf.mxu0
  %v4424 = vadd.f32 %v4351, %v4423
  %4425 = vmatmul.bf16.gmra.mxu0 %v4142
  %v4426 = vpop.f32.mrf.mxu0
  %v4427 = vadd.f32 %v4354, %v4426
  %v4428 = vpop.f32.mrf.mxu0
  %v4429 = vadd.f32 %v4356, %v4428
  %4430 = vmatmul.bf16.gmra.mxu0 %v4145
  %v4431 = vpop.f32.mrf.mxu0
  %v4432 = vadd.f32 %v4359, %v4431
  %v4433 = vpop.f32.mrf.mxu0
  %v4434 = vadd.f32 %v4361, %v4433
  %4435 = vmatmul.bf16.gmra.mxu0 %v4148
  %v4436 = vpop.f32.mrf.mxu0
  %v4437 = vadd.f32 %v4364, %v4436
  %v4438 = vpop.f32.mrf.mxu0
  %v4439 = vadd.f32 %v4366, %v4438
  %4440 = vmatmul.bf16.gmra.mxu0 %v4151
  %v4441 = vpop.f32.mrf.mxu0
  %v4442 = vadd.f32 %v4369, %v4441
  %v4443 = vpop.f32.mrf.mxu0
  %4444 = vdwg.mxu0
  %v4445 = vadd.f32 %v3408, %v4236
  %v4446 = vadd.f32 %v3554, %v4382
  %v4447 = vadd.f32 %v3410, %v4238
  %v4448 = vadd.f32 %v3556, %v4384
  %v4449 = vadd.f32 %v3413, %v4241
  %v4450 = vadd.f32 %v3559, %v4387
  %v4451 = vadd.f32 %v3415, %v4243
  %v4452 = vadd.f32 %v3561, %v4389
  %v4453 = vadd.f32 %v3418, %v4246
  %v4454 = vadd.f32 %v3564, %v4392
  %v4455 = vadd.f32 %v3420, %v4248
  %v4456 = vadd.f32 %v3566, %v4394
  %v4457 = vadd.f32 %v3423, %v4251
  %v4458 = vadd.f32 %v3569, %v4397
  %v4459 = vadd.f32 %v3425, %v4253
  %v4460 = vadd.f32 %v3571, %v4399
  %v4461 = vadd.f32 %v3428, %v4256
  %v4462 = vadd.f32 %v3574, %v4402
  %v4463 = vadd.f32 %v3430, %v4258
  %v4464 = vadd.f32 %v3576, %v4404
  %v4465 = vadd.f32 %v3433, %v4261
  %v4466 = vadd.f32 %v3579, %v4407
  %v4467 = vadd.f32 %v3435, %v4263
  %v4468 = vadd.f32 %v3581, %v4409
  %v4469 = vadd.f32 %v3438, %v4266
  %v4470 = vadd.f32 %v3584, %v4412
  %v4471 = vadd.f32 %v3440, %v4268
  %v4472 = vadd.f32 %v3586, %v4414
  %v4473 = vadd.f32 %v3443, %v4271
  %v4474 = vadd.f32 %v3589, %v4417
  %v4475 = vadd.f32 %v3445, %v4273
  %v4476 = vadd.f32 %v3591, %v4419
  %v4477 = vadd.f32 %v3448, %v4276
  %v4478 = vadd.f32 %v3594, %v4422
  %v4479 = vadd.f32 %v3450, %v4278
  %v4480 = vadd.f32 %v3596, %v4424
  %v4481 = vadd.f32 %v3453, %v4281
  %v4482 = vadd.f32 %v3599, %v4427
  %v4483 = vadd.f32 %v3455, %v4283
  %v4484 = vadd.f32 %v3601, %v4429
  %v4485 = vadd.f32 %v3458, %v4286
  %v4486 = vadd.f32 %v3604, %v4432
  %v4487 = vadd.f32 %v3460, %v4288
  %v4488 = vadd.f32 %v3606, %v4434
  %v4489 = vadd.f32 %v3463, %v4291
  %v4490 = vadd.f32 %v3609, %v4437
  %v4491 = vadd.f32 %v3465, %v4293
  %v4492 = vadd.f32 %v3611, %v4439
  %v4493 = vadd.f32 %v3468, %v4296
  %v4494 = vadd.f32 %v3614, %v4442
  %v4495 = vsel %vm2030, 1, 0
  %v4496 = vsel %vm2031, 1, 0
  %v4497 = vsel %vm2032, 1, 0
  %v4498 = vsel %vm2033, 1, 0
  %v4499 = vsel %vm2034, 1, 0
  %v4500 = vsel %vm2035, 1, 0
  %v4501 = vsel %vm2036, 1, 0
  %v4502 = vsel %vm2037, 1, 0
  %v4503 = vsel %vm2038, 1, 0
  %v4504 = vsel %vm2039, 1, 0
  %v4505 = vsel %vm2040, 1, 0
  %v4506 = vsel %vm2041, 1, 0
  %v4507 = vsel %vm2042, 1, 0
  %v4508 = vsel %vm2043, 1, 0
  %v4509 = vsel %vm2044, 1, 0
  %v4510 = vsel %vm2045, 1, 0
  %v4511 = vsel %vm2046, 1, 0
  %v4512 = vsel %vm2047, 1, 0
  %v4513 = vsel %vm2048, 1, 0
  %v4514 = vsel %vm2049, 1, 0
  %v4515 = vsel %vm2050, 1, 0
  %v4516 = vsel %vm2051, 1, 0
  %v4517 = vsel %vm2052, 1, 0
  %v4518 = vsel %vm2053, 1, 0
  %v4519 = vsel %vm2054, 1, 0
  %vm4520 = vcmp.eq.s32.totalorder %v4495, 1
  %vm4521 = vcmp.eq.s32.totalorder %v4496, 1
  %vm4522 = vcmp.eq.s32.totalorder %v4497, 1
  %vm4523 = vcmp.eq.s32.totalorder %v4498, 1
  %vm4524 = vcmp.eq.s32.totalorder %v4499, 1
  %vm4525 = vcmp.eq.s32.totalorder %v4500, 1
  %vm4526 = vcmp.eq.s32.totalorder %v4501, 1
  %vm4527 = vcmp.eq.s32.totalorder %v4502, 1
  %vm4528 = vcmp.eq.s32.totalorder %v4503, 1
  %vm4529 = vcmp.eq.s32.totalorder %v4504, 1
  %vm4530 = vcmp.eq.s32.totalorder %v4505, 1
  %vm4531 = vcmp.eq.s32.totalorder %v4506, 1
  %vm4532 = vcmp.eq.s32.totalorder %v4507, 1
  %vm4533 = vcmp.eq.s32.totalorder %v4508, 1
  %vm4534 = vcmp.eq.s32.totalorder %v4509, 1
  %vm4535 = vcmp.eq.s32.totalorder %v4510, 1
  %vm4536 = vcmp.eq.s32.totalorder %v4511, 1
  %vm4537 = vcmp.eq.s32.totalorder %v4512, 1
  %vm4538 = vcmp.eq.s32.totalorder %v4513, 1
  %vm4539 = vcmp.eq.s32.totalorder %v4514, 1
  %vm4540 = vcmp.eq.s32.totalorder %v4515, 1
  %vm4541 = vcmp.eq.s32.totalorder %v4516, 1
  %vm4542 = vcmp.eq.s32.totalorder %v4517, 1
  %vm4543 = vcmp.eq.s32.totalorder %v4518, 1
  %vm4544 = vcmp.eq.s32.totalorder %v4519, 1
  %v4545 = vsel %vm4520, %v4445, 0.0
  %v4546 = vsel %vm4520, %v4446, 0.0
  %v4547 = vsel %vm4521, %v4447, 0.0
  %v4548 = vsel %vm4521, %v4448, 0.0
  %v4549 = vsel %vm4522, %v4449, 0.0
  %v4550 = vsel %vm4522, %v4450, 0.0
  %v4551 = vsel %vm4523, %v4451, 0.0
  %v4552 = vsel %vm4523, %v4452, 0.0
  %v4553 = vsel %vm4524, %v4453, 0.0
  %v4554 = vsel %vm4524, %v4454, 0.0
  %v4555 = vsel %vm4525, %v4455, 0.0
  %v4556 = vsel %vm4525, %v4456, 0.0
  %v4557 = vsel %vm4526, %v4457, 0.0
  %v4558 = vsel %vm4526, %v4458, 0.0
  %v4559 = vsel %vm4527, %v4459, 0.0
  %v4560 = vsel %vm4527, %v4460, 0.0
  %v4561 = vsel %vm4528, %v4461, 0.0
  %v4562 = vsel %vm4528, %v4462, 0.0
  %v4563 = vsel %vm4529, %v4463, 0.0
  %v4564 = vsel %vm4529, %v4464, 0.0
  %v4565 = vsel %vm4530, %v4465, 0.0
  %v4566 = vsel %vm4530, %v4466, 0.0
  %v4567 = vsel %vm4531, %v4467, 0.0
  %v4568 = vsel %vm4531, %v4468, 0.0
  %v4569 = vsel %vm4532, %v4469, 0.0
  %v4570 = vsel %vm4532, %v4470, 0.0
  %v4571 = vsel %vm4533, %v4471, 0.0
  %v4572 = vsel %vm4533, %v4472, 0.0
  %v4573 = vsel %vm4534, %v4473, 0.0
  %v4574 = vsel %vm4534, %v4474, 0.0
  %v4575 = vsel %vm4535, %v4475, 0.0
  %v4576 = vsel %vm4535, %v4476, 0.0
  %v4577 = vsel %vm4536, %v4477, 0.0
  %v4578 = vsel %vm4536, %v4478, 0.0
  %v4579 = vsel %vm4537, %v4479, 0.0
  %v4580 = vsel %vm4537, %v4480, 0.0
  %v4581 = vsel %vm4538, %v4481, 0.0
  %v4582 = vsel %vm4538, %v4482, 0.0
  %v4583 = vsel %vm4539, %v4483, 0.0
  %v4584 = vsel %vm4539, %v4484, 0.0
  %v4585 = vsel %vm4540, %v4485, 0.0
  %v4586 = vsel %vm4540, %v4486, 0.0
  %v4587 = vsel %vm4541, %v4487, 0.0
  %v4588 = vsel %vm4541, %v4488, 0.0
  %v4589 = vsel %vm4542, %v4489, 0.0
  %v4590 = vsel %vm4542, %v4490, 0.0
  %v4591 = vsel %vm4543, %v4491, 0.0
  %v4592 = vsel %vm4543, %v4492, 0.0
  %v4593 = vsel %vm4544, %v4493, 0.0
  %v4594 = vsel %vm4544, %v4494, 0.0
  %v4595 = vld [vmem:[#allocation2] sm:$0xee]
  %s4596 = scalar_lea.vmem %s4, 160
  %v4597 = vld [vmem:[%s4596] sm:$0xff]
  %v4598 = vld [vmem:[%s4596 + $0x8] sm:$0xff]
  %v4599 = vld [vmem:[%s4596 + $0x10] sm:$0xff]
  %v4600 = vld [vmem:[%s4596 + $0x18] sm:$0xff]
  %v4601 = vld [vmem:[%s4596 + $0x20] sm:$0xff]
  %v4602 = vld [vmem:[%s4596 + $0x28] sm:$0xff]
  %v4603 = vld [vmem:[%s4596 + $0x30] sm:$0xff]
  %v4604 = vld [vmem:[%s4596 + $0x38] sm:$0xff]
  %v4605 = vld [vmem:[%s4596 + $0x40] sm:$0xff]
  %v4606 = vld [vmem:[%s4596 + $0x48] sm:$0xff]
  %v4607 = vld [vmem:[%s4596 + $0x50] sm:$0xff]
  %v4608 = vld [vmem:[%s4596 + $0x58] sm:$0xff]
  %v4609 = vld [vmem:[%s4596 + $0x60] sm:$0xff]
  %v4610 = vld [vmem:[%s4596 + $0x68] sm:$0xff]
  %v4611 = vld [vmem:[%s4596 + $0x70] sm:$0xff]
  %v4612 = vld [vmem:[%s4596 + $0x78] sm:$0xff]
  %v4613 = vld [vmem:[%s4596 + $0x80] sm:$0xff]
  %v4614 = vld [vmem:[%s4596 + $0x88] sm:$0xff]
  %v4615 = vld [vmem:[%s4596 + $0x90] sm:$0xff]
  %v4616 = vld [vmem:[%s4596 + $0x98] sm:$0xff]
  %s4617 = scalar_lea.vmem %s4, 640
  %v4618 = vld [vmem:[%s4617] sm:$0xff]
  %v4619 = vld [vmem:[%s4617 + $0x8] sm:$0xff]
  %v4620 = vld [vmem:[%s4617 + $0x10] sm:$0xff]
  %v4621 = vld [vmem:[%s4617 + $0x18] sm:$0xff]
  %v4622 = vld [vmem:[%s4617 + $0x20] sm:$0xff]
  %v4623 = vld [vmem:[%s4617 + $0x28] sm:$0xff]
  %v4624 = vld [vmem:[%s4617 + $0x30] sm:$0xff]
  %v4625 = vld [vmem:[%s4617 + $0x38] sm:$0xff]
  %v4626 = vld [vmem:[%s4617 + $0x40] sm:$0xff]
  %v4627 = vld [vmem:[%s4617 + $0x48] sm:$0xff]
  %v4628 = vld [vmem:[%s4617 + $0x50] sm:$0xff]
  %v4629 = vld [vmem:[%s4617 + $0x58] sm:$0xff]
  %v4630 = vld [vmem:[%s4617 + $0x60] sm:$0xff]
  %v4631 = vld [vmem:[%s4617 + $0x68] sm:$0xff]
  %v4632 = vld [vmem:[%s4617 + $0x70] sm:$0xff]
  %v4633 = vld [vmem:[%s4617 + $0x78] sm:$0xff]
  %v4634 = vld [vmem:[%s4617 + $0x80] sm:$0xff]
  %v4635 = vld [vmem:[%s4617 + $0x88] sm:$0xff]
  %v4636 = vld [vmem:[%s4617 + $0x90] sm:$0xff]
  %v4637 = vld [vmem:[%s4617 + $0x98] sm:$0xff]
  %v4638 = vpack.c.b16 %v2224, %v2222
  %v4639 = vpack.c.b16 %v2225, %v2223
  %v4640 = vpack.c.b16 %v2226, %v2226
  %v4641 = vpack.c.b16 %v2227, %v2227
  %v4675 = vunpack.c.l.b16 %v4618
  %v4676 = vunpack.c.h.b16 %v4618
  %v4677 = vunpack.c.l.b16 %v4619
  %v4678 = vunpack.c.h.b16 %v4619
  %v4679 = vunpack.c.l.b16 %v4620
  %v4680 = vunpack.c.h.b16 %v4620
  %v4681 = vunpack.c.l.b16 %v4621
  %v4682 = vunpack.c.h.b16 %v4621
  %v4683 = vunpack.c.l.b16 %v4622
  %v4684 = vunpack.c.h.b16 %v4622
  %v4685 = vunpack.c.l.b16 %v4623
  %v4686 = vunpack.c.h.b16 %v4623
  %v4687 = vunpack.c.l.b16 %v4624
  %v4688 = vunpack.c.h.b16 %v4624
  %v4689 = vunpack.c.l.b16 %v4625
  %v4690 = vunpack.c.h.b16 %v4625
  %v4691 = vunpack.c.l.b16 %v4626
  %v4692 = vunpack.c.h.b16 %v4626
  %v4693 = vunpack.c.l.b16 %v4627
  %v4694 = vunpack.c.h.b16 %v4627
  %v4695 = vunpack.c.l.b16 %v4628
  %v4696 = vunpack.c.h.b16 %v4628
  %v4697 = vunpack.c.l.b16 %v4629
  %v4698 = vunpack.c.h.b16 %v4629
  %v4699 = vunpack.c.l.b16 %v4630
  %v4700 = vunpack.c.h.b16 %v4630
  %v4701 = vunpack.c.l.b16 %v4631
  %v4702 = vunpack.c.h.b16 %v4631
  %v4703 = vunpack.c.l.b16 %v4632
  %v4704 = vunpack.c.h.b16 %v4632
  %v4705 = vunpack.c.l.b16 %v4633
  %v4706 = vunpack.c.h.b16 %v4633
  %v4707 = vunpack.c.l.b16 %v4634
  %v4708 = vunpack.c.h.b16 %v4634
  %v4709 = vunpack.c.l.b16 %v4635
  %v4710 = vunpack.c.h.b16 %v4635
  %v4711 = vunpack.c.l.b16 %v4636
  %v4712 = vunpack.c.h.b16 %v4636
  %v4713 = vunpack.c.l.b16 %v4637
  %v4714 = vunpack.c.h.b16 %v4637
  %v4715 = vpack.c.b16 %v4677, %v4675
  %v4716 = vpack.c.b16 %v4678, %v4676
  %v4717 = vpack.c.b16 %v4681, %v4679
  %v4718 = vpack.c.b16 %v4682, %v4680
  %v4719 = vpack.c.b16 %v4685, %v4683
  %v4720 = vpack.c.b16 %v4686, %v4684
  %v4721 = vpack.c.b16 %v4689, %v4687
  %v4722 = vpack.c.b16 %v4690, %v4688
  %v4723 = vpack.c.b16 %v4693, %v4691
  %v4724 = vpack.c.b16 %v4694, %v4692
  %v4725 = vpack.c.b16 %v4697, %v4695
  %v4726 = vpack.c.b16 %v4698, %v4696
  %v4727 = vpack.c.b16 %v4701, %v4699
  %v4728 = vpack.c.b16 %v4702, %v4700
  %v4729 = vpack.c.b16 %v4705, %v4703
  %v4730 = vpack.c.b16 %v4706, %v4704
  %v4731 = vpack.c.b16 %v4709, %v4707
  %v4732 = vpack.c.b16 %v4710, %v4708
  %v4733 = vpack.c.b16 %v4713, %v4711
  %v4734 = vpack.c.b16 %v4714, %v4712
  %v4755 = vsel %vm255, %v2943, 0
  %v4757 = vsel %vm255, %v2945, 0
  %v4759 = vsel %vm255, %v2947, 0
  %v4761 = vsel %vm255, %v2949, 0
  %v4763 = vsel %vm255, %v2951, 0
  %v4765 = vsel %vm255, %v2953, 0
  %v4767 = vsel %vm255, %v2955, 0
  %v4769 = vsel %vm255, %v2957, 0
  %v4771 = vsel %vm255, %v2959, 0
  %v4773 = vsel %vm255, %v2961, 0
  %v4775 = vsel %vm255, %v2963, 0
  %v4778 = vsel %vm255, %v4639, 0
  %v4781 = vsel %vm255, %v4641, 0
  %4783 = vmatpush.bf16.msra.mxu0 %v4729
  %4784 = vmatpush.bf16.msra.mxu0 %v4727
  %4785 = vmatpush.bf16.msra.mxu0 %v4725
  %4786 = vmatpush.bf16.msra.mxu0 %v4723
  %4787 = vmatpush.bf16.msra.mxu0 %v4721
  %4788 = vmatpush.bf16.msra.mxu0 %v4719
  %4789 = vmatpush.bf16.msra.mxu0 %v4717
  %4790 = vmatpush.bf16.msra.mxu0 %v4715
  %4791 = vmatmul.bf16.gmra.mxu0 %v2942
  %v4792 = vpop.f32.mrf.mxu0
  %v4793 = vadd.f32 0.0, %v4792
  %v4794 = vpop.f32.mrf.mxu0
  %v4795 = vadd.f32 0.0, %v4794
  %4796 = vmatmul.bf16.gmra.mxu0 %v2944
  %v4797 = vpop.f32.mrf.mxu0
  %v4798 = vadd.f32 0.0, %v4797
  %v4799 = vpop.f32.mrf.mxu0
  %v4800 = vadd.f32 0.0, %v4799
  %4801 = vmatmul.bf16.gmra.mxu0 %v2946
  %v4802 = vpop.f32.mrf.mxu0
  %v4803 = vadd.f32 0.0, %v4802
  %v4804 = vpop.f32.mrf.mxu0
  %v4805 = vadd.f32 0.0, %v4804
  %4806 = vmatmul.bf16.gmra.mxu0 %v2948
  %v4807 = vpop.f32.mrf.mxu0
  %v4808 = vadd.f32 0.0, %v4807
  %v4809 = vpop.f32.mrf.mxu0
  %v4810 = vadd.f32 0.0, %v4809
  %4811 = vmatmul.bf16.gmra.mxu0 %v2950
  %v4812 = vpop.f32.mrf.mxu0
  %v4813 = vadd.f32 0.0, %v4812
  %v4814 = vpop.f32.mrf.mxu0
  %v4815 = vadd.f32 0.0, %v4814
  %4816 = vmatmul.bf16.gmra.mxu0 %v2952
  %v4817 = vpop.f32.mrf.mxu0
  %v4818 = vadd.f32 0.0, %v4817
  %v4819 = vpop.f32.mrf.mxu0
  %v4820 = vadd.f32 0.0, %v4819
  %4821 = vmatmul.bf16.gmra.mxu0 %v2954
  %v4822 = vpop.f32.mrf.mxu0
  %v4823 = vadd.f32 0.0, %v4822
  %v4824 = vpop.f32.mrf.mxu0
  %v4825 = vadd.f32 0.0, %v4824
  %4826 = vmatmul.bf16.gmra.mxu0 %v2956
  %v4827 = vpop.f32.mrf.mxu0
  %v4828 = vadd.f32 0.0, %v4827
  %v4829 = vpop.f32.mrf.mxu0
  %v4830 = vadd.f32 0.0, %v4829
  %4831 = vmatmul.bf16.gmra.mxu0 %v2958
  %v4832 = vpop.f32.mrf.mxu0
  %v4833 = vadd.f32 0.0, %v4832
  %v4834 = vpop.f32.mrf.mxu0
  %v4835 = vadd.f32 0.0, %v4834
  %4836 = vmatmul.bf16.gmra.mxu0 %v2960
  %v4837 = vpop.f32.mrf.mxu0
  %v4838 = vadd.f32 0.0, %v4837
  %v4839 = vpop.f32.mrf.mxu0
  %v4840 = vadd.f32 0.0, %v4839
  %4841 = vmatmul.bf16.gmra.mxu0 %v2962
  %v4842 = vpop.f32.mrf.mxu0
  %v4843 = vadd.f32 0.0, %v4842
  %v4844 = vpop.f32.mrf.mxu0
  %v4845 = vadd.f32 0.0, %v4844
  %4846 = vmatmul.bf16.gmra.mxu0 %v4638
  %v4847 = vpop.f32.mrf.mxu0
  %v4848 = vadd.f32 0.0, %v4847
  %v4849 = vpop.f32.mrf.mxu0
  %v4850 = vadd.f32 0.0, %v4849
  %4851 = vmatmul.bf16.gmra.mxu0 %v4640
  %v4852 = vpop.f32.mrf.mxu0
  %v4853 = vadd.f32 0.0, %v4852
  %v4854 = vpop.f32.mrf.mxu0
  %4855 = vdwg.mxu0
  %4856 = vmatpush.bf16.msra.mxu0 0
  %4857 = vmatpush.bf16.msra.mxu0 0
  %4858 = vmatpush.bf16.msra.mxu0 0
  %4859 = vmatpush.bf16.msra.mxu0 0
  %4860 = vmatpush.bf16.msra.mxu0 0
  %4861 = vmatpush.bf16.msra.mxu0 0
  %4862 = vmatpush.bf16.msra.mxu0 %v4733
  %4863 = vmatpush.bf16.msra.mxu0 %v4731
  %4864 = vmatmul.bf16.gmra.mxu0 %v4755
  %v4865 = vpop.f32.mrf.mxu0
  %v4866 = vadd.f32 %v4793, %v4865
  %v4867 = vpop.f32.mrf.mxu0
  %v4868 = vadd.f32 %v4795, %v4867
  %4869 = vmatmul.bf16.gmra.mxu0 %v4757
  %v4870 = vpop.f32.mrf.mxu0
  %v4871 = vadd.f32 %v4798, %v4870
  %v4872 = vpop.f32.mrf.mxu0
  %v4873 = vadd.f32 %v4800, %v4872
  %4874 = vmatmul.bf16.gmra.mxu0 %v4759
  %v4875 = vpop.f32.mrf.mxu0
  %v4876 = vadd.f32 %v4803, %v4875
  %v4877 = vpop.f32.mrf.mxu0
  %v4878 = vadd.f32 %v4805, %v4877
  %4879 = vmatmul.bf16.gmra.mxu0 %v4761
  %v4880 = vpop.f32.mrf.mxu0
  %v4881 = vadd.f32 %v4808, %v4880
  %v4882 = vpop.f32.mrf.mxu0
  %v4883 = vadd.f32 %v4810, %v4882
  %4884 = vmatmul.bf16.gmra.mxu0 %v4763
  %v4885 = vpop.f32.mrf.mxu0
  %v4886 = vadd.f32 %v4813, %v4885
  %v4887 = vpop.f32.mrf.mxu0
  %v4888 = vadd.f32 %v4815, %v4887
  %4889 = vmatmul.bf16.gmra.mxu0 %v4765
  %v4890 = vpop.f32.mrf.mxu0
  %v4891 = vadd.f32 %v4818, %v4890
  %v4892 = vpop.f32.mrf.mxu0
  %v4893 = vadd.f32 %v4820, %v4892
  %4894 = vmatmul.bf16.gmra.mxu0 %v4767
  %v4895 = vpop.f32.mrf.mxu0
  %v4896 = vadd.f32 %v4823, %v4895
  %v4897 = vpop.f32.mrf.mxu0
  %v4898 = vadd.f32 %v4825, %v4897
  %4899 = vmatmul.bf16.gmra.mxu0 %v4769
  %v4900 = vpop.f32.mrf.mxu0
  %v4901 = vadd.f32 %v4828, %v4900
  %v4902 = vpop.f32.mrf.mxu0
  %v4903 = vadd.f32 %v4830, %v4902
  %4904 = vmatmul.bf16.gmra.mxu0 %v4771
  %v4905 = vpop.f32.mrf.mxu0
  %v4906 = vadd.f32 %v4833, %v4905
  %v4907 = vpop.f32.mrf.mxu0
  %v4908 = vadd.f32 %v4835, %v4907
  %4909 = vmatmul.bf16.gmra.mxu0 %v4773
  %v4910 = vpop.f32.mrf.mxu0
  %v4911 = vadd.f32 %v4838, %v4910
  %v4912 = vpop.f32.mrf.mxu0
  %v4913 = vadd.f32 %v4840, %v4912
  %4914 = vmatmul.bf16.gmra.mxu0 %v4775
  %v4915 = vpop.f32.mrf.mxu0
  %v4916 = vadd.f32 %v4843, %v4915
  %v4917 = vpop.f32.mrf.mxu0
  %v4918 = vadd.f32 %v4845, %v4917
  %4919 = vmatmul.bf16.gmra.mxu0 %v4778
  %v4920 = vpop.f32.mrf.mxu0
  %v4921 = vadd.f32 %v4848, %v4920
  %v4922 = vpop.f32.mrf.mxu0
  %v4923 = vadd.f32 %v4850, %v4922
  %4924 = vmatmul.bf16.gmra.mxu0 %v4781
  %v4925 = vpop.f32.mrf.mxu0
  %v4926 = vadd.f32 %v4853, %v4925
  %v4927 = vpop.f32.mrf.mxu0
  %4928 = vdwg.mxu0
  %4929 = vmatpush.bf16.msra.mxu0 %v4730
  %4930 = vmatpush.bf16.msra.mxu0 %v4728
  %4931 = vmatpush.bf16.msra.mxu0 %v4726
  %4932 = vmatpush.bf16.msra.mxu0 %v4724
  %4933 = vmatpush.bf16.msra.mxu0 %v4722
  %4934 = vmatpush.bf16.msra.mxu0 %v4720
  %4935 = vmatpush.bf16.msra.mxu0 %v4718
  %4936 = vmatpush.bf16.msra.mxu0 %v4716
  %4937 = vmatmul.bf16.gmra.mxu0 %v2942
  %v4938 = vpop.f32.mrf.mxu0
  %v4939 = vadd.f32 0.0, %v4938
  %v4940 = vpop.f32.mrf.mxu0
  %v4941 = vadd.f32 0.0, %v4940
  %4942 = vmatmul.bf16.gmra.mxu0 %v2944
  %v4943 = vpop.f32.mrf.mxu0
  %v4944 = vadd.f32 0.0, %v4943
  %v4945 = vpop.f32.mrf.mxu0
  %v4946 = vadd.f32 0.0, %v4945
  %4947 = vmatmul.bf16.gmra.mxu0 %v2946
  %v4948 = vpop.f32.mrf.mxu0
  %v4949 = vadd.f32 0.0, %v4948
  %v4950 = vpop.f32.mrf.mxu0
  %v4951 = vadd.f32 0.0, %v4950
  %4952 = vmatmul.bf16.gmra.mxu0 %v2948
  %v4953 = vpop.f32.mrf.mxu0
  %v4954 = vadd.f32 0.0, %v4953
  %v4955 = vpop.f32.mrf.mxu0
  %v4956 = vadd.f32 0.0, %v4955
  %4957 = vmatmul.bf16.gmra.mxu0 %v2950
  %v4958 = vpop.f32.mrf.mxu0
  %v4959 = vadd.f32 0.0, %v4958
  %v4960 = vpop.f32.mrf.mxu0
  %v4961 = vadd.f32 0.0, %v4960
  %4962 = vmatmul.bf16.gmra.mxu0 %v2952
  %v4963 = vpop.f32.mrf.mxu0
  %v4964 = vadd.f32 0.0, %v4963
  %v4965 = vpop.f32.mrf.mxu0
  %v4966 = vadd.f32 0.0, %v4965
  %4967 = vmatmul.bf16.gmra.mxu0 %v2954
  %v4968 = vpop.f32.mrf.mxu0
  %v4969 = vadd.f32 0.0, %v4968
  %v4970 = vpop.f32.mrf.mxu0
  %v4971 = vadd.f32 0.0, %v4970
  %4972 = vmatmul.bf16.gmra.mxu0 %v2956
  %v4973 = vpop.f32.mrf.mxu0
  %v4974 = vadd.f32 0.0, %v4973
  %v4975 = vpop.f32.mrf.mxu0
  %v4976 = vadd.f32 0.0, %v4975
  %4977 = vmatmul.bf16.gmra.mxu0 %v2958
  %v4978 = vpop.f32.mrf.mxu0
  %v4979 = vadd.f32 0.0, %v4978
  %v4980 = vpop.f32.mrf.mxu0
  %v4981 = vadd.f32 0.0, %v4980
  %4982 = vmatmul.bf16.gmra.mxu0 %v2960
  %v4983 = vpop.f32.mrf.mxu0
  %v4984 = vadd.f32 0.0, %v4983
  %v4985 = vpop.f32.mrf.mxu0
  %v4986 = vadd.f32 0.0, %v4985
  %4987 = vmatmul.bf16.gmra.mxu0 %v2962
  %v4988 = vpop.f32.mrf.mxu0
  %v4989 = vadd.f32 0.0, %v4988
  %v4990 = vpop.f32.mrf.mxu0
  %v4991 = vadd.f32 0.0, %v4990
  %4992 = vmatmul.bf16.gmra.mxu0 %v4638
  %v4993 = vpop.f32.mrf.mxu0
  %v4994 = vadd.f32 0.0, %v4993
  %v4995 = vpop.f32.mrf.mxu0
  %v4996 = vadd.f32 0.0, %v4995
  %4997 = vmatmul.bf16.gmra.mxu0 %v4640
  %v4998 = vpop.f32.mrf.mxu0
  %v4999 = vadd.f32 0.0, %v4998
  %v5000 = vpop.f32.mrf.mxu0
  %5001 = vdwg.mxu0
  %5002 = vmatpush.bf16.msra.mxu0 0
  %5003 = vmatpush.bf16.msra.mxu0 0
  %5004 = vmatpush.bf16.msra.mxu0 0
  %5005 = vmatpush.bf16.msra.mxu0 0
  %5006 = vmatpush.bf16.msra.mxu0 0
  %5007 = vmatpush.bf16.msra.mxu0 0
  %5008 = vmatpush.bf16.msra.mxu0 %v4734
  %5009 = vmatpush.bf16.msra.mxu0 %v4732
  %5010 = vmatmul.bf16.gmra.mxu0 %v4755
  %v5011 = vpop.f32.mrf.mxu0
  %v5012 = vadd.f32 %v4939, %v5011
  %v5013 = vpop.f32.mrf.mxu0
  %v5014 = vadd.f32 %v4941, %v5013
  %5015 = vmatmul.bf16.gmra.mxu0 %v4757
  %v5016 = vpop.f32.mrf.mxu0
  %v5017 = vadd.f32 %v4944, %v5016
  %v5018 = vpop.f32.mrf.mxu0
  %v5019 = vadd.f32 %v4946, %v5018
  %5020 = vmatmul.bf16.gmra.mxu0 %v4759
  %v5021 = vpop.f32.mrf.mxu0
  %v5022 = vadd.f32 %v4949, %v5021
  %v5023 = vpop.f32.mrf.mxu0
  %v5024 = vadd.f32 %v4951, %v5023
  %5025 = vmatmul.bf16.gmra.mxu0 %v4761
  %v5026 = vpop.f32.mrf.mxu0
  %v5027 = vadd.f32 %v4954, %v5026
  %v5028 = vpop.f32.mrf.mxu0
  %v5029 = vadd.f32 %v4956, %v5028
  %5030 = vmatmul.bf16.gmra.mxu0 %v4763
  %v5031 = vpop.f32.mrf.mxu0
  %v5032 = vadd.f32 %v4959, %v5031
  %v5033 = vpop.f32.mrf.mxu0
  %v5034 = vadd.f32 %v4961, %v5033
  %5035 = vmatmul.bf16.gmra.mxu0 %v4765
  %v5036 = vpop.f32.mrf.mxu0
  %v5037 = vadd.f32 %v4964, %v5036
  %v5038 = vpop.f32.mrf.mxu0
  %v5039 = vadd.f32 %v4966, %v5038
  %5040 = vmatmul.bf16.gmra.mxu0 %v4767
  %v5041 = vpop.f32.mrf.mxu0
  %v5042 = vadd.f32 %v4969, %v5041
  %v5043 = vpop.f32.mrf.mxu0
  %v5044 = vadd.f32 %v4971, %v5043
  %5045 = vmatmul.bf16.gmra.mxu0 %v4769
  %v5046 = vpop.f32.mrf.mxu0
  %v5047 = vadd.f32 %v4974, %v5046
  %v5048 = vpop.f32.mrf.mxu0
  %v5049 = vadd.f32 %v4976, %v5048
  %5050 = vmatmul.bf16.gmra.mxu0 %v4771
  %v5051 = vpop.f32.mrf.mxu0
  %v5052 = vadd.f32 %v4979, %v5051
  %v5053 = vpop.f32.mrf.mxu0
  %v5054 = vadd.f32 %v4981, %v5053
  %5055 = vmatmul.bf16.gmra.mxu0 %v4773
  %v5056 = vpop.f32.mrf.mxu0
  %v5057 = vadd.f32 %v4984, %v5056
  %v5058 = vpop.f32.mrf.mxu0
  %v5059 = vadd.f32 %v4986, %v5058
  %5060 = vmatmul.bf16.gmra.mxu0 %v4775
  %v5061 = vpop.f32.mrf.mxu0
  %v5062 = vadd.f32 %v4989, %v5061
  %v5063 = vpop.f32.mrf.mxu0
  %v5064 = vadd.f32 %v4991, %v5063
  %5065 = vmatmul.bf16.gmra.mxu0 %v4778
  %v5066 = vpop.f32.mrf.mxu0
  %v5067 = vadd.f32 %v4994, %v5066
  %v5068 = vpop.f32.mrf.mxu0
  %v5069 = vadd.f32 %v4996, %v5068
  %5070 = vmatmul.bf16.gmra.mxu0 %v4781
  %v5071 = vpop.f32.mrf.mxu0
  %v5072 = vadd.f32 %v4999, %v5071
  %v5073 = vpop.f32.mrf.mxu0
  %5074 = vdwg.mxu0
  %v5076 = vunpack.c.l.b16 %v4595
  %v5077 = vunpack.c.h.b16 %v4595
  %v5078 = vpack.c.b16 %v2936, %v5076
  %v5079 = vpack.c.b16 %v2937, %v5077
  %vm5080 = vcmask 1046528
  %v5081 = vrot.slane %v5078, 1
  %v5082 = vrot.slane %v2942, 1
  %v5083 = vsel %vm5080, %v5081, %v5082
  %v5084 = vrot.slane %v5079, 1
  %v5085 = vrot.slane %v2943, 1
  %v5086 = vsel %vm5080, %v5084, %v5085
  %v5087 = vrot.slane %v2944, 1
  %v5088 = vsel %vm5080, %v5082, %v5087
  %v5089 = vrot.slane %v2945, 1
  %v5090 = vsel %vm5080, %v5085, %v5089
  %v5091 = vrot.slane %v2946, 1
  %v5092 = vsel %vm5080, %v5087, %v5091
  %v5093 = vrot.slane %v2947, 1
  %v5094 = vsel %vm5080, %v5089, %v5093
  %v5095 = vrot.slane %v2948, 1
  %v5096 = vsel %vm5080, %v5091, %v5095
  %v5097 = vrot.slane %v2949, 1
  %v5098 = vsel %vm5080, %v5093, %v5097
  %v5099 = vrot.slane %v2950, 1
  %v5100 = vsel %vm5080, %v5095, %v5099
  %v5101 = vrot.slane %v2951, 1
  %v5102 = vsel %vm5080, %v5097, %v5101
  %v5103 = vrot.slane %v2952, 1
  %v5104 = vsel %vm5080, %v5099, %v5103
  %v5105 = vrot.slane %v2953, 1
  %v5106 = vsel %vm5080, %v5101, %v5105
  %v5107 = vrot.slane %v2954, 1
  %v5108 = vsel %vm5080, %v5103, %v5107
  %v5109 = vrot.slane %v2955, 1
  %v5110 = vsel %vm5080, %v5105, %v5109
  %v5111 = vrot.slane %v2956, 1
  %v5112 = vsel %vm5080, %v5107, %v5111
  %v5113 = vrot.slane %v2957, 1
  %v5114 = vsel %vm5080, %v5109, %v5113
  %v5115 = vrot.slane %v2958, 1
  %v5116 = vsel %vm5080, %v5111, %v5115
  %v5117 = vrot.slane %v2959, 1
  %v5118 = vsel %vm5080, %v5113, %v5117
  %v5119 = vrot.slane %v2960, 1
  %v5120 = vsel %vm5080, %v5115, %v5119
  %v5121 = vrot.slane %v2961, 1
  %v5122 = vsel %vm5080, %v5117, %v5121
  %v5123 = vrot.slane %v2962, 1
  %v5124 = vsel %vm5080, %v5119, %v5123
  %v5125 = vrot.slane %v2963, 1
  %v5126 = vsel %vm5080, %v5121, %v5125
  %v5127 = vrot.slane %v2964, 1
  %v5128 = vsel %vm5080, %v5123, %v5127
  %v5129 = vrot.slane %v2965, 1
  %v5130 = vsel %vm5080, %v5125, %v5129
  %v5164 = vunpack.c.l.b16 %v4597
  %v5165 = vunpack.c.h.b16 %v4597
  %v5166 = vunpack.c.l.b16 %v4598
  %v5167 = vunpack.c.h.b16 %v4598
  %v5168 = vunpack.c.l.b16 %v4599
  %v5169 = vunpack.c.h.b16 %v4599
  %v5170 = vunpack.c.l.b16 %v4600
  %v5171 = vunpack.c.h.b16 %v4600
  %v5172 = vunpack.c.l.b16 %v4601
  %v5173 = vunpack.c.h.b16 %v4601
  %v5174 = vunpack.c.l.b16 %v4602
  %v5175 = vunpack.c.h.b16 %v4602
  %v5176 = vunpack.c.l.b16 %v4603
  %v5177 = vunpack.c.h.b16 %v4603
  %v5178 = vunpack.c.l.b16 %v4604
  %v5179 = vunpack.c.h.b16 %v4604
  %v5180 = vunpack.c.l.b16 %v4605
  %v5181 = vunpack.c.h.b16 %v4605
  %v5182 = vunpack.c.l.b16 %v4606
  %v5183 = vunpack.c.h.b16 %v4606
  %v5184 = vunpack.c.l.b16 %v4607
  %v5185 = vunpack.c.h.b16 %v4607
  %v5186 = vunpack.c.l.b16 %v4608
  %v5187 = vunpack.c.h.b16 %v4608
  %v5188 = vunpack.c.l.b16 %v4609
  %v5189 = vunpack.c.h.b16 %v4609
  %v5190 = vunpack.c.l.b16 %v4610
  %v5191 = vunpack.c.h.b16 %v4610
  %v5192 = vunpack.c.l.b16 %v4611
  %v5193 = vunpack.c.h.b16 %v4611
  %v5194 = vunpack.c.l.b16 %v4612
  %v5195 = vunpack.c.h.b16 %v4612
  %v5196 = vunpack.c.l.b16 %v4613
  %v5197 = vunpack.c.h.b16 %v4613
  %v5198 = vunpack.c.l.b16 %v4614
  %v5199 = vunpack.c.h.b16 %v4614
  %v5200 = vunpack.c.l.b16 %v4615
  %v5201 = vunpack.c.h.b16 %v4615
  %v5202 = vunpack.c.l.b16 %v4616
  %v5203 = vunpack.c.h.b16 %v4616
  %v5204 = vpack.c.b16 %v5166, %v5164
  %v5205 = vpack.c.b16 %v5167, %v5165
  %v5206 = vpack.c.b16 %v5170, %v5168
  %v5207 = vpack.c.b16 %v5171, %v5169
  %v5208 = vpack.c.b16 %v5174, %v5172
  %v5209 = vpack.c.b16 %v5175, %v5173
  %v5210 = vpack.c.b16 %v5178, %v5176
  %v5211 = vpack.c.b16 %v5179, %v5177
  %v5212 = vpack.c.b16 %v5182, %v5180
  %v5213 = vpack.c.b16 %v5183, %v5181
  %v5214 = vpack.c.b16 %v5186, %v5184
  %v5215 = vpack.c.b16 %v5187, %v5185
  %v5216 = vpack.c.b16 %v5190, %v5188
  %v5217 = vpack.c.b16 %v5191, %v5189
  %v5218 = vpack.c.b16 %v5194, %v5192
  %v5219 = vpack.c.b16 %v5195, %v5193
  %v5220 = vpack.c.b16 %v5198, %v5196
  %v5221 = vpack.c.b16 %v5199, %v5197
  %v5222 = vpack.c.b16 %v5202, %v5200
  %v5223 = vpack.c.b16 %v5203, %v5201
  %v5245 = vsel %vm255, %v5086, 0
  %v5248 = vsel %vm255, %v5090, 0
  %v5251 = vsel %vm255, %v5094, 0
  %v5254 = vsel %vm255, %v5098, 0
  %v5257 = vsel %vm255, %v5102, 0
  %v5260 = vsel %vm255, %v5106, 0
  %v5263 = vsel %vm255, %v5110, 0
  %v5266 = vsel %vm255, %v5114, 0
  %v5269 = vsel %vm255, %v5118, 0
  %v5272 = vsel %vm255, %v5122, 0
  %v5275 = vsel %vm255, %v5126, 0
  %v5278 = vsel %vm255, %v5130, 0
  %v5281 = vsel %vm255, %v5129, 0
  %5283 = vmatpush.bf16.msra.mxu0 %v5218
  %5284 = vmatpush.bf16.msra.mxu0 %v5216
  %5285 = vmatpush.bf16.msra.mxu0 %v5214
  %5286 = vmatpush.bf16.msra.mxu0 %v5212
  %5287 = vmatpush.bf16.msra.mxu0 %v5210
  %5288 = vmatpush.bf16.msra.mxu0 %v5208
  %5289 = vmatpush.bf16.msra.mxu0 %v5206
  %5290 = vmatpush.bf16.msra.mxu0 %v5204
  %5291 = vmatmul.bf16.gmra.mxu0 %v5083
  %v5292 = vpop.f32.mrf.mxu0
  %v5293 = vadd.f32 %v4866, %v5292
  %v5294 = vpop.f32.mrf.mxu0
  %v5295 = vadd.f32 %v4868, %v5294
  %5296 = vmatmul.bf16.gmra.mxu0 %v5088
  %v5297 = vpop.f32.mrf.mxu0
  %v5298 = vadd.f32 %v4871, %v5297
  %v5299 = vpop.f32.mrf.mxu0
  %v5300 = vadd.f32 %v4873, %v5299
  %5301 = vmatmul.bf16.gmra.mxu0 %v5092
  %v5302 = vpop.f32.mrf.mxu0
  %v5303 = vadd.f32 %v4876, %v5302
  %v5304 = vpop.f32.mrf.mxu0
  %v5305 = vadd.f32 %v4878, %v5304
  %5306 = vmatmul.bf16.gmra.mxu0 %v5096
  %v5307 = vpop.f32.mrf.mxu0
  %v5308 = vadd.f32 %v4881, %v5307
  %v5309 = vpop.f32.mrf.mxu0
  %v5310 = vadd.f32 %v4883, %v5309
  %5311 = vmatmul.bf16.gmra.mxu0 %v5100
  %v5312 = vpop.f32.mrf.mxu0
  %v5313 = vadd.f32 %v4886, %v5312
  %v5314 = vpop.f32.mrf.mxu0
  %v5315 = vadd.f32 %v4888, %v5314
  %5316 = vmatmul.bf16.gmra.mxu0 %v5104
  %v5317 = vpop.f32.mrf.mxu0
  %v5318 = vadd.f32 %v4891, %v5317
  %v5319 = vpop.f32.mrf.mxu0
  %v5320 = vadd.f32 %v4893, %v5319
  %5321 = vmatmul.bf16.gmra.mxu0 %v5108
  %v5322 = vpop.f32.mrf.mxu0
  %v5323 = vadd.f32 %v4896, %v5322
  %v5324 = vpop.f32.mrf.mxu0
  %v5325 = vadd.f32 %v4898, %v5324
  %5326 = vmatmul.bf16.gmra.mxu0 %v5112
  %v5327 = vpop.f32.mrf.mxu0
  %v5328 = vadd.f32 %v4901, %v5327
  %v5329 = vpop.f32.mrf.mxu0
  %v5330 = vadd.f32 %v4903, %v5329
  %5331 = vmatmul.bf16.gmra.mxu0 %v5116
  %v5332 = vpop.f32.mrf.mxu0
  %v5333 = vadd.f32 %v4906, %v5332
  %v5334 = vpop.f32.mrf.mxu0
  %v5335 = vadd.f32 %v4908, %v5334
  %5336 = vmatmul.bf16.gmra.mxu0 %v5120
  %v5337 = vpop.f32.mrf.mxu0
  %v5338 = vadd.f32 %v4911, %v5337
  %v5339 = vpop.f32.mrf.mxu0
  %v5340 = vadd.f32 %v4913, %v5339
  %5341 = vmatmul.bf16.gmra.mxu0 %v5124
  %v5342 = vpop.f32.mrf.mxu0
  %v5343 = vadd.f32 %v4916, %v5342
  %v5344 = vpop.f32.mrf.mxu0
  %v5345 = vadd.f32 %v4918, %v5344
  %5346 = vmatmul.bf16.gmra.mxu0 %v5128
  %v5347 = vpop.f32.mrf.mxu0
  %v5348 = vadd.f32 %v4921, %v5347
  %v5349 = vpop.f32.mrf.mxu0
  %v5350 = vadd.f32 %v4923, %v5349
  %5351 = vmatmul.bf16.gmra.mxu0 %v5127
  %v5352 = vpop.f32.mrf.mxu0
  %v5353 = vadd.f32 %v4926, %v5352
  %v5354 = vpop.f32.mrf.mxu0
  %5355 = vdwg.mxu0
  %5356 = vmatpush.bf16.msra.mxu0 0
  %5357 = vmatpush.bf16.msra.mxu0 0
  %5358 = vmatpush.bf16.msra.mxu0 0
  %5359 = vmatpush.bf16.msra.mxu0 0
  %5360 = vmatpush.bf16.msra.mxu0 0
  %5361 = vmatpush.bf16.msra.mxu0 0
  %5362 = vmatpush.bf16.msra.mxu0 %v5222
  %5363 = vmatpush.bf16.msra.mxu0 %v5220
  %5364 = vmatmul.bf16.gmra.mxu0 %v5245
  %v5365 = vpop.f32.mrf.mxu0
  %v5366 = vadd.f32 %v5293, %v5365
  %v5367 = vpop.f32.mrf.mxu0
  %v5368 = vadd.f32 %v5295, %v5367
  %5369 = vmatmul.bf16.gmra.mxu0 %v5248
  %v5370 = vpop.f32.mrf.mxu0
  %v5371 = vadd.f32 %v5298, %v5370
  %v5372 = vpop.f32.mrf.mxu0
  %v5373 = vadd.f32 %v5300, %v5372
  %5374 = vmatmul.bf16.gmra.mxu0 %v5251
  %v5375 = vpop.f32.mrf.mxu0
  %v5376 = vadd.f32 %v5303, %v5375
  %v5377 = vpop.f32.mrf.mxu0
  %v5378 = vadd.f32 %v5305, %v5377
  %5379 = vmatmul.bf16.gmra.mxu0 %v5254
  %v5380 = vpop.f32.mrf.mxu0
  %v5381 = vadd.f32 %v5308, %v5380
  %v5382 = vpop.f32.mrf.mxu0
  %v5383 = vadd.f32 %v5310, %v5382
  %5384 = vmatmul.bf16.gmra.mxu0 %v5257
  %v5385 = vpop.f32.mrf.mxu0
  %v5386 = vadd.f32 %v5313, %v5385
  %v5387 = vpop.f32.mrf.mxu0
  %v5388 = vadd.f32 %v5315, %v5387
  %5389 = vmatmul.bf16.gmra.mxu0 %v5260
  %v5390 = vpop.f32.mrf.mxu0
  %v5391 = vadd.f32 %v5318, %v5390
  %v5392 = vpop.f32.mrf.mxu0
  %v5393 = vadd.f32 %v5320, %v5392
  %5394 = vmatmul.bf16.gmra.mxu0 %v5263
  %v5395 = vpop.f32.mrf.mxu0
  %v5396 = vadd.f32 %v5323, %v5395
  %v5397 = vpop.f32.mrf.mxu0
  %v5398 = vadd.f32 %v5325, %v5397
  %5399 = vmatmul.bf16.gmra.mxu0 %v5266
  %v5400 = vpop.f32.mrf.mxu0
  %v5401 = vadd.f32 %v5328, %v5400
  %v5402 = vpop.f32.mrf.mxu0
  %v5403 = vadd.f32 %v5330, %v5402
  %5404 = vmatmul.bf16.gmra.mxu0 %v5269
  %v5405 = vpop.f32.mrf.mxu0
  %v5406 = vadd.f32 %v5333, %v5405
  %v5407 = vpop.f32.mrf.mxu0
  %v5408 = vadd.f32 %v5335, %v5407
  %5409 = vmatmul.bf16.gmra.mxu0 %v5272
  %v5410 = vpop.f32.mrf.mxu0
  %v5411 = vadd.f32 %v5338, %v5410
  %v5412 = vpop.f32.mrf.mxu0
  %v5413 = vadd.f32 %v5340, %v5412
  %5414 = vmatmul.bf16.gmra.mxu0 %v5275
  %v5415 = vpop.f32.mrf.mxu0
  %v5416 = vadd.f32 %v5343, %v5415
  %v5417 = vpop.f32.mrf.mxu0
  %v5418 = vadd.f32 %v5345, %v5417
  %5419 = vmatmul.bf16.gmra.mxu0 %v5278
  %v5420 = vpop.f32.mrf.mxu0
  %v5421 = vadd.f32 %v5348, %v5420
  %v5422 = vpop.f32.mrf.mxu0
  %v5423 = vadd.f32 %v5350, %v5422
  %5424 = vmatmul.bf16.gmra.mxu0 %v5281
  %v5425 = vpop.f32.mrf.mxu0
  %v5426 = vadd.f32 %v5353, %v5425
  %v5427 = vpop.f32.mrf.mxu0
  %5428 = vdwg.mxu0
  %5429 = vmatpush.bf16.msra.mxu0 %v5219
  %5430 = vmatpush.bf16.msra.mxu0 %v5217
  %5431 = vmatpush.bf16.msra.mxu0 %v5215
  %5432 = vmatpush.bf16.msra.mxu0 %v5213
  %5433 = vmatpush.bf16.msra.mxu0 %v5211
  %5434 = vmatpush.bf16.msra.mxu0 %v5209
  %5435 = vmatpush.bf16.msra.mxu0 %v5207
  %5436 = vmatpush.bf16.msra.mxu0 %v5205
  %5437 = vmatmul.bf16.gmra.mxu0 %v5083
  %v5438 = vpop.f32.mrf.mxu0
  %v5439 = vadd.f32 %v5012, %v5438
  %v5440 = vpop.f32.mrf.mxu0
  %v5441 = vadd.f32 %v5014, %v5440
  %5442 = vmatmul.bf16.gmra.mxu0 %v5088
  %v5443 = vpop.f32.mrf.mxu0
  %v5444 = vadd.f32 %v5017, %v5443
  %v5445 = vpop.f32.mrf.mxu0
  %v5446 = vadd.f32 %v5019, %v5445
  %5447 = vmatmul.bf16.gmra.mxu0 %v5092
  %v5448 = vpop.f32.mrf.mxu0
  %v5449 = vadd.f32 %v5022, %v5448
  %v5450 = vpop.f32.mrf.mxu0
  %v5451 = vadd.f32 %v5024, %v5450
  %5452 = vmatmul.bf16.gmra.mxu0 %v5096
  %v5453 = vpop.f32.mrf.mxu0
  %v5454 = vadd.f32 %v5027, %v5453
  %v5455 = vpop.f32.mrf.mxu0
  %v5456 = vadd.f32 %v5029, %v5455
  %5457 = vmatmul.bf16.gmra.mxu0 %v5100
  %v5458 = vpop.f32.mrf.mxu0
  %v5459 = vadd.f32 %v5032, %v5458
  %v5460 = vpop.f32.mrf.mxu0
  %v5461 = vadd.f32 %v5034, %v5460
  %5462 = vmatmul.bf16.gmra.mxu0 %v5104
  %v5463 = vpop.f32.mrf.mxu0
  %v5464 = vadd.f32 %v5037, %v5463
  %v5465 = vpop.f32.mrf.mxu0
  %v5466 = vadd.f32 %v5039, %v5465
  %5467 = vmatmul.bf16.gmra.mxu0 %v5108
  %v5468 = vpop.f32.mrf.mxu0
  %v5469 = vadd.f32 %v5042, %v5468
  %v5470 = vpop.f32.mrf.mxu0
  %v5471 = vadd.f32 %v5044, %v5470
  %5472 = vmatmul.bf16.gmra.mxu0 %v5112
  %v5473 = vpop.f32.mrf.mxu0
  %v5474 = vadd.f32 %v5047, %v5473
  %v5475 = vpop.f32.mrf.mxu0
  %v5476 = vadd.f32 %v5049, %v5475
  %5477 = vmatmul.bf16.gmra.mxu0 %v5116
  %v5478 = vpop.f32.mrf.mxu0
  %v5479 = vadd.f32 %v5052, %v5478
  %v5480 = vpop.f32.mrf.mxu0
  %v5481 = vadd.f32 %v5054, %v5480
  %5482 = vmatmul.bf16.gmra.mxu0 %v5120
  %v5483 = vpop.f32.mrf.mxu0
  %v5484 = vadd.f32 %v5057, %v5483
  %v5485 = vpop.f32.mrf.mxu0
  %v5486 = vadd.f32 %v5059, %v5485
  %5487 = vmatmul.bf16.gmra.mxu0 %v5124
  %v5488 = vpop.f32.mrf.mxu0
  %v5489 = vadd.f32 %v5062, %v5488
  %v5490 = vpop.f32.mrf.mxu0
  %v5491 = vadd.f32 %v5064, %v5490
  %5492 = vmatmul.bf16.gmra.mxu0 %v5128
  %v5493 = vpop.f32.mrf.mxu0
  %v5494 = vadd.f32 %v5067, %v5493
  %v5495 = vpop.f32.mrf.mxu0
  %v5496 = vadd.f32 %v5069, %v5495
  %5497 = vmatmul.bf16.gmra.mxu0 %v5127
  %v5498 = vpop.f32.mrf.mxu0
  %v5499 = vadd.f32 %v5072, %v5498
  %v5500 = vpop.f32.mrf.mxu0
  %5501 = vdwg.mxu0
  %5502 = vmatpush.bf16.msra.mxu0 0
  %5503 = vmatpush.bf16.msra.mxu0 0
  %5504 = vmatpush.bf16.msra.mxu0 0
  %5505 = vmatpush.bf16.msra.mxu0 0
  %5506 = vmatpush.bf16.msra.mxu0 0
  %5507 = vmatpush.bf16.msra.mxu0 0
  %5508 = vmatpush.bf16.msra.mxu0 %v5223
  %5509 = vmatpush.bf16.msra.mxu0 %v5221
  %5510 = vmatmul.bf16.gmra.mxu0 %v5245
  %v5511 = vpop.f32.mrf.mxu0
  %v5512 = vadd.f32 %v5439, %v5511
  %v5513 = vpop.f32.mrf.mxu0
  %v5514 = vadd.f32 %v5441, %v5513
  %5515 = vmatmul.bf16.gmra.mxu0 %v5248
  %v5516 = vpop.f32.mrf.mxu0
  %v5517 = vadd.f32 %v5444, %v5516
  %v5518 = vpop.f32.mrf.mxu0
  %v5519 = vadd.f32 %v5446, %v5518
  %5520 = vmatmul.bf16.gmra.mxu0 %v5251
  %v5521 = vpop.f32.mrf.mxu0
  %v5522 = vadd.f32 %v5449, %v5521
  %v5523 = vpop.f32.mrf.mxu0
  %v5524 = vadd.f32 %v5451, %v5523
  %5525 = vmatmul.bf16.gmra.mxu0 %v5254
  %v5526 = vpop.f32.mrf.mxu0
  %v5527 = vadd.f32 %v5454, %v5526
  %v5528 = vpop.f32.mrf.mxu0
  %v5529 = vadd.f32 %v5456, %v5528
  %5530 = vmatmul.bf16.gmra.mxu0 %v5257
  %v5531 = vpop.f32.mrf.mxu0
  %v5532 = vadd.f32 %v5459, %v5531
  %v5533 = vpop.f32.mrf.mxu0
  %v5534 = vadd.f32 %v5461, %v5533
  %5535 = vmatmul.bf16.gmra.mxu0 %v5260
  %v5536 = vpop.f32.mrf.mxu0
  %v5537 = vadd.f32 %v5464, %v5536
  %v5538 = vpop.f32.mrf.mxu0
  %v5539 = vadd.f32 %v5466, %v5538
  %5540 = vmatmul.bf16.gmra.mxu0 %v5263
  %v5541 = vpop.f32.mrf.mxu0
  %v5542 = vadd.f32 %v5469, %v5541
  %v5543 = vpop.f32.mrf.mxu0
  %v5544 = vadd.f32 %v5471, %v5543
  %5545 = vmatmul.bf16.gmra.mxu0 %v5266
  %v5546 = vpop.f32.mrf.mxu0
  %v5547 = vadd.f32 %v5474, %v5546
  %v5548 = vpop.f32.mrf.mxu0
  %v5549 = vadd.f32 %v5476, %v5548
  %5550 = vmatmul.bf16.gmra.mxu0 %v5269
  %v5551 = vpop.f32.mrf.mxu0
  %v5552 = vadd.f32 %v5479, %v5551
  %v5553 = vpop.f32.mrf.mxu0
  %v5554 = vadd.f32 %v5481, %v5553
  %5555 = vmatmul.bf16.gmra.mxu0 %v5272
  %v5556 = vpop.f32.mrf.mxu0
  %v5557 = vadd.f32 %v5484, %v5556
  %v5558 = vpop.f32.mrf.mxu0
  %v5559 = vadd.f32 %v5486, %v5558
  %5560 = vmatmul.bf16.gmra.mxu0 %v5275
  %v5561 = vpop.f32.mrf.mxu0
  %v5562 = vadd.f32 %v5489, %v5561
  %v5563 = vpop.f32.mrf.mxu0
  %v5564 = vadd.f32 %v5491, %v5563
  %5565 = vmatmul.bf16.gmra.mxu0 %v5278
  %v5566 = vpop.f32.mrf.mxu0
  %v5567 = vadd.f32 %v5494, %v5566
  %v5568 = vpop.f32.mrf.mxu0
  %v5569 = vadd.f32 %v5496, %v5568
  %5570 = vmatmul.bf16.gmra.mxu0 %v5281
  %v5571 = vpop.f32.mrf.mxu0
  %v5572 = vadd.f32 %v5499, %v5571
  %v5573 = vpop.f32.mrf.mxu0
  %5574 = vdwg.mxu0
  %v5575 = vld [vmem:[#allocation2 + $0x18] sm:$0x88]
  %s5576 = scalar_lea.vmem %s4, 1120
  %v5577 = vld [vmem:[%s5576] sm:$0xff]
  %v5578 = vld [vmem:[%s5576 + $0x8] sm:$0xff]
  %v5579 = vld [vmem:[%s5576 + $0x10] sm:$0xff]
  %v5580 = vld [vmem:[%s5576 + $0x18] sm:$0xff]
  %v5581 = vld [vmem:[%s5576 + $0x20] sm:$0xff]
  %v5582 = vld [vmem:[%s5576 + $0x28] sm:$0xff]
  %v5583 = vld [vmem:[%s5576 + $0x30] sm:$0xff]
  %v5584 = vld [vmem:[%s5576 + $0x38] sm:$0xff]
  %v5585 = vld [vmem:[%s5576 + $0x40] sm:$0xff]
  %v5586 = vld [vmem:[%s5576 + $0x48] sm:$0xff]
  %v5587 = vld [vmem:[%s5576 + $0x50] sm:$0xff]
  %v5588 = vld [vmem:[%s5576 + $0x58] sm:$0xff]
  %v5589 = vld [vmem:[%s5576 + $0x60] sm:$0xff]
  %v5590 = vld [vmem:[%s5576 + $0x68] sm:$0xff]
  %v5591 = vld [vmem:[%s5576 + $0x70] sm:$0xff]
  %v5592 = vld [vmem:[%s5576 + $0x78] sm:$0xff]
  %v5593 = vld [vmem:[%s5576 + $0x80] sm:$0xff]
  %v5594 = vld [vmem:[%s5576 + $0x88] sm:$0xff]
  %v5595 = vld [vmem:[%s5576 + $0x90] sm:$0xff]
  %v5596 = vld [vmem:[%s5576 + $0x98] sm:$0xff]
  %v5598 = vunpack.c.l.b16 %v5575
  %v5599 = vunpack.c.h.b16 %v5575
  %v5600 = vpack.c.b16 %v3692, %v5598
  %v5601 = vpack.c.b16 %v3693, %v5599
  %vm5602 = vcmask 1044480
  %v5603 = vrot.slane %v5600, 3
  %v5604 = vrot.slane %v3744, 3
  %v5605 = vsel %vm5602, %v5603, %v5604
  %v5606 = vrot.slane %v5601, 3
  %v5607 = vrot.slane %v3745, 3
  %v5608 = vsel %vm5602, %v5606, %v5607
  %v5609 = vrot.slane %v3746, 3
  %v5610 = vsel %vm5602, %v5604, %v5609
  %v5611 = vrot.slane %v3747, 3
  %v5612 = vsel %vm5602, %v5607, %v5611
  %v5613 = vrot.slane %v3748, 3
  %v5614 = vsel %vm5602, %v5609, %v5613
  %v5615 = vrot.slane %v3749, 3
  %v5616 = vsel %vm5602, %v5611, %v5615
  %v5617 = vrot.slane %v3750, 3
  %v5618 = vsel %vm5602, %v5613, %v5617
  %v5619 = vrot.slane %v3751, 3
  %v5620 = vsel %vm5602, %v5615, %v5619
  %v5621 = vrot.slane %v3752, 3
  %v5622 = vsel %vm5602, %v5617, %v5621
  %v5623 = vrot.slane %v3753, 3
  %v5624 = vsel %vm5602, %v5619, %v5623
  %v5625 = vrot.slane %v3754, 3
  %v5626 = vsel %vm5602, %v5621, %v5625
  %v5627 = vrot.slane %v3755, 3
  %v5628 = vsel %vm5602, %v5623, %v5627
  %v5629 = vrot.slane %v3756, 3
  %v5630 = vsel %vm5602, %v5625, %v5629
  %v5631 = vrot.slane %v3757, 3
  %v5632 = vsel %vm5602, %v5627, %v5631
  %v5633 = vrot.slane %v3758, 3
  %v5634 = vsel %vm5602, %v5629, %v5633
  %v5635 = vrot.slane %v3759, 3
  %v5636 = vsel %vm5602, %v5631, %v5635
  %v5637 = vrot.slane %v3760, 3
  %v5638 = vsel %vm5602, %v5633, %v5637
  %v5639 = vrot.slane %v3761, 3
  %v5640 = vsel %vm5602, %v5635, %v5639
  %v5641 = vrot.slane %v3762, 3
  %v5642 = vsel %vm5602, %v5637, %v5641
  %v5643 = vrot.slane %v3763, 3
  %v5644 = vsel %vm5602, %v5639, %v5643
  %v5645 = vrot.slane %v3764, 3
  %v5646 = vsel %vm5602, %v5641, %v5645
  %v5647 = vrot.slane %v3765, 3
  %v5648 = vsel %vm5602, %v5643, %v5647
  %v5649 = vrot.slane %v3766, 3
  %v5650 = vsel %vm5602, %v5645, %v5649
  %v5651 = vrot.slane %v3767, 3
  %v5652 = vsel %vm5602, %v5647, %v5651
  %v5686 = vunpack.c.l.b16 %v5577
  %v5687 = vunpack.c.h.b16 %v5577
  %v5688 = vunpack.c.l.b16 %v5578
  %v5689 = vunpack.c.h.b16 %v5578
  %v5690 = vunpack.c.l.b16 %v5579
  %v5691 = vunpack.c.h.b16 %v5579
  %v5692 = vunpack.c.l.b16 %v5580
  %v5693 = vunpack.c.h.b16 %v5580
  %v5694 = vunpack.c.l.b16 %v5581
  %v5695 = vunpack.c.h.b16 %v5581
  %v5696 = vunpack.c.l.b16 %v5582
  %v5697 = vunpack.c.h.b16 %v5582
  %v5698 = vunpack.c.l.b16 %v5583
  %v5699 = vunpack.c.h.b16 %v5583
  %v5700 = vunpack.c.l.b16 %v5584
  %v5701 = vunpack.c.h.b16 %v5584
  %v5702 = vunpack.c.l.b16 %v5585
  %v5703 = vunpack.c.h.b16 %v5585
  %v5704 = vunpack.c.l.b16 %v5586
  %v5705 = vunpack.c.h.b16 %v5586
  %v5706 = vunpack.c.l.b16 %v5587
  %v5707 = vunpack.c.h.b16 %v5587
  %v5708 = vunpack.c.l.b16 %v5588
  %v5709 = vunpack.c.h.b16 %v5588
  %v5710 = vunpack.c.l.b16 %v5589
  %v5711 = vunpack.c.h.b16 %v5589
  %v5712 = vunpack.c.l.b16 %v5590
  %v5713 = vunpack.c.h.b16 %v5590
  %v5714 = vunpack.c.l.b16 %v5591
  %v5715 = vunpack.c.h.b16 %v5591
  %v5716 = vunpack.c.l.b16 %v5592
  %v5717 = vunpack.c.h.b16 %v5592
  %v5718 = vunpack.c.l.b16 %v5593
  %v5719 = vunpack.c.h.b16 %v5593
  %v5720 = vunpack.c.l.b16 %v5594
  %v5721 = vunpack.c.h.b16 %v5594
  %v5722 = vunpack.c.l.b16 %v5595
  %v5723 = vunpack.c.h.b16 %v5595
  %v5724 = vunpack.c.l.b16 %v5596
  %v5725 = vunpack.c.h.b16 %v5596
  %v5726 = vpack.c.b16 %v5688, %v5686
  %v5727 = vpack.c.b16 %v5689, %v5687
  %v5728 = vpack.c.b16 %v5692, %v5690
  %v5729 = vpack.c.b16 %v5693, %v5691
  %v5730 = vpack.c.b16 %v5696, %v5694
  %v5731 = vpack.c.b16 %v5697, %v5695
  %v5732 = vpack.c.b16 %v5700, %v5698
  %v5733 = vpack.c.b16 %v5701, %v5699
  %v5734 = vpack.c.b16 %v5704, %v5702
  %v5735 = vpack.c.b16 %v5705, %v5703
  %v5736 = vpack.c.b16 %v5708, %v5706
  %v5737 = vpack.c.b16 %v5709, %v5707
  %v5738 = vpack.c.b16 %v5712, %v5710
  %v5739 = vpack.c.b16 %v5713, %v5711
  %v5740 = vpack.c.b16 %v5716, %v5714
  %v5741 = vpack.c.b16 %v5717, %v5715
  %v5742 = vpack.c.b16 %v5720, %v5718
  %v5743 = vpack.c.b16 %v5721, %v5719
  %v5744 = vpack.c.b16 %v5724, %v5722
  %v5745 = vpack.c.b16 %v5725, %v5723
  %v5767 = vsel %vm255, %v5608, 0
  %v5770 = vsel %vm255, %v5612, 0
  %v5773 = vsel %vm255, %v5616, 0
  %v5776 = vsel %vm255, %v5620, 0
  %v5779 = vsel %vm255, %v5624, 0
  %v5782 = vsel %vm255, %v5628, 0
  %v5785 = vsel %vm255, %v5632, 0
  %v5788 = vsel %vm255, %v5636, 0
  %v5791 = vsel %vm255, %v5640, 0
  %v5794 = vsel %vm255, %v5644, 0
  %v5797 = vsel %vm255, %v5648, 0
  %v5800 = vsel %vm255, %v5652, 0
  %v5803 = vsel %vm255, %v5651, 0
  %5805 = vmatpush.bf16.msra.mxu0 %v5740
  %5806 = vmatpush.bf16.msra.mxu0 %v5738
  %5807 = vmatpush.bf16.msra.mxu0 %v5736
  %5808 = vmatpush.bf16.msra.mxu0 %v5734
  %5809 = vmatpush.bf16.msra.mxu0 %v5732
  %5810 = vmatpush.bf16.msra.mxu0 %v5730
  %5811 = vmatpush.bf16.msra.mxu0 %v5728
  %5812 = vmatpush.bf16.msra.mxu0 %v5726
  %5813 = vmatmul.bf16.gmra.mxu0 %v5605
  %v5814 = vpop.f32.mrf.mxu0
  %v5815 = vadd.f32 0.0, %v5814
  %v5816 = vpop.f32.mrf.mxu0
  %v5817 = vadd.f32 0.0, %v5816
  %5818 = vmatmul.bf16.gmra.mxu0 %v5610
  %v5819 = vpop.f32.mrf.mxu0
  %v5820 = vadd.f32 0.0, %v5819
  %v5821 = vpop.f32.mrf.mxu0
  %v5822 = vadd.f32 0.0, %v5821
  %5823 = vmatmul.bf16.gmra.mxu0 %v5614
  %v5824 = vpop.f32.mrf.mxu0
  %v5825 = vadd.f32 0.0, %v5824
  %v5826 = vpop.f32.mrf.mxu0
  %v5827 = vadd.f32 0.0, %v5826
  %5828 = vmatmul.bf16.gmra.mxu0 %v5618
  %v5829 = vpop.f32.mrf.mxu0
  %v5830 = vadd.f32 0.0, %v5829
  %v5831 = vpop.f32.mrf.mxu0
  %v5832 = vadd.f32 0.0, %v5831
  %5833 = vmatmul.bf16.gmra.mxu0 %v5622
  %v5834 = vpop.f32.mrf.mxu0
  %v5835 = vadd.f32 0.0, %v5834
  %v5836 = vpop.f32.mrf.mxu0
  %v5837 = vadd.f32 0.0, %v5836
  %5838 = vmatmul.bf16.gmra.mxu0 %v5626
  %v5839 = vpop.f32.mrf.mxu0
  %v5840 = vadd.f32 0.0, %v5839
  %v5841 = vpop.f32.mrf.mxu0
  %v5842 = vadd.f32 0.0, %v5841
  %5843 = vmatmul.bf16.gmra.mxu0 %v5630
  %v5844 = vpop.f32.mrf.mxu0
  %v5845 = vadd.f32 0.0, %v5844
  %v5846 = vpop.f32.mrf.mxu0
  %v5847 = vadd.f32 0.0, %v5846
  %5848 = vmatmul.bf16.gmra.mxu0 %v5634
  %v5849 = vpop.f32.mrf.mxu0
  %v5850 = vadd.f32 0.0, %v5849
  %v5851 = vpop.f32.mrf.mxu0
  %v5852 = vadd.f32 0.0, %v5851
  %5853 = vmatmul.bf16.gmra.mxu0 %v5638
  %v5854 = vpop.f32.mrf.mxu0
  %v5855 = vadd.f32 0.0, %v5854
  %v5856 = vpop.f32.mrf.mxu0
  %v5857 = vadd.f32 0.0, %v5856
  %5858 = vmatmul.bf16.gmra.mxu0 %v5642
  %v5859 = vpop.f32.mrf.mxu0
  %v5860 = vadd.f32 0.0, %v5859
  %v5861 = vpop.f32.mrf.mxu0
  %v5862 = vadd.f32 0.0, %v5861
  %5863 = vmatmul.bf16.gmra.mxu0 %v5646
  %v5864 = vpop.f32.mrf.mxu0
  %v5865 = vadd.f32 0.0, %v5864
  %v5866 = vpop.f32.mrf.mxu0
  %v5867 = vadd.f32 0.0, %v5866
  %5868 = vmatmul.bf16.gmra.mxu0 %v5650
  %v5869 = vpop.f32.mrf.mxu0
  %v5870 = vadd.f32 0.0, %v5869
  %v5871 = vpop.f32.mrf.mxu0
  %v5872 = vadd.f32 0.0, %v5871
  %5873 = vmatmul.bf16.gmra.mxu0 %v5649
  %v5874 = vpop.f32.mrf.mxu0
  %v5875 = vadd.f32 0.0, %v5874
  %v5876 = vpop.f32.mrf.mxu0
  %5877 = vdwg.mxu0
  %5878 = vmatpush.bf16.msra.mxu0 0
  %5879 = vmatpush.bf16.msra.mxu0 0
  %5880 = vmatpush.bf16.msra.mxu0 0
  %5881 = vmatpush.bf16.msra.mxu0 0
  %5882 = vmatpush.bf16.msra.mxu0 0
  %5883 = vmatpush.bf16.msra.mxu0 0
  %5884 = vmatpush.bf16.msra.mxu0 %v5744
  %5885 = vmatpush.bf16.msra.mxu0 %v5742
  %5886 = vmatmul.bf16.gmra.mxu0 %v5767
  %v5887 = vpop.f32.mrf.mxu0
  %v5888 = vadd.f32 %v5815, %v5887
  %v5889 = vpop.f32.mrf.mxu0
  %v5890 = vadd.f32 %v5817, %v5889
  %5891 = vmatmul.bf16.gmra.mxu0 %v5770
  %v5892 = vpop.f32.mrf.mxu0
  %v5893 = vadd.f32 %v5820, %v5892
  %v5894 = vpop.f32.mrf.mxu0
  %v5895 = vadd.f32 %v5822, %v5894
  %5896 = vmatmul.bf16.gmra.mxu0 %v5773
  %v5897 = vpop.f32.mrf.mxu0
  %v5898 = vadd.f32 %v5825, %v5897
  %v5899 = vpop.f32.mrf.mxu0
  %v5900 = vadd.f32 %v5827, %v5899
  %5901 = vmatmul.bf16.gmra.mxu0 %v5776
  %v5902 = vpop.f32.mrf.mxu0
  %v5903 = vadd.f32 %v5830, %v5902
  %v5904 = vpop.f32.mrf.mxu0
  %v5905 = vadd.f32 %v5832, %v5904
  %5906 = vmatmul.bf16.gmra.mxu0 %v5779
  %v5907 = vpop.f32.mrf.mxu0
  %v5908 = vadd.f32 %v5835, %v5907
  %v5909 = vpop.f32.mrf.mxu0
  %v5910 = vadd.f32 %v5837, %v5909
  %5911 = vmatmul.bf16.gmra.mxu0 %v5782
  %v5912 = vpop.f32.mrf.mxu0
  %v5913 = vadd.f32 %v5840, %v5912
  %v5914 = vpop.f32.mrf.mxu0
  %v5915 = vadd.f32 %v5842, %v5914
  %5916 = vmatmul.bf16.gmra.mxu0 %v5785
  %v5917 = vpop.f32.mrf.mxu0
  %v5918 = vadd.f32 %v5845, %v5917
  %v5919 = vpop.f32.mrf.mxu0
  %v5920 = vadd.f32 %v5847, %v5919
  %5921 = vmatmul.bf16.gmra.mxu0 %v5788
  %v5922 = vpop.f32.mrf.mxu0
  %v5923 = vadd.f32 %v5850, %v5922
  %v5924 = vpop.f32.mrf.mxu0
  %v5925 = vadd.f32 %v5852, %v5924
  %5926 = vmatmul.bf16.gmra.mxu0 %v5791
  %v5927 = vpop.f32.mrf.mxu0
  %v5928 = vadd.f32 %v5855, %v5927
  %v5929 = vpop.f32.mrf.mxu0
  %v5930 = vadd.f32 %v5857, %v5929
  %5931 = vmatmul.bf16.gmra.mxu0 %v5794
  %v5932 = vpop.f32.mrf.mxu0
  %v5933 = vadd.f32 %v5860, %v5932
  %v5934 = vpop.f32.mrf.mxu0
  %v5935 = vadd.f32 %v5862, %v5934
  %5936 = vmatmul.bf16.gmra.mxu0 %v5797
  %v5937 = vpop.f32.mrf.mxu0
  %v5938 = vadd.f32 %v5865, %v5937
  %v5939 = vpop.f32.mrf.mxu0
  %v5940 = vadd.f32 %v5867, %v5939
  %5941 = vmatmul.bf16.gmra.mxu0 %v5800
  %v5942 = vpop.f32.mrf.mxu0
  %v5943 = vadd.f32 %v5870, %v5942
  %v5944 = vpop.f32.mrf.mxu0
  %v5945 = vadd.f32 %v5872, %v5944
  %5946 = vmatmul.bf16.gmra.mxu0 %v5803
  %v5947 = vpop.f32.mrf.mxu0
  %v5948 = vadd.f32 %v5875, %v5947
  %v5949 = vpop.f32.mrf.mxu0
  %5950 = vdwg.mxu0
  %5951 = vmatpush.bf16.msra.mxu0 %v5741
  %5952 = vmatpush.bf16.msra.mxu0 %v5739
  %5953 = vmatpush.bf16.msra.mxu0 %v5737
  %5954 = vmatpush.bf16.msra.mxu0 %v5735
  %5955 = vmatpush.bf16.msra.mxu0 %v5733
  %5956 = vmatpush.bf16.msra.mxu0 %v5731
  %5957 = vmatpush.bf16.msra.mxu0 %v5729
  %5958 = vmatpush.bf16.msra.mxu0 %v5727
  %5959 = vmatmul.bf16.gmra.mxu0 %v5605
  %v5960 = vpop.f32.mrf.mxu0
  %v5961 = vadd.f32 0.0, %v5960
  %v5962 = vpop.f32.mrf.mxu0
  %v5963 = vadd.f32 0.0, %v5962
  %5964 = vmatmul.bf16.gmra.mxu0 %v5610
  %v5965 = vpop.f32.mrf.mxu0
  %v5966 = vadd.f32 0.0, %v5965
  %v5967 = vpop.f32.mrf.mxu0
  %v5968 = vadd.f32 0.0, %v5967
  %5969 = vmatmul.bf16.gmra.mxu0 %v5614
  %v5970 = vpop.f32.mrf.mxu0
  %v5971 = vadd.f32 0.0, %v5970
  %v5972 = vpop.f32.mrf.mxu0
  %v5973 = vadd.f32 0.0, %v5972
  %5974 = vmatmul.bf16.gmra.mxu0 %v5618
  %v5975 = vpop.f32.mrf.mxu0
  %v5976 = vadd.f32 0.0, %v5975
  %v5977 = vpop.f32.mrf.mxu0
  %v5978 = vadd.f32 0.0, %v5977
  %5979 = vmatmul.bf16.gmra.mxu0 %v5622
  %v5980 = vpop.f32.mrf.mxu0
  %v5981 = vadd.f32 0.0, %v5980
  %v5982 = vpop.f32.mrf.mxu0
  %v5983 = vadd.f32 0.0, %v5982
  %5984 = vmatmul.bf16.gmra.mxu0 %v5626
  %v5985 = vpop.f32.mrf.mxu0
  %v5986 = vadd.f32 0.0, %v5985
  %v5987 = vpop.f32.mrf.mxu0
  %v5988 = vadd.f32 0.0, %v5987
  %5989 = vmatmul.bf16.gmra.mxu0 %v5630
  %v5990 = vpop.f32.mrf.mxu0
  %v5991 = vadd.f32 0.0, %v5990
  %v5992 = vpop.f32.mrf.mxu0
  %v5993 = vadd.f32 0.0, %v5992
  %5994 = vmatmul.bf16.gmra.mxu0 %v5634
  %v5995 = vpop.f32.mrf.mxu0
  %v5996 = vadd.f32 0.0, %v5995
  %v5997 = vpop.f32.mrf.mxu0
  %v5998 = vadd.f32 0.0, %v5997
  %5999 = vmatmul.bf16.gmra.mxu0 %v5638
  %v6000 = vpop.f32.mrf.mxu0
  %v6001 = vadd.f32 0.0, %v6000
  %v6002 = vpop.f32.mrf.mxu0
  %v6003 = vadd.f32 0.0, %v6002
  %6004 = vmatmul.bf16.gmra.mxu0 %v5642
  %v6005 = vpop.f32.mrf.mxu0
  %v6006 = vadd.f32 0.0, %v6005
  %v6007 = vpop.f32.mrf.mxu0
  %v6008 = vadd.f32 0.0, %v6007
  %6009 = vmatmul.bf16.gmra.mxu0 %v5646
  %v6010 = vpop.f32.mrf.mxu0
  %v6011 = vadd.f32 0.0, %v6010
  %v6012 = vpop.f32.mrf.mxu0
  %v6013 = vadd.f32 0.0, %v6012
  %6014 = vmatmul.bf16.gmra.mxu0 %v5650
  %v6015 = vpop.f32.mrf.mxu0
  %v6016 = vadd.f32 0.0, %v6015
  %v6017 = vpop.f32.mrf.mxu0
  %v6018 = vadd.f32 0.0, %v6017
  %6019 = vmatmul.bf16.gmra.mxu0 %v5649
  %v6020 = vpop.f32.mrf.mxu0
  %v6021 = vadd.f32 0.0, %v6020
  %v6022 = vpop.f32.mrf.mxu0
  %6023 = vdwg.mxu0
  %6024 = vmatpush.bf16.msra.mxu0 0
  %6025 = vmatpush.bf16.msra.mxu0 0
  %6026 = vmatpush.bf16.msra.mxu0 0
  %6027 = vmatpush.bf16.msra.mxu0 0
  %6028 = vmatpush.bf16.msra.mxu0 0
  %6029 = vmatpush.bf16.msra.mxu0 0
  %6030 = vmatpush.bf16.msra.mxu0 %v5745
  %6031 = vmatpush.bf16.msra.mxu0 %v5743
  %6032 = vmatmul.bf16.gmra.mxu0 %v5767
  %v6033 = vpop.f32.mrf.mxu0
  %v6034 = vadd.f32 %v5961, %v6033
  %v6035 = vpop.f32.mrf.mxu0
  %v6036 = vadd.f32 %v5963, %v6035
  %6037 = vmatmul.bf16.gmra.mxu0 %v5770
  %v6038 = vpop.f32.mrf.mxu0
  %v6039 = vadd.f32 %v5966, %v6038
  %v6040 = vpop.f32.mrf.mxu0
  %v6041 = vadd.f32 %v5968, %v6040
  %6042 = vmatmul.bf16.gmra.mxu0 %v5773
  %v6043 = vpop.f32.mrf.mxu0
  %v6044 = vadd.f32 %v5971, %v6043
  %v6045 = vpop.f32.mrf.mxu0
  %v6046 = vadd.f32 %v5973, %v6045
  %6047 = vmatmul.bf16.gmra.mxu0 %v5776
  %v6048 = vpop.f32.mrf.mxu0
  %v6049 = vadd.f32 %v5976, %v6048
  %v6050 = vpop.f32.mrf.mxu0
  %v6051 = vadd.f32 %v5978, %v6050
  %6052 = vmatmul.bf16.gmra.mxu0 %v5779
  %v6053 = vpop.f32.mrf.mxu0
  %v6054 = vadd.f32 %v5981, %v6053
  %v6055 = vpop.f32.mrf.mxu0
  %v6056 = vadd.f32 %v5983, %v6055
  %6057 = vmatmul.bf16.gmra.mxu0 %v5782
  %v6058 = vpop.f32.mrf.mxu0
  %v6059 = vadd.f32 %v5986, %v6058
  %v6060 = vpop.f32.mrf.mxu0
  %v6061 = vadd.f32 %v5988, %v6060
  %6062 = vmatmul.bf16.gmra.mxu0 %v5785
  %v6063 = vpop.f32.mrf.mxu0
  %v6064 = vadd.f32 %v5991, %v6063
  %v6065 = vpop.f32.mrf.mxu0
  %v6066 = vadd.f32 %v5993, %v6065
  %6067 = vmatmul.bf16.gmra.mxu0 %v5788
  %v6068 = vpop.f32.mrf.mxu0
  %v6069 = vadd.f32 %v5996, %v6068
  %v6070 = vpop.f32.mrf.mxu0
  %v6071 = vadd.f32 %v5998, %v6070
  %6072 = vmatmul.bf16.gmra.mxu0 %v5791
  %v6073 = vpop.f32.mrf.mxu0
  %v6074 = vadd.f32 %v6001, %v6073
  %v6075 = vpop.f32.mrf.mxu0
  %v6076 = vadd.f32 %v6003, %v6075
  %6077 = vmatmul.bf16.gmra.mxu0 %v5794
  %v6078 = vpop.f32.mrf.mxu0
  %v6079 = vadd.f32 %v6006, %v6078
  %v6080 = vpop.f32.mrf.mxu0
  %v6081 = vadd.f32 %v6008, %v6080
  %6082 = vmatmul.bf16.gmra.mxu0 %v5797
  %v6083 = vpop.f32.mrf.mxu0
  %v6084 = vadd.f32 %v6011, %v6083
  %v6085 = vpop.f32.mrf.mxu0
  %v6086 = vadd.f32 %v6013, %v6085
  %6087 = vmatmul.bf16.gmra.mxu0 %v5800
  %v6088 = vpop.f32.mrf.mxu0
  %v6089 = vadd.f32 %v6016, %v6088
  %v6090 = vpop.f32.mrf.mxu0
  %v6091 = vadd.f32 %v6018, %v6090
  %6092 = vmatmul.bf16.gmra.mxu0 %v5803
  %v6093 = vpop.f32.mrf.mxu0
  %v6094 = vadd.f32 %v6021, %v6093
  %v6095 = vpop.f32.mrf.mxu0
  %6096 = vdwg.mxu0
  %v6097 = vadd.f32 %v5366, %v5888
  %v6098 = vadd.f32 %v5512, %v6034
  %v6099 = vadd.f32 %v5368, %v5890
  %v6100 = vadd.f32 %v5514, %v6036
  %v6101 = vadd.f32 %v5371, %v5893
  %v6102 = vadd.f32 %v5517, %v6039
  %v6103 = vadd.f32 %v5373, %v5895
  %v6104 = vadd.f32 %v5519, %v6041
  %v6105 = vadd.f32 %v5376, %v5898
  %v6106 = vadd.f32 %v5522, %v6044
  %v6107 = vadd.f32 %v5378, %v5900
  %v6108 = vadd.f32 %v5524, %v6046
  %v6109 = vadd.f32 %v5381, %v5903
  %v6110 = vadd.f32 %v5527, %v6049
  %v6111 = vadd.f32 %v5383, %v5905
  %v6112 = vadd.f32 %v5529, %v6051
  %v6113 = vadd.f32 %v5386, %v5908
  %v6114 = vadd.f32 %v5532, %v6054
  %v6115 = vadd.f32 %v5388, %v5910
  %v6116 = vadd.f32 %v5534, %v6056
  %v6117 = vadd.f32 %v5391, %v5913
  %v6118 = vadd.f32 %v5537, %v6059
  %v6119 = vadd.f32 %v5393, %v5915
  %v6120 = vadd.f32 %v5539, %v6061
  %v6121 = vadd.f32 %v5396, %v5918
  %v6122 = vadd.f32 %v5542, %v6064
  %v6123 = vadd.f32 %v5398, %v5920
  %v6124 = vadd.f32 %v5544, %v6066
  %v6125 = vadd.f32 %v5401, %v5923
  %v6126 = vadd.f32 %v5547, %v6069
  %v6127 = vadd.f32 %v5403, %v5925
  %v6128 = vadd.f32 %v5549, %v6071
  %v6129 = vadd.f32 %v5406, %v5928
  %v6130 = vadd.f32 %v5552, %v6074
  %v6131 = vadd.f32 %v5408, %v5930
  %v6132 = vadd.f32 %v5554, %v6076
  %v6133 = vadd.f32 %v5411, %v5933
  %v6134 = vadd.f32 %v5557, %v6079
  %v6135 = vadd.f32 %v5413, %v5935
  %v6136 = vadd.f32 %v5559, %v6081
  %v6137 = vadd.f32 %v5416, %v5938
  %v6138 = vadd.f32 %v5562, %v6084
  %v6139 = vadd.f32 %v5418, %v5940
  %v6140 = vadd.f32 %v5564, %v6086
  %v6141 = vadd.f32 %v5421, %v5943
  %v6142 = vadd.f32 %v5567, %v6089
  %v6143 = vadd.f32 %v5423, %v5945
  %v6144 = vadd.f32 %v5569, %v6091
  %v6145 = vadd.f32 %v5426, %v5948
  %v6146 = vadd.f32 %v5572, %v6094
  %v6147 = vadd.f32 %v4545, %v6097
  %v6148 = vadd.f32 %v4546, %v6098
  %v6149 = vadd.f32 %v4547, %v6099
  %v6150 = vadd.f32 %v4548, %v6100
  %v6151 = vadd.f32 %v4549, %v6101
  %v6152 = vadd.f32 %v4550, %v6102
  %v6153 = vadd.f32 %v4551, %v6103
  %v6154 = vadd.f32 %v4552, %v6104
  %v6155 = vadd.f32 %v4553, %v6105
  %v6156 = vadd.f32 %v4554, %v6106
  %v6157 = vadd.f32 %v4555, %v6107
  %v6158 = vadd.f32 %v4556, %v6108
  %v6159 = vadd.f32 %v4557, %v6109
  %v6160 = vadd.f32 %v4558, %v6110
  %v6161 = vadd.f32 %v4559, %v6111
  %v6162 = vadd.f32 %v4560, %v6112
  %v6163 = vadd.f32 %v4561, %v6113
  %v6164 = vadd.f32 %v4562, %v6114
  %v6165 = vadd.f32 %v4563, %v6115
  %v6166 = vadd.f32 %v4564, %v6116
  %v6167 = vadd.f32 %v4565, %v6117
  %v6168 = vadd.f32 %v4566, %v6118
  %v6169 = vadd.f32 %v4567, %v6119
  %v6170 = vadd.f32 %v4568, %v6120
  %v6171 = vadd.f32 %v4569, %v6121
  %v6172 = vadd.f32 %v4570, %v6122
  %v6173 = vadd.f32 %v4571, %v6123
  %v6174 = vadd.f32 %v4572, %v6124
  %v6175 = vadd.f32 %v4573, %v6125
  %v6176 = vadd.f32 %v4574, %v6126
  %v6177 = vadd.f32 %v4575, %v6127
  %v6178 = vadd.f32 %v4576, %v6128
  %v6179 = vadd.f32 %v4577, %v6129
  %v6180 = vadd.f32 %v4578, %v6130
  %v6181 = vadd.f32 %v4579, %v6131
  %v6182 = vadd.f32 %v4580, %v6132
  %v6183 = vadd.f32 %v4581, %v6133
  %v6184 = vadd.f32 %v4582, %v6134
  %v6185 = vadd.f32 %v4583, %v6135
  %v6186 = vadd.f32 %v4584, %v6136
  %v6187 = vadd.f32 %v4585, %v6137
  %v6188 = vadd.f32 %v4586, %v6138
  %v6189 = vadd.f32 %v4587, %v6139
  %v6190 = vadd.f32 %v4588, %v6140
  %v6191 = vadd.f32 %v4589, %v6141
  %v6192 = vadd.f32 %v4590, %v6142
  %v6193 = vadd.f32 %v4591, %v6143
  %v6194 = vadd.f32 %v4592, %v6144
  %v6195 = vadd.f32 %v4593, %v6145
  %v6196 = vadd.f32 %v4594, %v6146
  %v6197 = vld [vmem:[#allocation2 + $0xc0] sm:$0xff]
  %s6198 = scalar_lea.vmem %s4, 320
  %v6199 = vld [vmem:[%s6198] sm:$0xff]
  %v6200 = vld [vmem:[%s6198 + $0x8] sm:$0xff]
  %v6201 = vld [vmem:[%s6198 + $0x10] sm:$0xff]
  %v6202 = vld [vmem:[%s6198 + $0x18] sm:$0xff]
  %v6203 = vld [vmem:[%s6198 + $0x20] sm:$0xff]
  %v6204 = vld [vmem:[%s6198 + $0x28] sm:$0xff]
  %v6205 = vld [vmem:[%s6198 + $0x30] sm:$0xff]
  %v6206 = vld [vmem:[%s6198 + $0x38] sm:$0xff]
  %v6207 = vld [vmem:[%s6198 + $0x40] sm:$0xff]
  %v6208 = vld [vmem:[%s6198 + $0x48] sm:$0xff]
  %v6209 = vld [vmem:[%s6198 + $0x50] sm:$0xff]
  %v6210 = vld [vmem:[%s6198 + $0x58] sm:$0xff]
  %v6211 = vld [vmem:[%s6198 + $0x60] sm:$0xff]
  %v6212 = vld [vmem:[%s6198 + $0x68] sm:$0xff]
  %v6213 = vld [vmem:[%s6198 + $0x70] sm:$0xff]
  %v6214 = vld [vmem:[%s6198 + $0x78] sm:$0xff]
  %v6215 = vld [vmem:[%s6198 + $0x80] sm:$0xff]
  %v6216 = vld [vmem:[%s6198 + $0x88] sm:$0xff]
  %v6217 = vld [vmem:[%s6198 + $0x90] sm:$0xff]
  %v6218 = vld [vmem:[%s6198 + $0x98] sm:$0xff]
  %v6219 = vld [vmem:[#allocation2 + $0xd0] sm:$0x77]
  %s6220 = scalar_lea.vmem %s4, 800
  %v6221 = vld [vmem:[%s6220] sm:$0xff]
  %v6222 = vld [vmem:[%s6220 + $0x8] sm:$0xff]
  %v6223 = vld [vmem:[%s6220 + $0x10] sm:$0xff]
  %v6224 = vld [vmem:[%s6220 + $0x18] sm:$0xff]
  %v6225 = vld [vmem:[%s6220 + $0x20] sm:$0xff]
  %v6226 = vld [vmem:[%s6220 + $0x28] sm:$0xff]
  %v6227 = vld [vmem:[%s6220 + $0x30] sm:$0xff]
  %v6228 = vld [vmem:[%s6220 + $0x38] sm:$0xff]
  %v6229 = vld [vmem:[%s6220 + $0x40] sm:$0xff]
  %v6230 = vld [vmem:[%s6220 + $0x48] sm:$0xff]
  %v6231 = vld [vmem:[%s6220 + $0x50] sm:$0xff]
  %v6232 = vld [vmem:[%s6220 + $0x58] sm:$0xff]
  %v6233 = vld [vmem:[%s6220 + $0x60] sm:$0xff]
  %v6234 = vld [vmem:[%s6220 + $0x68] sm:$0xff]
  %v6235 = vld [vmem:[%s6220 + $0x70] sm:$0xff]
  %v6236 = vld [vmem:[%s6220 + $0x78] sm:$0xff]
  %v6237 = vld [vmem:[%s6220 + $0x80] sm:$0xff]
  %v6238 = vld [vmem:[%s6220 + $0x88] sm:$0xff]
  %v6239 = vld [vmem:[%s6220 + $0x90] sm:$0xff]
  %v6240 = vld [vmem:[%s6220 + $0x98] sm:$0xff]
  %v6242 = vunpack.c.l.b16 %v6219
  %v6243 = vunpack.c.h.b16 %v6219
  %v6244 = vpack.c.b16 %v6242, %v6242
  %v6245 = vpack.c.b16 %v6243, %v6243
  %v6247 = vshll.u32 %v4638, 16
  %v6249 = vrot.slane %v6247, 1
  %v6250 = vsel %vm2966, %v3153, %v6249
  %v6251 = vshll.u32 %v4639, 16
  %v6253 = vrot.slane %v6251, 1
  %v6254 = vsel %vm2966, %v3161, %v6253
  %v6255 = vshrl.u32 %v4638, 16
  %v6257 = vor.u32 %v6255, %v6249
  %v6259 = vshll.u32 %v6244, 16
  %v6261 = vrot.slane %v6259, 1
  %v6262 = vsel %vm2966, %v6257, %v6261
  %v6263 = vshrl.u32 %v4639, 16
  %v6265 = vor.u32 %v6263, %v6253
  %v6267 = vshll.u32 %v6245, 16
  %v6269 = vrot.slane %v6267, 1
  %v6270 = vsel %vm2966, %v6265, %v6269
  %v6271 = vshrl.u32 %v6244, 16
  %v6273 = vor.u32 %v6271, %v6261
  %v6274 = vshrl.u32 %v6245, 16
  %v6276 = vor.u32 %v6274, %v6269
  %v6300 = vunpack.c.l.b16 %v6221
  %v6301 = vunpack.c.h.b16 %v6221
  %v6302 = vunpack.c.l.b16 %v6222
  %v6303 = vunpack.c.h.b16 %v6222
  %v6304 = vunpack.c.l.b16 %v6223
  %v6305 = vunpack.c.h.b16 %v6223
  %v6306 = vunpack.c.l.b16 %v6224
  %v6307 = vunpack.c.h.b16 %v6224
  %v6308 = vunpack.c.l.b16 %v6225
  %v6309 = vunpack.c.h.b16 %v6225
  %v6310 = vunpack.c.l.b16 %v6226
  %v6311 = vunpack.c.h.b16 %v6226
  %v6312 = vunpack.c.l.b16 %v6227
  %v6313 = vunpack.c.h.b16 %v6227
  %v6314 = vunpack.c.l.b16 %v6228
  %v6315 = vunpack.c.h.b16 %v6228
  %v6316 = vunpack.c.l.b16 %v6229
  %v6317 = vunpack.c.h.b16 %v6229
  %v6318 = vunpack.c.l.b16 %v6230
  %v6319 = vunpack.c.h.b16 %v6230
  %v6320 = vunpack.c.l.b16 %v6231
  %v6321 = vunpack.c.h.b16 %v6231
  %v6322 = vunpack.c.l.b16 %v6232
  %v6323 = vunpack.c.h.b16 %v6232
  %v6324 = vunpack.c.l.b16 %v6233
  %v6325 = vunpack.c.h.b16 %v6233
  %v6326 = vunpack.c.l.b16 %v6234
  %v6327 = vunpack.c.h.b16 %v6234
  %v6328 = vunpack.c.l.b16 %v6235
  %v6329 = vunpack.c.h.b16 %v6235
  %v6330 = vunpack.c.l.b16 %v6236
  %v6331 = vunpack.c.h.b16 %v6236
  %v6332 = vunpack.c.l.b16 %v6237
  %v6333 = vunpack.c.h.b16 %v6237
  %v6334 = vunpack.c.l.b16 %v6238
  %v6335 = vunpack.c.h.b16 %v6238
  %v6336 = vunpack.c.l.b16 %v6239
  %v6337 = vunpack.c.h.b16 %v6239
  %v6338 = vunpack.c.l.b16 %v6240
  %v6339 = vunpack.c.h.b16 %v6240
  %v6340 = vpack.c.b16 %v6302, %v6300
  %v6341 = vpack.c.b16 %v6303, %v6301
  %v6342 = vpack.c.b16 %v6306, %v6304
  %v6343 = vpack.c.b16 %v6307, %v6305
  %v6344 = vpack.c.b16 %v6310, %v6308
  %v6345 = vpack.c.b16 %v6311, %v6309
  %v6346 = vpack.c.b16 %v6314, %v6312
  %v6347 = vpack.c.b16 %v6315, %v6313
  %v6348 = vpack.c.b16 %v6318, %v6316
  %v6349 = vpack.c.b16 %v6319, %v6317
  %v6350 = vpack.c.b16 %v6322, %v6320
  %v6351 = vpack.c.b16 %v6323, %v6321
  %v6352 = vpack.c.b16 %v6326, %v6324
  %v6353 = vpack.c.b16 %v6327, %v6325
  %v6354 = vpack.c.b16 %v6330, %v6328
  %v6355 = vpack.c.b16 %v6331, %v6329
  %v6356 = vpack.c.b16 %v6334, %v6332
  %v6357 = vpack.c.b16 %v6335, %v6333
  %v6358 = vpack.c.b16 %v6338, %v6336
  %v6359 = vpack.c.b16 %v6339, %v6337
  %v6381 = vsel %vm255, %v6254, 0
  %v6384 = vsel %vm255, %v6270, 0
  %v6387 = vsel %vm255, %v6276, 0
  %6389 = vmatpush.bf16.msra.mxu0 %v6354
  %6390 = vmatpush.bf16.msra.mxu0 %v6352
  %6391 = vmatpush.bf16.msra.mxu0 %v6350
  %6392 = vmatpush.bf16.msra.mxu0 %v6348
  %6393 = vmatpush.bf16.msra.mxu0 %v6346
  %6394 = vmatpush.bf16.msra.mxu0 %v6344
  %6395 = vmatpush.bf16.msra.mxu0 %v6342
  %6396 = vmatpush.bf16.msra.mxu0 %v6340
  %6397 = vmatmul.bf16.gmra.mxu0 %v2998
  %v6398 = vpop.f32.mrf.mxu0
  %v6399 = vadd.f32 0.0, %v6398
  %v6400 = vpop.f32.mrf.mxu0
  %v6401 = vadd.f32 0.0, %v6400
  %6402 = vmatmul.bf16.gmra.mxu0 %v3014
  %v6403 = vpop.f32.mrf.mxu0
  %v6404 = vadd.f32 0.0, %v6403
  %v6405 = vpop.f32.mrf.mxu0
  %v6406 = vadd.f32 0.0, %v6405
  %6407 = vmatmul.bf16.gmra.mxu0 %v3030
  %v6408 = vpop.f32.mrf.mxu0
  %v6409 = vadd.f32 0.0, %v6408
  %v6410 = vpop.f32.mrf.mxu0
  %v6411 = vadd.f32 0.0, %v6410
  %6412 = vmatmul.bf16.gmra.mxu0 %v3046
  %v6413 = vpop.f32.mrf.mxu0
  %v6414 = vadd.f32 0.0, %v6413
  %v6415 = vpop.f32.mrf.mxu0
  %v6416 = vadd.f32 0.0, %v6415
  %6417 = vmatmul.bf16.gmra.mxu0 %v3062
  %v6418 = vpop.f32.mrf.mxu0
  %v6419 = vadd.f32 0.0, %v6418
  %v6420 = vpop.f32.mrf.mxu0
  %v6421 = vadd.f32 0.0, %v6420
  %6422 = vmatmul.bf16.gmra.mxu0 %v3078
  %v6423 = vpop.f32.mrf.mxu0
  %v6424 = vadd.f32 0.0, %v6423
  %v6425 = vpop.f32.mrf.mxu0
  %v6426 = vadd.f32 0.0, %v6425
  %6427 = vmatmul.bf16.gmra.mxu0 %v3094
  %v6428 = vpop.f32.mrf.mxu0
  %v6429 = vadd.f32 0.0, %v6428
  %v6430 = vpop.f32.mrf.mxu0
  %v6431 = vadd.f32 0.0, %v6430
  %6432 = vmatmul.bf16.gmra.mxu0 %v3110
  %v6433 = vpop.f32.mrf.mxu0
  %v6434 = vadd.f32 0.0, %v6433
  %v6435 = vpop.f32.mrf.mxu0
  %v6436 = vadd.f32 0.0, %v6435
  %6437 = vmatmul.bf16.gmra.mxu0 %v3126
  %v6438 = vpop.f32.mrf.mxu0
  %v6439 = vadd.f32 0.0, %v6438
  %v6440 = vpop.f32.mrf.mxu0
  %v6441 = vadd.f32 0.0, %v6440
  %6442 = vmatmul.bf16.gmra.mxu0 %v3142
  %v6443 = vpop.f32.mrf.mxu0
  %v6444 = vadd.f32 0.0, %v6443
  %v6445 = vpop.f32.mrf.mxu0
  %v6446 = vadd.f32 0.0, %v6445
  %6447 = vmatmul.bf16.gmra.mxu0 %v6250
  %v6448 = vpop.f32.mrf.mxu0
  %v6449 = vadd.f32 0.0, %v6448
  %v6450 = vpop.f32.mrf.mxu0
  %v6451 = vadd.f32 0.0, %v6450
  %6452 = vmatmul.bf16.gmra.mxu0 %v6262
  %v6453 = vpop.f32.mrf.mxu0
  %v6454 = vadd.f32 0.0, %v6453
  %v6455 = vpop.f32.mrf.mxu0
  %v6456 = vadd.f32 0.0, %v6455
  %6457 = vmatmul.bf16.gmra.mxu0 %v6273
  %v6458 = vpop.f32.mrf.mxu0
  %v6459 = vadd.f32 0.0, %v6458
  %v6460 = vpop.f32.mrf.mxu0
  %6461 = vdwg.mxu0
  %6462 = vmatpush.bf16.msra.mxu0 0
  %6463 = vmatpush.bf16.msra.mxu0 0
  %6464 = vmatpush.bf16.msra.mxu0 0
  %6465 = vmatpush.bf16.msra.mxu0 0
  %6466 = vmatpush.bf16.msra.mxu0 0
  %6467 = vmatpush.bf16.msra.mxu0 0
  %6468 = vmatpush.bf16.msra.mxu0 %v6358
  %6469 = vmatpush.bf16.msra.mxu0 %v6356
  %6470 = vmatmul.bf16.gmra.mxu0 %v3290
  %v6471 = vpop.f32.mrf.mxu0
  %v6472 = vadd.f32 %v6399, %v6471
  %v6473 = vpop.f32.mrf.mxu0
  %v6474 = vadd.f32 %v6401, %v6473
  %6475 = vmatmul.bf16.gmra.mxu0 %v3293
  %v6476 = vpop.f32.mrf.mxu0
  %v6477 = vadd.f32 %v6404, %v6476
  %v6478 = vpop.f32.mrf.mxu0
  %v6479 = vadd.f32 %v6406, %v6478
  %6480 = vmatmul.bf16.gmra.mxu0 %v3296
  %v6481 = vpop.f32.mrf.mxu0
  %v6482 = vadd.f32 %v6409, %v6481
  %v6483 = vpop.f32.mrf.mxu0
  %v6484 = vadd.f32 %v6411, %v6483
  %6485 = vmatmul.bf16.gmra.mxu0 %v3299
  %v6486 = vpop.f32.mrf.mxu0
  %v6487 = vadd.f32 %v6414, %v6486
  %v6488 = vpop.f32.mrf.mxu0
  %v6489 = vadd.f32 %v6416, %v6488
  %6490 = vmatmul.bf16.gmra.mxu0 %v3302
  %v6491 = vpop.f32.mrf.mxu0
  %v6492 = vadd.f32 %v6419, %v6491
  %v6493 = vpop.f32.mrf.mxu0
  %v6494 = vadd.f32 %v6421, %v6493
  %6495 = vmatmul.bf16.gmra.mxu0 %v3305
  %v6496 = vpop.f32.mrf.mxu0
  %v6497 = vadd.f32 %v6424, %v6496
  %v6498 = vpop.f32.mrf.mxu0
  %v6499 = vadd.f32 %v6426, %v6498
  %6500 = vmatmul.bf16.gmra.mxu0 %v3308
  %v6501 = vpop.f32.mrf.mxu0
  %v6502 = vadd.f32 %v6429, %v6501
  %v6503 = vpop.f32.mrf.mxu0
  %v6504 = vadd.f32 %v6431, %v6503
  %6505 = vmatmul.bf16.gmra.mxu0 %v3311
  %v6506 = vpop.f32.mrf.mxu0
  %v6507 = vadd.f32 %v6434, %v6506
  %v6508 = vpop.f32.mrf.mxu0
  %v6509 = vadd.f32 %v6436, %v6508
  %6510 = vmatmul.bf16.gmra.mxu0 %v3314
  %v6511 = vpop.f32.mrf.mxu0
  %v6512 = vadd.f32 %v6439, %v6511
  %v6513 = vpop.f32.mrf.mxu0
  %v6514 = vadd.f32 %v6441, %v6513
  %6515 = vmatmul.bf16.gmra.mxu0 %v3317
  %v6516 = vpop.f32.mrf.mxu0
  %v6517 = vadd.f32 %v6444, %v6516
  %v6518 = vpop.f32.mrf.mxu0
  %v6519 = vadd.f32 %v6446, %v6518
  %6520 = vmatmul.bf16.gmra.mxu0 %v6381
  %v6521 = vpop.f32.mrf.mxu0
  %v6522 = vadd.f32 %v6449, %v6521
  %v6523 = vpop.f32.mrf.mxu0
  %v6524 = vadd.f32 %v6451, %v6523
  %6525 = vmatmul.bf16.gmra.mxu0 %v6384
  %v6526 = vpop.f32.mrf.mxu0
  %v6527 = vadd.f32 %v6454, %v6526
  %v6528 = vpop.f32.mrf.mxu0
  %v6529 = vadd.f32 %v6456, %v6528
  %6530 = vmatmul.bf16.gmra.mxu0 %v6387
  %v6531 = vpop.f32.mrf.mxu0
  %v6532 = vadd.f32 %v6459, %v6531
  %v6533 = vpop.f32.mrf.mxu0
  %6534 = vdwg.mxu0
  %6535 = vmatpush.bf16.msra.mxu0 %v6355
  %6536 = vmatpush.bf16.msra.mxu0 %v6353
  %6537 = vmatpush.bf16.msra.mxu0 %v6351
  %6538 = vmatpush.bf16.msra.mxu0 %v6349
  %6539 = vmatpush.bf16.msra.mxu0 %v6347
  %6540 = vmatpush.bf16.msra.mxu0 %v6345
  %6541 = vmatpush.bf16.msra.mxu0 %v6343
  %6542 = vmatpush.bf16.msra.mxu0 %v6341
  %6543 = vmatmul.bf16.gmra.mxu0 %v2998
  %v6544 = vpop.f32.mrf.mxu0
  %v6545 = vadd.f32 0.0, %v6544
  %v6546 = vpop.f32.mrf.mxu0
  %v6547 = vadd.f32 0.0, %v6546
  %6548 = vmatmul.bf16.gmra.mxu0 %v3014
  %v6549 = vpop.f32.mrf.mxu0
  %v6550 = vadd.f32 0.0, %v6549
  %v6551 = vpop.f32.mrf.mxu0
  %v6552 = vadd.f32 0.0, %v6551
  %6553 = vmatmul.bf16.gmra.mxu0 %v3030
  %v6554 = vpop.f32.mrf.mxu0
  %v6555 = vadd.f32 0.0, %v6554
  %v6556 = vpop.f32.mrf.mxu0
  %v6557 = vadd.f32 0.0, %v6556
  %6558 = vmatmul.bf16.gmra.mxu0 %v3046
  %v6559 = vpop.f32.mrf.mxu0
  %v6560 = vadd.f32 0.0, %v6559
  %v6561 = vpop.f32.mrf.mxu0
  %v6562 = vadd.f32 0.0, %v6561
  %6563 = vmatmul.bf16.gmra.mxu0 %v3062
  %v6564 = vpop.f32.mrf.mxu0
  %v6565 = vadd.f32 0.0, %v6564
  %v6566 = vpop.f32.mrf.mxu0
  %v6567 = vadd.f32 0.0, %v6566
  %6568 = vmatmul.bf16.gmra.mxu0 %v3078
  %v6569 = vpop.f32.mrf.mxu0
  %v6570 = vadd.f32 0.0, %v6569
  %v6571 = vpop.f32.mrf.mxu0
  %v6572 = vadd.f32 0.0, %v6571
  %6573 = vmatmul.bf16.gmra.mxu0 %v3094
  %v6574 = vpop.f32.mrf.mxu0
  %v6575 = vadd.f32 0.0, %v6574
  %v6576 = vpop.f32.mrf.mxu0
  %v6577 = vadd.f32 0.0, %v6576
  %6578 = vmatmul.bf16.gmra.mxu0 %v3110
  %v6579 = vpop.f32.mrf.mxu0
  %v6580 = vadd.f32 0.0, %v6579
  %v6581 = vpop.f32.mrf.mxu0
  %v6582 = vadd.f32 0.0, %v6581
  %6583 = vmatmul.bf16.gmra.mxu0 %v3126
  %v6584 = vpop.f32.mrf.mxu0
  %v6585 = vadd.f32 0.0, %v6584
  %v6586 = vpop.f32.mrf.mxu0
  %v6587 = vadd.f32 0.0, %v6586
  %6588 = vmatmul.bf16.gmra.mxu0 %v3142
  %v6589 = vpop.f32.mrf.mxu0
  %v6590 = vadd.f32 0.0, %v6589
  %v6591 = vpop.f32.mrf.mxu0
  %v6592 = vadd.f32 0.0, %v6591
  %6593 = vmatmul.bf16.gmra.mxu0 %v6250
  %v6594 = vpop.f32.mrf.mxu0
  %v6595 = vadd.f32 0.0, %v6594
  %v6596 = vpop.f32.mrf.mxu0
  %v6597 = vadd.f32 0.0, %v6596
  %6598 = vmatmul.bf16.gmra.mxu0 %v6262
  %v6599 = vpop.f32.mrf.mxu0
  %v6600 = vadd.f32 0.0, %v6599
  %v6601 = vpop.f32.mrf.mxu0
  %v6602 = vadd.f32 0.0, %v6601
  %6603 = vmatmul.bf16.gmra.mxu0 %v6273
  %v6604 = vpop.f32.mrf.mxu0
  %v6605 = vadd.f32 0.0, %v6604
  %v6606 = vpop.f32.mrf.mxu0
  %6607 = vdwg.mxu0
  %6608 = vmatpush.bf16.msra.mxu0 0
  %6609 = vmatpush.bf16.msra.mxu0 0
  %6610 = vmatpush.bf16.msra.mxu0 0
  %6611 = vmatpush.bf16.msra.mxu0 0
  %6612 = vmatpush.bf16.msra.mxu0 0
  %6613 = vmatpush.bf16.msra.mxu0 0
  %6614 = vmatpush.bf16.msra.mxu0 %v6359
  %6615 = vmatpush.bf16.msra.mxu0 %v6357
  %6616 = vmatmul.bf16.gmra.mxu0 %v3290
  %v6617 = vpop.f32.mrf.mxu0
  %v6618 = vadd.f32 %v6545, %v6617
  %v6619 = vpop.f32.mrf.mxu0
  %v6620 = vadd.f32 %v6547, %v6619
  %6621 = vmatmul.bf16.gmra.mxu0 %v3293
  %v6622 = vpop.f32.mrf.mxu0
  %v6623 = vadd.f32 %v6550, %v6622
  %v6624 = vpop.f32.mrf.mxu0
  %v6625 = vadd.f32 %v6552, %v6624
  %6626 = vmatmul.bf16.gmra.mxu0 %v3296
  %v6627 = vpop.f32.mrf.mxu0
  %v6628 = vadd.f32 %v6555, %v6627
  %v6629 = vpop.f32.mrf.mxu0
  %v6630 = vadd.f32 %v6557, %v6629
  %6631 = vmatmul.bf16.gmra.mxu0 %v3299
  %v6632 = vpop.f32.mrf.mxu0
  %v6633 = vadd.f32 %v6560, %v6632
  %v6634 = vpop.f32.mrf.mxu0
  %v6635 = vadd.f32 %v6562, %v6634
  %6636 = vmatmul.bf16.gmra.mxu0 %v3302
  %v6637 = vpop.f32.mrf.mxu0
  %v6638 = vadd.f32 %v6565, %v6637
  %v6639 = vpop.f32.mrf.mxu0
  %v6640 = vadd.f32 %v6567, %v6639
  %6641 = vmatmul.bf16.gmra.mxu0 %v3305
  %v6642 = vpop.f32.mrf.mxu0
  %v6643 = vadd.f32 %v6570, %v6642
  %v6644 = vpop.f32.mrf.mxu0
  %v6645 = vadd.f32 %v6572, %v6644
  %6646 = vmatmul.bf16.gmra.mxu0 %v3308
  %v6647 = vpop.f32.mrf.mxu0
  %v6648 = vadd.f32 %v6575, %v6647
  %v6649 = vpop.f32.mrf.mxu0
  %v6650 = vadd.f32 %v6577, %v6649
  %6651 = vmatmul.bf16.gmra.mxu0 %v3311
  %v6652 = vpop.f32.mrf.mxu0
  %v6653 = vadd.f32 %v6580, %v6652
  %v6654 = vpop.f32.mrf.mxu0
  %v6655 = vadd.f32 %v6582, %v6654
  %6656 = vmatmul.bf16.gmra.mxu0 %v3314
  %v6657 = vpop.f32.mrf.mxu0
  %v6658 = vadd.f32 %v6585, %v6657
  %v6659 = vpop.f32.mrf.mxu0
  %v6660 = vadd.f32 %v6587, %v6659
  %6661 = vmatmul.bf16.gmra.mxu0 %v3317
  %v6662 = vpop.f32.mrf.mxu0
  %v6663 = vadd.f32 %v6590, %v6662
  %v6664 = vpop.f32.mrf.mxu0
  %v6665 = vadd.f32 %v6592, %v6664
  %6666 = vmatmul.bf16.gmra.mxu0 %v6381
  %v6667 = vpop.f32.mrf.mxu0
  %v6668 = vadd.f32 %v6595, %v6667
  %v6669 = vpop.f32.mrf.mxu0
  %v6670 = vadd.f32 %v6597, %v6669
  %6671 = vmatmul.bf16.gmra.mxu0 %v6384
  %v6672 = vpop.f32.mrf.mxu0
  %v6673 = vadd.f32 %v6600, %v6672
  %v6674 = vpop.f32.mrf.mxu0
  %v6675 = vadd.f32 %v6602, %v6674
  %6676 = vmatmul.bf16.gmra.mxu0 %v6387
  %v6677 = vpop.f32.mrf.mxu0
  %v6678 = vadd.f32 %v6605, %v6677
  %v6679 = vpop.f32.mrf.mxu0
  %6680 = vdwg.mxu0
  %v6682 = vunpack.c.l.b16 %v6197
  %v6683 = vunpack.c.h.b16 %v6197
  %v6684 = vpack.c.b16 %v6682, %v6682
  %v6685 = vpack.c.b16 %v6683, %v6683
  %vm6686 = vsmask.f32 6400
  %v6688 = vshrl.u32 %v5078, 16
  %v6690 = vrot.slane %v6688, 1
  %v6691 = vshll.u32 %v5078, 16
  %v6693 = vrot.slane %v6691, 2
  %v6694 = vor.u32 %v6690, %v6693
  %v6695 = vrot.slane %v2991, 1
  %v6696 = vrot.slane %v2975, 2
  %v6697 = vor.u32 %v6695, %v6696
  %v6698 = vsel %vm6686, %v6694, %v6697
  %v6700 = vshrl.u32 %v5079, 16
  %v6702 = vrot.slane %v6700, 1
  %v6703 = vshll.u32 %v5079, 16
  %v6705 = vrot.slane %v6703, 2
  %v6706 = vor.u32 %v6702, %v6705
  %v6707 = vrot.slane %v2999, 1
  %v6708 = vrot.slane %v2987, 2
  %v6709 = vor.u32 %v6707, %v6708
  %v6710 = vsel %vm6686, %v6706, %v6709
  %v6711 = vrot.slane %v3007, 1
  %v6712 = vrot.slane %v2995, 2
  %v6713 = vor.u32 %v6711, %v6712
  %v6714 = vsel %vm6686, %v6697, %v6713
  %v6715 = vrot.slane %v3015, 1
  %v6716 = vrot.slane %v3003, 2
  %v6717 = vor.u32 %v6715, %v6716
  %v6718 = vsel %vm6686, %v6709, %v6717
  %v6719 = vrot.slane %v3023, 1
  %v6720 = vrot.slane %v3011, 2
  %v6721 = vor.u32 %v6719, %v6720
  %v6722 = vsel %vm6686, %v6713, %v6721
  %v6723 = vrot.slane %v3031, 1
  %v6724 = vrot.slane %v3019, 2
  %v6725 = vor.u32 %v6723, %v6724
  %v6726 = vsel %vm6686, %v6717, %v6725
  %v6727 = vrot.slane %v3039, 1
  %v6728 = vrot.slane %v3027, 2
  %v6729 = vor.u32 %v6727, %v6728
  %v6730 = vsel %vm6686, %v6721, %v6729
  %v6731 = vrot.slane %v3047, 1
  %v6732 = vrot.slane %v3035, 2
  %v6733 = vor.u32 %v6731, %v6732
  %v6734 = vsel %vm6686, %v6725, %v6733
  %v6735 = vrot.slane %v3055, 1
  %v6736 = vrot.slane %v3043, 2
  %v6737 = vor.u32 %v6735, %v6736
  %v6738 = vsel %vm6686, %v6729, %v6737
  %v6739 = vrot.slane %v3063, 1
  %v6740 = vrot.slane %v3051, 2
  %v6741 = vor.u32 %v6739, %v6740
  %v6742 = vsel %vm6686, %v6733, %v6741
  %v6743 = vrot.slane %v3071, 1
  %v6744 = vrot.slane %v3059, 2
  %v6745 = vor.u32 %v6743, %v6744
  %v6746 = vsel %vm6686, %v6737, %v6745
  %v6747 = vrot.slane %v3079, 1
  %v6748 = vrot.slane %v3067, 2
  %v6749 = vor.u32 %v6747, %v6748
  %v6750 = vsel %vm6686, %v6741, %v6749
  %v6751 = vrot.slane %v3087, 1
  %v6752 = vrot.slane %v3075, 2
  %v6753 = vor.u32 %v6751, %v6752
  %v6754 = vsel %vm6686, %v6745, %v6753
  %v6755 = vrot.slane %v3095, 1
  %v6756 = vrot.slane %v3083, 2
  %v6757 = vor.u32 %v6755, %v6756
  %v6758 = vsel %vm6686, %v6749, %v6757
  %v6759 = vrot.slane %v3103, 1
  %v6760 = vrot.slane %v3091, 2
  %v6761 = vor.u32 %v6759, %v6760
  %v6762 = vsel %vm6686, %v6753, %v6761
  %v6763 = vrot.slane %v3111, 1
  %v6764 = vrot.slane %v3099, 2
  %v6765 = vor.u32 %v6763, %v6764
  %v6766 = vsel %vm6686, %v6757, %v6765
  %v6767 = vrot.slane %v3119, 1
  %v6768 = vrot.slane %v3107, 2
  %v6769 = vor.u32 %v6767, %v6768
  %v6770 = vsel %vm6686, %v6761, %v6769
  %v6771 = vrot.slane %v3127, 1
  %v6772 = vrot.slane %v3115, 2
  %v6773 = vor.u32 %v6771, %v6772
  %v6774 = vsel %vm6686, %v6765, %v6773
  %v6775 = vrot.slane %v3135, 1
  %v6776 = vrot.slane %v3123, 2
  %v6777 = vor.u32 %v6775, %v6776
  %v6778 = vsel %vm6686, %v6769, %v6777
  %v6779 = vrot.slane %v3143, 1
  %v6780 = vrot.slane %v3131, 2
  %v6781 = vor.u32 %v6779, %v6780
  %v6782 = vsel %vm6686, %v6773, %v6781
  %v6783 = vrot.slane %v3151, 1
  %v6784 = vrot.slane %v3139, 2
  %v6785 = vor.u32 %v6783, %v6784
  %v6786 = vsel %vm6686, %v6777, %v6785
  %v6787 = vrot.slane %v3159, 1
  %v6788 = vrot.slane %v3147, 2
  %v6789 = vor.u32 %v6787, %v6788
  %v6790 = vsel %vm6686, %v6781, %v6789
  %v6792 = vshrl.u32 %v6684, 16
  %v6794 = vrot.slane %v6792, 1
  %v6795 = vshll.u32 %v6684, 16
  %v6797 = vrot.slane %v6795, 2
  %v6798 = vor.u32 %v6794, %v6797
  %v6799 = vsel %vm6686, %v6785, %v6798
  %v6801 = vshrl.u32 %v6685, 16
  %v6803 = vrot.slane %v6801, 1
  %v6804 = vshll.u32 %v6685, 16
  %v6806 = vrot.slane %v6804, 2
  %v6807 = vor.u32 %v6803, %v6806
  %v6808 = vsel %vm6686, %v6789, %v6807
  %v6842 = vunpack.c.l.b16 %v6199
  %v6843 = vunpack.c.h.b16 %v6199
  %v6844 = vunpack.c.l.b16 %v6200
  %v6845 = vunpack.c.h.b16 %v6200
  %v6846 = vunpack.c.l.b16 %v6201
  %v6847 = vunpack.c.h.b16 %v6201
  %v6848 = vunpack.c.l.b16 %v6202
  %v6849 = vunpack.c.h.b16 %v6202
  %v6850 = vunpack.c.l.b16 %v6203
  %v6851 = vunpack.c.h.b16 %v6203
  %v6852 = vunpack.c.l.b16 %v6204
  %v6853 = vunpack.c.h.b16 %v6204
  %v6854 = vunpack.c.l.b16 %v6205
  %v6855 = vunpack.c.h.b16 %v6205
  %v6856 = vunpack.c.l.b16 %v6206
  %v6857 = vunpack.c.h.b16 %v6206
  %v6858 = vunpack.c.l.b16 %v6207
  %v6859 = vunpack.c.h.b16 %v6207
  %v6860 = vunpack.c.l.b16 %v6208
  %v6861 = vunpack.c.h.b16 %v6208
  %v6862 = vunpack.c.l.b16 %v6209
  %v6863 = vunpack.c.h.b16 %v6209
  %v6864 = vunpack.c.l.b16 %v6210
  %v6865 = vunpack.c.h.b16 %v6210
  %v6866 = vunpack.c.l.b16 %v6211
  %v6867 = vunpack.c.h.b16 %v6211
  %v6868 = vunpack.c.l.b16 %v6212
  %v6869 = vunpack.c.h.b16 %v6212
  %v6870 = vunpack.c.l.b16 %v6213
  %v6871 = vunpack.c.h.b16 %v6213
  %v6872 = vunpack.c.l.b16 %v6214
  %v6873 = vunpack.c.h.b16 %v6214
  %v6874 = vunpack.c.l.b16 %v6215
  %v6875 = vunpack.c.h.b16 %v6215
  %v6876 = vunpack.c.l.b16 %v6216
  %v6877 = vunpack.c.h.b16 %v6216
  %v6878 = vunpack.c.l.b16 %v6217
  %v6879 = vunpack.c.h.b16 %v6217
  %v6880 = vunpack.c.l.b16 %v6218
  %v6881 = vunpack.c.h.b16 %v6218
  %v6882 = vpack.c.b16 %v6844, %v6842
  %v6883 = vpack.c.b16 %v6845, %v6843
  %v6884 = vpack.c.b16 %v6848, %v6846
  %v6885 = vpack.c.b16 %v6849, %v6847
  %v6886 = vpack.c.b16 %v6852, %v6850
  %v6887 = vpack.c.b16 %v6853, %v6851
  %v6888 = vpack.c.b16 %v6856, %v6854
  %v6889 = vpack.c.b16 %v6857, %v6855
  %v6890 = vpack.c.b16 %v6860, %v6858
  %v6891 = vpack.c.b16 %v6861, %v6859
  %v6892 = vpack.c.b16 %v6864, %v6862
  %v6893 = vpack.c.b16 %v6865, %v6863
  %v6894 = vpack.c.b16 %v6868, %v6866
  %v6895 = vpack.c.b16 %v6869, %v6867
  %v6896 = vpack.c.b16 %v6872, %v6870
  %v6897 = vpack.c.b16 %v6873, %v6871
  %v6898 = vpack.c.b16 %v6876, %v6874
  %v6899 = vpack.c.b16 %v6877, %v6875
  %v6900 = vpack.c.b16 %v6880, %v6878
  %v6901 = vpack.c.b16 %v6881, %v6879
  %v6923 = vsel %vm255, %v6710, 0
  %v6926 = vsel %vm255, %v6718, 0
  %v6929 = vsel %vm255, %v6726, 0
  %v6932 = vsel %vm255, %v6734, 0
  %v6935 = vsel %vm255, %v6742, 0
  %v6938 = vsel %vm255, %v6750, 0
  %v6941 = vsel %vm255, %v6758, 0
  %v6944 = vsel %vm255, %v6766, 0
  %v6947 = vsel %vm255, %v6774, 0
  %v6950 = vsel %vm255, %v6782, 0
  %v6953 = vsel %vm255, %v6790, 0
  %v6956 = vsel %vm255, %v6808, 0
  %v6959 = vsel %vm255, %v6807, 0
  %6961 = vmatpush.bf16.msra.mxu0 %v6896
  %6962 = vmatpush.bf16.msra.mxu0 %v6894
  %6963 = vmatpush.bf16.msra.mxu0 %v6892
  %6964 = vmatpush.bf16.msra.mxu0 %v6890
  %6965 = vmatpush.bf16.msra.mxu0 %v6888
  %6966 = vmatpush.bf16.msra.mxu0 %v6886
  %6967 = vmatpush.bf16.msra.mxu0 %v6884
  %6968 = vmatpush.bf16.msra.mxu0 %v6882
  %6969 = vmatmul.bf16.gmra.mxu0 %v6698
  %v6970 = vpop.f32.mrf.mxu0
  %v6971 = vadd.f32 %v6472, %v6970
  %v6972 = vpop.f32.mrf.mxu0
  %v6973 = vadd.f32 %v6474, %v6972
  %6974 = vmatmul.bf16.gmra.mxu0 %v6714
  %v6975 = vpop.f32.mrf.mxu0
  %v6976 = vadd.f32 %v6477, %v6975
  %v6977 = vpop.f32.mrf.mxu0
  %v6978 = vadd.f32 %v6479, %v6977
  %6979 = vmatmul.bf16.gmra.mxu0 %v6722
  %v6980 = vpop.f32.mrf.mxu0
  %v6981 = vadd.f32 %v6482, %v6980
  %v6982 = vpop.f32.mrf.mxu0
  %v6983 = vadd.f32 %v6484, %v6982
  %6984 = vmatmul.bf16.gmra.mxu0 %v6730
  %v6985 = vpop.f32.mrf.mxu0
  %v6986 = vadd.f32 %v6487, %v6985
  %v6987 = vpop.f32.mrf.mxu0
  %v6988 = vadd.f32 %v6489, %v6987
  %6989 = vmatmul.bf16.gmra.mxu0 %v6738
  %v6990 = vpop.f32.mrf.mxu0
  %v6991 = vadd.f32 %v6492, %v6990
  %v6992 = vpop.f32.mrf.mxu0
  %v6993 = vadd.f32 %v6494, %v6992
  %6994 = vmatmul.bf16.gmra.mxu0 %v6746
  %v6995 = vpop.f32.mrf.mxu0
  %v6996 = vadd.f32 %v6497, %v6995
  %v6997 = vpop.f32.mrf.mxu0
  %v6998 = vadd.f32 %v6499, %v6997
  %6999 = vmatmul.bf16.gmra.mxu0 %v6754
  %v7000 = vpop.f32.mrf.mxu0
  %v7001 = vadd.f32 %v6502, %v7000
  %v7002 = vpop.f32.mrf.mxu0
  %v7003 = vadd.f32 %v6504, %v7002
  %7004 = vmatmul.bf16.gmra.mxu0 %v6762
  %v7005 = vpop.f32.mrf.mxu0
  %v7006 = vadd.f32 %v6507, %v7005
  %v7007 = vpop.f32.mrf.mxu0
  %v7008 = vadd.f32 %v6509, %v7007
  %7009 = vmatmul.bf16.gmra.mxu0 %v6770
  %v7010 = vpop.f32.mrf.mxu0
  %v7011 = vadd.f32 %v6512, %v7010
  %v7012 = vpop.f32.mrf.mxu0
  %v7013 = vadd.f32 %v6514, %v7012
  %7014 = vmatmul.bf16.gmra.mxu0 %v6778
  %v7015 = vpop.f32.mrf.mxu0
  %v7016 = vadd.f32 %v6517, %v7015
  %v7017 = vpop.f32.mrf.mxu0
  %v7018 = vadd.f32 %v6519, %v7017
  %7019 = vmatmul.bf16.gmra.mxu0 %v6786
  %v7020 = vpop.f32.mrf.mxu0
  %v7021 = vadd.f32 %v6522, %v7020
  %v7022 = vpop.f32.mrf.mxu0
  %v7023 = vadd.f32 %v6524, %v7022
  %7024 = vmatmul.bf16.gmra.mxu0 %v6799
  %v7025 = vpop.f32.mrf.mxu0
  %v7026 = vadd.f32 %v6527, %v7025
  %v7027 = vpop.f32.mrf.mxu0
  %v7028 = vadd.f32 %v6529, %v7027
  %7029 = vmatmul.bf16.gmra.mxu0 %v6798
  %v7030 = vpop.f32.mrf.mxu0
  %v7031 = vadd.f32 %v6532, %v7030
  %v7032 = vpop.f32.mrf.mxu0
  %7033 = vdwg.mxu0
  %7034 = vmatpush.bf16.msra.mxu0 0
  %7035 = vmatpush.bf16.msra.mxu0 0
  %7036 = vmatpush.bf16.msra.mxu0 0
  %7037 = vmatpush.bf16.msra.mxu0 0
  %7038 = vmatpush.bf16.msra.mxu0 0
  %7039 = vmatpush.bf16.msra.mxu0 0
  %7040 = vmatpush.bf16.msra.mxu0 %v6900
  %7041 = vmatpush.bf16.msra.mxu0 %v6898
  %7042 = vmatmul.bf16.gmra.mxu0 %v6923
  %v7043 = vpop.f32.mrf.mxu0
  %v7044 = vadd.f32 %v6971, %v7043
  %v7045 = vpop.f32.mrf.mxu0
  %v7046 = vadd.f32 %v6973, %v7045
  %7047 = vmatmul.bf16.gmra.mxu0 %v6926
  %v7048 = vpop.f32.mrf.mxu0
  %v7049 = vadd.f32 %v6976, %v7048
  %v7050 = vpop.f32.mrf.mxu0
  %v7051 = vadd.f32 %v6978, %v7050
  %7052 = vmatmul.bf16.gmra.mxu0 %v6929
  %v7053 = vpop.f32.mrf.mxu0
  %v7054 = vadd.f32 %v6981, %v7053
  %v7055 = vpop.f32.mrf.mxu0
  %v7056 = vadd.f32 %v6983, %v7055
  %7057 = vmatmul.bf16.gmra.mxu0 %v6932
  %v7058 = vpop.f32.mrf.mxu0
  %v7059 = vadd.f32 %v6986, %v7058
  %v7060 = vpop.f32.mrf.mxu0
  %v7061 = vadd.f32 %v6988, %v7060
  %7062 = vmatmul.bf16.gmra.mxu0 %v6935
  %v7063 = vpop.f32.mrf.mxu0
  %v7064 = vadd.f32 %v6991, %v7063
  %v7065 = vpop.f32.mrf.mxu0
  %v7066 = vadd.f32 %v6993, %v7065
  %7067 = vmatmul.bf16.gmra.mxu0 %v6938
  %v7068 = vpop.f32.mrf.mxu0
  %v7069 = vadd.f32 %v6996, %v7068
  %v7070 = vpop.f32.mrf.mxu0
  %v7071 = vadd.f32 %v6998, %v7070
  %7072 = vmatmul.bf16.gmra.mxu0 %v6941
  %v7073 = vpop.f32.mrf.mxu0
  %v7074 = vadd.f32 %v7001, %v7073
  %v7075 = vpop.f32.mrf.mxu0
  %v7076 = vadd.f32 %v7003, %v7075
  %7077 = vmatmul.bf16.gmra.mxu0 %v6944
  %v7078 = vpop.f32.mrf.mxu0
  %v7079 = vadd.f32 %v7006, %v7078
  %v7080 = vpop.f32.mrf.mxu0
  %v7081 = vadd.f32 %v7008, %v7080
  %7082 = vmatmul.bf16.gmra.mxu0 %v6947
  %v7083 = vpop.f32.mrf.mxu0
  %v7084 = vadd.f32 %v7011, %v7083
  %v7085 = vpop.f32.mrf.mxu0
  %v7086 = vadd.f32 %v7013, %v7085
  %7087 = vmatmul.bf16.gmra.mxu0 %v6950
  %v7088 = vpop.f32.mrf.mxu0
  %v7089 = vadd.f32 %v7016, %v7088
  %v7090 = vpop.f32.mrf.mxu0
  %v7091 = vadd.f32 %v7018, %v7090
  %7092 = vmatmul.bf16.gmra.mxu0 %v6953
  %v7093 = vpop.f32.mrf.mxu0
  %v7094 = vadd.f32 %v7021, %v7093
  %v7095 = vpop.f32.mrf.mxu0
  %v7096 = vadd.f32 %v7023, %v7095
  %7097 = vmatmul.bf16.gmra.mxu0 %v6956
  %v7098 = vpop.f32.mrf.mxu0
  %v7099 = vadd.f32 %v7026, %v7098
  %v7100 = vpop.f32.mrf.mxu0
  %v7101 = vadd.f32 %v7028, %v7100
  %7102 = vmatmul.bf16.gmra.mxu0 %v6959
  %v7103 = vpop.f32.mrf.mxu0
  %v7104 = vadd.f32 %v7031, %v7103
  %v7105 = vpop.f32.mrf.mxu0
  %7106 = vdwg.mxu0
  %7107 = vmatpush.bf16.msra.mxu0 %v6897
  %7108 = vmatpush.bf16.msra.mxu0 %v6895
  %7109 = vmatpush.bf16.msra.mxu0 %v6893
  %7110 = vmatpush.bf16.msra.mxu0 %v6891
  %7111 = vmatpush.bf16.msra.mxu0 %v6889
  %7112 = vmatpush.bf16.msra.mxu0 %v6887
  %7113 = vmatpush.bf16.msra.mxu0 %v6885
  %7114 = vmatpush.bf16.msra.mxu0 %v6883
  %7115 = vmatmul.bf16.gmra.mxu0 %v6698
  %v7116 = vpop.f32.mrf.mxu0
  %v7117 = vadd.f32 %v6618, %v7116
  %v7118 = vpop.f32.mrf.mxu0
  %v7119 = vadd.f32 %v6620, %v7118
  %7120 = vmatmul.bf16.gmra.mxu0 %v6714
  %v7121 = vpop.f32.mrf.mxu0
  %v7122 = vadd.f32 %v6623, %v7121
  %v7123 = vpop.f32.mrf.mxu0
  %v7124 = vadd.f32 %v6625, %v7123
  %7125 = vmatmul.bf16.gmra.mxu0 %v6722
  %v7126 = vpop.f32.mrf.mxu0
  %v7127 = vadd.f32 %v6628, %v7126
  %v7128 = vpop.f32.mrf.mxu0
  %v7129 = vadd.f32 %v6630, %v7128
  %7130 = vmatmul.bf16.gmra.mxu0 %v6730
  %v7131 = vpop.f32.mrf.mxu0
  %v7132 = vadd.f32 %v6633, %v7131
  %v7133 = vpop.f32.mrf.mxu0
  %v7134 = vadd.f32 %v6635, %v7133
  %7135 = vmatmul.bf16.gmra.mxu0 %v6738
  %v7136 = vpop.f32.mrf.mxu0
  %v7137 = vadd.f32 %v6638, %v7136
  %v7138 = vpop.f32.mrf.mxu0
  %v7139 = vadd.f32 %v6640, %v7138
  %7140 = vmatmul.bf16.gmra.mxu0 %v6746
  %v7141 = vpop.f32.mrf.mxu0
  %v7142 = vadd.f32 %v6643, %v7141
  %v7143 = vpop.f32.mrf.mxu0
  %v7144 = vadd.f32 %v6645, %v7143
  %7145 = vmatmul.bf16.gmra.mxu0 %v6754
  %v7146 = vpop.f32.mrf.mxu0
  %v7147 = vadd.f32 %v6648, %v7146
  %v7148 = vpop.f32.mrf.mxu0
  %v7149 = vadd.f32 %v6650, %v7148
  %7150 = vmatmul.bf16.gmra.mxu0 %v6762
  %v7151 = vpop.f32.mrf.mxu0
  %v7152 = vadd.f32 %v6653, %v7151
  %v7153 = vpop.f32.mrf.mxu0
  %v7154 = vadd.f32 %v6655, %v7153
  %7155 = vmatmul.bf16.gmra.mxu0 %v6770
  %v7156 = vpop.f32.mrf.mxu0
  %v7157 = vadd.f32 %v6658, %v7156
  %v7158 = vpop.f32.mrf.mxu0
  %v7159 = vadd.f32 %v6660, %v7158
  %7160 = vmatmul.bf16.gmra.mxu0 %v6778
  %v7161 = vpop.f32.mrf.mxu0
  %v7162 = vadd.f32 %v6663, %v7161
  %v7163 = vpop.f32.mrf.mxu0
  %v7164 = vadd.f32 %v6665, %v7163
  %7165 = vmatmul.bf16.gmra.mxu0 %v6786
  %v7166 = vpop.f32.mrf.mxu0
  %v7167 = vadd.f32 %v6668, %v7166
  %v7168 = vpop.f32.mrf.mxu0
  %v7169 = vadd.f32 %v6670, %v7168
  %7170 = vmatmul.bf16.gmra.mxu0 %v6799
  %v7171 = vpop.f32.mrf.mxu0
  %v7172 = vadd.f32 %v6673, %v7171
  %v7173 = vpop.f32.mrf.mxu0
  %v7174 = vadd.f32 %v6675, %v7173
  %7175 = vmatmul.bf16.gmra.mxu0 %v6798
  %v7176 = vpop.f32.mrf.mxu0
  %v7177 = vadd.f32 %v6678, %v7176
  %v7178 = vpop.f32.mrf.mxu0
  %7179 = vdwg.mxu0
  %7180 = vmatpush.bf16.msra.mxu0 0
  %7181 = vmatpush.bf16.msra.mxu0 0
  %7182 = vmatpush.bf16.msra.mxu0 0
  %7183 = vmatpush.bf16.msra.mxu0 0
  %7184 = vmatpush.bf16.msra.mxu0 0
  %7185 = vmatpush.bf16.msra.mxu0 0
  %7186 = vmatpush.bf16.msra.mxu0 %v6901
  %7187 = vmatpush.bf16.msra.mxu0 %v6899
  %7188 = vmatmul.bf16.gmra.mxu0 %v6923
  %v7189 = vpop.f32.mrf.mxu0
  %v7190 = vadd.f32 %v7117, %v7189
  %v7191 = vpop.f32.mrf.mxu0
  %v7192 = vadd.f32 %v7119, %v7191
  %7193 = vmatmul.bf16.gmra.mxu0 %v6926
  %v7194 = vpop.f32.mrf.mxu0
  %v7195 = vadd.f32 %v7122, %v7194
  %v7196 = vpop.f32.mrf.mxu0
  %v7197 = vadd.f32 %v7124, %v7196
  %7198 = vmatmul.bf16.gmra.mxu0 %v6929
  %v7199 = vpop.f32.mrf.mxu0
  %v7200 = vadd.f32 %v7127, %v7199
  %v7201 = vpop.f32.mrf.mxu0
  %v7202 = vadd.f32 %v7129, %v7201
  %7203 = vmatmul.bf16.gmra.mxu0 %v6932
  %v7204 = vpop.f32.mrf.mxu0
  %v7205 = vadd.f32 %v7132, %v7204
  %v7206 = vpop.f32.mrf.mxu0
  %v7207 = vadd.f32 %v7134, %v7206
  %7208 = vmatmul.bf16.gmra.mxu0 %v6935
  %v7209 = vpop.f32.mrf.mxu0
  %v7210 = vadd.f32 %v7137, %v7209
  %v7211 = vpop.f32.mrf.mxu0
  %v7212 = vadd.f32 %v7139, %v7211
  %7213 = vmatmul.bf16.gmra.mxu0 %v6938
  %v7214 = vpop.f32.mrf.mxu0
  %v7215 = vadd.f32 %v7142, %v7214
  %v7216 = vpop.f32.mrf.mxu0
  %v7217 = vadd.f32 %v7144, %v7216
  %7218 = vmatmul.bf16.gmra.mxu0 %v6941
  %v7219 = vpop.f32.mrf.mxu0
  %v7220 = vadd.f32 %v7147, %v7219
  %v7221 = vpop.f32.mrf.mxu0
  %v7222 = vadd.f32 %v7149, %v7221
  %7223 = vmatmul.bf16.gmra.mxu0 %v6944
  %v7224 = vpop.f32.mrf.mxu0
  %v7225 = vadd.f32 %v7152, %v7224
  %v7226 = vpop.f32.mrf.mxu0
  %v7227 = vadd.f32 %v7154, %v7226
  %7228 = vmatmul.bf16.gmra.mxu0 %v6947
  %v7229 = vpop.f32.mrf.mxu0
  %v7230 = vadd.f32 %v7157, %v7229
  %v7231 = vpop.f32.mrf.mxu0
  %v7232 = vadd.f32 %v7159, %v7231
  %7233 = vmatmul.bf16.gmra.mxu0 %v6950
  %v7234 = vpop.f32.mrf.mxu0
  %v7235 = vadd.f32 %v7162, %v7234
  %v7236 = vpop.f32.mrf.mxu0
  %v7237 = vadd.f32 %v7164, %v7236
  %7238 = vmatmul.bf16.gmra.mxu0 %v6953
  %v7239 = vpop.f32.mrf.mxu0
  %v7240 = vadd.f32 %v7167, %v7239
  %v7241 = vpop.f32.mrf.mxu0
  %v7242 = vadd.f32 %v7169, %v7241
  %7243 = vmatmul.bf16.gmra.mxu0 %v6956
  %v7244 = vpop.f32.mrf.mxu0
  %v7245 = vadd.f32 %v7172, %v7244
  %v7246 = vpop.f32.mrf.mxu0
  %v7247 = vadd.f32 %v7174, %v7246
  %7248 = vmatmul.bf16.gmra.mxu0 %v6959
  %v7249 = vpop.f32.mrf.mxu0
  %v7250 = vadd.f32 %v7177, %v7249
  %v7251 = vpop.f32.mrf.mxu0
  %7252 = vdwg.mxu0
  %v7253 = vld [vmem:[#allocation2 + $0xe0] sm:$0x33]
  %s7254 = scalar_lea.vmem %s4, 1280
  %v7255 = vld [vmem:[%s7254] sm:$0xff]
  %v7256 = vld [vmem:[%s7254 + $0x8] sm:$0xff]
  %v7257 = vld [vmem:[%s7254 + $0x10] sm:$0xff]
  %v7258 = vld [vmem:[%s7254 + $0x18] sm:$0xff]
  %v7259 = vld [vmem:[%s7254 + $0x20] sm:$0xff]
  %v7260 = vld [vmem:[%s7254 + $0x28] sm:$0xff]
  %v7261 = vld [vmem:[%s7254 + $0x30] sm:$0xff]
  %v7262 = vld [vmem:[%s7254 + $0x38] sm:$0xff]
  %v7263 = vld [vmem:[%s7254 + $0x40] sm:$0xff]
  %v7264 = vld [vmem:[%s7254 + $0x48] sm:$0xff]
  %v7265 = vld [vmem:[%s7254 + $0x50] sm:$0xff]
  %v7266 = vld [vmem:[%s7254 + $0x58] sm:$0xff]
  %v7267 = vld [vmem:[%s7254 + $0x60] sm:$0xff]
  %v7268 = vld [vmem:[%s7254 + $0x68] sm:$0xff]
  %v7269 = vld [vmem:[%s7254 + $0x70] sm:$0xff]
  %v7270 = vld [vmem:[%s7254 + $0x78] sm:$0xff]
  %v7271 = vld [vmem:[%s7254 + $0x80] sm:$0xff]
  %v7272 = vld [vmem:[%s7254 + $0x88] sm:$0xff]
  %v7273 = vld [vmem:[%s7254 + $0x90] sm:$0xff]
  %v7274 = vld [vmem:[%s7254 + $0x98] sm:$0xff]
  %v7276 = vunpack.c.l.b16 %v7253
  %v7277 = vunpack.c.h.b16 %v7253
  %v7278 = vpack.c.b16 %v7276, %v3738
  %v7279 = vpack.c.b16 %v7277, %v3739
  %v7281 = vshrl.u32 %v5600, 16
  %v7283 = vrot.slane %v7281, 3
  %v7284 = vshll.u32 %v5600, 16
  %v7286 = vrot.slane %v7284, 4
  %v7287 = vor.u32 %v7283, %v7286
  %v7288 = vrot.slane %v3778, 3
  %v7289 = vrot.slane %v3781, 4
  %v7290 = vor.u32 %v7288, %v7289
  %v7291 = vsel %vm2254, %v7287, %v7290
  %v7293 = vshrl.u32 %v5601, 16
  %v7295 = vrot.slane %v7293, 3
  %v7296 = vshll.u32 %v5601, 16
  %v7298 = vrot.slane %v7296, 4
  %v7299 = vor.u32 %v7295, %v7298
  %v7300 = vrot.slane %v3795, 3
  %v7301 = vrot.slane %v3798, 4
  %v7302 = vor.u32 %v7300, %v7301
  %v7303 = vsel %vm2254, %v7299, %v7302
  %v7304 = vrot.slane %v3804, 3
  %v7305 = vrot.slane %v3807, 4
  %v7306 = vor.u32 %v7304, %v7305
  %v7307 = vsel %vm2254, %v7290, %v7306
  %v7308 = vrot.slane %v3813, 3
  %v7309 = vrot.slane %v3816, 4
  %v7310 = vor.u32 %v7308, %v7309
  %v7311 = vsel %vm2254, %v7302, %v7310
  %v7312 = vrot.slane %v3822, 3
  %v7313 = vrot.slane %v3825, 4
  %v7314 = vor.u32 %v7312, %v7313
  %v7315 = vsel %vm2254, %v7306, %v7314
  %v7316 = vrot.slane %v3831, 3
  %v7317 = vrot.slane %v3834, 4
  %v7318 = vor.u32 %v7316, %v7317
  %v7319 = vsel %vm2254, %v7310, %v7318
  %v7320 = vrot.slane %v3840, 3
  %v7321 = vrot.slane %v3843, 4
  %v7322 = vor.u32 %v7320, %v7321
  %v7323 = vsel %vm2254, %v7314, %v7322
  %v7324 = vrot.slane %v3849, 3
  %v7325 = vrot.slane %v3852, 4
  %v7326 = vor.u32 %v7324, %v7325
  %v7327 = vsel %vm2254, %v7318, %v7326
  %v7328 = vrot.slane %v3858, 3
  %v7329 = vrot.slane %v3861, 4
  %v7330 = vor.u32 %v7328, %v7329
  %v7331 = vsel %vm2254, %v7322, %v7330
  %v7332 = vrot.slane %v3867, 3
  %v7333 = vrot.slane %v3870, 4
  %v7334 = vor.u32 %v7332, %v7333
  %v7335 = vsel %vm2254, %v7326, %v7334
  %v7336 = vrot.slane %v3876, 3
  %v7337 = vrot.slane %v3879, 4
  %v7338 = vor.u32 %v7336, %v7337
  %v7339 = vsel %vm2254, %v7330, %v7338
  %v7340 = vrot.slane %v3885, 3
  %v7341 = vrot.slane %v3888, 4
  %v7342 = vor.u32 %v7340, %v7341
  %v7343 = vsel %vm2254, %v7334, %v7342
  %v7344 = vrot.slane %v3894, 3
  %v7345 = vrot.slane %v3897, 4
  %v7346 = vor.u32 %v7344, %v7345
  %v7347 = vsel %vm2254, %v7338, %v7346
  %v7348 = vrot.slane %v3903, 3
  %v7349 = vrot.slane %v3906, 4
  %v7350 = vor.u32 %v7348, %v7349
  %v7351 = vsel %vm2254, %v7342, %v7350
  %v7352 = vrot.slane %v3912, 3
  %v7353 = vrot.slane %v3915, 4
  %v7354 = vor.u32 %v7352, %v7353
  %v7355 = vsel %vm2254, %v7346, %v7354
  %v7356 = vrot.slane %v3921, 3
  %v7357 = vrot.slane %v3924, 4
  %v7358 = vor.u32 %v7356, %v7357
  %v7359 = vsel %vm2254, %v7350, %v7358
  %v7360 = vrot.slane %v3930, 3
  %v7361 = vrot.slane %v3933, 4
  %v7362 = vor.u32 %v7360, %v7361
  %v7363 = vsel %vm2254, %v7354, %v7362
  %v7364 = vrot.slane %v3939, 3
  %v7365 = vrot.slane %v3942, 4
  %v7366 = vor.u32 %v7364, %v7365
  %v7367 = vsel %vm2254, %v7358, %v7366
  %v7368 = vrot.slane %v3948, 3
  %v7369 = vrot.slane %v3951, 4
  %v7370 = vor.u32 %v7368, %v7369
  %v7371 = vsel %vm2254, %v7362, %v7370
  %v7372 = vrot.slane %v3957, 3
  %v7373 = vrot.slane %v3960, 4
  %v7374 = vor.u32 %v7372, %v7373
  %v7375 = vsel %vm2254, %v7366, %v7374
  %v7376 = vrot.slane %v3966, 3
  %v7377 = vrot.slane %v3969, 4
  %v7378 = vor.u32 %v7376, %v7377
  %v7379 = vsel %vm2254, %v7370, %v7378
  %v7380 = vrot.slane %v3975, 3
  %v7381 = vrot.slane %v3978, 4
  %v7382 = vor.u32 %v7380, %v7381
  %v7383 = vsel %vm2254, %v7374, %v7382
  %v7385 = vshrl.u32 %v7278, 16
  %v7387 = vrot.slane %v7385, 3
  %v7388 = vshll.u32 %v7278, 16
  %v7390 = vrot.slane %v7388, 4
  %v7391 = vor.u32 %v7387, %v7390
  %v7392 = vsel %vm2254, %v7378, %v7391
  %v7394 = vshrl.u32 %v7279, 16
  %v7396 = vrot.slane %v7394, 3
  %v7397 = vshll.u32 %v7279, 16
  %v7399 = vrot.slane %v7397, 4
  %v7400 = vor.u32 %v7396, %v7399
  %v7401 = vsel %vm2254, %v7382, %v7400
  %v7435 = vunpack.c.l.b16 %v7255
  %v7436 = vunpack.c.h.b16 %v7255
  %v7437 = vunpack.c.l.b16 %v7256
  %v7438 = vunpack.c.h.b16 %v7256
  %v7439 = vunpack.c.l.b16 %v7257
  %v7440 = vunpack.c.h.b16 %v7257
  %v7441 = vunpack.c.l.b16 %v7258
  %v7442 = vunpack.c.h.b16 %v7258
  %v7443 = vunpack.c.l.b16 %v7259
  %v7444 = vunpack.c.h.b16 %v7259
  %v7445 = vunpack.c.l.b16 %v7260
  %v7446 = vunpack.c.h.b16 %v7260
  %v7447 = vunpack.c.l.b16 %v7261
  %v7448 = vunpack.c.h.b16 %v7261
  %v7449 = vunpack.c.l.b16 %v7262
  %v7450 = vunpack.c.h.b16 %v7262
  %v7451 = vunpack.c.l.b16 %v7263
  %v7452 = vunpack.c.h.b16 %v7263
  %v7453 = vunpack.c.l.b16 %v7264
  %v7454 = vunpack.c.h.b16 %v7264
  %v7455 = vunpack.c.l.b16 %v7265
  %v7456 = vunpack.c.h.b16 %v7265
  %v7457 = vunpack.c.l.b16 %v7266
  %v7458 = vunpack.c.h.b16 %v7266
  %v7459 = vunpack.c.l.b16 %v7267
  %v7460 = vunpack.c.h.b16 %v7267
  %v7461 = vunpack.c.l.b16 %v7268
  %v7462 = vunpack.c.h.b16 %v7268
  %v7463 = vunpack.c.l.b16 %v7269
  %v7464 = vunpack.c.h.b16 %v7269
  %v7465 = vunpack.c.l.b16 %v7270
  %v7466 = vunpack.c.h.b16 %v7270
  %v7467 = vunpack.c.l.b16 %v7271
  %v7468 = vunpack.c.h.b16 %v7271
  %v7469 = vunpack.c.l.b16 %v7272
  %v7470 = vunpack.c.h.b16 %v7272
  %v7471 = vunpack.c.l.b16 %v7273
  %v7472 = vunpack.c.h.b16 %v7273
  %v7473 = vunpack.c.l.b16 %v7274
  %v7474 = vunpack.c.h.b16 %v7274
  %v7475 = vpack.c.b16 %v7437, %v7435
  %v7476 = vpack.c.b16 %v7438, %v7436
  %v7477 = vpack.c.b16 %v7441, %v7439
  %v7478 = vpack.c.b16 %v7442, %v7440
  %v7479 = vpack.c.b16 %v7445, %v7443
  %v7480 = vpack.c.b16 %v7446, %v7444
  %v7481 = vpack.c.b16 %v7449, %v7447
  %v7482 = vpack.c.b16 %v7450, %v7448
  %v7483 = vpack.c.b16 %v7453, %v7451
  %v7484 = vpack.c.b16 %v7454, %v7452
  %v7485 = vpack.c.b16 %v7457, %v7455
  %v7486 = vpack.c.b16 %v7458, %v7456
  %v7487 = vpack.c.b16 %v7461, %v7459
  %v7488 = vpack.c.b16 %v7462, %v7460
  %v7489 = vpack.c.b16 %v7465, %v7463
  %v7490 = vpack.c.b16 %v7466, %v7464
  %v7491 = vpack.c.b16 %v7469, %v7467
  %v7492 = vpack.c.b16 %v7470, %v7468
  %v7493 = vpack.c.b16 %v7473, %v7471
  %v7494 = vpack.c.b16 %v7474, %v7472
  %v7516 = vsel %vm255, %v7303, 0
  %v7519 = vsel %vm255, %v7311, 0
  %v7522 = vsel %vm255, %v7319, 0
  %v7525 = vsel %vm255, %v7327, 0
  %v7528 = vsel %vm255, %v7335, 0
  %v7531 = vsel %vm255, %v7343, 0
  %v7534 = vsel %vm255, %v7351, 0
  %v7537 = vsel %vm255, %v7359, 0
  %v7540 = vsel %vm255, %v7367, 0
  %v7543 = vsel %vm255, %v7375, 0
  %v7546 = vsel %vm255, %v7383, 0
  %v7549 = vsel %vm255, %v7401, 0
  %v7552 = vsel %vm255, %v7400, 0
  %7554 = vmatpush.bf16.msra.mxu0 %v7489
  %7555 = vmatpush.bf16.msra.mxu0 %v7487
  %7556 = vmatpush.bf16.msra.mxu0 %v7485
  %7557 = vmatpush.bf16.msra.mxu0 %v7483
  %7558 = vmatpush.bf16.msra.mxu0 %v7481
  %7559 = vmatpush.bf16.msra.mxu0 %v7479
  %7560 = vmatpush.bf16.msra.mxu0 %v7477
  %7561 = vmatpush.bf16.msra.mxu0 %v7475
  %7562 = vmatmul.bf16.gmra.mxu0 %v7291
  %v7563 = vpop.f32.mrf.mxu0
  %v7564 = vadd.f32 0.0, %v7563
  %v7565 = vpop.f32.mrf.mxu0
  %v7566 = vadd.f32 0.0, %v7565
  %7567 = vmatmul.bf16.gmra.mxu0 %v7307
  %v7568 = vpop.f32.mrf.mxu0
  %v7569 = vadd.f32 0.0, %v7568
  %v7570 = vpop.f32.mrf.mxu0
  %v7571 = vadd.f32 0.0, %v7570
  %7572 = vmatmul.bf16.gmra.mxu0 %v7315
  %v7573 = vpop.f32.mrf.mxu0
  %v7574 = vadd.f32 0.0, %v7573
  %v7575 = vpop.f32.mrf.mxu0
  %v7576 = vadd.f32 0.0, %v7575
  %7577 = vmatmul.bf16.gmra.mxu0 %v7323
  %v7578 = vpop.f32.mrf.mxu0
  %v7579 = vadd.f32 0.0, %v7578
  %v7580 = vpop.f32.mrf.mxu0
  %v7581 = vadd.f32 0.0, %v7580
  %7582 = vmatmul.bf16.gmra.mxu0 %v7331
  %v7583 = vpop.f32.mrf.mxu0
  %v7584 = vadd.f32 0.0, %v7583
  %v7585 = vpop.f32.mrf.mxu0
  %v7586 = vadd.f32 0.0, %v7585
  %7587 = vmatmul.bf16.gmra.mxu0 %v7339
  %v7588 = vpop.f32.mrf.mxu0
  %v7589 = vadd.f32 0.0, %v7588
  %v7590 = vpop.f32.mrf.mxu0
  %v7591 = vadd.f32 0.0, %v7590
  %7592 = vmatmul.bf16.gmra.mxu0 %v7347
  %v7593 = vpop.f32.mrf.mxu0
  %v7594 = vadd.f32 0.0, %v7593
  %v7595 = vpop.f32.mrf.mxu0
  %v7596 = vadd.f32 0.0, %v7595
  %7597 = vmatmul.bf16.gmra.mxu0 %v7355
  %v7598 = vpop.f32.mrf.mxu0
  %v7599 = vadd.f32 0.0, %v7598
  %v7600 = vpop.f32.mrf.mxu0
  %v7601 = vadd.f32 0.0, %v7600
  %7602 = vmatmul.bf16.gmra.mxu0 %v7363
  %v7603 = vpop.f32.mrf.mxu0
  %v7604 = vadd.f32 0.0, %v7603
  %v7605 = vpop.f32.mrf.mxu0
  %v7606 = vadd.f32 0.0, %v7605
  %7607 = vmatmul.bf16.gmra.mxu0 %v7371
  %v7608 = vpop.f32.mrf.mxu0
  %v7609 = vadd.f32 0.0, %v7608
  %v7610 = vpop.f32.mrf.mxu0
  %v7611 = vadd.f32 0.0, %v7610
  %7612 = vmatmul.bf16.gmra.mxu0 %v7379
  %v7613 = vpop.f32.mrf.mxu0
  %v7614 = vadd.f32 0.0, %v7613
  %v7615 = vpop.f32.mrf.mxu0
  %v7616 = vadd.f32 0.0, %v7615
  %7617 = vmatmul.bf16.gmra.mxu0 %v7392
  %v7618 = vpop.f32.mrf.mxu0
  %v7619 = vadd.f32 0.0, %v7618
  %v7620 = vpop.f32.mrf.mxu0
  %v7621 = vadd.f32 0.0, %v7620
  %7622 = vmatmul.bf16.gmra.mxu0 %v7391
  %v7623 = vpop.f32.mrf.mxu0
  %v7624 = vadd.f32 0.0, %v7623
  %v7625 = vpop.f32.mrf.mxu0
  %7626 = vdwg.mxu0
  %7627 = vmatpush.bf16.msra.mxu0 0
  %7628 = vmatpush.bf16.msra.mxu0 0
  %7629 = vmatpush.bf16.msra.mxu0 0
  %7630 = vmatpush.bf16.msra.mxu0 0
  %7631 = vmatpush.bf16.msra.mxu0 0
  %7632 = vmatpush.bf16.msra.mxu0 0
  %7633 = vmatpush.bf16.msra.mxu0 %v7493
  %7634 = vmatpush.bf16.msra.mxu0 %v7491
  %7635 = vmatmul.bf16.gmra.mxu0 %v7516
  %v7636 = vpop.f32.mrf.mxu0
  %v7637 = vadd.f32 %v7564, %v7636
  %v7638 = vpop.f32.mrf.mxu0
  %v7639 = vadd.f32 %v7566, %v7638
  %7640 = vmatmul.bf16.gmra.mxu0 %v7519
  %v7641 = vpop.f32.mrf.mxu0
  %v7642 = vadd.f32 %v7569, %v7641
  %v7643 = vpop.f32.mrf.mxu0
  %v7644 = vadd.f32 %v7571, %v7643
  %7645 = vmatmul.bf16.gmra.mxu0 %v7522
  %v7646 = vpop.f32.mrf.mxu0
  %v7647 = vadd.f32 %v7574, %v7646
  %v7648 = vpop.f32.mrf.mxu0
  %v7649 = vadd.f32 %v7576, %v7648
  %7650 = vmatmul.bf16.gmra.mxu0 %v7525
  %v7651 = vpop.f32.mrf.mxu0
  %v7652 = vadd.f32 %v7579, %v7651
  %v7653 = vpop.f32.mrf.mxu0
  %v7654 = vadd.f32 %v7581, %v7653
  %7655 = vmatmul.bf16.gmra.mxu0 %v7528
  %v7656 = vpop.f32.mrf.mxu0
  %v7657 = vadd.f32 %v7584, %v7656
  %v7658 = vpop.f32.mrf.mxu0
  %v7659 = vadd.f32 %v7586, %v7658
  %7660 = vmatmul.bf16.gmra.mxu0 %v7531
  %v7661 = vpop.f32.mrf.mxu0
  %v7662 = vadd.f32 %v7589, %v7661
  %v7663 = vpop.f32.mrf.mxu0
  %v7664 = vadd.f32 %v7591, %v7663
  %7665 = vmatmul.bf16.gmra.mxu0 %v7534
  %v7666 = vpop.f32.mrf.mxu0
  %v7667 = vadd.f32 %v7594, %v7666
  %v7668 = vpop.f32.mrf.mxu0
  %v7669 = vadd.f32 %v7596, %v7668
  %7670 = vmatmul.bf16.gmra.mxu0 %v7537
  %v7671 = vpop.f32.mrf.mxu0
  %v7672 = vadd.f32 %v7599, %v7671
  %v7673 = vpop.f32.mrf.mxu0
  %v7674 = vadd.f32 %v7601, %v7673
  %7675 = vmatmul.bf16.gmra.mxu0 %v7540
  %v7676 = vpop.f32.mrf.mxu0
  %v7677 = vadd.f32 %v7604, %v7676
  %v7678 = vpop.f32.mrf.mxu0
  %v7679 = vadd.f32 %v7606, %v7678
  %7680 = vmatmul.bf16.gmra.mxu0 %v7543
  %v7681 = vpop.f32.mrf.mxu0
  %v7682 = vadd.f32 %v7609, %v7681
  %v7683 = vpop.f32.mrf.mxu0
  %v7684 = vadd.f32 %v7611, %v7683
  %7685 = vmatmul.bf16.gmra.mxu0 %v7546
  %v7686 = vpop.f32.mrf.mxu0
  %v7687 = vadd.f32 %v7614, %v7686
  %v7688 = vpop.f32.mrf.mxu0
  %v7689 = vadd.f32 %v7616, %v7688
  %7690 = vmatmul.bf16.gmra.mxu0 %v7549
  %v7691 = vpop.f32.mrf.mxu0
  %v7692 = vadd.f32 %v7619, %v7691
  %v7693 = vpop.f32.mrf.mxu0
  %v7694 = vadd.f32 %v7621, %v7693
  %7695 = vmatmul.bf16.gmra.mxu0 %v7552
  %v7696 = vpop.f32.mrf.mxu0
  %v7697 = vadd.f32 %v7624, %v7696
  %v7698 = vpop.f32.mrf.mxu0
  %7699 = vdwg.mxu0
  %7700 = vmatpush.bf16.msra.mxu0 %v7490
  %7701 = vmatpush.bf16.msra.mxu0 %v7488
  %7702 = vmatpush.bf16.msra.mxu0 %v7486
  %7703 = vmatpush.bf16.msra.mxu0 %v7484
  %7704 = vmatpush.bf16.msra.mxu0 %v7482
  %7705 = vmatpush.bf16.msra.mxu0 %v7480
  %7706 = vmatpush.bf16.msra.mxu0 %v7478
  %7707 = vmatpush.bf16.msra.mxu0 %v7476
  %7708 = vmatmul.bf16.gmra.mxu0 %v7291
  %v7709 = vpop.f32.mrf.mxu0
  %v7710 = vadd.f32 0.0, %v7709
  %v7711 = vpop.f32.mrf.mxu0
  %v7712 = vadd.f32 0.0, %v7711
  %7713 = vmatmul.bf16.gmra.mxu0 %v7307
  %v7714 = vpop.f32.mrf.mxu0
  %v7715 = vadd.f32 0.0, %v7714
  %v7716 = vpop.f32.mrf.mxu0
  %v7717 = vadd.f32 0.0, %v7716
  %7718 = vmatmul.bf16.gmra.mxu0 %v7315
  %v7719 = vpop.f32.mrf.mxu0
  %v7720 = vadd.f32 0.0, %v7719
  %v7721 = vpop.f32.mrf.mxu0
  %v7722 = vadd.f32 0.0, %v7721
  %7723 = vmatmul.bf16.gmra.mxu0 %v7323
  %v7724 = vpop.f32.mrf.mxu0
  %v7725 = vadd.f32 0.0, %v7724
  %v7726 = vpop.f32.mrf.mxu0
  %v7727 = vadd.f32 0.0, %v7726
  %7728 = vmatmul.bf16.gmra.mxu0 %v7331
  %v7729 = vpop.f32.mrf.mxu0
  %v7730 = vadd.f32 0.0, %v7729
  %v7731 = vpop.f32.mrf.mxu0
  %v7732 = vadd.f32 0.0, %v7731
  %7733 = vmatmul.bf16.gmra.mxu0 %v7339
  %v7734 = vpop.f32.mrf.mxu0
  %v7735 = vadd.f32 0.0, %v7734
  %v7736 = vpop.f32.mrf.mxu0
  %v7737 = vadd.f32 0.0, %v7736
  %7738 = vmatmul.bf16.gmra.mxu0 %v7347
  %v7739 = vpop.f32.mrf.mxu0
  %v7740 = vadd.f32 0.0, %v7739
  %v7741 = vpop.f32.mrf.mxu0
  %v7742 = vadd.f32 0.0, %v7741
  %7743 = vmatmul.bf16.gmra.mxu0 %v7355
  %v7744 = vpop.f32.mrf.mxu0
  %v7745 = vadd.f32 0.0, %v7744
  %v7746 = vpop.f32.mrf.mxu0
  %v7747 = vadd.f32 0.0, %v7746
  %7748 = vmatmul.bf16.gmra.mxu0 %v7363
  %v7749 = vpop.f32.mrf.mxu0
  %v7750 = vadd.f32 0.0, %v7749
  %v7751 = vpop.f32.mrf.mxu0
  %v7752 = vadd.f32 0.0, %v7751
  %7753 = vmatmul.bf16.gmra.mxu0 %v7371
  %v7754 = vpop.f32.mrf.mxu0
  %v7755 = vadd.f32 0.0, %v7754
  %v7756 = vpop.f32.mrf.mxu0
  %v7757 = vadd.f32 0.0, %v7756
  %7758 = vmatmul.bf16.gmra.mxu0 %v7379
  %v7759 = vpop.f32.mrf.mxu0
  %v7760 = vadd.f32 0.0, %v7759
  %v7761 = vpop.f32.mrf.mxu0
  %v7762 = vadd.f32 0.0, %v7761
  %7763 = vmatmul.bf16.gmra.mxu0 %v7392
  %v7764 = vpop.f32.mrf.mxu0
  %v7765 = vadd.f32 0.0, %v7764
  %v7766 = vpop.f32.mrf.mxu0
  %v7767 = vadd.f32 0.0, %v7766
  %7768 = vmatmul.bf16.gmra.mxu0 %v7391
  %v7769 = vpop.f32.mrf.mxu0
  %v7770 = vadd.f32 0.0, %v7769
  %v7771 = vpop.f32.mrf.mxu0
  %7772 = vdwg.mxu0
  %7773 = vmatpush.bf16.msra.mxu0 0
  %7774 = vmatpush.bf16.msra.mxu0 0
  %7775 = vmatpush.bf16.msra.mxu0 0
  %7776 = vmatpush.bf16.msra.mxu0 0
  %7777 = vmatpush.bf16.msra.mxu0 0
  %7778 = vmatpush.bf16.msra.mxu0 0
  %7779 = vmatpush.bf16.msra.mxu0 %v7494
  %7780 = vmatpush.bf16.msra.mxu0 %v7492
  %7781 = vmatmul.bf16.gmra.mxu0 %v7516
  %v7782 = vpop.f32.mrf.mxu0
  %v7783 = vadd.f32 %v7710, %v7782
  %v7784 = vpop.f32.mrf.mxu0
  %v7785 = vadd.f32 %v7712, %v7784
  %7786 = vmatmul.bf16.gmra.mxu0 %v7519
  %v7787 = vpop.f32.mrf.mxu0
  %v7788 = vadd.f32 %v7715, %v7787
  %v7789 = vpop.f32.mrf.mxu0
  %v7790 = vadd.f32 %v7717, %v7789
  %7791 = vmatmul.bf16.gmra.mxu0 %v7522
  %v7792 = vpop.f32.mrf.mxu0
  %v7793 = vadd.f32 %v7720, %v7792
  %v7794 = vpop.f32.mrf.mxu0
  %v7795 = vadd.f32 %v7722, %v7794
  %7796 = vmatmul.bf16.gmra.mxu0 %v7525
  %v7797 = vpop.f32.mrf.mxu0
  %v7798 = vadd.f32 %v7725, %v7797
  %v7799 = vpop.f32.mrf.mxu0
  %v7800 = vadd.f32 %v7727, %v7799
  %7801 = vmatmul.bf16.gmra.mxu0 %v7528
  %v7802 = vpop.f32.mrf.mxu0
  %v7803 = vadd.f32 %v7730, %v7802
  %v7804 = vpop.f32.mrf.mxu0
  %v7805 = vadd.f32 %v7732, %v7804
  %7806 = vmatmul.bf16.gmra.mxu0 %v7531
  %v7807 = vpop.f32.mrf.mxu0
  %v7808 = vadd.f32 %v7735, %v7807
  %v7809 = vpop.f32.mrf.mxu0
  %v7810 = vadd.f32 %v7737, %v7809
  %7811 = vmatmul.bf16.gmra.mxu0 %v7534
  %v7812 = vpop.f32.mrf.mxu0
  %v7813 = vadd.f32 %v7740, %v7812
  %v7814 = vpop.f32.mrf.mxu0
  %v7815 = vadd.f32 %v7742, %v7814
  %7816 = vmatmul.bf16.gmra.mxu0 %v7537
  %v7817 = vpop.f32.mrf.mxu0
  %v7818 = vadd.f32 %v7745, %v7817
  %v7819 = vpop.f32.mrf.mxu0
  %v7820 = vadd.f32 %v7747, %v7819
  %7821 = vmatmul.bf16.gmra.mxu0 %v7540
  %v7822 = vpop.f32.mrf.mxu0
  %v7823 = vadd.f32 %v7750, %v7822
  %v7824 = vpop.f32.mrf.mxu0
  %v7825 = vadd.f32 %v7752, %v7824
  %7826 = vmatmul.bf16.gmra.mxu0 %v7543
  %v7827 = vpop.f32.mrf.mxu0
  %v7828 = vadd.f32 %v7755, %v7827
  %v7829 = vpop.f32.mrf.mxu0
  %v7830 = vadd.f32 %v7757, %v7829
  %7831 = vmatmul.bf16.gmra.mxu0 %v7546
  %v7832 = vpop.f32.mrf.mxu0
  %v7833 = vadd.f32 %v7760, %v7832
  %v7834 = vpop.f32.mrf.mxu0
  %v7835 = vadd.f32 %v7762, %v7834
  %7836 = vmatmul.bf16.gmra.mxu0 %v7549
  %v7837 = vpop.f32.mrf.mxu0
  %v7838 = vadd.f32 %v7765, %v7837
  %v7839 = vpop.f32.mrf.mxu0
  %v7840 = vadd.f32 %v7767, %v7839
  %7841 = vmatmul.bf16.gmra.mxu0 %v7552
  %v7842 = vpop.f32.mrf.mxu0
  %v7843 = vadd.f32 %v7770, %v7842
  %v7844 = vpop.f32.mrf.mxu0
  %7845 = vdwg.mxu0
  %v7846 = vadd.f32 %v7044, %v7637
  %v7847 = vadd.f32 %v7190, %v7783
  %v7848 = vadd.f32 %v7046, %v7639
  %v7849 = vadd.f32 %v7192, %v7785
  %v7850 = vadd.f32 %v7049, %v7642
  %v7851 = vadd.f32 %v7195, %v7788
  %v7852 = vadd.f32 %v7051, %v7644
  %v7853 = vadd.f32 %v7197, %v7790
  %v7854 = vadd.f32 %v7054, %v7647
  %v7855 = vadd.f32 %v7200, %v7793
  %v7856 = vadd.f32 %v7056, %v7649
  %v7857 = vadd.f32 %v7202, %v7795
  %v7858 = vadd.f32 %v7059, %v7652
  %v7859 = vadd.f32 %v7205, %v7798
  %v7860 = vadd.f32 %v7061, %v7654
  %v7861 = vadd.f32 %v7207, %v7800
  %v7862 = vadd.f32 %v7064, %v7657
  %v7863 = vadd.f32 %v7210, %v7803
  %v7864 = vadd.f32 %v7066, %v7659
  %v7865 = vadd.f32 %v7212, %v7805
  %v7866 = vadd.f32 %v7069, %v7662
  %v7867 = vadd.f32 %v7215, %v7808
  %v7868 = vadd.f32 %v7071, %v7664
  %v7869 = vadd.f32 %v7217, %v7810
  %v7870 = vadd.f32 %v7074, %v7667
  %v7871 = vadd.f32 %v7220, %v7813
  %v7872 = vadd.f32 %v7076, %v7669
  %v7873 = vadd.f32 %v7222, %v7815
  %v7874 = vadd.f32 %v7079, %v7672
  %v7875 = vadd.f32 %v7225, %v7818
  %v7876 = vadd.f32 %v7081, %v7674
  %v7877 = vadd.f32 %v7227, %v7820
  %v7878 = vadd.f32 %v7084, %v7677
  %v7879 = vadd.f32 %v7230, %v7823
  %v7880 = vadd.f32 %v7086, %v7679
  %v7881 = vadd.f32 %v7232, %v7825
  %v7882 = vadd.f32 %v7089, %v7682
  %v7883 = vadd.f32 %v7235, %v7828
  %v7884 = vadd.f32 %v7091, %v7684
  %v7885 = vadd.f32 %v7237, %v7830
  %v7886 = vadd.f32 %v7094, %v7687
  %v7887 = vadd.f32 %v7240, %v7833
  %v7888 = vadd.f32 %v7096, %v7689
  %v7889 = vadd.f32 %v7242, %v7835
  %v7890 = vadd.f32 %v7099, %v7692
  %v7891 = vadd.f32 %v7245, %v7838
  %v7892 = vadd.f32 %v7101, %v7694
  %v7893 = vadd.f32 %v7247, %v7840
  %v7894 = vadd.f32 %v7104, %v7697
  %v7895 = vadd.f32 %v7250, %v7843
  %v7896 = vsel %vm2055, 1, 0
  %v7897 = vsel %vm2056, 1, 0
  %v7898 = vsel %vm2057, 1, 0
  %v7899 = vsel %vm2058, 1, 0
  %v7900 = vsel %vm2059, 1, 0
  %v7901 = vsel %vm2060, 1, 0
  %v7902 = vsel %vm2061, 1, 0
  %v7903 = vsel %vm2062, 1, 0
  %v7904 = vsel %vm2063, 1, 0
  %v7905 = vsel %vm2064, 1, 0
  %v7906 = vsel %vm2065, 1, 0
  %v7907 = vsel %vm2066, 1, 0
  %v7908 = vsel %vm2067, 1, 0
  %v7909 = vsel %vm2068, 1, 0
  %v7910 = vsel %vm2069, 1, 0
  %v7911 = vsel %vm2070, 1, 0
  %v7912 = vsel %vm2071, 1, 0
  %v7913 = vsel %vm2072, 1, 0
  %v7914 = vsel %vm2073, 1, 0
  %v7915 = vsel %vm2074, 1, 0
  %v7916 = vsel %vm2075, 1, 0
  %v7917 = vsel %vm2076, 1, 0
  %v7918 = vsel %vm2077, 1, 0
  %v7919 = vsel %vm2078, 1, 0
  %v7920 = vsel %vm2079, 1, 0
  %vm7921 = vcmp.eq.s32.totalorder %v7896, 1
  %vm7922 = vcmp.eq.s32.totalorder %v7897, 1
  %vm7923 = vcmp.eq.s32.totalorder %v7898, 1
  %vm7924 = vcmp.eq.s32.totalorder %v7899, 1
  %vm7925 = vcmp.eq.s32.totalorder %v7900, 1
  %vm7926 = vcmp.eq.s32.totalorder %v7901, 1
  %vm7927 = vcmp.eq.s32.totalorder %v7902, 1
  %vm7928 = vcmp.eq.s32.totalorder %v7903, 1
  %vm7929 = vcmp.eq.s32.totalorder %v7904, 1
  %vm7930 = vcmp.eq.s32.totalorder %v7905, 1
  %vm7931 = vcmp.eq.s32.totalorder %v7906, 1
  %vm7932 = vcmp.eq.s32.totalorder %v7907, 1
  %vm7933 = vcmp.eq.s32.totalorder %v7908, 1
  %vm7934 = vcmp.eq.s32.totalorder %v7909, 1
  %vm7935 = vcmp.eq.s32.totalorder %v7910, 1
  %vm7936 = vcmp.eq.s32.totalorder %v7911, 1
  %vm7937 = vcmp.eq.s32.totalorder %v7912, 1
  %vm7938 = vcmp.eq.s32.totalorder %v7913, 1
  %vm7939 = vcmp.eq.s32.totalorder %v7914, 1
  %vm7940 = vcmp.eq.s32.totalorder %v7915, 1
  %vm7941 = vcmp.eq.s32.totalorder %v7916, 1
  %vm7942 = vcmp.eq.s32.totalorder %v7917, 1
  %vm7943 = vcmp.eq.s32.totalorder %v7918, 1
  %vm7944 = vcmp.eq.s32.totalorder %v7919, 1
  %vm7945 = vcmp.eq.s32.totalorder %v7920, 1
  %v7946 = vsel %vm7921, %v7846, 0.0
  %v7947 = vsel %vm7921, %v7847, 0.0
  %v7948 = vsel %vm7922, %v7848, 0.0
  %v7949 = vsel %vm7922, %v7849, 0.0
  %v7950 = vsel %vm7923, %v7850, 0.0
  %v7951 = vsel %vm7923, %v7851, 0.0
  %v7952 = vsel %vm7924, %v7852, 0.0
  %v7953 = vsel %vm7924, %v7853, 0.0
  %v7954 = vsel %vm7925, %v7854, 0.0
  %v7955 = vsel %vm7925, %v7855, 0.0
  %v7956 = vsel %vm7926, %v7856, 0.0
  %v7957 = vsel %vm7926, %v7857, 0.0
  %v7958 = vsel %vm7927, %v7858, 0.0
  %v7959 = vsel %vm7927, %v7859, 0.0
  %v7960 = vsel %vm7928, %v7860, 0.0
  %v7961 = vsel %vm7928, %v7861, 0.0
  %v7962 = vsel %vm7929, %v7862, 0.0
  %v7963 = vsel %vm7929, %v7863, 0.0
  %v7964 = vsel %vm7930, %v7864, 0.0
  %v7965 = vsel %vm7930, %v7865, 0.0
  %v7966 = vsel %vm7931, %v7866, 0.0
  %v7967 = vsel %vm7931, %v7867, 0.0
  %v7968 = vsel %vm7932, %v7868, 0.0
  %v7969 = vsel %vm7932, %v7869, 0.0
  %v7970 = vsel %vm7933, %v7870, 0.0
  %v7971 = vsel %vm7933, %v7871, 0.0
  %v7972 = vsel %vm7934, %v7872, 0.0
  %v7973 = vsel %vm7934, %v7873, 0.0
  %v7974 = vsel %vm7935, %v7874, 0.0
  %v7975 = vsel %vm7935, %v7875, 0.0
  %v7976 = vsel %vm7936, %v7876, 0.0
  %v7977 = vsel %vm7936, %v7877, 0.0
  %v7978 = vsel %vm7937, %v7878, 0.0
  %v7979 = vsel %vm7937, %v7879, 0.0
  %v7980 = vsel %vm7938, %v7880, 0.0
  %v7981 = vsel %vm7938, %v7881, 0.0
  %v7982 = vsel %vm7939, %v7882, 0.0
  %v7983 = vsel %vm7939, %v7883, 0.0
  %v7984 = vsel %vm7940, %v7884, 0.0
  %v7985 = vsel %vm7940, %v7885, 0.0
  %v7986 = vsel %vm7941, %v7886, 0.0
  %v7987 = vsel %vm7941, %v7887, 0.0
  %v7988 = vsel %vm7942, %v7888, 0.0
  %v7989 = vsel %vm7942, %v7889, 0.0
  %v7990 = vsel %vm7943, %v7890, 0.0
  %v7991 = vsel %vm7943, %v7891, 0.0
  %v7992 = vsel %vm7944, %v7892, 0.0
  %v7993 = vsel %vm7944, %v7893, 0.0
  %v7994 = vsel %vm7945, %v7894, 0.0
  %v7995 = vsel %vm7945, %v7895, 0.0
  %v7996 = vadd.f32 %v6147, %v7946
  %v7997 = vadd.f32 %v6148, %v7947
  %v7998 = vadd.f32 %v6149, %v7948
  %v7999 = vadd.f32 %v6150, %v7949
  %v8000 = vadd.f32 %v6151, %v7950
  %v8001 = vadd.f32 %v6152, %v7951
  %v8002 = vadd.f32 %v6153, %v7952
  %v8003 = vadd.f32 %v6154, %v7953
  %v8004 = vadd.f32 %v6155, %v7954
  %v8005 = vadd.f32 %v6156, %v7955
  %v8006 = vadd.f32 %v6157, %v7956
  %v8007 = vadd.f32 %v6158, %v7957
  %v8008 = vadd.f32 %v6159, %v7958
  %v8009 = vadd.f32 %v6160, %v7959
  %v8010 = vadd.f32 %v6161, %v7960
  %v8011 = vadd.f32 %v6162, %v7961
  %v8012 = vadd.f32 %v6163, %v7962
  %v8013 = vadd.f32 %v6164, %v7963
  %v8014 = vadd.f32 %v6165, %v7964
  %v8015 = vadd.f32 %v6166, %v7965
  %v8016 = vadd.f32 %v6167, %v7966
  %v8017 = vadd.f32 %v6168, %v7967
  %v8018 = vadd.f32 %v6169, %v7968
  %v8019 = vadd.f32 %v6170, %v7969
  %v8020 = vadd.f32 %v6171, %v7970
  %v8021 = vadd.f32 %v6172, %v7971
  %v8022 = vadd.f32 %v6173, %v7972
  %v8023 = vadd.f32 %v6174, %v7973
  %v8024 = vadd.f32 %v6175, %v7974
  %v8025 = vadd.f32 %v6176, %v7975
  %v8026 = vadd.f32 %v6177, %v7976
  %v8027 = vadd.f32 %v6178, %v7977
  %v8028 = vadd.f32 %v6179, %v7978
  %v8029 = vadd.f32 %v6180, %v7979
  %v8030 = vadd.f32 %v6181, %v7980
  %v8031 = vadd.f32 %v6182, %v7981
  %v8032 = vadd.f32 %v6183, %v7982
  %v8033 = vadd.f32 %v6184, %v7983
  %v8034 = vadd.f32 %v6185, %v7984
  %v8035 = vadd.f32 %v6186, %v7985
  %v8036 = vadd.f32 %v6187, %v7986
  %v8037 = vadd.f32 %v6188, %v7987
  %v8038 = vadd.f32 %v6189, %v7988
  %v8039 = vadd.f32 %v6190, %v7989
  %v8040 = vadd.f32 %v6191, %v7990
  %v8041 = vadd.f32 %v6192, %v7991
  %v8042 = vadd.f32 %v6193, %v7992
  %v8043 = vadd.f32 %v6194, %v7993
  %v8044 = vadd.f32 %v6195, %v7994
  %v8045 = vadd.f32 %v6196, %v7995
  %v8046 = vadd.f32 %v7996, %v7998
  %v8047 = vadd.f32 %v8046, %v8000
  %v8048 = vadd.f32 %v8047, %v8002
  %v8049 = vadd.f32 %v8048, %v8004
  %v8050 = vadd.f32 %v8049, %v8006
  %v8051 = vadd.f32 %v8050, %v8008
  %v8052 = vadd.f32 %v8051, %v8010
  %v8053 = vadd.f32 %v8052, %v8012
  %v8054 = vadd.f32 %v8053, %v8014
  %v8055 = vadd.f32 %v8054, %v8016
  %v8056 = vadd.f32 %v8055, %v8018
  %v8057 = vadd.f32 %v8056, %v8020
  %v8058 = vadd.f32 %v8057, %v8022
  %v8059 = vadd.f32 %v8058, %v8024
  %v8060 = vadd.f32 %v8059, %v8026
  %v8061 = vadd.f32 %v8060, %v8028
  %v8062 = vadd.f32 %v8061, %v8030
  %v8063 = vadd.f32 %v8062, %v8032
  %v8064 = vadd.f32 %v8063, %v8034
  %v8065 = vadd.f32 %v8064, %v8036
  %v8066 = vadd.f32 %v8065, %v8038
  %v8067 = vadd.f32 %v8066, %v8040
  %v8068 = vadd.f32 %v8067, %v8042
  %v8069 = vsel %vm610, %v8044, 0.0
  %v8070 = vadd.f32 %v8068, %v8069
  %v8071 = vrot.slane %v8070, 4
  %v8072 = vadd.f32 %v8070, %v8071
  %v8073 = vrot.slane %v8072, 2
  %v8074 = vadd.f32 %v8072, %v8073
  %v8075 = vrot.slane %v8074, 1
  %v8076 = vadd.f32 %v8074, %v8075
  %v8077 = vsel %vm255, %v7997, 0.0
  %v8078 = vsel %vm255, %v7999, 0.0
  %v8079 = vadd.f32 %v8077, %v8078
  %v8080 = vsel %vm255, %v8001, 0.0
  %v8081 = vadd.f32 %v8079, %v8080
  %v8082 = vsel %vm255, %v8003, 0.0
  %v8083 = vadd.f32 %v8081, %v8082
  %v8084 = vsel %vm255, %v8005, 0.0
  %v8085 = vadd.f32 %v8083, %v8084
  %v8086 = vsel %vm255, %v8007, 0.0
  %v8087 = vadd.f32 %v8085, %v8086
  %v8088 = vsel %vm255, %v8009, 0.0
  %v8089 = vadd.f32 %v8087, %v8088
  %v8090 = vsel %vm255, %v8011, 0.0
  %v8091 = vadd.f32 %v8089, %v8090
  %v8092 = vsel %vm255, %v8013, 0.0
  %v8093 = vadd.f32 %v8091, %v8092
  %v8094 = vsel %vm255, %v8015, 0.0
  %v8095 = vadd.f32 %v8093, %v8094
  %v8096 = vsel %vm255, %v8017, 0.0
  %v8097 = vadd.f32 %v8095, %v8096
  %v8098 = vsel %vm255, %v8019, 0.0
  %v8099 = vadd.f32 %v8097, %v8098
  %v8100 = vsel %vm255, %v8021, 0.0
  %v8101 = vadd.f32 %v8099, %v8100
  %v8102 = vsel %vm255, %v8023, 0.0
  %v8103 = vadd.f32 %v8101, %v8102
  %v8104 = vsel %vm255, %v8025, 0.0
  %v8105 = vadd.f32 %v8103, %v8104
  %v8106 = vsel %vm255, %v8027, 0.0
  %v8107 = vadd.f32 %v8105, %v8106
  %v8108 = vsel %vm255, %v8029, 0.0
  %v8109 = vadd.f32 %v8107, %v8108
  %v8110 = vsel %vm255, %v8031, 0.0
  %v8111 = vadd.f32 %v8109, %v8110
  %v8112 = vsel %vm255, %v8033, 0.0
  %v8113 = vadd.f32 %v8111, %v8112
  %v8114 = vsel %vm255, %v8035, 0.0
  %v8115 = vadd.f32 %v8113, %v8114
  %v8116 = vsel %vm255, %v8037, 0.0
  %v8117 = vadd.f32 %v8115, %v8116
  %v8118 = vsel %vm255, %v8039, 0.0
  %v8119 = vadd.f32 %v8117, %v8118
  %v8120 = vsel %vm255, %v8041, 0.0
  %v8121 = vadd.f32 %v8119, %v8120
  %v8122 = vsel %vm255, %v8043, 0.0
  %v8123 = vadd.f32 %v8121, %v8122
  %v8124 = vsel %vm666, %v8045, 0.0
  %v8125 = vadd.f32 %v8123, %v8124
  %v8126 = vrot.slane %v8125, 4
  %v8127 = vadd.f32 %v8125, %v8126
  %v8128 = vrot.slane %v8127, 2
  %v8129 = vadd.f32 %v8127, %v8128
  %v8130 = vrot.slane %v8129, 1
  %v8131 = vadd.f32 %v8129, %v8130
  %v8132 = vmul.f32 %v7996, %v7996
  %v8133 = vmul.f32 %v7997, %v7997
  %v8134 = vmul.f32 %v7998, %v7998
  %v8135 = vmul.f32 %v7999, %v7999
  %v8136 = vmul.f32 %v8000, %v8000
  %v8137 = vmul.f32 %v8001, %v8001
  %v8138 = vmul.f32 %v8002, %v8002
  %v8139 = vmul.f32 %v8003, %v8003
  %v8140 = vmul.f32 %v8004, %v8004
  %v8141 = vmul.f32 %v8005, %v8005
  %v8142 = vmul.f32 %v8006, %v8006
  %v8143 = vmul.f32 %v8007, %v8007
  %v8144 = vmul.f32 %v8008, %v8008
  %v8145 = vmul.f32 %v8009, %v8009
  %v8146 = vmul.f32 %v8010, %v8010
  %v8147 = vmul.f32 %v8011, %v8011
  %v8148 = vmul.f32 %v8012, %v8012
  %v8149 = vmul.f32 %v8013, %v8013
  %v8150 = vmul.f32 %v8014, %v8014
  %v8151 = vmul.f32 %v8015, %v8015
  %v8152 = vmul.f32 %v8016, %v8016
  %v8153 = vmul.f32 %v8017, %v8017
  %v8154 = vmul.f32 %v8018, %v8018
  %v8155 = vmul.f32 %v8019, %v8019
  %v8156 = vmul.f32 %v8020, %v8020
  %v8157 = vmul.f32 %v8021, %v8021
  %v8158 = vmul.f32 %v8022, %v8022
  %v8159 = vmul.f32 %v8023, %v8023
  %v8160 = vmul.f32 %v8024, %v8024
  %v8161 = vmul.f32 %v8025, %v8025
  %v8162 = vmul.f32 %v8026, %v8026
  %v8163 = vmul.f32 %v8027, %v8027
  %v8164 = vmul.f32 %v8028, %v8028
  %v8165 = vmul.f32 %v8029, %v8029
  %v8166 = vmul.f32 %v8030, %v8030
  %v8167 = vmul.f32 %v8031, %v8031
  %v8168 = vmul.f32 %v8032, %v8032
  %v8169 = vmul.f32 %v8033, %v8033
  %v8170 = vmul.f32 %v8034, %v8034
  %v8171 = vmul.f32 %v8035, %v8035
  %v8172 = vmul.f32 %v8036, %v8036
  %v8173 = vmul.f32 %v8037, %v8037
  %v8174 = vmul.f32 %v8038, %v8038
  %v8175 = vmul.f32 %v8039, %v8039
  %v8176 = vmul.f32 %v8040, %v8040
  %v8177 = vmul.f32 %v8041, %v8041
  %v8178 = vmul.f32 %v8042, %v8042
  %v8179 = vmul.f32 %v8043, %v8043
  %v8180 = vmul.f32 %v8044, %v8044
  %v8181 = vmul.f32 %v8045, %v8045
  %v8182 = vadd.f32 %v8132, %v8134
  %v8183 = vadd.f32 %v8182, %v8136
  %v8184 = vadd.f32 %v8183, %v8138
  %v8185 = vadd.f32 %v8184, %v8140
  %v8186 = vadd.f32 %v8185, %v8142
  %v8187 = vadd.f32 %v8186, %v8144
  %v8188 = vadd.f32 %v8187, %v8146
  %v8189 = vadd.f32 %v8188, %v8148
  %v8190 = vadd.f32 %v8189, %v8150
  %v8191 = vadd.f32 %v8190, %v8152
  %v8192 = vadd.f32 %v8191, %v8154
  %v8193 = vadd.f32 %v8192, %v8156
  %v8194 = vadd.f32 %v8193, %v8158
  %v8195 = vadd.f32 %v8194, %v8160
  %v8196 = vadd.f32 %v8195, %v8162
  %v8197 = vadd.f32 %v8196, %v8164
  %v8198 = vadd.f32 %v8197, %v8166
  %v8199 = vadd.f32 %v8198, %v8168
  %v8200 = vadd.f32 %v8199, %v8170
  %v8201 = vadd.f32 %v8200, %v8172
  %v8202 = vadd.f32 %v8201, %v8174
  %v8203 = vadd.f32 %v8202, %v8176
  %v8204 = vadd.f32 %v8203, %v8178
  %v8205 = vsel %vm610, %v8180, 0.0
  %v8206 = vadd.f32 %v8204, %v8205
  %v8207 = vrot.slane %v8206, 4
  %v8208 = vadd.f32 %v8206, %v8207
  %v8209 = vrot.slane %v8208, 2
  %v8210 = vadd.f32 %v8208, %v8209
  %v8211 = vrot.slane %v8210, 1
  %v8212 = vadd.f32 %v8210, %v8211
  %v8213 = vsel %vm255, %v8133, 0.0
  %v8214 = vsel %vm255, %v8135, 0.0
  %v8215 = vadd.f32 %v8213, %v8214
  %v8216 = vsel %vm255, %v8137, 0.0
  %v8217 = vadd.f32 %v8215, %v8216
  %v8218 = vsel %vm255, %v8139, 0.0
  %v8219 = vadd.f32 %v8217, %v8218
  %v8220 = vsel %vm255, %v8141, 0.0
  %v8221 = vadd.f32 %v8219, %v8220
  %v8222 = vsel %vm255, %v8143, 0.0
  %v8223 = vadd.f32 %v8221, %v8222
  %v8224 = vsel %vm255, %v8145, 0.0
  %v8225 = vadd.f32 %v8223, %v8224
  %v8226 = vsel %vm255, %v8147, 0.0
  %v8227 = vadd.f32 %v8225, %v8226
  %v8228 = vsel %vm255, %v8149, 0.0
  %v8229 = vadd.f32 %v8227, %v8228
  %v8230 = vsel %vm255, %v8151, 0.0
  %v8231 = vadd.f32 %v8229, %v8230
  %v8232 = vsel %vm255, %v8153, 0.0
  %v8233 = vadd.f32 %v8231, %v8232
  %v8234 = vsel %vm255, %v8155, 0.0
  %v8235 = vadd.f32 %v8233, %v8234
  %v8236 = vsel %vm255, %v8157, 0.0
  %v8237 = vadd.f32 %v8235, %v8236
  %v8238 = vsel %vm255, %v8159, 0.0
  %v8239 = vadd.f32 %v8237, %v8238
  %v8240 = vsel %vm255, %v8161, 0.0
  %v8241 = vadd.f32 %v8239, %v8240
  %v8242 = vsel %vm255, %v8163, 0.0
  %v8243 = vadd.f32 %v8241, %v8242
  %v8244 = vsel %vm255, %v8165, 0.0
  %v8245 = vadd.f32 %v8243, %v8244
  %v8246 = vsel %vm255, %v8167, 0.0
  %v8247 = vadd.f32 %v8245, %v8246
  %v8248 = vsel %vm255, %v8169, 0.0
  %v8249 = vadd.f32 %v8247, %v8248
  %v8250 = vsel %vm255, %v8171, 0.0
  %v8251 = vadd.f32 %v8249, %v8250
  %v8252 = vsel %vm255, %v8173, 0.0
  %v8253 = vadd.f32 %v8251, %v8252
  %v8254 = vsel %vm255, %v8175, 0.0
  %v8255 = vadd.f32 %v8253, %v8254
  %v8256 = vsel %vm255, %v8177, 0.0
  %v8257 = vadd.f32 %v8255, %v8256
  %v8258 = vsel %vm255, %v8179, 0.0
  %v8259 = vadd.f32 %v8257, %v8258
  %v8260 = vsel %vm666, %v8181, 0.0
  %v8261 = vadd.f32 %v8259, %v8260
  %v8262 = vrot.slane %v8261, 4
  %v8263 = vadd.f32 %v8261, %v8262
  %v8264 = vrot.slane %v8263, 2
  %v8265 = vadd.f32 %v8263, %v8264
  %v8266 = vrot.slane %v8265, 1
  %v8267 = vadd.f32 %v8265, %v8266
  %v8268 = vmul.f32 %v8076, 0.0051020407
  %v8269 = vmul.f32 %v8131, 0.0051020407
  %v8270 = vmul.f32 %v8212, 0.0051020407
  %v8271 = vmul.f32 %v8267, 0.0051020407
  %v8272 = vmul.f32 %v8268, %v8268
  %v8273 = vmul.f32 %v8269, %v8269
  %v8274 = vsub.f32 %v8270, %v8272
  %v8275 = vsub.f32 %v8271, %v8273
  %v8276 = vld [vmem:[%s5] sm:$0x3]
  %v8277 = vadd.f32 %v8274, 1e-05
  %v8278 = vadd.f32 %v8275, 1e-05
  %v8279 = vrsqrt.pop %v8277
  %v8280 = vmul.f32 %v8279, %v8277
  %v8281 = vmul.f32 %v8280, %v8279
  %v8282 = vmul.f32 0.5, %v8281
  %v8283 = vsub.f32 1.5, %v8282
  %v8284 = vmul.f32 %v8279, %v8283
  %vm8285 = vweird.f32 %v8277
  %vm8286 = vweird.f32 %v8279
  %vm8287 = vmor %vm8285, %vm8286
  %v8288 = vsel %vm8287, %v8279, %v8284
  %v8289 = vrsqrt.pop %v8278
  %v8290 = vmul.f32 %v8289, %v8278
  %v8291 = vmul.f32 %v8290, %v8289
  %v8292 = vmul.f32 0.5, %v8291
  %v8293 = vsub.f32 1.5, %v8292
  %v8294 = vmul.f32 %v8289, %v8293
  %vm8295 = vweird.f32 %v8278
  %vm8296 = vweird.f32 %v8289
  %vm8297 = vmor %vm8295, %vm8296
  %v8298 = vsel %vm8297, %v8289, %v8294
  %v8301 = vrot.slane %v8298, 7
  %v8302 = vsel %vm845, %v8288, %v8301
  %v8304 = vmul.f32 %v8276, %v8302
  %v8305 = vld [vmem:[%s6] sm:$0x3]
  %v8307 = vperm.slane %v8304, 0
  %v8308 = vperm.slane %v8304, 1
  %v8311 = vmul.f32 %v8268, %v8307
  %v8312 = vmul.f32 %v8269, %v8308
  %v8315 = vrot.slane %v8312, 7
  %v8316 = vsel %vm845, %v8311, %v8315
  %v8318 = vsub.f32 %v8305, %v8316
  %v8319 = vmul.f32 %v7996, %v8307
  %v8320 = vmul.f32 %v7997, %v8308
  %v8321 = vmul.f32 %v7998, %v8307
  %v8322 = vmul.f32 %v7999, %v8308
  %v8323 = vmul.f32 %v8000, %v8307
  %v8324 = vmul.f32 %v8001, %v8308
  %v8325 = vmul.f32 %v8002, %v8307
  %v8326 = vmul.f32 %v8003, %v8308
  %v8327 = vmul.f32 %v8004, %v8307
  %v8328 = vmul.f32 %v8005, %v8308
  %v8329 = vmul.f32 %v8006, %v8307
  %v8330 = vmul.f32 %v8007, %v8308
  %v8331 = vmul.f32 %v8008, %v8307
  %v8332 = vmul.f32 %v8009, %v8308
  %v8333 = vmul.f32 %v8010, %v8307
  %v8334 = vmul.f32 %v8011, %v8308
  %v8335 = vmul.f32 %v8012, %v8307
  %v8336 = vmul.f32 %v8013, %v8308
  %v8337 = vmul.f32 %v8014, %v8307
  %v8338 = vmul.f32 %v8015, %v8308
  %v8339 = vmul.f32 %v8016, %v8307
  %v8340 = vmul.f32 %v8017, %v8308
  %v8341 = vmul.f32 %v8018, %v8307
  %v8342 = vmul.f32 %v8019, %v8308
  %v8343 = vmul.f32 %v8020, %v8307
  %v8344 = vmul.f32 %v8021, %v8308
  %v8345 = vmul.f32 %v8022, %v8307
  %v8346 = vmul.f32 %v8023, %v8308
  %v8347 = vmul.f32 %v8024, %v8307
  %v8348 = vmul.f32 %v8025, %v8308
  %v8349 = vmul.f32 %v8026, %v8307
  %v8350 = vmul.f32 %v8027, %v8308
  %v8351 = vmul.f32 %v8028, %v8307
  %v8352 = vmul.f32 %v8029, %v8308
  %v8353 = vmul.f32 %v8030, %v8307
  %v8354 = vmul.f32 %v8031, %v8308
  %v8355 = vmul.f32 %v8032, %v8307
  %v8356 = vmul.f32 %v8033, %v8308
  %v8357 = vmul.f32 %v8034, %v8307
  %v8358 = vmul.f32 %v8035, %v8308
  %v8359 = vmul.f32 %v8036, %v8307
  %v8360 = vmul.f32 %v8037, %v8308
  %v8361 = vmul.f32 %v8038, %v8307
  %v8362 = vmul.f32 %v8039, %v8308
  %v8363 = vmul.f32 %v8040, %v8307
  %v8364 = vmul.f32 %v8041, %v8308
  %v8365 = vmul.f32 %v8042, %v8307
  %v8366 = vmul.f32 %v8043, %v8308
  %v8367 = vmul.f32 %v8044, %v8307
  %v8368 = vmul.f32 %v8045, %v8308
  %v8370 = vperm.slane %v8318, 0
  %v8371 = vperm.slane %v8318, 1
  %v8374 = vadd.f32 %v8319, %v8370
  %v8375 = vadd.f32 %v8320, %v8371
  %v8376 = vadd.f32 %v8321, %v8370
  %v8377 = vadd.f32 %v8322, %v8371
  %v8378 = vadd.f32 %v8323, %v8370
  %v8379 = vadd.f32 %v8324, %v8371
  %v8380 = vadd.f32 %v8325, %v8370
  %v8381 = vadd.f32 %v8326, %v8371
  %v8382 = vadd.f32 %v8327, %v8370
  %v8383 = vadd.f32 %v8328, %v8371
  %v8384 = vadd.f32 %v8329, %v8370
  %v8385 = vadd.f32 %v8330, %v8371
  %v8386 = vadd.f32 %v8331, %v8370
  %v8387 = vadd.f32 %v8332, %v8371
  %v8388 = vadd.f32 %v8333, %v8370
  %v8389 = vadd.f32 %v8334, %v8371
  %v8390 = vadd.f32 %v8335, %v8370
  %v8391 = vadd.f32 %v8336, %v8371
  %v8392 = vadd.f32 %v8337, %v8370
  %v8393 = vadd.f32 %v8338, %v8371
  %v8394 = vadd.f32 %v8339, %v8370
  %v8395 = vadd.f32 %v8340, %v8371
  %v8396 = vadd.f32 %v8341, %v8370
  %v8397 = vadd.f32 %v8342, %v8371
  %v8398 = vadd.f32 %v8343, %v8370
  %v8399 = vadd.f32 %v8344, %v8371
  %v8400 = vadd.f32 %v8345, %v8370
  %v8401 = vadd.f32 %v8346, %v8371
  %v8402 = vadd.f32 %v8347, %v8370
  %v8403 = vadd.f32 %v8348, %v8371
  %v8404 = vadd.f32 %v8349, %v8370
  %v8405 = vadd.f32 %v8350, %v8371
  %v8406 = vadd.f32 %v8351, %v8370
  %v8407 = vadd.f32 %v8352, %v8371
  %v8408 = vadd.f32 %v8353, %v8370
  %v8409 = vadd.f32 %v8354, %v8371
  %v8410 = vadd.f32 %v8355, %v8370
  %v8411 = vadd.f32 %v8356, %v8371
  %v8412 = vadd.f32 %v8357, %v8370
  %v8413 = vadd.f32 %v8358, %v8371
  %v8414 = vadd.f32 %v8359, %v8370
  %v8415 = vadd.f32 %v8360, %v8371
  %v8416 = vadd.f32 %v8361, %v8370
  %v8417 = vadd.f32 %v8362, %v8371
  %v8418 = vadd.f32 %v8363, %v8370
  %v8419 = vadd.f32 %v8364, %v8371
  %v8420 = vadd.f32 %v8365, %v8370
  %v8421 = vadd.f32 %v8366, %v8371
  %v8422 = vadd.f32 %v8367, %v8370
  %v8423 = vadd.f32 %v8368, %v8371
  %v8424 = vmax.f32 %v8374, 0.0
  %v8425 = vmax.f32 %v8375, 0.0
  %v8426 = vmax.f32 %v8376, 0.0
  %v8427 = vmax.f32 %v8377, 0.0
  %v8428 = vmax.f32 %v8378, 0.0
  %v8429 = vmax.f32 %v8379, 0.0
  %v8430 = vmax.f32 %v8380, 0.0
  %v8431 = vmax.f32 %v8381, 0.0
  %v8432 = vmax.f32 %v8382, 0.0
  %v8433 = vmax.f32 %v8383, 0.0
  %v8434 = vmax.f32 %v8384, 0.0
  %v8435 = vmax.f32 %v8385, 0.0
  %v8436 = vmax.f32 %v8386, 0.0
  %v8437 = vmax.f32 %v8387, 0.0
  %v8438 = vmax.f32 %v8388, 0.0
  %v8439 = vmax.f32 %v8389, 0.0
  %v8440 = vmax.f32 %v8390, 0.0
  %v8441 = vmax.f32 %v8391, 0.0
  %v8442 = vmax.f32 %v8392, 0.0
  %v8443 = vmax.f32 %v8393, 0.0
  %v8444 = vmax.f32 %v8394, 0.0
  %v8445 = vmax.f32 %v8395, 0.0
  %v8446 = vmax.f32 %v8396, 0.0
  %v8447 = vmax.f32 %v8397, 0.0
  %v8448 = vmax.f32 %v8398, 0.0
  %v8449 = vmax.f32 %v8399, 0.0
  %v8450 = vmax.f32 %v8400, 0.0
  %v8451 = vmax.f32 %v8401, 0.0
  %v8452 = vmax.f32 %v8402, 0.0
  %v8453 = vmax.f32 %v8403, 0.0
  %v8454 = vmax.f32 %v8404, 0.0
  %v8455 = vmax.f32 %v8405, 0.0
  %v8456 = vmax.f32 %v8406, 0.0
  %v8457 = vmax.f32 %v8407, 0.0
  %v8458 = vmax.f32 %v8408, 0.0
  %v8459 = vmax.f32 %v8409, 0.0
  %v8460 = vmax.f32 %v8410, 0.0
  %v8461 = vmax.f32 %v8411, 0.0
  %v8462 = vmax.f32 %v8412, 0.0
  %v8463 = vmax.f32 %v8413, 0.0
  %v8464 = vmax.f32 %v8414, 0.0
  %v8465 = vmax.f32 %v8415, 0.0
  %v8466 = vmax.f32 %v8416, 0.0
  %v8467 = vmax.f32 %v8417, 0.0
  %v8468 = vmax.f32 %v8418, 0.0
  %v8469 = vmax.f32 %v8419, 0.0
  %v8470 = vmax.f32 %v8420, 0.0
  %v8471 = vmax.f32 %v8421, 0.0
  %v8472 = vmax.f32 %v8422, 0.0
  %v8473 = vmax.f32 %v8423, 0.0
  %8474 = vxpose.xlu0.b32.start [1/16] %v8424, 128
  %8475 = vxpose.xlu0.b32.cont [2/16] %v8426, 128
  %8476 = vxpose.xlu0.b32.cont [3/16] %v8428, 128
  %8477 = vxpose.xlu0.b32.cont [4/16] %v8430, 128
  %8478 = vxpose.xlu0.b32.cont [5/16] %v8432, 128
  %8479 = vxpose.xlu0.b32.cont [6/16] %v8434, 128
  %8480 = vxpose.xlu0.b32.cont [7/16] %v8436, 128
  %8481 = vxpose.xlu0.b32.cont [8/16] %v8438, 128
  %8482 = vxpose.xlu0.b32.cont [9/16] %v8440, 128
  %8483 = vxpose.xlu0.b32.cont [10/16] %v8442, 128
  %8484 = vxpose.xlu0.b32.cont [11/16] %v8444, 128
  %8485 = vxpose.xlu0.b32.cont [12/16] %v8446, 128
  %8486 = vxpose.xlu0.b32.cont [13/16] %v8448, 128
  %8487 = vxpose.xlu0.b32.cont [14/16] %v8450, 128
  %8488 = vxpose.xlu0.b32.cont [15/16] %v8452, 128
  %8489 = vxpose.xlu0.b32.end [16/16] %v8454, 128
  %v8490 = vpop.trf.xlu0
  %v8491 = vpop.trf.xlu0
  %v8492 = vpop.trf.xlu0
  %v8493 = vpop.trf.xlu0
  %v8494 = vpop.trf.xlu0
  %v8495 = vpop.trf.xlu0
  %v8496 = vpop.trf.xlu0
  %v8497 = vpop.trf.xlu0
  %v8498 = vpop.trf.xlu0
  %v8499 = vpop.trf.xlu0
  %v8500 = vpop.trf.xlu0
  %v8501 = vpop.trf.xlu0
  %v8502 = vpop.trf.xlu0
  %v8503 = vpop.trf.xlu0
  %v8504 = vpop.trf.xlu0
  %v8505 = vpop.trf.xlu0
  %8506 = vxpose.xlu0.b32.start [1/16] %v8425, 128
  %8507 = vxpose.xlu0.b32.cont [2/16] %v8427, 128
  %8508 = vxpose.xlu0.b32.cont [3/16] %v8429, 128
  %8509 = vxpose.xlu0.b32.cont [4/16] %v8431, 128
  %8510 = vxpose.xlu0.b32.cont [5/16] %v8433, 128
  %8511 = vxpose.xlu0.b32.cont [6/16] %v8435, 128
  %8512 = vxpose.xlu0.b32.cont [7/16] %v8437, 128
  %8513 = vxpose.xlu0.b32.cont [8/16] %v8439, 128
  %8514 = vxpose.xlu0.b32.cont [9/16] %v8441, 128
  %8515 = vxpose.xlu0.b32.cont [10/16] %v8443, 128
  %8516 = vxpose.xlu0.b32.cont [11/16] %v8445, 128
  %8517 = vxpose.xlu0.b32.cont [12/16] %v8447, 128
  %8518 = vxpose.xlu0.b32.cont [13/16] %v8449, 128
  %8519 = vxpose.xlu0.b32.cont [14/16] %v8451, 128
  %8520 = vxpose.xlu0.b32.cont [15/16] %v8453, 128
  %8521 = vxpose.xlu0.b32.end [16/16] %v8455, 128
  %v8522 = vpop.trf.xlu0
  %v8523 = vpop.trf.xlu0
  %v8524 = vpop.trf.xlu0
  %v8525 = vpop.trf.xlu0
  %v8526 = vpop.trf.xlu0
  %v8527 = vpop.trf.xlu0
  %v8528 = vpop.trf.xlu0
  %v8529 = vpop.trf.xlu0
  %v8530 = vpop.trf.xlu0
  %v8531 = vpop.trf.xlu0
  %v8532 = vpop.trf.xlu0
  %v8533 = vpop.trf.xlu0
  %v8534 = vpop.trf.xlu0
  %v8535 = vpop.trf.xlu0
  %v8536 = vpop.trf.xlu0
  %v8537 = vpop.trf.xlu0
  %8538 = vxpose.xlu0.b32.start [1/16] %v8456, 128
  %8539 = vxpose.xlu0.b32.cont [2/16] %v8458, 128
  %8540 = vxpose.xlu0.b32.cont [3/16] %v8460, 128
  %8541 = vxpose.xlu0.b32.cont [4/16] %v8462, 128
  %8542 = vxpose.xlu0.b32.cont [5/16] %v8464, 128
  %8543 = vxpose.xlu0.b32.cont [6/16] %v8466, 128
  %8544 = vxpose.xlu0.b32.cont [7/16] %v8468, 128
  %8545 = vxpose.xlu0.b32.cont [8/16] %v8470, 128
  %8546 = vxpose.xlu0.b32.cont [9/16] %v8472, 128
  %8547 = vxpose.xlu0.b32.cont [10/16] 0.0, 128
  %8548 = vxpose.xlu0.b32.cont [11/16] 0.0, 128
  %8549 = vxpose.xlu0.b32.cont [12/16] 0.0, 128
  %8550 = vxpose.xlu0.b32.cont [13/16] 0.0, 128
  %8551 = vxpose.xlu0.b32.cont [14/16] 0.0, 128
  %8552 = vxpose.xlu0.b32.cont [15/16] 0.0, 128
  %8553 = vxpose.xlu0.b32.end [16/16] 0.0, 128
  %v8554 = vpop.trf.xlu0
  %v8555 = vpop.trf.xlu0
  %v8556 = vpop.trf.xlu0
  %v8557 = vpop.trf.xlu0
  %v8558 = vpop.trf.xlu0
  %v8559 = vpop.trf.xlu0
  %v8560 = vpop.trf.xlu0
  %v8561 = vpop.trf.xlu0
  %v8562 = vpop.trf.xlu0
  %v8563 = vpop.trf.xlu0
  %v8564 = vpop.trf.xlu0
  %v8565 = vpop.trf.xlu0
  %v8566 = vpop.trf.xlu0
  %v8567 = vpop.trf.xlu0
  %v8568 = vpop.trf.xlu0
  %v8569 = vpop.trf.xlu0
  %8570 = vxpose.xlu0.b32.start [1/16] %v8457, 128
  %8571 = vxpose.xlu0.b32.cont [2/16] %v8459, 128
  %8572 = vxpose.xlu0.b32.cont [3/16] %v8461, 128
  %8573 = vxpose.xlu0.b32.cont [4/16] %v8463, 128
  %8574 = vxpose.xlu0.b32.cont [5/16] %v8465, 128
  %8575 = vxpose.xlu0.b32.cont [6/16] %v8467, 128
  %8576 = vxpose.xlu0.b32.cont [7/16] %v8469, 128
  %8577 = vxpose.xlu0.b32.cont [8/16] %v8471, 128
  %8578 = vxpose.xlu0.b32.cont [9/16] %v8473, 128
  %8579 = vxpose.xlu0.b32.cont [10/16] 0.0, 128
  %8580 = vxpose.xlu0.b32.cont [11/16] 0.0, 128
  %8581 = vxpose.xlu0.b32.cont [12/16] 0.0, 128
  %8582 = vxpose.xlu0.b32.cont [13/16] 0.0, 128
  %8583 = vxpose.xlu0.b32.cont [14/16] 0.0, 128
  %8584 = vxpose.xlu0.b32.cont [15/16] 0.0, 128
  %8585 = vxpose.xlu0.b32.end [16/16] 0.0, 128
  %v8586 = vpop.trf.xlu0
  %v8587 = vpop.trf.xlu0
  %v8588 = vpop.trf.xlu0
  %v8589 = vpop.trf.xlu0
  %v8590 = vpop.trf.xlu0
  %v8591 = vpop.trf.xlu0
  %v8592 = vpop.trf.xlu0
  %v8593 = vpop.trf.xlu0
  %v8594 = vpop.trf.xlu0
  %v8595 = vpop.trf.xlu0
  %v8596 = vpop.trf.xlu0
  %v8597 = vpop.trf.xlu0
  %v8598 = vpop.trf.xlu0
  %v8599 = vpop.trf.xlu0
  %v8600 = vpop.trf.xlu0
  %v8601 = vpop.trf.xlu0
  %8602 = vst [vmem:[%s7] sm:$0xff] %v8490
  %vm8603 = vcmask 556032
  %8604 = vst.msk [vmem:[%s7 + $0x8] sm:$0xff] %vm8603, %v8554
  %8605 = vst [vmem:[%s7 + $0x10] sm:$0xff] %v8491
  %8606 = vst.msk [vmem:[%s7 + $0x18] sm:$0xff] %vm8603, %v8555
  %8607 = vst [vmem:[%s7 + $0x20] sm:$0xff] %v8492
  %8608 = vst.msk [vmem:[%s7 + $0x28] sm:$0xff] %vm8603, %v8556
  %8609 = vst [vmem:[%s7 + $0x30] sm:$0xff] %v8493
  %8610 = vst.msk [vmem:[%s7 + $0x38] sm:$0xff] %vm8603, %v8557
  %8611 = vst [vmem:[%s7 + $0x40] sm:$0xff] %v8494
  %8612 = vst.msk [vmem:[%s7 + $0x48] sm:$0xff] %vm8603, %v8558
  %8613 = vst [vmem:[%s7 + $0x50] sm:$0xff] %v8495
  %8614 = vst.msk [vmem:[%s7 + $0x58] sm:$0xff] %vm8603, %v8559
  %8615 = vst [vmem:[%s7 + $0x60] sm:$0xff] %v8496
  %8616 = vst.msk [vmem:[%s7 + $0x68] sm:$0xff] %vm8603, %v8560
  %8617 = vst [vmem:[%s7 + $0x70] sm:$0xff] %v8497
  %8618 = vst.msk [vmem:[%s7 + $0x78] sm:$0xff] %vm8603, %v8561
  %8619 = vst [vmem:[%s7 + $0x80] sm:$0xff] %v8498
  %8620 = vst.msk [vmem:[%s7 + $0x88] sm:$0xff] %vm8603, %v8562
  %8621 = vst [vmem:[%s7 + $0x90] sm:$0xff] %v8499
  %8622 = vst.msk [vmem:[%s7 + $0x98] sm:$0xff] %vm8603, %v8563
  %8623 = vst [vmem:[%s7 + $0xa0] sm:$0xff] %v8500
  %8624 = vst.msk [vmem:[%s7 + $0xa8] sm:$0xff] %vm8603, %v8564
  %8625 = vst [vmem:[%s7 + $0xb0] sm:$0xff] %v8501
  %8626 = vst.msk [vmem:[%s7 + $0xb8] sm:$0xff] %vm8603, %v8565
  %8627 = vst [vmem:[%s7 + $0xc0] sm:$0xff] %v8502
  %8628 = vst.msk [vmem:[%s7 + $0xc8] sm:$0xff] %vm8603, %v8566
  %8629 = vst [vmem:[%s7 + $0xd0] sm:$0xff] %v8503
  %8630 = vst.msk [vmem:[%s7 + $0xd8] sm:$0xff] %vm8603, %v8567
  %8631 = vst [vmem:[%s7 + $0xe0] sm:$0xff] %v8504
  %8632 = vst.msk [vmem:[%s7 + $0xe8] sm:$0xff] %vm8603, %v8568
  %8633 = vst [vmem:[%s7 + $0xf0] sm:$0xff] %v8505
  %8634 = vst.msk [vmem:[%s7 + $0xf8] sm:$0xff] %vm8603, %v8569
  %8635 = vst [vmem:[%s7 + $0x100] sm:$0xff] %v8522
  %8636 = vst.msk [vmem:[%s7 + $0x108] sm:$0xff] %vm8603, %v8586
  %8637 = vst [vmem:[%s7 + $0x110] sm:$0xff] %v8523
  %8638 = vst.msk [vmem:[%s7 + $0x118] sm:$0xff] %vm8603, %v8587
  %8639 = vst [vmem:[%s7 + $0x120] sm:$0xff] %v8524
  %8640 = vst.msk [vmem:[%s7 + $0x128] sm:$0xff] %vm8603, %v8588
  %8641 = vst [vmem:[%s7 + $0x130] sm:$0xff] %v8525
  %8642 = vst.msk [vmem:[%s7 + $0x138] sm:$0xff] %vm8603, %v8589
  // Predicated region
  $region30: #{forward.1} parent=0 // pred_check
    _
  $region31: #{forward.1} parent=0 // pred_check_branch
    %8644 = sbr.rel (0) target = $region33
  $region32: #{forward.1} parent=0 // pred_region
    _
  $region33: #{forward.1} parent=0 // pred_fallthru
    _
  // Predicated region
  $region34: #{forward.1} parent=0 // pred_check
    _
  $region35: #{forward.1} parent=0 // pred_check_branch
    %8646 = sbr.rel (0) target = $region37
  $region36: #{forward.1} parent=0 // pred_region
    _
  $region37: #{forward.1} parent=0 // pred_fallthru
    _

</llo_original>
